<compile_context>
chip_gen: v7x
topology: tpu7x:2x2x1
jax: 0.10.0
libtpu: 0.0.40
codegen_flags: <defaults>
</compile_context>

<pallas_src>
import math

import jax
import jax.numpy as jnp
from jax import lax
from jax.experimental import pallas as pl
from jax.experimental.pallas import tpu as pltpu


# --------------------------- model configuration ---------------------------

VOCAB = 128
MAX_POS = 64
D_MODEL = 32
N_HEADS = 4
HEAD_DIM = D_MODEL // N_HEADS
FFN_DIM = 64
ENC_LAYERS = 2
DEC_LAYERS = 2
POS_OFFSET = 2          # BartLearnedPositionalEmbedding offset
LN_EPS = 1e-5

PARAM_DTYPE = jnp.bfloat16   # MXU-facing weights / embeddings
ACT_DTYPE = jnp.bfloat16     # activations feeding the MXU

# Parity / perf switches (review "correctness_concerns"):
GELU_TANH_APPROX = True      # True: tanh GELU on EUP (tiny deviation from HF erf GELU)
APPROX_SOFTMAX_RECIP = True  # True: pl.reciprocal(approx=True) (~1e-3 rel err)
LOGITS_DTYPE = jnp.bfloat16  # jnp.float32 for exact-parity tests

_INV_SQRT2 = 1.0 / math.sqrt(2.0)
_SQRT_2_OVER_PI = math.sqrt(2.0 / math.pi)


# ----------------------- weight argument order (fixed) ----------------------

_WEIGHT_NAMES = (
    # encoder embedding LayerNorm
    "enc_eln_g", "enc_eln_b",
    # encoder layers (stacked over ENC_LAYERS)
    "enc_wqkv", "enc_bqkv", "enc_wo", "enc_bo", "enc_aln_g", "enc_aln_b",
    "enc_w1", "enc_b1", "enc_w2", "enc_b2", "enc_fln_g", "enc_fln_b",
    # decoder embedding LayerNorm
    "dec_eln_g", "dec_eln_b",
    # decoder self-attention (stacked over DEC_LAYERS)
    "dec_s_wqkv", "dec_s_bqkv", "dec_s_wo", "dec_s_bo", "dec_s_ln_g", "dec_s_ln_b",
    # decoder cross-attention
    "dec_c_wq", "dec_c_bq", "dec_c_wkv", "dec_c_bkv",
    "dec_c_wo", "dec_c_bo", "dec_c_ln_g", "dec_c_ln_b",
    # decoder FFN
    "dec_w1", "dec_b1", "dec_w2", "dec_b2", "dec_fln_g", "dec_fln_b",
    # tied LM head
    "embed_tokens", "final_logits_bias",
)


# ------------------------------- the kernel ---------------------------------

def _bart_fwd_kernel(enc_in_ref, dec_in_ref, *refs):
    # refs = (<38 weight refs in _WEIGHT_NAMES order>, logits_ref)
    assert len(refs) == len(_WEIGHT_NAMES) + 1
    w = dict(zip(_WEIGHT_NAMES, refs[:-1]))
    logits_ref = refs[-1]

    def ln(y, g, b):                                   # y: [M, D] f32; g,b: [1, D] f32
        mean = jnp.mean(y, axis=-1, keepdims=True)
        var = jnp.mean(jnp.square(y - mean), axis=-1, keepdims=True)
        return (y - mean) * lax.rsqrt(var + LN_EPS) * g + b

    def gelu(h):                                       # f32
        if GELU_TANH_APPROX:
            # tanh routes through the EUP slot (v5e has no bf16 VALU and the f32
            # VALU is the first slot to saturate there).
            return 0.5 * h * (1.0 + jnp.tanh(_SQRT_2_OVER_PI * (h + 0.044715 * h * h * h)))
        return 0.5 * h * (1.0 + lax.erf(h * _INV_SQRT2))

    def softmax_rows(s):                               # f32, softmax along last dim
        s = s - jnp.max(s, axis=-1, keepdims=True)
        p = jnp.exp(s)
        denom = jnp.sum(p, axis=-1, keepdims=True)
        if APPROX_SOFTMAX_RECIP:
            return p * pl.reciprocal(denom, approx=True)   # EUP slot
        return p / denom

    def attend(q, k, v, wo_l, bo_l, bias):
        # q: [Tq, D] f32 (scale already folded into W_q); k, v: [Skv, D] f32
        # wo_l: [H, dh, D] bf16 (head-split out-proj), bo_l: [1, D] f32
        acc = jnp.zeros((q.shape[0], D_MODEL), jnp.float32)
        # Static per-head loop: a batched-head dot would lower to the same H MXU
        # pushes (2-D systolic array) and the [H,Tq,dh] views would need
        # sub-(8,128) reshapes; static lane slices are the low-risk/cheap path.
        for h in range(N_HEADS):
            sl = slice(h * HEAD_DIM, (h + 1) * HEAD_DIM)
            qh = q[:, sl].astype(ACT_DTYPE)
            kh = k[:, sl].astype(ACT_DTYPE)
            vh = v[:, sl].astype(ACT_DTYPE)
            # scores: contract last dims (trans_b) -- no XLU transpose of K
            s = lax.dot_general(qh, kh, (((1,), (1,)), ((), ())),
                                preferred_element_type=jnp.float32)     # [Tq, Skv]
            if bias is not None:
                s = s + bias
            p = softmax_rows(s)
            ctx = jnp.dot(p.astype(ACT_DTYPE), vh,
                          preferred_element_type=jnp.float32)           # [Tq, dh]
            # merge-heads folded into the head-split output projection
            acc = acc + jnp.dot(ctx.astype(ACT_DTYPE), wo_l[h],
                                preferred_element_type=jnp.float32)     # [Tq, D]
        return acc + bo_l

    def self_attn_block(x, wqkv_l, bqkv_l, wo_l, bo_l, g, b, bias):
        # post-norm BART self-attn block; single fused Q|K|V projection.
        qkv = jnp.dot(x.astype(ACT_DTYPE), wqkv_l,
                      preferred_element_type=jnp.float32) + bqkv_l      # [T, 3D]
        q = qkv[:, :D_MODEL]                     # 1/sqrt(dh) folded into W_q at init
        k = qkv[:, D_MODEL:2 * D_MODEL]
        v = qkv[:, 2 * D_MODEL:]
        y = attend(q, k, v, wo_l, bo_l, bias) + x
        return ln(y, g, b)

    def cross_attn_block(x, enc_h, wq_l, bq_l, wkv_l, bkv_l, wo_l, bo_l, g, b):
        q = jnp.dot(x.astype(ACT_DTYPE), wq_l,
                    preferred_element_type=jnp.float32) + bq_l          # [T, D]
        kv = jnp.dot(enc_h, wkv_l,
                     preferred_element_type=jnp.float32) + bkv_l        # [S, 2D]
        k = kv[:, :D_MODEL]
        v = kv[:, D_MODEL:]
        y = attend(q, k, v, wo_l, bo_l, None) + x
        return ln(y, g, b)

    def ffn_block(x, w1_l, b1_l, w2_l, b2_l, g, b):
        h = jnp.dot(x.astype(ACT_DTYPE), w1_l,
                    preferred_element_type=jnp.float32) + b1_l
        h = gelu(h)
        y = jnp.dot(h.astype(ACT_DTYPE), w2_l,
                    preferred_element_type=jnp.float32) + b2_l + x
        return ln(y, g, b)

    # ----- encoder (embedding LN fused; activations never leave VMEM) -----
    h = ln(enc_in_ref[0].astype(jnp.float32), w["enc_eln_g"][...], w["enc_eln_b"][...])
    for l in range(ENC_LAYERS):
        h = self_attn_block(h, w["enc_wqkv"][l], w["enc_bqkv"][l],
                            w["enc_wo"][l], w["enc_bo"][l],
                            w["enc_aln_g"][l], w["enc_aln_b"][l], bias=None)
        h = ffn_block(h, w["enc_w1"][l], w["enc_b1"][l],
                      w["enc_w2"][l], w["enc_b2"][l],
                      w["enc_fln_g"][l], w["enc_fln_b"][l])
    enc_h = h.astype(ACT_DTYPE)        # hoisted cast; reused by every cross-attn layer

    # ----- decoder -----
    t = dec_in_ref.shape[1]
    row = lax.broadcasted_iota(jnp.int32, (t, t), 0)
    col = lax.broadcasted_iota(jnp.int32, (t, t), 1)
    causal_bias = jnp.where(row >= col, jnp.float32(0.0), jnp.float32(-1e9))  # hoisted

    d = ln(dec_in_ref[0].astype(jnp.float32), w["dec_eln_g"][...], w["dec_eln_b"][...])
    for l in range(DEC_LAYERS):
        d = self_attn_block(d, w["dec_s_wqkv"][l], w["dec_s_bqkv"][l],
                            w["dec_s_wo"][l], w["dec_s_bo"][l],
                            w["dec_s_ln_g"][l], w["dec_s_ln_b"][l], bias=causal_bias)
        d = cross_attn_block(d, enc_h, w["dec_c_wq"][l], w["dec_c_bq"][l],
                             w["dec_c_wkv"][l], w["dec_c_bkv"][l],
                             w["dec_c_wo"][l], w["dec_c_bo"][l],
                             w["dec_c_ln_g"][l], w["dec_c_ln_b"][l])
        d = ffn_block(d, w["dec_w1"][l], w["dec_b1"][l],
                      w["dec_w2"][l], w["dec_b2"][l],
                      w["dec_fln_g"][l], w["dec_fln_b"][l])

    # ----- tied LM head: trans_b contraction; lane-dense [T, VOCAB] store -----
    logits = lax.dot_general(d.astype(ACT_DTYPE), w["embed_tokens"][...],
                             (((1,), (1,)), ((), ())),
                             preferred_element_type=jnp.float32)        # [T, V]
    logits_ref[0] = (logits + w["final_logits_bias"][...]).astype(logits_ref.dtype)


# ------------------------------ kernel wrapper -------------------------------

def _const_spec(x):
    # Full-array weight block, same block for every grid step (fetched once).
    nd = x.ndim
    return pl.BlockSpec(x.shape, lambda *_, n=nd: (0,) * n)


def bart_forward(params, input_ids, decoder_input_ids):
    """Returns logits [B, T, VOCAB] (post-norm BART, dropout disabled)."""
    B, S = input_ids.shape
    _, T = decoder_input_ids.shape

    # Embedding gathers are plain-JAX glue (no clean Pallas gather here).
    enc_x = _embed_sum(params, input_ids)            # [B, S, D] bf16 (pre-LN)
    dec_x = _embed_sum(params, decoder_input_ids)    # [B, T, D] bf16 (pre-LN)

    weights = [params[k] for k in _WEIGHT_NAMES]
    in_specs = [
        pl.BlockSpec((1, S, D_MODEL), lambda i: (i, 0, 0)),
        pl.BlockSpec((1, T, D_MODEL), lambda i: (i, 0, 0)),
    ] + [_const_spec(x) for x in weights]

    return pl.pallas_call(
        _bart_fwd_kernel,
        out_shape=jax.ShapeDtypeStruct((B, T, VOCAB), LOGITS_DTYPE),
        grid=(B,),
        in_specs=in_specs,
        out_specs=pl.BlockSpec((1, T, VOCAB), lambda i: (i, 0, 0)),
        compiler_params=pltpu.CompilerParams(dimension_semantics=("parallel",)),
    )(enc_x, dec_x, *weights)


def _embed_sum(params, ids):
    # tok-emb + learned pos-emb (+2 offset); the fused kernel applies LN_emb.
    _, s = ids.shape
    tok = params["embed_tokens"][ids]                                 # [B, S, D]
    pos = params["embed_pos"][jnp.arange(s) + POS_OFFSET]             # [S, D]
    return (tok + pos[None]).astype(ACT_DTYPE)


# -------------------------------- parameters --------------------------------

def _init_params(key):
    keys = iter(jax.random.split(key, 64))

    def w(*shape):
        return 0.02 * jax.random.normal(next(keys), shape, jnp.float32)

    scale = HEAD_DIM ** -0.5
    p = {}
    p["embed_tokens"] = w(VOCAB, D_MODEL).astype(PARAM_DTYPE)
    p["embed_pos"] = w(MAX_POS + POS_OFFSET, D_MODEL).astype(PARAM_DTYPE)
    p["final_logits_bias"] = jnp.zeros((1, VOCAB), jnp.float32)

    def ln_params(n=None):
        if n is None:
            return (jnp.ones((1, D_MODEL), jnp.float32),
                    jnp.zeros((1, D_MODEL), jnp.float32))
        return (jnp.ones((n, 1, D_MODEL), jnp.float32),
                jnp.zeros((n, 1, D_MODEL), jnp.float32))

    p["enc_eln_g"], p["enc_eln_b"] = ln_params()
    p["dec_eln_g"], p["dec_eln_b"] = ln_params()

    def self_attn_stack(n):
        wqkv = w(n, D_MODEL, 3 * D_MODEL)
        # Fold the 1/sqrt(head_dim) attention scale into the Q projection
        # (biases are zero; a nonzero Q-bias would be scaled identically).
        wqkv = wqkv.at[:, :, :D_MODEL].multiply(scale)
        bqkv = jnp.zeros((n, 1, 3 * D_MODEL), jnp.float32)
        wo = w(n, N_HEADS, HEAD_DIM, D_MODEL)       # head-split out-proj [L,H,dh,D]
        bo = jnp.zeros((n, 1, D_MODEL), jnp.float32)
        g, b = ln_params(n)
        return wqkv.astype(PARAM_DTYPE), bqkv, wo.astype(PARAM_DTYPE), bo, g, b

    (p["enc_wqkv"], p["enc_bqkv"], p["enc_wo"], p["enc_bo"],
     p["enc_aln_g"], p["enc_aln_b"]) = self_attn_stack(ENC_LAYERS)
    (p["dec_s_wqkv"], p["dec_s_bqkv"], p["dec_s_wo"], p["dec_s_bo"],
     p["dec_s_ln_g"], p["dec_s_ln_b"]) = self_attn_stack(DEC_LAYERS)

    # decoder cross-attention (Q from decoder, fused K|V from encoder output)
    p["dec_c_wq"] = (w(DEC_LAYERS, D_MODEL, D_MODEL) * scale).astype(PARAM_DTYPE)
    p["dec_c_bq"] = jnp.zeros((DEC_LAYERS, 1, D_MODEL), jnp.float32)
    p["dec_c_wkv"] = w(DEC_LAYERS, D_MODEL, 2 * D_MODEL).astype(PARAM_DTYPE)
    p["dec_c_bkv"] = jnp.zeros((DEC_LAYERS, 1, 2 * D_MODEL), jnp.float32)
    p["dec_c_wo"] = w(DEC_LAYERS, N_HEADS, HEAD_DIM, D_MODEL).astype(PARAM_DTYPE)
    p["dec_c_bo"] = jnp.zeros((DEC_LAYERS, 1, D_MODEL), jnp.float32)
    p["dec_c_ln_g"], p["dec_c_ln_b"] = ln_params(DEC_LAYERS)

    def ffn_stack(n):
        w1 = w(n, D_MODEL, FFN_DIM)
        b1 = jnp.zeros((n, 1, FFN_DIM), jnp.float32)
        w2 = w(n, FFN_DIM, D_MODEL)
        b2 = jnp.zeros((n, 1, D_MODEL), jnp.float32)
        g, b = ln_params(n)
        return w1.astype(PARAM_DTYPE), b1, w2.astype(PARAM_DTYPE), b2, g, b

    (p["enc_w1"], p["enc_b1"], p["enc_w2"], p["enc_b2"],
     p["enc_fln_g"], p["enc_fln_b"]) = ffn_stack(ENC_LAYERS)
    (p["dec_w1"], p["dec_b1"], p["dec_w2"], p["dec_b2"],
     p["dec_fln_g"], p["dec_fln_b"]) = ffn_stack(DEC_LAYERS)
    return p


# ---------------------------------- main ------------------------------------

if __name__ == "__main__":
    key = jax.random.PRNGKey(0)
    pkey, ikey, dkey = jax.random.split(key, 3)

    params = _init_params(pkey)

    B, S, T = 2, 8, 8
    input_ids = jax.random.randint(ikey, (B, S), 0, VOCAB, dtype=jnp.int32)
    decoder_input_ids = jax.random.randint(dkey, (B, T), 0, VOCAB, dtype=jnp.int32)

    logits = jax.jit(bart_forward)(params, input_ids, decoder_input_ids)
    jax.block_until_ready(logits)

    assert logits.shape == (B, T, VOCAB)
    assert bool(jnp.all(jnp.isfinite(logits.astype(jnp.float32))))
    print("KERNEL_OK")
</pallas_src>

<mosaic_0001>
module attributes {stable_mosaic.version = 11 : i64} {
  func.func @_bart_fwd_kernel(%arg0: i32, %arg1: memref<1x8x32xbf16, #tpu.memory_space<vmem>>, %arg2: memref<1x8x32xbf16, #tpu.memory_space<vmem>>, %arg3: memref<1x32xf32, #tpu.memory_space<vmem>>, %arg4: memref<1x32xf32, #tpu.memory_space<vmem>>, %arg5: memref<2x32x96xbf16, #tpu.memory_space<vmem>>, %arg6: memref<2x1x96xf32, #tpu.memory_space<vmem>>, %arg7: memref<2x4x8x32xbf16, #tpu.memory_space<vmem>>, %arg8: memref<2x1x32xf32, #tpu.memory_space<vmem>>, %arg9: memref<2x1x32xf32, #tpu.memory_space<vmem>>, %arg10: memref<2x1x32xf32, #tpu.memory_space<vmem>>, %arg11: memref<2x32x64xbf16, #tpu.memory_space<vmem>>, %arg12: memref<2x1x64xf32, #tpu.memory_space<vmem>>, %arg13: memref<2x64x32xbf16, #tpu.memory_space<vmem>>, %arg14: memref<2x1x32xf32, #tpu.memory_space<vmem>>, %arg15: memref<2x1x32xf32, #tpu.memory_space<vmem>>, %arg16: memref<2x1x32xf32, #tpu.memory_space<vmem>>, %arg17: memref<1x32xf32, #tpu.memory_space<vmem>>, %arg18: memref<1x32xf32, #tpu.memory_space<vmem>>, %arg19: memref<2x32x96xbf16, #tpu.memory_space<vmem>>, %arg20: memref<2x1x96xf32, #tpu.memory_space<vmem>>, %arg21: memref<2x4x8x32xbf16, #tpu.memory_space<vmem>>, %arg22: memref<2x1x32xf32, #tpu.memory_space<vmem>>, %arg23: memref<2x1x32xf32, #tpu.memory_space<vmem>>, %arg24: memref<2x1x32xf32, #tpu.memory_space<vmem>>, %arg25: memref<2x32x32xbf16, #tpu.memory_space<vmem>>, %arg26: memref<2x1x32xf32, #tpu.memory_space<vmem>>, %arg27: memref<2x32x64xbf16, #tpu.memory_space<vmem>>, %arg28: memref<2x1x64xf32, #tpu.memory_space<vmem>>, %arg29: memref<2x4x8x32xbf16, #tpu.memory_space<vmem>>, %arg30: memref<2x1x32xf32, #tpu.memory_space<vmem>>, %arg31: memref<2x1x32xf32, #tpu.memory_space<vmem>>, %arg32: memref<2x1x32xf32, #tpu.memory_space<vmem>>, %arg33: memref<2x32x64xbf16, #tpu.memory_space<vmem>>, %arg34: memref<2x1x64xf32, #tpu.memory_space<vmem>>, %arg35: memref<2x64x32xbf16, #tpu.memory_space<vmem>>, %arg36: memref<2x1x32xf32, #tpu.memory_space<vmem>>, %arg37: memref<2x1x32xf32, #tpu.memory_space<vmem>>, %arg38: memref<2x1x32xf32, #tpu.memory_space<vmem>>, %arg39: memref<128x32xbf16, #tpu.memory_space<vmem>>, %arg40: memref<1x128xf32, #tpu.memory_space<vmem>>, %arg41: memref<1x8x128xbf16, #tpu.memory_space<vmem>>) attributes {dimension_semantics = [#tpu.dimension_semantics<parallel>], iteration_bounds = array<i64: 2>, scalar_prefetch = 0 : i64, scratch_operands = 0 : i64, tpu.core_type = #tpu.core_type<tc>, window_params = [{transform_indices = @transform_0, window_bounds = array<i64: 1, 8, 32>}, {transform_indices = @transform_1, window_bounds = array<i64: 1, 8, 32>}, {pipeline_mode = #tpu.pipeline_mode<synchronous>, transform_indices = @transform_2, window_bounds = array<i64: 1, 32>}, {pipeline_mode = #tpu.pipeline_mode<synchronous>, transform_indices = @transform_3, window_bounds = array<i64: 1, 32>}, {pipeline_mode = #tpu.pipeline_mode<synchronous>, transform_indices = @transform_4, window_bounds = array<i64: 2, 32, 96>}, {pipeline_mode = #tpu.pipeline_mode<synchronous>, transform_indices = @transform_5, window_bounds = array<i64: 2, 1, 96>}, {pipeline_mode = #tpu.pipeline_mode<synchronous>, transform_indices = @transform_6, window_bounds = array<i64: 2, 4, 8, 32>}, {pipeline_mode = #tpu.pipeline_mode<synchronous>, transform_indices = @transform_7, window_bounds = array<i64: 2, 1, 32>}, {pipeline_mode = #tpu.pipeline_mode<synchronous>, transform_indices = @transform_8, window_bounds = array<i64: 2, 1, 32>}, {pipeline_mode = #tpu.pipeline_mode<synchronous>, transform_indices = @transform_9, window_bounds = array<i64: 2, 1, 32>}, {pipeline_mode = #tpu.pipeline_mode<synchronous>, transform_indices = @transform_10, window_bounds = array<i64: 2, 32, 64>}, {pipeline_mode = #tpu.pipeline_mode<synchronous>, transform_indices = @transform_11, window_bounds = array<i64: 2, 1, 64>}, {pipeline_mode = #tpu.pipeline_mode<synchronous>, transform_indices = @transform_12, window_bounds = array<i64: 2, 64, 32>}, {pipeline_mode = #tpu.pipeline_mode<synchronous>, transform_indices = @transform_13, window_bounds = array<i64: 2, 1, 32>}, {pipeline_mode = #tpu.pipeline_mode<synchronous>, transform_indices = @transform_14, window_bounds = array<i64: 2, 1, 32>}, {pipeline_mode = #tpu.pipeline_mode<synchronous>, transform_indices = @transform_15, window_bounds = array<i64: 2, 1, 32>}, {pipeline_mode = #tpu.pipeline_mode<synchronous>, transform_indices = @transform_16, window_bounds = array<i64: 1, 32>}, {pipeline_mode = #tpu.pipeline_mode<synchronous>, transform_indices = @transform_17, window_bounds = array<i64: 1, 32>}, {pipeline_mode = #tpu.pipeline_mode<synchronous>, transform_indices = @transform_18, window_bounds = array<i64: 2, 32, 96>}, {pipeline_mode = #tpu.pipeline_mode<synchronous>, transform_indices = @transform_19, window_bounds = array<i64: 2, 1, 96>}, {pipeline_mode = #tpu.pipeline_mode<synchronous>, transform_indices = @transform_20, window_bounds = array<i64: 2, 4, 8, 32>}, {pipeline_mode = #tpu.pipeline_mode<synchronous>, transform_indices = @transform_21, window_bounds = array<i64: 2, 1, 32>}, {pipeline_mode = #tpu.pipeline_mode<synchronous>, transform_indices = @transform_22, window_bounds = array<i64: 2, 1, 32>}, {pipeline_mode = #tpu.pipeline_mode<synchronous>, transform_indices = @transform_23, window_bounds = array<i64: 2, 1, 32>}, {pipeline_mode = #tpu.pipeline_mode<synchronous>, transform_indices = @transform_24, window_bounds = array<i64: 2, 32, 32>}, {pipeline_mode = #tpu.pipeline_mode<synchronous>, transform_indices = @transform_25, window_bounds = array<i64: 2, 1, 32>}, {pipeline_mode = #tpu.pipeline_mode<synchronous>, transform_indices = @transform_26, window_bounds = array<i64: 2, 32, 64>}, {pipeline_mode = #tpu.pipeline_mode<synchronous>, transform_indices = @transform_27, window_bounds = array<i64: 2, 1, 64>}, {pipeline_mode = #tpu.pipeline_mode<synchronous>, transform_indices = @transform_28, window_bounds = array<i64: 2, 4, 8, 32>}, {pipeline_mode = #tpu.pipeline_mode<synchronous>, transform_indices = @transform_29, window_bounds = array<i64: 2, 1, 32>}, {pipeline_mode = #tpu.pipeline_mode<synchronous>, transform_indices = @transform_30, window_bounds = array<i64: 2, 1, 32>}, {pipeline_mode = #tpu.pipeline_mode<synchronous>, transform_indices = @transform_31, window_bounds = array<i64: 2, 1, 32>}, {pipeline_mode = #tpu.pipeline_mode<synchronous>, transform_indices = @transform_32, window_bounds = array<i64: 2, 32, 64>}, {pipeline_mode = #tpu.pipeline_mode<synchronous>, transform_indices = @transform_33, window_bounds = array<i64: 2, 1, 64>}, {pipeline_mode = #tpu.pipeline_mode<synchronous>, transform_indices = @transform_34, window_bounds = array<i64: 2, 64, 32>}, {pipeline_mode = #tpu.pipeline_mode<synchronous>, transform_indices = @transform_35, window_bounds = array<i64: 2, 1, 32>}, {pipeline_mode = #tpu.pipeline_mode<synchronous>, transform_indices = @transform_36, window_bounds = array<i64: 2, 1, 32>}, {pipeline_mode = #tpu.pipeline_mode<synchronous>, transform_indices = @transform_37, window_bounds = array<i64: 2, 1, 32>}, {pipeline_mode = #tpu.pipeline_mode<synchronous>, transform_indices = @transform_38, window_bounds = array<i64: 128, 32>}, {pipeline_mode = #tpu.pipeline_mode<synchronous>, transform_indices = @transform_39, window_bounds = array<i64: 1, 128>}, {transform_indices = @transform_40, window_bounds = array<i64: 1, 8, 128>}]} {
    %c0 = arith.constant 0 : index
    %c0_0 = arith.constant 0 : index
    %c0_1 = arith.constant 0 : index
    %0 = vector.load %arg1[%c0, %c0_0, %c0_1] : memref<1x8x32xbf16, #tpu.memory_space<vmem>>, vector<1x8x32xbf16>
    %1 = vector.shape_cast %0 : vector<1x8x32xbf16> to vector<8x32xbf16>
    %2 = arith.extf %1 : vector<8x32xbf16> to vector<8x32xf32>
    %c0_2 = arith.constant 0 : index
    %c0_3 = arith.constant 0 : index
    %3 = vector.load %arg3[%c0_2, %c0_3] : memref<1x32xf32, #tpu.memory_space<vmem>>, vector<1x32xf32>
    %c0_4 = arith.constant 0 : index
    %c0_5 = arith.constant 0 : index
    %4 = vector.load %arg4[%c0_4, %c0_5] : memref<1x32xf32, #tpu.memory_space<vmem>>, vector<1x32xf32>
    %cst = arith.constant dense<0.000000e+00> : vector<8xf32>
    %5 = vector.multi_reduction <add>, %2, %cst [1] : vector<8x32xf32> to vector<8xf32>
    %6 = vector.shape_cast %5 : vector<8xf32> to vector<8x1xf32>
    %cst_6 = arith.constant 3.200000e+01 : f32
    %7 = vector.broadcast %cst_6 : f32 to vector<8x1xf32>
    %8 = arith.divf %6, %7 : vector<8x1xf32>
    %9 = vector.broadcast %8 : vector<8x1xf32> to vector<8x32xf32>
    %10 = arith.subf %2, %9 : vector<8x32xf32>
    %11 = arith.mulf %10, %10 : vector<8x32xf32>
    %cst_7 = arith.constant dense<0.000000e+00> : vector<8xf32>
    %12 = vector.multi_reduction <add>, %11, %cst_7 [1] : vector<8x32xf32> to vector<8xf32>
    %13 = vector.shape_cast %12 : vector<8xf32> to vector<8x1xf32>
    %cst_8 = arith.constant 3.200000e+01 : f32
    %14 = vector.broadcast %cst_8 : f32 to vector<8x1xf32>
    %15 = arith.divf %13, %14 : vector<8x1xf32>
    %16 = vector.broadcast %8 : vector<8x1xf32> to vector<8x32xf32>
    %17 = arith.subf %2, %16 : vector<8x32xf32>
    %cst_9 = arith.constant 9.99999974E-6 : f32
    %18 = vector.broadcast %cst_9 : f32 to vector<8x1xf32>
    %19 = arith.addf %15, %18 : vector<8x1xf32>
    %20 = math.rsqrt %19 : vector<8x1xf32>
    %21 = vector.broadcast %20 : vector<8x1xf32> to vector<8x32xf32>
    %22 = arith.mulf %17, %21 : vector<8x32xf32>
    %23 = vector.broadcast %3 : vector<1x32xf32> to vector<8x32xf32>
    %24 = arith.mulf %22, %23 : vector<8x32xf32>
    %25 = vector.broadcast %4 : vector<1x32xf32> to vector<8x32xf32>
    %26 = arith.addf %24, %25 : vector<8x32xf32>
    %c0_10 = arith.constant 0 : index
    %c0_11 = arith.constant 0 : index
    %c0_12 = arith.constant 0 : index
    %27 = vector.load %arg5[%c0_10, %c0_11, %c0_12] : memref<2x32x96xbf16, #tpu.memory_space<vmem>>, vector<1x32x96xbf16>
    %28 = vector.shape_cast %27 : vector<1x32x96xbf16> to vector<32x96xbf16>
    %c0_13 = arith.constant 0 : index
    %c0_14 = arith.constant 0 : index
    %c0_15 = arith.constant 0 : index
    %29 = vector.load %arg6[%c0_13, %c0_14, %c0_15] : memref<2x1x96xf32, #tpu.memory_space<vmem>>, vector<1x1x96xf32>
    %30 = vector.shape_cast %29 : vector<1x1x96xf32> to vector<1x96xf32>
    %c0_16 = arith.constant 0 : index
    %c0_17 = arith.constant 0 : index
    %c0_18 = arith.constant 0 : index
    %c0_19 = arith.constant 0 : index
    %31 = vector.load %arg7[%c0_16, %c0_17, %c0_18, %c0_19] : memref<2x4x8x32xbf16, #tpu.memory_space<vmem>>, vector<1x4x8x32xbf16>
    %32 = vector.shape_cast %31 : vector<1x4x8x32xbf16> to vector<4x8x32xbf16>
    %c0_20 = arith.constant 0 : index
    %c0_21 = arith.constant 0 : index
    %c0_22 = arith.constant 0 : index
    %33 = vector.load %arg8[%c0_20, %c0_21, %c0_22] : memref<2x1x32xf32, #tpu.memory_space<vmem>>, vector<1x1x32xf32>
    %34 = vector.shape_cast %33 : vector<1x1x32xf32> to vector<1x32xf32>
    %c0_23 = arith.constant 0 : index
    %c0_24 = arith.constant 0 : index
    %c0_25 = arith.constant 0 : index
    %35 = vector.load %arg9[%c0_23, %c0_24, %c0_25] : memref<2x1x32xf32, #tpu.memory_space<vmem>>, vector<1x1x32xf32>
    %36 = vector.shape_cast %35 : vector<1x1x32xf32> to vector<1x32xf32>
    %c0_26 = arith.constant 0 : index
    %c0_27 = arith.constant 0 : index
    %c0_28 = arith.constant 0 : index
    %37 = vector.load %arg10[%c0_26, %c0_27, %c0_28] : memref<2x1x32xf32, #tpu.memory_space<vmem>>, vector<1x1x32xf32>
    %38 = vector.shape_cast %37 : vector<1x1x32xf32> to vector<1x32xf32>
    %39 = arith.truncf %26 : vector<8x32xf32> to vector<8x32xbf16>
    %cst_29 = arith.constant dense<0.000000e+00> : vector<8x96xf32>
    %40 = tpu.matmul %39, %28, %cst_29 {dimension_numbers = #tpu.dot_dimension_numbers<[1], [0], [0], [1], [0, 0, 1, 1], [], []>} : vector<8x32xbf16>, vector<32x96xbf16>, vector<8x96xf32> -> vector<8x96xf32>
    %41 = vector.broadcast %30 : vector<1x96xf32> to vector<8x96xf32>
    %42 = arith.addf %40, %41 : vector<8x96xf32>
    %43 = vector.extract_strided_slice %42 {offsets = [0, 0], sizes = [8, 32], strides = [1, 1]} : vector<8x96xf32> to vector<8x32xf32>
    %44 = vector.extract_strided_slice %42 {offsets = [0, 32], sizes = [8, 32], strides = [1, 1]} : vector<8x96xf32> to vector<8x32xf32>
    %45 = vector.extract_strided_slice %42 {offsets = [0, 64], sizes = [8, 32], strides = [1, 1]} : vector<8x96xf32> to vector<8x32xf32>
    %cst_30 = arith.constant 0.000000e+00 : f32
    %46 = vector.broadcast %cst_30 : f32 to vector<8x32xf32>
    %47 = vector.extract_strided_slice %43 {offsets = [0, 0], sizes = [8, 8], strides = [1, 1]} : vector<8x32xf32> to vector<8x8xf32>
    %48 = arith.truncf %47 : vector<8x8xf32> to vector<8x8xbf16>
    %49 = vector.extract_strided_slice %44 {offsets = [0, 0], sizes = [8, 8], strides = [1, 1]} : vector<8x32xf32> to vector<8x8xf32>
    %50 = arith.truncf %49 : vector<8x8xf32> to vector<8x8xbf16>
    %51 = vector.extract_strided_slice %45 {offsets = [0, 0], sizes = [8, 8], strides = [1, 1]} : vector<8x32xf32> to vector<8x8xf32>
    %52 = arith.truncf %51 : vector<8x8xf32> to vector<8x8xbf16>
    %cst_31 = arith.constant dense<0.000000e+00> : vector<8x8xf32>
    %53 = tpu.matmul %48, %50, %cst_31 {dimension_numbers = #tpu.dot_dimension_numbers<[1], [1], [0], [0], [0, 0, 1, 0], [], []>} : vector<8x8xbf16>, vector<8x8xbf16>, vector<8x8xf32> -> vector<8x8xf32>
    %cst_32 = arith.constant dense<0xFF800000> : vector<8xf32>
    %54 = vector.multi_reduction <maximumf>, %53, %cst_32 [1] : vector<8x8xf32> to vector<8xf32>
    %55 = vector.shape_cast %54 : vector<8xf32> to vector<8x1xf32>
    %56 = vector.broadcast %55 : vector<8x1xf32> to vector<8x8xf32>
    %57 = arith.subf %53, %56 : vector<8x8xf32>
    %58 = math.exp %57 : vector<8x8xf32>
    %cst_33 = arith.constant dense<0.000000e+00> : vector<8xf32>
    %59 = vector.multi_reduction <add>, %58, %cst_33 [1] : vector<8x8xf32> to vector<8xf32>
    %60 = vector.shape_cast %59 : vector<8xf32> to vector<8x1xf32>
    %61 = tpu.reciprocal %60 {approx = true} : vector<8x1xf32> -> vector<8x1xf32>
    %62 = vector.broadcast %61 : vector<8x1xf32> to vector<8x8xf32>
    %63 = arith.mulf %58, %62 : vector<8x8xf32>
    %64 = arith.truncf %63 : vector<8x8xf32> to vector<8x8xbf16>
    %cst_34 = arith.constant dense<0.000000e+00> : vector<8x8xf32>
    %65 = tpu.matmul %64, %52, %cst_34 {dimension_numbers = #tpu.dot_dimension_numbers<[1], [0], [0], [1], [0, 0, 1, 1], [], []>} : vector<8x8xbf16>, vector<8x8xbf16>, vector<8x8xf32> -> vector<8x8xf32>
    %66 = arith.truncf %65 : vector<8x8xf32> to vector<8x8xbf16>
    %67 = vector.extract_strided_slice %32 {offsets = [0, 0, 0], sizes = [1, 8, 32], strides = [1, 1, 1]} : vector<4x8x32xbf16> to vector<1x8x32xbf16>
    %68 = vector.shape_cast %67 : vector<1x8x32xbf16> to vector<8x32xbf16>
    %cst_35 = arith.constant dense<0.000000e+00> : vector<8x32xf32>
    %69 = tpu.matmul %66, %68, %cst_35 {dimension_numbers = #tpu.dot_dimension_numbers<[1], [0], [0], [1], [0, 0, 1, 1], [], []>} : vector<8x8xbf16>, vector<8x32xbf16>, vector<8x32xf32> -> vector<8x32xf32>
    %70 = arith.addf %46, %69 : vector<8x32xf32>
    %71 = vector.extract_strided_slice %43 {offsets = [0, 8], sizes = [8, 8], strides = [1, 1]} : vector<8x32xf32> to vector<8x8xf32>
    %72 = arith.truncf %71 : vector<8x8xf32> to vector<8x8xbf16>
    %73 = vector.extract_strided_slice %44 {offsets = [0, 8], sizes = [8, 8], strides = [1, 1]} : vector<8x32xf32> to vector<8x8xf32>
    %74 = arith.truncf %73 : vector<8x8xf32> to vector<8x8xbf16>
    %75 = vector.extract_strided_slice %45 {offsets = [0, 8], sizes = [8, 8], strides = [1, 1]} : vector<8x32xf32> to vector<8x8xf32>
    %76 = arith.truncf %75 : vector<8x8xf32> to vector<8x8xbf16>
    %cst_36 = arith.constant dense<0.000000e+00> : vector<8x8xf32>
    %77 = tpu.matmul %72, %74, %cst_36 {dimension_numbers = #tpu.dot_dimension_numbers<[1], [1], [0], [0], [0, 0, 1, 0], [], []>} : vector<8x8xbf16>, vector<8x8xbf16>, vector<8x8xf32> -> vector<8x8xf32>
    %cst_37 = arith.constant dense<0xFF800000> : vector<8xf32>
    %78 = vector.multi_reduction <maximumf>, %77, %cst_37 [1] : vector<8x8xf32> to vector<8xf32>
    %79 = vector.shape_cast %78 : vector<8xf32> to vector<8x1xf32>
    %80 = vector.broadcast %79 : vector<8x1xf32> to vector<8x8xf32>
    %81 = arith.subf %77, %80 : vector<8x8xf32>
    %82 = math.exp %81 : vector<8x8xf32>
    %cst_38 = arith.constant dense<0.000000e+00> : vector<8xf32>
    %83 = vector.multi_reduction <add>, %82, %cst_38 [1] : vector<8x8xf32> to vector<8xf32>
    %84 = vector.shape_cast %83 : vector<8xf32> to vector<8x1xf32>
    %85 = tpu.reciprocal %84 {approx = true} : vector<8x1xf32> -> vector<8x1xf32>
    %86 = vector.broadcast %85 : vector<8x1xf32> to vector<8x8xf32>
    %87 = arith.mulf %82, %86 : vector<8x8xf32>
    %88 = arith.truncf %87 : vector<8x8xf32> to vector<8x8xbf16>
    %cst_39 = arith.constant dense<0.000000e+00> : vector<8x8xf32>
    %89 = tpu.matmul %88, %76, %cst_39 {dimension_numbers = #tpu.dot_dimension_numbers<[1], [0], [0], [1], [0, 0, 1, 1], [], []>} : vector<8x8xbf16>, vector<8x8xbf16>, vector<8x8xf32> -> vector<8x8xf32>
    %90 = arith.truncf %89 : vector<8x8xf32> to vector<8x8xbf16>
    %91 = vector.extract_strided_slice %32 {offsets = [1, 0, 0], sizes = [1, 8, 32], strides = [1, 1, 1]} : vector<4x8x32xbf16> to vector<1x8x32xbf16>
    %92 = vector.shape_cast %91 : vector<1x8x32xbf16> to vector<8x32xbf16>
    %cst_40 = arith.constant dense<0.000000e+00> : vector<8x32xf32>
    %93 = tpu.matmul %90, %92, %cst_40 {dimension_numbers = #tpu.dot_dimension_numbers<[1], [0], [0], [1], [0, 0, 1, 1], [], []>} : vector<8x8xbf16>, vector<8x32xbf16>, vector<8x32xf32> -> vector<8x32xf32>
    %94 = arith.addf %70, %93 : vector<8x32xf32>
    %95 = vector.extract_strided_slice %43 {offsets = [0, 16], sizes = [8, 8], strides = [1, 1]} : vector<8x32xf32> to vector<8x8xf32>
    %96 = arith.truncf %95 : vector<8x8xf32> to vector<8x8xbf16>
    %97 = vector.extract_strided_slice %44 {offsets = [0, 16], sizes = [8, 8], strides = [1, 1]} : vector<8x32xf32> to vector<8x8xf32>
    %98 = arith.truncf %97 : vector<8x8xf32> to vector<8x8xbf16>
    %99 = vector.extract_strided_slice %45 {offsets = [0, 16], sizes = [8, 8], strides = [1, 1]} : vector<8x32xf32> to vector<8x8xf32>
    %100 = arith.truncf %99 : vector<8x8xf32> to vector<8x8xbf16>
    %cst_41 = arith.constant dense<0.000000e+00> : vector<8x8xf32>
    %101 = tpu.matmul %96, %98, %cst_41 {dimension_numbers = #tpu.dot_dimension_numbers<[1], [1], [0], [0], [0, 0, 1, 0], [], []>} : vector<8x8xbf16>, vector<8x8xbf16>, vector<8x8xf32> -> vector<8x8xf32>
    %cst_42 = arith.constant dense<0xFF800000> : vector<8xf32>
    %102 = vector.multi_reduction <maximumf>, %101, %cst_42 [1] : vector<8x8xf32> to vector<8xf32>
    %103 = vector.shape_cast %102 : vector<8xf32> to vector<8x1xf32>
    %104 = vector.broadcast %103 : vector<8x1xf32> to vector<8x8xf32>
    %105 = arith.subf %101, %104 : vector<8x8xf32>
    %106 = math.exp %105 : vector<8x8xf32>
    %cst_43 = arith.constant dense<0.000000e+00> : vector<8xf32>
    %107 = vector.multi_reduction <add>, %106, %cst_43 [1] : vector<8x8xf32> to vector<8xf32>
    %108 = vector.shape_cast %107 : vector<8xf32> to vector<8x1xf32>
    %109 = tpu.reciprocal %108 {approx = true} : vector<8x1xf32> -> vector<8x1xf32>
    %110 = vector.broadcast %109 : vector<8x1xf32> to vector<8x8xf32>
    %111 = arith.mulf %106, %110 : vector<8x8xf32>
    %112 = arith.truncf %111 : vector<8x8xf32> to vector<8x8xbf16>
    %cst_44 = arith.constant dense<0.000000e+00> : vector<8x8xf32>
    %113 = tpu.matmul %112, %100, %cst_44 {dimension_numbers = #tpu.dot_dimension_numbers<[1], [0], [0], [1], [0, 0, 1, 1], [], []>} : vector<8x8xbf16>, vector<8x8xbf16>, vector<8x8xf32> -> vector<8x8xf32>
    %114 = arith.truncf %113 : vector<8x8xf32> to vector<8x8xbf16>
    %115 = vector.extract_strided_slice %32 {offsets = [2, 0, 0], sizes = [1, 8, 32], strides = [1, 1, 1]} : vector<4x8x32xbf16> to vector<1x8x32xbf16>
    %116 = vector.shape_cast %115 : vector<1x8x32xbf16> to vector<8x32xbf16>
    %cst_45 = arith.constant dense<0.000000e+00> : vector<8x32xf32>
    %117 = tpu.matmul %114, %116, %cst_45 {dimension_numbers = #tpu.dot_dimension_numbers<[1], [0], [0], [1], [0, 0, 1, 1], [], []>} : vector<8x8xbf16>, vector<8x32xbf16>, vector<8x32xf32> -> vector<8x32xf32>
    %118 = arith.addf %94, %117 : vector<8x32xf32>
    %119 = vector.extract_strided_slice %43 {offsets = [0, 24], sizes = [8, 8], strides = [1, 1]} : vector<8x32xf32> to vector<8x8xf32>
    %120 = arith.truncf %119 : vector<8x8xf32> to vector<8x8xbf16>
    %121 = vector.extract_strided_slice %44 {offsets = [0, 24], sizes = [8, 8], strides = [1, 1]} : vector<8x32xf32> to vector<8x8xf32>
    %122 = arith.truncf %121 : vector<8x8xf32> to vector<8x8xbf16>
    %123 = vector.extract_strided_slice %45 {offsets = [0, 24], sizes = [8, 8], strides = [1, 1]} : vector<8x32xf32> to vector<8x8xf32>
    %124 = arith.truncf %123 : vector<8x8xf32> to vector<8x8xbf16>
    %cst_46 = arith.constant dense<0.000000e+00> : vector<8x8xf32>
    %125 = tpu.matmul %120, %122, %cst_46 {dimension_numbers = #tpu.dot_dimension_numbers<[1], [1], [0], [0], [0, 0, 1, 0], [], []>} : vector<8x8xbf16>, vector<8x8xbf16>, vector<8x8xf32> -> vector<8x8xf32>
    %cst_47 = arith.constant dense<0xFF800000> : vector<8xf32>
    %126 = vector.multi_reduction <maximumf>, %125, %cst_47 [1] : vector<8x8xf32> to vector<8xf32>
    %127 = vector.shape_cast %126 : vector<8xf32> to vector<8x1xf32>
    %128 = vector.broadcast %127 : vector<8x1xf32> to vector<8x8xf32>
    %129 = arith.subf %125, %128 : vector<8x8xf32>
    %130 = math.exp %129 : vector<8x8xf32>
    %cst_48 = arith.constant dense<0.000000e+00> : vector<8xf32>
    %131 = vector.multi_reduction <add>, %130, %cst_48 [1] : vector<8x8xf32> to vector<8xf32>
    %132 = vector.shape_cast %131 : vector<8xf32> to vector<8x1xf32>
    %133 = tpu.reciprocal %132 {approx = true} : vector<8x1xf32> -> vector<8x1xf32>
    %134 = vector.broadcast %133 : vector<8x1xf32> to vector<8x8xf32>
    %135 = arith.mulf %130, %134 : vector<8x8xf32>
    %136 = arith.truncf %135 : vector<8x8xf32> to vector<8x8xbf16>
    %cst_49 = arith.constant dense<0.000000e+00> : vector<8x8xf32>
    %137 = tpu.matmul %136, %124, %cst_49 {dimension_numbers = #tpu.dot_dimension_numbers<[1], [0], [0], [1], [0, 0, 1, 1], [], []>} : vector<8x8xbf16>, vector<8x8xbf16>, vector<8x8xf32> -> vector<8x8xf32>
    %138 = arith.truncf %137 : vector<8x8xf32> to vector<8x8xbf16>
    %139 = vector.extract_strided_slice %32 {offsets = [3, 0, 0], sizes = [1, 8, 32], strides = [1, 1, 1]} : vector<4x8x32xbf16> to vector<1x8x32xbf16>
    %140 = vector.shape_cast %139 : vector<1x8x32xbf16> to vector<8x32xbf16>
    %cst_50 = arith.constant dense<0.000000e+00> : vector<8x32xf32>
    %141 = tpu.matmul %138, %140, %cst_50 {dimension_numbers = #tpu.dot_dimension_numbers<[1], [0], [0], [1], [0, 0, 1, 1], [], []>} : vector<8x8xbf16>, vector<8x32xbf16>, vector<8x32xf32> -> vector<8x32xf32>
    %142 = arith.addf %118, %141 : vector<8x32xf32>
    %143 = vector.broadcast %34 : vector<1x32xf32> to vector<8x32xf32>
    %144 = arith.addf %142, %143 : vector<8x32xf32>
    %145 = arith.addf %144, %26 : vector<8x32xf32>
    %cst_51 = arith.constant dense<0.000000e+00> : vector<8xf32>
    %146 = vector.multi_reduction <add>, %145, %cst_51 [1] : vector<8x32xf32> to vector<8xf32>
    %147 = vector.shape_cast %146 : vector<8xf32> to vector<8x1xf32>
    %cst_52 = arith.constant 3.200000e+01 : f32
    %148 = vector.broadcast %cst_52 : f32 to vector<8x1xf32>
    %149 = arith.divf %147, %148 : vector<8x1xf32>
    %150 = vector.broadcast %149 : vector<8x1xf32> to vector<8x32xf32>
    %151 = arith.subf %145, %150 : vector<8x32xf32>
    %152 = arith.mulf %151, %151 : vector<8x32xf32>
    %cst_53 = arith.constant dense<0.000000e+00> : vector<8xf32>
    %153 = vector.multi_reduction <add>, %152, %cst_53 [1] : vector<8x32xf32> to vector<8xf32>
    %154 = vector.shape_cast %153 : vector<8xf32> to vector<8x1xf32>
    %cst_54 = arith.constant 3.200000e+01 : f32
    %155 = vector.broadcast %cst_54 : f32 to vector<8x1xf32>
    %156 = arith.divf %154, %155 : vector<8x1xf32>
    %157 = vector.broadcast %149 : vector<8x1xf32> to vector<8x32xf32>
    %158 = arith.subf %145, %157 : vector<8x32xf32>
    %cst_55 = arith.constant 9.99999974E-6 : f32
    %159 = vector.broadcast %cst_55 : f32 to vector<8x1xf32>
    %160 = arith.addf %156, %159 : vector<8x1xf32>
    %161 = math.rsqrt %160 : vector<8x1xf32>
    %162 = vector.broadcast %161 : vector<8x1xf32> to vector<8x32xf32>
    %163 = arith.mulf %158, %162 : vector<8x32xf32>
    %164 = vector.broadcast %36 : vector<1x32xf32> to vector<8x32xf32>
    %165 = arith.mulf %163, %164 : vector<8x32xf32>
    %166 = vector.broadcast %38 : vector<1x32xf32> to vector<8x32xf32>
    %167 = arith.addf %165, %166 : vector<8x32xf32>
    %c0_56 = arith.constant 0 : index
    %c0_57 = arith.constant 0 : index
    %c0_58 = arith.constant 0 : index
    %168 = vector.load %arg11[%c0_56, %c0_57, %c0_58] : memref<2x32x64xbf16, #tpu.memory_space<vmem>>, vector<1x32x64xbf16>
    %169 = vector.shape_cast %168 : vector<1x32x64xbf16> to vector<32x64xbf16>
    %c0_59 = arith.constant 0 : index
    %c0_60 = arith.constant 0 : index
    %c0_61 = arith.constant 0 : index
    %170 = vector.load %arg12[%c0_59, %c0_60, %c0_61] : memref<2x1x64xf32, #tpu.memory_space<vmem>>, vector<1x1x64xf32>
    %171 = vector.shape_cast %170 : vector<1x1x64xf32> to vector<1x64xf32>
    %c0_62 = arith.constant 0 : index
    %c0_63 = arith.constant 0 : index
    %c0_64 = arith.constant 0 : index
    %172 = vector.load %arg13[%c0_62, %c0_63, %c0_64] : memref<2x64x32xbf16, #tpu.memory_space<vmem>>, vector<1x64x32xbf16>
    %173 = vector.shape_cast %172 : vector<1x64x32xbf16> to vector<64x32xbf16>
    %c0_65 = arith.constant 0 : index
    %c0_66 = arith.constant 0 : index
    %c0_67 = arith.constant 0 : index
    %174 = vector.load %arg14[%c0_65, %c0_66, %c0_67] : memref<2x1x32xf32, #tpu.memory_space<vmem>>, vector<1x1x32xf32>
    %175 = vector.shape_cast %174 : vector<1x1x32xf32> to vector<1x32xf32>
    %c0_68 = arith.constant 0 : index
    %c0_69 = arith.constant 0 : index
    %c0_70 = arith.constant 0 : index
    %176 = vector.load %arg15[%c0_68, %c0_69, %c0_70] : memref<2x1x32xf32, #tpu.memory_space<vmem>>, vector<1x1x32xf32>
    %177 = vector.shape_cast %176 : vector<1x1x32xf32> to vector<1x32xf32>
    %c0_71 = arith.constant 0 : index
    %c0_72 = arith.constant 0 : index
    %c0_73 = arith.constant 0 : index
    %178 = vector.load %arg16[%c0_71, %c0_72, %c0_73] : memref<2x1x32xf32, #tpu.memory_space<vmem>>, vector<1x1x32xf32>
    %179 = vector.shape_cast %178 : vector<1x1x32xf32> to vector<1x32xf32>
    %180 = arith.truncf %167 : vector<8x32xf32> to vector<8x32xbf16>
    %cst_74 = arith.constant dense<0.000000e+00> : vector<8x64xf32>
    %181 = tpu.matmul %180, %169, %cst_74 {dimension_numbers = #tpu.dot_dimension_numbers<[1], [0], [0], [1], [0, 0, 1, 1], [], []>} : vector<8x32xbf16>, vector<32x64xbf16>, vector<8x64xf32> -> vector<8x64xf32>
    %182 = vector.broadcast %171 : vector<1x64xf32> to vector<8x64xf32>
    %183 = arith.addf %181, %182 : vector<8x64xf32>
    %cst_75 = arith.constant 5.000000e-01 : f32
    %184 = vector.broadcast %cst_75 : f32 to vector<8x64xf32>
    %185 = arith.mulf %184, %183 : vector<8x64xf32>
    %cst_76 = arith.constant 4.471500e-02 : f32
    %186 = vector.broadcast %cst_76 : f32 to vector<8x64xf32>
    %187 = arith.mulf %186, %183 : vector<8x64xf32>
    %188 = arith.mulf %187, %183 : vector<8x64xf32>
    %189 = arith.mulf %188, %183 : vector<8x64xf32>
    %190 = arith.addf %183, %189 : vector<8x64xf32>
    %cst_77 = arith.constant 0.797884583 : f32
    %191 = vector.broadcast %cst_77 : f32 to vector<8x64xf32>
    %192 = arith.mulf %191, %190 : vector<8x64xf32>
    %193 = math.tanh %192 : vector<8x64xf32>
    %cst_78 = arith.constant 1.000000e+00 : f32
    %194 = vector.broadcast %cst_78 : f32 to vector<8x64xf32>
    %195 = arith.addf %194, %193 : vector<8x64xf32>
    %196 = arith.mulf %185, %195 : vector<8x64xf32>
    %197 = arith.truncf %196 : vector<8x64xf32> to vector<8x64xbf16>
    %cst_79 = arith.constant dense<0.000000e+00> : vector<8x32xf32>
    %198 = tpu.matmul %197, %173, %cst_79 {dimension_numbers = #tpu.dot_dimension_numbers<[1], [0], [0], [1], [0, 0, 1, 1], [], []>} : vector<8x64xbf16>, vector<64x32xbf16>, vector<8x32xf32> -> vector<8x32xf32>
    %199 = vector.broadcast %175 : vector<1x32xf32> to vector<8x32xf32>
    %200 = arith.addf %198, %199 : vector<8x32xf32>
    %201 = arith.addf %200, %167 : vector<8x32xf32>
    %cst_80 = arith.constant dense<0.000000e+00> : vector<8xf32>
    %202 = vector.multi_reduction <add>, %201, %cst_80 [1] : vector<8x32xf32> to vector<8xf32>
    %203 = vector.shape_cast %202 : vector<8xf32> to vector<8x1xf32>
    %cst_81 = arith.constant 3.200000e+01 : f32
    %204 = vector.broadcast %cst_81 : f32 to vector<8x1xf32>
    %205 = arith.divf %203, %204 : vector<8x1xf32>
    %206 = vector.broadcast %205 : vector<8x1xf32> to vector<8x32xf32>
    %207 = arith.subf %201, %206 : vector<8x32xf32>
    %208 = arith.mulf %207, %207 : vector<8x32xf32>
    %cst_82 = arith.constant dense<0.000000e+00> : vector<8xf32>
    %209 = vector.multi_reduction <add>, %208, %cst_82 [1] : vector<8x32xf32> to vector<8xf32>
    %210 = vector.shape_cast %209 : vector<8xf32> to vector<8x1xf32>
    %cst_83 = arith.constant 3.200000e+01 : f32
    %211 = vector.broadcast %cst_83 : f32 to vector<8x1xf32>
    %212 = arith.divf %210, %211 : vector<8x1xf32>
    %213 = vector.broadcast %205 : vector<8x1xf32> to vector<8x32xf32>
    %214 = arith.subf %201, %213 : vector<8x32xf32>
    %cst_84 = arith.constant 9.99999974E-6 : f32
    %215 = vector.broadcast %cst_84 : f32 to vector<8x1xf32>
    %216 = arith.addf %212, %215 : vector<8x1xf32>
    %217 = math.rsqrt %216 : vector<8x1xf32>
    %218 = vector.broadcast %217 : vector<8x1xf32> to vector<8x32xf32>
    %219 = arith.mulf %214, %218 : vector<8x32xf32>
    %220 = vector.broadcast %177 : vector<1x32xf32> to vector<8x32xf32>
    %221 = arith.mulf %219, %220 : vector<8x32xf32>
    %222 = vector.broadcast %179 : vector<1x32xf32> to vector<8x32xf32>
    %223 = arith.addf %221, %222 : vector<8x32xf32>
    %c1 = arith.constant 1 : index
    %c0_85 = arith.constant 0 : index
    %c0_86 = arith.constant 0 : index
    %224 = vector.load %arg5[%c1, %c0_85, %c0_86] : memref<2x32x96xbf16, #tpu.memory_space<vmem>>, vector<1x32x96xbf16>
    %225 = vector.shape_cast %224 : vector<1x32x96xbf16> to vector<32x96xbf16>
    %c1_87 = arith.constant 1 : index
    %c0_88 = arith.constant 0 : index
    %c0_89 = arith.constant 0 : index
    %226 = vector.load %arg6[%c1_87, %c0_88, %c0_89] : memref<2x1x96xf32, #tpu.memory_space<vmem>>, vector<1x1x96xf32>
    %227 = vector.shape_cast %226 : vector<1x1x96xf32> to vector<1x96xf32>
    %c1_90 = arith.constant 1 : index
    %c0_91 = arith.constant 0 : index
    %c0_92 = arith.constant 0 : index
    %c0_93 = arith.constant 0 : index
    %228 = vector.load %arg7[%c1_90, %c0_91, %c0_92, %c0_93] : memref<2x4x8x32xbf16, #tpu.memory_space<vmem>>, vector<1x4x8x32xbf16>
    %229 = vector.shape_cast %228 : vector<1x4x8x32xbf16> to vector<4x8x32xbf16>
    %c1_94 = arith.constant 1 : index
    %c0_95 = arith.constant 0 : index
    %c0_96 = arith.constant 0 : index
    %230 = vector.load %arg8[%c1_94, %c0_95, %c0_96] : memref<2x1x32xf32, #tpu.memory_space<vmem>>, vector<1x1x32xf32>
    %231 = vector.shape_cast %230 : vector<1x1x32xf32> to vector<1x32xf32>
    %c1_97 = arith.constant 1 : index
    %c0_98 = arith.constant 0 : index
    %c0_99 = arith.constant 0 : index
    %232 = vector.load %arg9[%c1_97, %c0_98, %c0_99] : memref<2x1x32xf32, #tpu.memory_space<vmem>>, vector<1x1x32xf32>
    %233 = vector.shape_cast %232 : vector<1x1x32xf32> to vector<1x32xf32>
    %c1_100 = arith.constant 1 : index
    %c0_101 = arith.constant 0 : index
    %c0_102 = arith.constant 0 : index
    %234 = vector.load %arg10[%c1_100, %c0_101, %c0_102] : memref<2x1x32xf32, #tpu.memory_space<vmem>>, vector<1x1x32xf32>
    %235 = vector.shape_cast %234 : vector<1x1x32xf32> to vector<1x32xf32>
    %236 = arith.truncf %223 : vector<8x32xf32> to vector<8x32xbf16>
    %cst_103 = arith.constant dense<0.000000e+00> : vector<8x96xf32>
    %237 = tpu.matmul %236, %225, %cst_103 {dimension_numbers = #tpu.dot_dimension_numbers<[1], [0], [0], [1], [0, 0, 1, 1], [], []>} : vector<8x32xbf16>, vector<32x96xbf16>, vector<8x96xf32> -> vector<8x96xf32>
    %238 = vector.broadcast %227 : vector<1x96xf32> to vector<8x96xf32>
    %239 = arith.addf %237, %238 : vector<8x96xf32>
    %240 = vector.extract_strided_slice %239 {offsets = [0, 0], sizes = [8, 32], strides = [1, 1]} : vector<8x96xf32> to vector<8x32xf32>
    %241 = vector.extract_strided_slice %239 {offsets = [0, 32], sizes = [8, 32], strides = [1, 1]} : vector<8x96xf32> to vector<8x32xf32>
    %242 = vector.extract_strided_slice %239 {offsets = [0, 64], sizes = [8, 32], strides = [1, 1]} : vector<8x96xf32> to vector<8x32xf32>
    %cst_104 = arith.constant 0.000000e+00 : f32
    %243 = vector.broadcast %cst_104 : f32 to vector<8x32xf32>
    %244 = vector.extract_strided_slice %240 {offsets = [0, 0], sizes = [8, 8], strides = [1, 1]} : vector<8x32xf32> to vector<8x8xf32>
    %245 = arith.truncf %244 : vector<8x8xf32> to vector<8x8xbf16>
    %246 = vector.extract_strided_slice %241 {offsets = [0, 0], sizes = [8, 8], strides = [1, 1]} : vector<8x32xf32> to vector<8x8xf32>
    %247 = arith.truncf %246 : vector<8x8xf32> to vector<8x8xbf16>
    %248 = vector.extract_strided_slice %242 {offsets = [0, 0], sizes = [8, 8], strides = [1, 1]} : vector<8x32xf32> to vector<8x8xf32>
    %249 = arith.truncf %248 : vector<8x8xf32> to vector<8x8xbf16>
    %cst_105 = arith.constant dense<0.000000e+00> : vector<8x8xf32>
    %250 = tpu.matmul %245, %247, %cst_105 {dimension_numbers = #tpu.dot_dimension_numbers<[1], [1], [0], [0], [0, 0, 1, 0], [], []>} : vector<8x8xbf16>, vector<8x8xbf16>, vector<8x8xf32> -> vector<8x8xf32>
    %cst_106 = arith.constant dense<0xFF800000> : vector<8xf32>
    %251 = vector.multi_reduction <maximumf>, %250, %cst_106 [1] : vector<8x8xf32> to vector<8xf32>
    %252 = vector.shape_cast %251 : vector<8xf32> to vector<8x1xf32>
    %253 = vector.broadcast %252 : vector<8x1xf32> to vector<8x8xf32>
    %254 = arith.subf %250, %253 : vector<8x8xf32>
    %255 = math.exp %254 : vector<8x8xf32>
    %cst_107 = arith.constant dense<0.000000e+00> : vector<8xf32>
    %256 = vector.multi_reduction <add>, %255, %cst_107 [1] : vector<8x8xf32> to vector<8xf32>
    %257 = vector.shape_cast %256 : vector<8xf32> to vector<8x1xf32>
    %258 = tpu.reciprocal %257 {approx = true} : vector<8x1xf32> -> vector<8x1xf32>
    %259 = vector.broadcast %258 : vector<8x1xf32> to vector<8x8xf32>
    %260 = arith.mulf %255, %259 : vector<8x8xf32>
    %261 = arith.truncf %260 : vector<8x8xf32> to vector<8x8xbf16>
    %cst_108 = arith.constant dense<0.000000e+00> : vector<8x8xf32>
    %262 = tpu.matmul %261, %249, %cst_108 {dimension_numbers = #tpu.dot_dimension_numbers<[1], [0], [0], [1], [0, 0, 1, 1], [], []>} : vector<8x8xbf16>, vector<8x8xbf16>, vector<8x8xf32> -> vector<8x8xf32>
    %263 = arith.truncf %262 : vector<8x8xf32> to vector<8x8xbf16>
    %264 = vector.extract_strided_slice %229 {offsets = [0, 0, 0], sizes = [1, 8, 32], strides = [1, 1, 1]} : vector<4x8x32xbf16> to vector<1x8x32xbf16>
    %265 = vector.shape_cast %264 : vector<1x8x32xbf16> to vector<8x32xbf16>
    %cst_109 = arith.constant dense<0.000000e+00> : vector<8x32xf32>
    %266 = tpu.matmul %263, %265, %cst_109 {dimension_numbers = #tpu.dot_dimension_numbers<[1], [0], [0], [1], [0, 0, 1, 1], [], []>} : vector<8x8xbf16>, vector<8x32xbf16>, vector<8x32xf32> -> vector<8x32xf32>
    %267 = arith.addf %243, %266 : vector<8x32xf32>
    %268 = vector.extract_strided_slice %240 {offsets = [0, 8], sizes = [8, 8], strides = [1, 1]} : vector<8x32xf32> to vector<8x8xf32>
    %269 = arith.truncf %268 : vector<8x8xf32> to vector<8x8xbf16>
    %270 = vector.extract_strided_slice %241 {offsets = [0, 8], sizes = [8, 8], strides = [1, 1]} : vector<8x32xf32> to vector<8x8xf32>
    %271 = arith.truncf %270 : vector<8x8xf32> to vector<8x8xbf16>
    %272 = vector.extract_strided_slice %242 {offsets = [0, 8], sizes = [8, 8], strides = [1, 1]} : vector<8x32xf32> to vector<8x8xf32>
    %273 = arith.truncf %272 : vector<8x8xf32> to vector<8x8xbf16>
    %cst_110 = arith.constant dense<0.000000e+00> : vector<8x8xf32>
    %274 = tpu.matmul %269, %271, %cst_110 {dimension_numbers = #tpu.dot_dimension_numbers<[1], [1], [0], [0], [0, 0, 1, 0], [], []>} : vector<8x8xbf16>, vector<8x8xbf16>, vector<8x8xf32> -> vector<8x8xf32>
    %cst_111 = arith.constant dense<0xFF800000> : vector<8xf32>
    %275 = vector.multi_reduction <maximumf>, %274, %cst_111 [1] : vector<8x8xf32> to vector<8xf32>
    %276 = vector.shape_cast %275 : vector<8xf32> to vector<8x1xf32>
    %277 = vector.broadcast %276 : vector<8x1xf32> to vector<8x8xf32>
    %278 = arith.subf %274, %277 : vector<8x8xf32>
    %279 = math.exp %278 : vector<8x8xf32>
    %cst_112 = arith.constant dense<0.000000e+00> : vector<8xf32>
    %280 = vector.multi_reduction <add>, %279, %cst_112 [1] : vector<8x8xf32> to vector<8xf32>
    %281 = vector.shape_cast %280 : vector<8xf32> to vector<8x1xf32>
    %282 = tpu.reciprocal %281 {approx = true} : vector<8x1xf32> -> vector<8x1xf32>
    %283 = vector.broadcast %282 : vector<8x1xf32> to vector<8x8xf32>
    %284 = arith.mulf %279, %283 : vector<8x8xf32>
    %285 = arith.truncf %284 : vector<8x8xf32> to vector<8x8xbf16>
    %cst_113 = arith.constant dense<0.000000e+00> : vector<8x8xf32>
    %286 = tpu.matmul %285, %273, %cst_113 {dimension_numbers = #tpu.dot_dimension_numbers<[1], [0], [0], [1], [0, 0, 1, 1], [], []>} : vector<8x8xbf16>, vector<8x8xbf16>, vector<8x8xf32> -> vector<8x8xf32>
    %287 = arith.truncf %286 : vector<8x8xf32> to vector<8x8xbf16>
    %288 = vector.extract_strided_slice %229 {offsets = [1, 0, 0], sizes = [1, 8, 32], strides = [1, 1, 1]} : vector<4x8x32xbf16> to vector<1x8x32xbf16>
    %289 = vector.shape_cast %288 : vector<1x8x32xbf16> to vector<8x32xbf16>
    %cst_114 = arith.constant dense<0.000000e+00> : vector<8x32xf32>
    %290 = tpu.matmul %287, %289, %cst_114 {dimension_numbers = #tpu.dot_dimension_numbers<[1], [0], [0], [1], [0, 0, 1, 1], [], []>} : vector<8x8xbf16>, vector<8x32xbf16>, vector<8x32xf32> -> vector<8x32xf32>
    %291 = arith.addf %267, %290 : vector<8x32xf32>
    %292 = vector.extract_strided_slice %240 {offsets = [0, 16], sizes = [8, 8], strides = [1, 1]} : vector<8x32xf32> to vector<8x8xf32>
    %293 = arith.truncf %292 : vector<8x8xf32> to vector<8x8xbf16>
    %294 = vector.extract_strided_slice %241 {offsets = [0, 16], sizes = [8, 8], strides = [1, 1]} : vector<8x32xf32> to vector<8x8xf32>
    %295 = arith.truncf %294 : vector<8x8xf32> to vector<8x8xbf16>
    %296 = vector.extract_strided_slice %242 {offsets = [0, 16], sizes = [8, 8], strides = [1, 1]} : vector<8x32xf32> to vector<8x8xf32>
    %297 = arith.truncf %296 : vector<8x8xf32> to vector<8x8xbf16>
    %cst_115 = arith.constant dense<0.000000e+00> : vector<8x8xf32>
    %298 = tpu.matmul %293, %295, %cst_115 {dimension_numbers = #tpu.dot_dimension_numbers<[1], [1], [0], [0], [0, 0, 1, 0], [], []>} : vector<8x8xbf16>, vector<8x8xbf16>, vector<8x8xf32> -> vector<8x8xf32>
    %cst_116 = arith.constant dense<0xFF800000> : vector<8xf32>
    %299 = vector.multi_reduction <maximumf>, %298, %cst_116 [1] : vector<8x8xf32> to vector<8xf32>
    %300 = vector.shape_cast %299 : vector<8xf32> to vector<8x1xf32>
    %301 = vector.broadcast %300 : vector<8x1xf32> to vector<8x8xf32>
    %302 = arith.subf %298, %301 : vector<8x8xf32>
    %303 = math.exp %302 : vector<8x8xf32>
    %cst_117 = arith.constant dense<0.000000e+00> : vector<8xf32>
    %304 = vector.multi_reduction <add>, %303, %cst_117 [1] : vector<8x8xf32> to vector<8xf32>
    %305 = vector.shape_cast %304 : vector<8xf32> to vector<8x1xf32>
    %306 = tpu.reciprocal %305 {approx = true} : vector<8x1xf32> -> vector<8x1xf32>
    %307 = vector.broadcast %306 : vector<8x1xf32> to vector<8x8xf32>
    %308 = arith.mulf %303, %307 : vector<8x8xf32>
    %309 = arith.truncf %308 : vector<8x8xf32> to vector<8x8xbf16>
    %cst_118 = arith.constant dense<0.000000e+00> : vector<8x8xf32>
    %310 = tpu.matmul %309, %297, %cst_118 {dimension_numbers = #tpu.dot_dimension_numbers<[1], [0], [0], [1], [0, 0, 1, 1], [], []>} : vector<8x8xbf16>, vector<8x8xbf16>, vector<8x8xf32> -> vector<8x8xf32>
    %311 = arith.truncf %310 : vector<8x8xf32> to vector<8x8xbf16>
    %312 = vector.extract_strided_slice %229 {offsets = [2, 0, 0], sizes = [1, 8, 32], strides = [1, 1, 1]} : vector<4x8x32xbf16> to vector<1x8x32xbf16>
    %313 = vector.shape_cast %312 : vector<1x8x32xbf16> to vector<8x32xbf16>
    %cst_119 = arith.constant dense<0.000000e+00> : vector<8x32xf32>
    %314 = tpu.matmul %311, %313, %cst_119 {dimension_numbers = #tpu.dot_dimension_numbers<[1], [0], [0], [1], [0, 0, 1, 1], [], []>} : vector<8x8xbf16>, vector<8x32xbf16>, vector<8x32xf32> -> vector<8x32xf32>
    %315 = arith.addf %291, %314 : vector<8x32xf32>
    %316 = vector.extract_strided_slice %240 {offsets = [0, 24], sizes = [8, 8], strides = [1, 1]} : vector<8x32xf32> to vector<8x8xf32>
    %317 = arith.truncf %316 : vector<8x8xf32> to vector<8x8xbf16>
    %318 = vector.extract_strided_slice %241 {offsets = [0, 24], sizes = [8, 8], strides = [1, 1]} : vector<8x32xf32> to vector<8x8xf32>
    %319 = arith.truncf %318 : vector<8x8xf32> to vector<8x8xbf16>
    %320 = vector.extract_strided_slice %242 {offsets = [0, 24], sizes = [8, 8], strides = [1, 1]} : vector<8x32xf32> to vector<8x8xf32>
    %321 = arith.truncf %320 : vector<8x8xf32> to vector<8x8xbf16>
    %cst_120 = arith.constant dense<0.000000e+00> : vector<8x8xf32>
    %322 = tpu.matmul %317, %319, %cst_120 {dimension_numbers = #tpu.dot_dimension_numbers<[1], [1], [0], [0], [0, 0, 1, 0], [], []>} : vector<8x8xbf16>, vector<8x8xbf16>, vector<8x8xf32> -> vector<8x8xf32>
    %cst_121 = arith.constant dense<0xFF800000> : vector<8xf32>
    %323 = vector.multi_reduction <maximumf>, %322, %cst_121 [1] : vector<8x8xf32> to vector<8xf32>
    %324 = vector.shape_cast %323 : vector<8xf32> to vector<8x1xf32>
    %325 = vector.broadcast %324 : vector<8x1xf32> to vector<8x8xf32>
    %326 = arith.subf %322, %325 : vector<8x8xf32>
    %327 = math.exp %326 : vector<8x8xf32>
    %cst_122 = arith.constant dense<0.000000e+00> : vector<8xf32>
    %328 = vector.multi_reduction <add>, %327, %cst_122 [1] : vector<8x8xf32> to vector<8xf32>
    %329 = vector.shape_cast %328 : vector<8xf32> to vector<8x1xf32>
    %330 = tpu.reciprocal %329 {approx = true} : vector<8x1xf32> -> vector<8x1xf32>
    %331 = vector.broadcast %330 : vector<8x1xf32> to vector<8x8xf32>
    %332 = arith.mulf %327, %331 : vector<8x8xf32>
    %333 = arith.truncf %332 : vector<8x8xf32> to vector<8x8xbf16>
    %cst_123 = arith.constant dense<0.000000e+00> : vector<8x8xf32>
    %334 = tpu.matmul %333, %321, %cst_123 {dimension_numbers = #tpu.dot_dimension_numbers<[1], [0], [0], [1], [0, 0, 1, 1], [], []>} : vector<8x8xbf16>, vector<8x8xbf16>, vector<8x8xf32> -> vector<8x8xf32>
    %335 = arith.truncf %334 : vector<8x8xf32> to vector<8x8xbf16>
    %336 = vector.extract_strided_slice %229 {offsets = [3, 0, 0], sizes = [1, 8, 32], strides = [1, 1, 1]} : vector<4x8x32xbf16> to vector<1x8x32xbf16>
    %337 = vector.shape_cast %336 : vector<1x8x32xbf16> to vector<8x32xbf16>
    %cst_124 = arith.constant dense<0.000000e+00> : vector<8x32xf32>
    %338 = tpu.matmul %335, %337, %cst_124 {dimension_numbers = #tpu.dot_dimension_numbers<[1], [0], [0], [1], [0, 0, 1, 1], [], []>} : vector<8x8xbf16>, vector<8x32xbf16>, vector<8x32xf32> -> vector<8x32xf32>
    %339 = arith.addf %315, %338 : vector<8x32xf32>
    %340 = vector.broadcast %231 : vector<1x32xf32> to vector<8x32xf32>
    %341 = arith.addf %339, %340 : vector<8x32xf32>
    %342 = arith.addf %341, %223 : vector<8x32xf32>
    %cst_125 = arith.constant dense<0.000000e+00> : vector<8xf32>
    %343 = vector.multi_reduction <add>, %342, %cst_125 [1] : vector<8x32xf32> to vector<8xf32>
    %344 = vector.shape_cast %343 : vector<8xf32> to vector<8x1xf32>
    %cst_126 = arith.constant 3.200000e+01 : f32
    %345 = vector.broadcast %cst_126 : f32 to vector<8x1xf32>
    %346 = arith.divf %344, %345 : vector<8x1xf32>
    %347 = vector.broadcast %346 : vector<8x1xf32> to vector<8x32xf32>
    %348 = arith.subf %342, %347 : vector<8x32xf32>
    %349 = arith.mulf %348, %348 : vector<8x32xf32>
    %cst_127 = arith.constant dense<0.000000e+00> : vector<8xf32>
    %350 = vector.multi_reduction <add>, %349, %cst_127 [1] : vector<8x32xf32> to vector<8xf32>
    %351 = vector.shape_cast %350 : vector<8xf32> to vector<8x1xf32>
    %cst_128 = arith.constant 3.200000e+01 : f32
    %352 = vector.broadcast %cst_128 : f32 to vector<8x1xf32>
    %353 = arith.divf %351, %352 : vector<8x1xf32>
    %354 = vector.broadcast %346 : vector<8x1xf32> to vector<8x32xf32>
    %355 = arith.subf %342, %354 : vector<8x32xf32>
    %cst_129 = arith.constant 9.99999974E-6 : f32
    %356 = vector.broadcast %cst_129 : f32 to vector<8x1xf32>
    %357 = arith.addf %353, %356 : vector<8x1xf32>
    %358 = math.rsqrt %357 : vector<8x1xf32>
    %359 = vector.broadcast %358 : vector<8x1xf32> to vector<8x32xf32>
    %360 = arith.mulf %355, %359 : vector<8x32xf32>
    %361 = vector.broadcast %233 : vector<1x32xf32> to vector<8x32xf32>
    %362 = arith.mulf %360, %361 : vector<8x32xf32>
    %363 = vector.broadcast %235 : vector<1x32xf32> to vector<8x32xf32>
    %364 = arith.addf %362, %363 : vector<8x32xf32>
    %c1_130 = arith.constant 1 : index
    %c0_131 = arith.constant 0 : index
    %c0_132 = arith.constant 0 : index
    %365 = vector.load %arg11[%c1_130, %c0_131, %c0_132] : memref<2x32x64xbf16, #tpu.memory_space<vmem>>, vector<1x32x64xbf16>
    %366 = vector.shape_cast %365 : vector<1x32x64xbf16> to vector<32x64xbf16>
    %c1_133 = arith.constant 1 : index
    %c0_134 = arith.constant 0 : index
    %c0_135 = arith.constant 0 : index
    %367 = vector.load %arg12[%c1_133, %c0_134, %c0_135] : memref<2x1x64xf32, #tpu.memory_space<vmem>>, vector<1x1x64xf32>
    %368 = vector.shape_cast %367 : vector<1x1x64xf32> to vector<1x64xf32>
    %c1_136 = arith.constant 1 : index
    %c0_137 = arith.constant 0 : index
    %c0_138 = arith.constant 0 : index
    %369 = vector.load %arg13[%c1_136, %c0_137, %c0_138] : memref<2x64x32xbf16, #tpu.memory_space<vmem>>, vector<1x64x32xbf16>
    %370 = vector.shape_cast %369 : vector<1x64x32xbf16> to vector<64x32xbf16>
    %c1_139 = arith.constant 1 : index
    %c0_140 = arith.constant 0 : index
    %c0_141 = arith.constant 0 : index
    %371 = vector.load %arg14[%c1_139, %c0_140, %c0_141] : memref<2x1x32xf32, #tpu.memory_space<vmem>>, vector<1x1x32xf32>
    %372 = vector.shape_cast %371 : vector<1x1x32xf32> to vector<1x32xf32>
    %c1_142 = arith.constant 1 : index
    %c0_143 = arith.constant 0 : index
    %c0_144 = arith.constant 0 : index
    %373 = vector.load %arg15[%c1_142, %c0_143, %c0_144] : memref<2x1x32xf32, #tpu.memory_space<vmem>>, vector<1x1x32xf32>
    %374 = vector.shape_cast %373 : vector<1x1x32xf32> to vector<1x32xf32>
    %c1_145 = arith.constant 1 : index
    %c0_146 = arith.constant 0 : index
    %c0_147 = arith.constant 0 : index
    %375 = vector.load %arg16[%c1_145, %c0_146, %c0_147] : memref<2x1x32xf32, #tpu.memory_space<vmem>>, vector<1x1x32xf32>
    %376 = vector.shape_cast %375 : vector<1x1x32xf32> to vector<1x32xf32>
    %377 = arith.truncf %364 : vector<8x32xf32> to vector<8x32xbf16>
    %cst_148 = arith.constant dense<0.000000e+00> : vector<8x64xf32>
    %378 = tpu.matmul %377, %366, %cst_148 {dimension_numbers = #tpu.dot_dimension_numbers<[1], [0], [0], [1], [0, 0, 1, 1], [], []>} : vector<8x32xbf16>, vector<32x64xbf16>, vector<8x64xf32> -> vector<8x64xf32>
    %379 = vector.broadcast %368 : vector<1x64xf32> to vector<8x64xf32>
    %380 = arith.addf %378, %379 : vector<8x64xf32>
    %cst_149 = arith.constant 5.000000e-01 : f32
    %381 = vector.broadcast %cst_149 : f32 to vector<8x64xf32>
    %382 = arith.mulf %381, %380 : vector<8x64xf32>
    %cst_150 = arith.constant 4.471500e-02 : f32
    %383 = vector.broadcast %cst_150 : f32 to vector<8x64xf32>
    %384 = arith.mulf %383, %380 : vector<8x64xf32>
    %385 = arith.mulf %384, %380 : vector<8x64xf32>
    %386 = arith.mulf %385, %380 : vector<8x64xf32>
    %387 = arith.addf %380, %386 : vector<8x64xf32>
    %cst_151 = arith.constant 0.797884583 : f32
    %388 = vector.broadcast %cst_151 : f32 to vector<8x64xf32>
    %389 = arith.mulf %388, %387 : vector<8x64xf32>
    %390 = math.tanh %389 : vector<8x64xf32>
    %cst_152 = arith.constant 1.000000e+00 : f32
    %391 = vector.broadcast %cst_152 : f32 to vector<8x64xf32>
    %392 = arith.addf %391, %390 : vector<8x64xf32>
    %393 = arith.mulf %382, %392 : vector<8x64xf32>
    %394 = arith.truncf %393 : vector<8x64xf32> to vector<8x64xbf16>
    %cst_153 = arith.constant dense<0.000000e+00> : vector<8x32xf32>
    %395 = tpu.matmul %394, %370, %cst_153 {dimension_numbers = #tpu.dot_dimension_numbers<[1], [0], [0], [1], [0, 0, 1, 1], [], []>} : vector<8x64xbf16>, vector<64x32xbf16>, vector<8x32xf32> -> vector<8x32xf32>
    %396 = vector.broadcast %372 : vector<1x32xf32> to vector<8x32xf32>
    %397 = arith.addf %395, %396 : vector<8x32xf32>
    %398 = arith.addf %397, %364 : vector<8x32xf32>
    %cst_154 = arith.constant dense<0.000000e+00> : vector<8xf32>
    %399 = vector.multi_reduction <add>, %398, %cst_154 [1] : vector<8x32xf32> to vector<8xf32>
    %400 = vector.shape_cast %399 : vector<8xf32> to vector<8x1xf32>
    %cst_155 = arith.constant 3.200000e+01 : f32
    %401 = vector.broadcast %cst_155 : f32 to vector<8x1xf32>
    %402 = arith.divf %400, %401 : vector<8x1xf32>
    %403 = vector.broadcast %402 : vector<8x1xf32> to vector<8x32xf32>
    %404 = arith.subf %398, %403 : vector<8x32xf32>
    %405 = arith.mulf %404, %404 : vector<8x32xf32>
    %cst_156 = arith.constant dense<0.000000e+00> : vector<8xf32>
    %406 = vector.multi_reduction <add>, %405, %cst_156 [1] : vector<8x32xf32> to vector<8xf32>
    %407 = vector.shape_cast %406 : vector<8xf32> to vector<8x1xf32>
    %cst_157 = arith.constant 3.200000e+01 : f32
    %408 = vector.broadcast %cst_157 : f32 to vector<8x1xf32>
    %409 = arith.divf %407, %408 : vector<8x1xf32>
    %410 = vector.broadcast %402 : vector<8x1xf32> to vector<8x32xf32>
    %411 = arith.subf %398, %410 : vector<8x32xf32>
    %cst_158 = arith.constant 9.99999974E-6 : f32
    %412 = vector.broadcast %cst_158 : f32 to vector<8x1xf32>
    %413 = arith.addf %409, %412 : vector<8x1xf32>
    %414 = math.rsqrt %413 : vector<8x1xf32>
    %415 = vector.broadcast %414 : vector<8x1xf32> to vector<8x32xf32>
    %416 = arith.mulf %411, %415 : vector<8x32xf32>
    %417 = vector.broadcast %374 : vector<1x32xf32> to vector<8x32xf32>
    %418 = arith.mulf %416, %417 : vector<8x32xf32>
    %419 = vector.broadcast %376 : vector<1x32xf32> to vector<8x32xf32>
    %420 = arith.addf %418, %419 : vector<8x32xf32>
    %421 = arith.truncf %420 : vector<8x32xf32> to vector<8x32xbf16>
    %422 = tpu.iota {dimensions = array<i32: 0>} : vector<8x8xi32>
    %423 = tpu.iota {dimensions = array<i32: 1>} : vector<8x8xi32>
    %424 = arith.cmpi sge, %422, %423 : vector<8x8xi32>
    %cst_159 = arith.constant 0.000000e+00 : f32
    %cst_160 = arith.constant -1.000000e+09 : f32
    %425 = vector.broadcast %cst_159 : f32 to vector<8x8xf32>
    %426 = vector.broadcast %cst_160 : f32 to vector<8x8xf32>
    %427 = arith.select %424, %425, %426 : vector<8x8xi1>, vector<8x8xf32>
    %c0_161 = arith.constant 0 : index
    %c0_162 = arith.constant 0 : index
    %c0_163 = arith.constant 0 : index
    %428 = vector.load %arg2[%c0_161, %c0_162, %c0_163] : memref<1x8x32xbf16, #tpu.memory_space<vmem>>, vector<1x8x32xbf16>
    %429 = vector.shape_cast %428 : vector<1x8x32xbf16> to vector<8x32xbf16>
    %430 = arith.extf %429 : vector<8x32xbf16> to vector<8x32xf32>
    %c0_164 = arith.constant 0 : index
    %c0_165 = arith.constant 0 : index
    %431 = vector.load %arg17[%c0_164, %c0_165] : memref<1x32xf32, #tpu.memory_space<vmem>>, vector<1x32xf32>
    %c0_166 = arith.constant 0 : index
    %c0_167 = arith.constant 0 : index
    %432 = vector.load %arg18[%c0_166, %c0_167] : memref<1x32xf32, #tpu.memory_space<vmem>>, vector<1x32xf32>
    %cst_168 = arith.constant dense<0.000000e+00> : vector<8xf32>
    %433 = vector.multi_reduction <add>, %430, %cst_168 [1] : vector<8x32xf32> to vector<8xf32>
    %434 = vector.shape_cast %433 : vector<8xf32> to vector<8x1xf32>
    %cst_169 = arith.constant 3.200000e+01 : f32
    %435 = vector.broadcast %cst_169 : f32 to vector<8x1xf32>
    %436 = arith.divf %434, %435 : vector<8x1xf32>
    %437 = vector.broadcast %436 : vector<8x1xf32> to vector<8x32xf32>
    %438 = arith.subf %430, %437 : vector<8x32xf32>
    %439 = arith.mulf %438, %438 : vector<8x32xf32>
    %cst_170 = arith.constant dense<0.000000e+00> : vector<8xf32>
    %440 = vector.multi_reduction <add>, %439, %cst_170 [1] : vector<8x32xf32> to vector<8xf32>
    %441 = vector.shape_cast %440 : vector<8xf32> to vector<8x1xf32>
    %cst_171 = arith.constant 3.200000e+01 : f32
    %442 = vector.broadcast %cst_171 : f32 to vector<8x1xf32>
    %443 = arith.divf %441, %442 : vector<8x1xf32>
    %444 = vector.broadcast %436 : vector<8x1xf32> to vector<8x32xf32>
    %445 = arith.subf %430, %444 : vector<8x32xf32>
    %cst_172 = arith.constant 9.99999974E-6 : f32
    %446 = vector.broadcast %cst_172 : f32 to vector<8x1xf32>
    %447 = arith.addf %443, %446 : vector<8x1xf32>
    %448 = math.rsqrt %447 : vector<8x1xf32>
    %449 = vector.broadcast %448 : vector<8x1xf32> to vector<8x32xf32>
    %450 = arith.mulf %445, %449 : vector<8x32xf32>
    %451 = vector.broadcast %431 : vector<1x32xf32> to vector<8x32xf32>
    %452 = arith.mulf %450, %451 : vector<8x32xf32>
    %453 = vector.broadcast %432 : vector<1x32xf32> to vector<8x32xf32>
    %454 = arith.addf %452, %453 : vector<8x32xf32>
    %c0_173 = arith.constant 0 : index
    %c0_174 = arith.constant 0 : index
    %c0_175 = arith.constant 0 : index
    %455 = vector.load %arg19[%c0_173, %c0_174, %c0_175] : memref<2x32x96xbf16, #tpu.memory_space<vmem>>, vector<1x32x96xbf16>
    %456 = vector.shape_cast %455 : vector<1x32x96xbf16> to vector<32x96xbf16>
    %c0_176 = arith.constant 0 : index
    %c0_177 = arith.constant 0 : index
    %c0_178 = arith.constant 0 : index
    %457 = vector.load %arg20[%c0_176, %c0_177, %c0_178] : memref<2x1x96xf32, #tpu.memory_space<vmem>>, vector<1x1x96xf32>
    %458 = vector.shape_cast %457 : vector<1x1x96xf32> to vector<1x96xf32>
    %c0_179 = arith.constant 0 : index
    %c0_180 = arith.constant 0 : index
    %c0_181 = arith.constant 0 : index
    %c0_182 = arith.constant 0 : index
    %459 = vector.load %arg21[%c0_179, %c0_180, %c0_181, %c0_182] : memref<2x4x8x32xbf16, #tpu.memory_space<vmem>>, vector<1x4x8x32xbf16>
    %460 = vector.shape_cast %459 : vector<1x4x8x32xbf16> to vector<4x8x32xbf16>
    %c0_183 = arith.constant 0 : index
    %c0_184 = arith.constant 0 : index
    %c0_185 = arith.constant 0 : index
    %461 = vector.load %arg22[%c0_183, %c0_184, %c0_185] : memref<2x1x32xf32, #tpu.memory_space<vmem>>, vector<1x1x32xf32>
    %462 = vector.shape_cast %461 : vector<1x1x32xf32> to vector<1x32xf32>
    %c0_186 = arith.constant 0 : index
    %c0_187 = arith.constant 0 : index
    %c0_188 = arith.constant 0 : index
    %463 = vector.load %arg23[%c0_186, %c0_187, %c0_188] : memref<2x1x32xf32, #tpu.memory_space<vmem>>, vector<1x1x32xf32>
    %464 = vector.shape_cast %463 : vector<1x1x32xf32> to vector<1x32xf32>
    %c0_189 = arith.constant 0 : index
    %c0_190 = arith.constant 0 : index
    %c0_191 = arith.constant 0 : index
    %465 = vector.load %arg24[%c0_189, %c0_190, %c0_191] : memref<2x1x32xf32, #tpu.memory_space<vmem>>, vector<1x1x32xf32>
    %466 = vector.shape_cast %465 : vector<1x1x32xf32> to vector<1x32xf32>
    %467 = arith.truncf %454 : vector<8x32xf32> to vector<8x32xbf16>
    %cst_192 = arith.constant dense<0.000000e+00> : vector<8x96xf32>
    %468 = tpu.matmul %467, %456, %cst_192 {dimension_numbers = #tpu.dot_dimension_numbers<[1], [0], [0], [1], [0, 0, 1, 1], [], []>} : vector<8x32xbf16>, vector<32x96xbf16>, vector<8x96xf32> -> vector<8x96xf32>
    %469 = vector.broadcast %458 : vector<1x96xf32> to vector<8x96xf32>
    %470 = arith.addf %468, %469 : vector<8x96xf32>
    %471 = vector.extract_strided_slice %470 {offsets = [0, 0], sizes = [8, 32], strides = [1, 1]} : vector<8x96xf32> to vector<8x32xf32>
    %472 = vector.extract_strided_slice %470 {offsets = [0, 32], sizes = [8, 32], strides = [1, 1]} : vector<8x96xf32> to vector<8x32xf32>
    %473 = vector.extract_strided_slice %470 {offsets = [0, 64], sizes = [8, 32], strides = [1, 1]} : vector<8x96xf32> to vector<8x32xf32>
    %cst_193 = arith.constant 0.000000e+00 : f32
    %474 = vector.broadcast %cst_193 : f32 to vector<8x32xf32>
    %475 = vector.extract_strided_slice %471 {offsets = [0, 0], sizes = [8, 8], strides = [1, 1]} : vector<8x32xf32> to vector<8x8xf32>
    %476 = arith.truncf %475 : vector<8x8xf32> to vector<8x8xbf16>
    %477 = vector.extract_strided_slice %472 {offsets = [0, 0], sizes = [8, 8], strides = [1, 1]} : vector<8x32xf32> to vector<8x8xf32>
    %478 = arith.truncf %477 : vector<8x8xf32> to vector<8x8xbf16>
    %479 = vector.extract_strided_slice %473 {offsets = [0, 0], sizes = [8, 8], strides = [1, 1]} : vector<8x32xf32> to vector<8x8xf32>
    %480 = arith.truncf %479 : vector<8x8xf32> to vector<8x8xbf16>
    %cst_194 = arith.constant dense<0.000000e+00> : vector<8x8xf32>
    %481 = tpu.matmul %476, %478, %cst_194 {dimension_numbers = #tpu.dot_dimension_numbers<[1], [1], [0], [0], [0, 0, 1, 0], [], []>} : vector<8x8xbf16>, vector<8x8xbf16>, vector<8x8xf32> -> vector<8x8xf32>
    %482 = arith.addf %481, %427 : vector<8x8xf32>
    %cst_195 = arith.constant dense<0xFF800000> : vector<8xf32>
    %483 = vector.multi_reduction <maximumf>, %482, %cst_195 [1] : vector<8x8xf32> to vector<8xf32>
    %484 = vector.shape_cast %483 : vector<8xf32> to vector<8x1xf32>
    %485 = vector.broadcast %484 : vector<8x1xf32> to vector<8x8xf32>
    %486 = arith.subf %482, %485 : vector<8x8xf32>
    %487 = math.exp %486 : vector<8x8xf32>
    %cst_196 = arith.constant dense<0.000000e+00> : vector<8xf32>
    %488 = vector.multi_reduction <add>, %487, %cst_196 [1] : vector<8x8xf32> to vector<8xf32>
    %489 = vector.shape_cast %488 : vector<8xf32> to vector<8x1xf32>
    %490 = tpu.reciprocal %489 {approx = true} : vector<8x1xf32> -> vector<8x1xf32>
    %491 = vector.broadcast %490 : vector<8x1xf32> to vector<8x8xf32>
    %492 = arith.mulf %487, %491 : vector<8x8xf32>
    %493 = arith.truncf %492 : vector<8x8xf32> to vector<8x8xbf16>
    %cst_197 = arith.constant dense<0.000000e+00> : vector<8x8xf32>
    %494 = tpu.matmul %493, %480, %cst_197 {dimension_numbers = #tpu.dot_dimension_numbers<[1], [0], [0], [1], [0, 0, 1, 1], [], []>} : vector<8x8xbf16>, vector<8x8xbf16>, vector<8x8xf32> -> vector<8x8xf32>
    %495 = arith.truncf %494 : vector<8x8xf32> to vector<8x8xbf16>
    %496 = vector.extract_strided_slice %460 {offsets = [0, 0, 0], sizes = [1, 8, 32], strides = [1, 1, 1]} : vector<4x8x32xbf16> to vector<1x8x32xbf16>
    %497 = vector.shape_cast %496 : vector<1x8x32xbf16> to vector<8x32xbf16>
    %cst_198 = arith.constant dense<0.000000e+00> : vector<8x32xf32>
    %498 = tpu.matmul %495, %497, %cst_198 {dimension_numbers = #tpu.dot_dimension_numbers<[1], [0], [0], [1], [0, 0, 1, 1], [], []>} : vector<8x8xbf16>, vector<8x32xbf16>, vector<8x32xf32> -> vector<8x32xf32>
    %499 = arith.addf %474, %498 : vector<8x32xf32>
    %500 = vector.extract_strided_slice %471 {offsets = [0, 8], sizes = [8, 8], strides = [1, 1]} : vector<8x32xf32> to vector<8x8xf32>
    %501 = arith.truncf %500 : vector<8x8xf32> to vector<8x8xbf16>
    %502 = vector.extract_strided_slice %472 {offsets = [0, 8], sizes = [8, 8], strides = [1, 1]} : vector<8x32xf32> to vector<8x8xf32>
    %503 = arith.truncf %502 : vector<8x8xf32> to vector<8x8xbf16>
    %504 = vector.extract_strided_slice %473 {offsets = [0, 8], sizes = [8, 8], strides = [1, 1]} : vector<8x32xf32> to vector<8x8xf32>
    %505 = arith.truncf %504 : vector<8x8xf32> to vector<8x8xbf16>
    %cst_199 = arith.constant dense<0.000000e+00> : vector<8x8xf32>
    %506 = tpu.matmul %501, %503, %cst_199 {dimension_numbers = #tpu.dot_dimension_numbers<[1], [1], [0], [0], [0, 0, 1, 0], [], []>} : vector<8x8xbf16>, vector<8x8xbf16>, vector<8x8xf32> -> vector<8x8xf32>
    %507 = arith.addf %506, %427 : vector<8x8xf32>
    %cst_200 = arith.constant dense<0xFF800000> : vector<8xf32>
    %508 = vector.multi_reduction <maximumf>, %507, %cst_200 [1] : vector<8x8xf32> to vector<8xf32>
    %509 = vector.shape_cast %508 : vector<8xf32> to vector<8x1xf32>
    %510 = vector.broadcast %509 : vector<8x1xf32> to vector<8x8xf32>
    %511 = arith.subf %507, %510 : vector<8x8xf32>
    %512 = math.exp %511 : vector<8x8xf32>
    %cst_201 = arith.constant dense<0.000000e+00> : vector<8xf32>
    %513 = vector.multi_reduction <add>, %512, %cst_201 [1] : vector<8x8xf32> to vector<8xf32>
    %514 = vector.shape_cast %513 : vector<8xf32> to vector<8x1xf32>
    %515 = tpu.reciprocal %514 {approx = true} : vector<8x1xf32> -> vector<8x1xf32>
    %516 = vector.broadcast %515 : vector<8x1xf32> to vector<8x8xf32>
    %517 = arith.mulf %512, %516 : vector<8x8xf32>
    %518 = arith.truncf %517 : vector<8x8xf32> to vector<8x8xbf16>
    %cst_202 = arith.constant dense<0.000000e+00> : vector<8x8xf32>
    %519 = tpu.matmul %518, %505, %cst_202 {dimension_numbers = #tpu.dot_dimension_numbers<[1], [0], [0], [1], [0, 0, 1, 1], [], []>} : vector<8x8xbf16>, vector<8x8xbf16>, vector<8x8xf32> -> vector<8x8xf32>
    %520 = arith.truncf %519 : vector<8x8xf32> to vector<8x8xbf16>
    %521 = vector.extract_strided_slice %460 {offsets = [1, 0, 0], sizes = [1, 8, 32], strides = [1, 1, 1]} : vector<4x8x32xbf16> to vector<1x8x32xbf16>
    %522 = vector.shape_cast %521 : vector<1x8x32xbf16> to vector<8x32xbf16>
    %cst_203 = arith.constant dense<0.000000e+00> : vector<8x32xf32>
    %523 = tpu.matmul %520, %522, %cst_203 {dimension_numbers = #tpu.dot_dimension_numbers<[1], [0], [0], [1], [0, 0, 1, 1], [], []>} : vector<8x8xbf16>, vector<8x32xbf16>, vector<8x32xf32> -> vector<8x32xf32>
    %524 = arith.addf %499, %523 : vector<8x32xf32>
    %525 = vector.extract_strided_slice %471 {offsets = [0, 16], sizes = [8, 8], strides = [1, 1]} : vector<8x32xf32> to vector<8x8xf32>
    %526 = arith.truncf %525 : vector<8x8xf32> to vector<8x8xbf16>
    %527 = vector.extract_strided_slice %472 {offsets = [0, 16], sizes = [8, 8], strides = [1, 1]} : vector<8x32xf32> to vector<8x8xf32>
    %528 = arith.truncf %527 : vector<8x8xf32> to vector<8x8xbf16>
    %529 = vector.extract_strided_slice %473 {offsets = [0, 16], sizes = [8, 8], strides = [1, 1]} : vector<8x32xf32> to vector<8x8xf32>
    %530 = arith.truncf %529 : vector<8x8xf32> to vector<8x8xbf16>
    %cst_204 = arith.constant dense<0.000000e+00> : vector<8x8xf32>
    %531 = tpu.matmul %526, %528, %cst_204 {dimension_numbers = #tpu.dot_dimension_numbers<[1], [1], [0], [0], [0, 0, 1, 0], [], []>} : vector<8x8xbf16>, vector<8x8xbf16>, vector<8x8xf32> -> vector<8x8xf32>
    %532 = arith.addf %531, %427 : vector<8x8xf32>
    %cst_205 = arith.constant dense<0xFF800000> : vector<8xf32>
    %533 = vector.multi_reduction <maximumf>, %532, %cst_205 [1] : vector<8x8xf32> to vector<8xf32>
    %534 = vector.shape_cast %533 : vector<8xf32> to vector<8x1xf32>
    %535 = vector.broadcast %534 : vector<8x1xf32> to vector<8x8xf32>
    %536 = arith.subf %532, %535 : vector<8x8xf32>
    %537 = math.exp %536 : vector<8x8xf32>
    %cst_206 = arith.constant dense<0.000000e+00> : vector<8xf32>
    %538 = vector.multi_reduction <add>, %537, %cst_206 [1] : vector<8x8xf32> to vector<8xf32>
    %539 = vector.shape_cast %538 : vector<8xf32> to vector<8x1xf32>
    %540 = tpu.reciprocal %539 {approx = true} : vector<8x1xf32> -> vector<8x1xf32>
    %541 = vector.broadcast %540 : vector<8x1xf32> to vector<8x8xf32>
    %542 = arith.mulf %537, %541 : vector<8x8xf32>
    %543 = arith.truncf %542 : vector<8x8xf32> to vector<8x8xbf16>
    %cst_207 = arith.constant dense<0.000000e+00> : vector<8x8xf32>
    %544 = tpu.matmul %543, %530, %cst_207 {dimension_numbers = #tpu.dot_dimension_numbers<[1], [0], [0], [1], [0, 0, 1, 1], [], []>} : vector<8x8xbf16>, vector<8x8xbf16>, vector<8x8xf32> -> vector<8x8xf32>
    %545 = arith.truncf %544 : vector<8x8xf32> to vector<8x8xbf16>
    %546 = vector.extract_strided_slice %460 {offsets = [2, 0, 0], sizes = [1, 8, 32], strides = [1, 1, 1]} : vector<4x8x32xbf16> to vector<1x8x32xbf16>
    %547 = vector.shape_cast %546 : vector<1x8x32xbf16> to vector<8x32xbf16>
    %cst_208 = arith.constant dense<0.000000e+00> : vector<8x32xf32>
    %548 = tpu.matmul %545, %547, %cst_208 {dimension_numbers = #tpu.dot_dimension_numbers<[1], [0], [0], [1], [0, 0, 1, 1], [], []>} : vector<8x8xbf16>, vector<8x32xbf16>, vector<8x32xf32> -> vector<8x32xf32>
    %549 = arith.addf %524, %548 : vector<8x32xf32>
    %550 = vector.extract_strided_slice %471 {offsets = [0, 24], sizes = [8, 8], strides = [1, 1]} : vector<8x32xf32> to vector<8x8xf32>
    %551 = arith.truncf %550 : vector<8x8xf32> to vector<8x8xbf16>
    %552 = vector.extract_strided_slice %472 {offsets = [0, 24], sizes = [8, 8], strides = [1, 1]} : vector<8x32xf32> to vector<8x8xf32>
    %553 = arith.truncf %552 : vector<8x8xf32> to vector<8x8xbf16>
    %554 = vector.extract_strided_slice %473 {offsets = [0, 24], sizes = [8, 8], strides = [1, 1]} : vector<8x32xf32> to vector<8x8xf32>
    %555 = arith.truncf %554 : vector<8x8xf32> to vector<8x8xbf16>
    %cst_209 = arith.constant dense<0.000000e+00> : vector<8x8xf32>
    %556 = tpu.matmul %551, %553, %cst_209 {dimension_numbers = #tpu.dot_dimension_numbers<[1], [1], [0], [0], [0, 0, 1, 0], [], []>} : vector<8x8xbf16>, vector<8x8xbf16>, vector<8x8xf32> -> vector<8x8xf32>
    %557 = arith.addf %556, %427 : vector<8x8xf32>
    %cst_210 = arith.constant dense<0xFF800000> : vector<8xf32>
    %558 = vector.multi_reduction <maximumf>, %557, %cst_210 [1] : vector<8x8xf32> to vector<8xf32>
    %559 = vector.shape_cast %558 : vector<8xf32> to vector<8x1xf32>
    %560 = vector.broadcast %559 : vector<8x1xf32> to vector<8x8xf32>
    %561 = arith.subf %557, %560 : vector<8x8xf32>
    %562 = math.exp %561 : vector<8x8xf32>
    %cst_211 = arith.constant dense<0.000000e+00> : vector<8xf32>
    %563 = vector.multi_reduction <add>, %562, %cst_211 [1] : vector<8x8xf32> to vector<8xf32>
    %564 = vector.shape_cast %563 : vector<8xf32> to vector<8x1xf32>
    %565 = tpu.reciprocal %564 {approx = true} : vector<8x1xf32> -> vector<8x1xf32>
    %566 = vector.broadcast %565 : vector<8x1xf32> to vector<8x8xf32>
    %567 = arith.mulf %562, %566 : vector<8x8xf32>
    %568 = arith.truncf %567 : vector<8x8xf32> to vector<8x8xbf16>
    %cst_212 = arith.constant dense<0.000000e+00> : vector<8x8xf32>
    %569 = tpu.matmul %568, %555, %cst_212 {dimension_numbers = #tpu.dot_dimension_numbers<[1], [0], [0], [1], [0, 0, 1, 1], [], []>} : vector<8x8xbf16>, vector<8x8xbf16>, vector<8x8xf32> -> vector<8x8xf32>
    %570 = arith.truncf %569 : vector<8x8xf32> to vector<8x8xbf16>
    %571 = vector.extract_strided_slice %460 {offsets = [3, 0, 0], sizes = [1, 8, 32], strides = [1, 1, 1]} : vector<4x8x32xbf16> to vector<1x8x32xbf16>
    %572 = vector.shape_cast %571 : vector<1x8x32xbf16> to vector<8x32xbf16>
    %cst_213 = arith.constant dense<0.000000e+00> : vector<8x32xf32>
    %573 = tpu.matmul %570, %572, %cst_213 {dimension_numbers = #tpu.dot_dimension_numbers<[1], [0], [0], [1], [0, 0, 1, 1], [], []>} : vector<8x8xbf16>, vector<8x32xbf16>, vector<8x32xf32> -> vector<8x32xf32>
    %574 = arith.addf %549, %573 : vector<8x32xf32>
    %575 = vector.broadcast %462 : vector<1x32xf32> to vector<8x32xf32>
    %576 = arith.addf %574, %575 : vector<8x32xf32>
    %577 = arith.addf %576, %454 : vector<8x32xf32>
    %cst_214 = arith.constant dense<0.000000e+00> : vector<8xf32>
    %578 = vector.multi_reduction <add>, %577, %cst_214 [1] : vector<8x32xf32> to vector<8xf32>
    %579 = vector.shape_cast %578 : vector<8xf32> to vector<8x1xf32>
    %cst_215 = arith.constant 3.200000e+01 : f32
    %580 = vector.broadcast %cst_215 : f32 to vector<8x1xf32>
    %581 = arith.divf %579, %580 : vector<8x1xf32>
    %582 = vector.broadcast %581 : vector<8x1xf32> to vector<8x32xf32>
    %583 = arith.subf %577, %582 : vector<8x32xf32>
    %584 = arith.mulf %583, %583 : vector<8x32xf32>
    %cst_216 = arith.constant dense<0.000000e+00> : vector<8xf32>
    %585 = vector.multi_reduction <add>, %584, %cst_216 [1] : vector<8x32xf32> to vector<8xf32>
    %586 = vector.shape_cast %585 : vector<8xf32> to vector<8x1xf32>
    %cst_217 = arith.constant 3.200000e+01 : f32
    %587 = vector.broadcast %cst_217 : f32 to vector<8x1xf32>
    %588 = arith.divf %586, %587 : vector<8x1xf32>
    %589 = vector.broadcast %581 : vector<8x1xf32> to vector<8x32xf32>
    %590 = arith.subf %577, %589 : vector<8x32xf32>
    %cst_218 = arith.constant 9.99999974E-6 : f32
    %591 = vector.broadcast %cst_218 : f32 to vector<8x1xf32>
    %592 = arith.addf %588, %591 : vector<8x1xf32>
    %593 = math.rsqrt %592 : vector<8x1xf32>
    %594 = vector.broadcast %593 : vector<8x1xf32> to vector<8x32xf32>
    %595 = arith.mulf %590, %594 : vector<8x32xf32>
    %596 = vector.broadcast %464 : vector<1x32xf32> to vector<8x32xf32>
    %597 = arith.mulf %595, %596 : vector<8x32xf32>
    %598 = vector.broadcast %466 : vector<1x32xf32> to vector<8x32xf32>
    %599 = arith.addf %597, %598 : vector<8x32xf32>
    %c0_219 = arith.constant 0 : index
    %c0_220 = arith.constant 0 : index
    %c0_221 = arith.constant 0 : index
    %600 = vector.load %arg25[%c0_219, %c0_220, %c0_221] : memref<2x32x32xbf16, #tpu.memory_space<vmem>>, vector<1x32x32xbf16>
    %601 = vector.shape_cast %600 : vector<1x32x32xbf16> to vector<32x32xbf16>
    %c0_222 = arith.constant 0 : index
    %c0_223 = arith.constant 0 : index
    %c0_224 = arith.constant 0 : index
    %602 = vector.load %arg26[%c0_222, %c0_223, %c0_224] : memref<2x1x32xf32, #tpu.memory_space<vmem>>, vector<1x1x32xf32>
    %603 = vector.shape_cast %602 : vector<1x1x32xf32> to vector<1x32xf32>
    %c0_225 = arith.constant 0 : index
    %c0_226 = arith.constant 0 : index
    %c0_227 = arith.constant 0 : index
    %604 = vector.load %arg27[%c0_225, %c0_226, %c0_227] : memref<2x32x64xbf16, #tpu.memory_space<vmem>>, vector<1x32x64xbf16>
    %605 = vector.shape_cast %604 : vector<1x32x64xbf16> to vector<32x64xbf16>
    %c0_228 = arith.constant 0 : index
    %c0_229 = arith.constant 0 : index
    %c0_230 = arith.constant 0 : index
    %606 = vector.load %arg28[%c0_228, %c0_229, %c0_230] : memref<2x1x64xf32, #tpu.memory_space<vmem>>, vector<1x1x64xf32>
    %607 = vector.shape_cast %606 : vector<1x1x64xf32> to vector<1x64xf32>
    %c0_231 = arith.constant 0 : index
    %c0_232 = arith.constant 0 : index
    %c0_233 = arith.constant 0 : index
    %c0_234 = arith.constant 0 : index
    %608 = vector.load %arg29[%c0_231, %c0_232, %c0_233, %c0_234] : memref<2x4x8x32xbf16, #tpu.memory_space<vmem>>, vector<1x4x8x32xbf16>
    %609 = vector.shape_cast %608 : vector<1x4x8x32xbf16> to vector<4x8x32xbf16>
    %c0_235 = arith.constant 0 : index
    %c0_236 = arith.constant 0 : index
    %c0_237 = arith.constant 0 : index
    %610 = vector.load %arg30[%c0_235, %c0_236, %c0_237] : memref<2x1x32xf32, #tpu.memory_space<vmem>>, vector<1x1x32xf32>
    %611 = vector.shape_cast %610 : vector<1x1x32xf32> to vector<1x32xf32>
    %c0_238 = arith.constant 0 : index
    %c0_239 = arith.constant 0 : index
    %c0_240 = arith.constant 0 : index
    %612 = vector.load %arg31[%c0_238, %c0_239, %c0_240] : memref<2x1x32xf32, #tpu.memory_space<vmem>>, vector<1x1x32xf32>
    %613 = vector.shape_cast %612 : vector<1x1x32xf32> to vector<1x32xf32>
    %c0_241 = arith.constant 0 : index
    %c0_242 = arith.constant 0 : index
    %c0_243 = arith.constant 0 : index
    %614 = vector.load %arg32[%c0_241, %c0_242, %c0_243] : memref<2x1x32xf32, #tpu.memory_space<vmem>>, vector<1x1x32xf32>
    %615 = vector.shape_cast %614 : vector<1x1x32xf32> to vector<1x32xf32>
    %616 = arith.truncf %599 : vector<8x32xf32> to vector<8x32xbf16>
    %cst_244 = arith.constant dense<0.000000e+00> : vector<8x32xf32>
    %617 = tpu.matmul %616, %601, %cst_244 {dimension_numbers = #tpu.dot_dimension_numbers<[1], [0], [0], [1], [0, 0, 1, 1], [], []>} : vector<8x32xbf16>, vector<32x32xbf16>, vector<8x32xf32> -> vector<8x32xf32>
    %618 = vector.broadcast %603 : vector<1x32xf32> to vector<8x32xf32>
    %619 = arith.addf %617, %618 : vector<8x32xf32>
    %cst_245 = arith.constant dense<0.000000e+00> : vector<8x64xf32>
    %620 = tpu.matmul %421, %605, %cst_245 {dimension_numbers = #tpu.dot_dimension_numbers<[1], [0], [0], [1], [0, 0, 1, 1], [], []>} : vector<8x32xbf16>, vector<32x64xbf16>, vector<8x64xf32> -> vector<8x64xf32>
    %621 = vector.broadcast %607 : vector<1x64xf32> to vector<8x64xf32>
    %622 = arith.addf %620, %621 : vector<8x64xf32>
    %623 = vector.extract_strided_slice %622 {offsets = [0, 0], sizes = [8, 32], strides = [1, 1]} : vector<8x64xf32> to vector<8x32xf32>
    %624 = vector.extract_strided_slice %622 {offsets = [0, 32], sizes = [8, 32], strides = [1, 1]} : vector<8x64xf32> to vector<8x32xf32>
    %cst_246 = arith.constant 0.000000e+00 : f32
    %625 = vector.broadcast %cst_246 : f32 to vector<8x32xf32>
    %626 = vector.extract_strided_slice %619 {offsets = [0, 0], sizes = [8, 8], strides = [1, 1]} : vector<8x32xf32> to vector<8x8xf32>
    %627 = arith.truncf %626 : vector<8x8xf32> to vector<8x8xbf16>
    %628 = vector.extract_strided_slice %623 {offsets = [0, 0], sizes = [8, 8], strides = [1, 1]} : vector<8x32xf32> to vector<8x8xf32>
    %629 = arith.truncf %628 : vector<8x8xf32> to vector<8x8xbf16>
    %630 = vector.extract_strided_slice %624 {offsets = [0, 0], sizes = [8, 8], strides = [1, 1]} : vector<8x32xf32> to vector<8x8xf32>
    %631 = arith.truncf %630 : vector<8x8xf32> to vector<8x8xbf16>
    %cst_247 = arith.constant dense<0.000000e+00> : vector<8x8xf32>
    %632 = tpu.matmul %627, %629, %cst_247 {dimension_numbers = #tpu.dot_dimension_numbers<[1], [1], [0], [0], [0, 0, 1, 0], [], []>} : vector<8x8xbf16>, vector<8x8xbf16>, vector<8x8xf32> -> vector<8x8xf32>
    %cst_248 = arith.constant dense<0xFF800000> : vector<8xf32>
    %633 = vector.multi_reduction <maximumf>, %632, %cst_248 [1] : vector<8x8xf32> to vector<8xf32>
    %634 = vector.shape_cast %633 : vector<8xf32> to vector<8x1xf32>
    %635 = vector.broadcast %634 : vector<8x1xf32> to vector<8x8xf32>
    %636 = arith.subf %632, %635 : vector<8x8xf32>
    %637 = math.exp %636 : vector<8x8xf32>
    %cst_249 = arith.constant dense<0.000000e+00> : vector<8xf32>
    %638 = vector.multi_reduction <add>, %637, %cst_249 [1] : vector<8x8xf32> to vector<8xf32>
    %639 = vector.shape_cast %638 : vector<8xf32> to vector<8x1xf32>
    %640 = tpu.reciprocal %639 {approx = true} : vector<8x1xf32> -> vector<8x1xf32>
    %641 = vector.broadcast %640 : vector<8x1xf32> to vector<8x8xf32>
    %642 = arith.mulf %637, %641 : vector<8x8xf32>
    %643 = arith.truncf %642 : vector<8x8xf32> to vector<8x8xbf16>
    %cst_250 = arith.constant dense<0.000000e+00> : vector<8x8xf32>
    %644 = tpu.matmul %643, %631, %cst_250 {dimension_numbers = #tpu.dot_dimension_numbers<[1], [0], [0], [1], [0, 0, 1, 1], [], []>} : vector<8x8xbf16>, vector<8x8xbf16>, vector<8x8xf32> -> vector<8x8xf32>
    %645 = arith.truncf %644 : vector<8x8xf32> to vector<8x8xbf16>
    %646 = vector.extract_strided_slice %609 {offsets = [0, 0, 0], sizes = [1, 8, 32], strides = [1, 1, 1]} : vector<4x8x32xbf16> to vector<1x8x32xbf16>
    %647 = vector.shape_cast %646 : vector<1x8x32xbf16> to vector<8x32xbf16>
    %cst_251 = arith.constant dense<0.000000e+00> : vector<8x32xf32>
    %648 = tpu.matmul %645, %647, %cst_251 {dimension_numbers = #tpu.dot_dimension_numbers<[1], [0], [0], [1], [0, 0, 1, 1], [], []>} : vector<8x8xbf16>, vector<8x32xbf16>, vector<8x32xf32> -> vector<8x32xf32>
    %649 = arith.addf %625, %648 : vector<8x32xf32>
    %650 = vector.extract_strided_slice %619 {offsets = [0, 8], sizes = [8, 8], strides = [1, 1]} : vector<8x32xf32> to vector<8x8xf32>
    %651 = arith.truncf %650 : vector<8x8xf32> to vector<8x8xbf16>
    %652 = vector.extract_strided_slice %623 {offsets = [0, 8], sizes = [8, 8], strides = [1, 1]} : vector<8x32xf32> to vector<8x8xf32>
    %653 = arith.truncf %652 : vector<8x8xf32> to vector<8x8xbf16>
    %654 = vector.extract_strided_slice %624 {offsets = [0, 8], sizes = [8, 8], strides = [1, 1]} : vector<8x32xf32> to vector<8x8xf32>
    %655 = arith.truncf %654 : vector<8x8xf32> to vector<8x8xbf16>
    %cst_252 = arith.constant dense<0.000000e+00> : vector<8x8xf32>
    %656 = tpu.matmul %651, %653, %cst_252 {dimension_numbers = #tpu.dot_dimension_numbers<[1], [1], [0], [0], [0, 0, 1, 0], [], []>} : vector<8x8xbf16>, vector<8x8xbf16>, vector<8x8xf32> -> vector<8x8xf32>
    %cst_253 = arith.constant dense<0xFF800000> : vector<8xf32>
    %657 = vector.multi_reduction <maximumf>, %656, %cst_253 [1] : vector<8x8xf32> to vector<8xf32>
    %658 = vector.shape_cast %657 : vector<8xf32> to vector<8x1xf32>
    %659 = vector.broadcast %658 : vector<8x1xf32> to vector<8x8xf32>
    %660 = arith.subf %656, %659 : vector<8x8xf32>
    %661 = math.exp %660 : vector<8x8xf32>
    %cst_254 = arith.constant dense<0.000000e+00> : vector<8xf32>
    %662 = vector.multi_reduction <add>, %661, %cst_254 [1] : vector<8x8xf32> to vector<8xf32>
    %663 = vector.shape_cast %662 : vector<8xf32> to vector<8x1xf32>
    %664 = tpu.reciprocal %663 {approx = true} : vector<8x1xf32> -> vector<8x1xf32>
    %665 = vector.broadcast %664 : vector<8x1xf32> to vector<8x8xf32>
    %666 = arith.mulf %661, %665 : vector<8x8xf32>
    %667 = arith.truncf %666 : vector<8x8xf32> to vector<8x8xbf16>
    %cst_255 = arith.constant dense<0.000000e+00> : vector<8x8xf32>
    %668 = tpu.matmul %667, %655, %cst_255 {dimension_numbers = #tpu.dot_dimension_numbers<[1], [0], [0], [1], [0, 0, 1, 1], [], []>} : vector<8x8xbf16>, vector<8x8xbf16>, vector<8x8xf32> -> vector<8x8xf32>
    %669 = arith.truncf %668 : vector<8x8xf32> to vector<8x8xbf16>
    %670 = vector.extract_strided_slice %609 {offsets = [1, 0, 0], sizes = [1, 8, 32], strides = [1, 1, 1]} : vector<4x8x32xbf16> to vector<1x8x32xbf16>
    %671 = vector.shape_cast %670 : vector<1x8x32xbf16> to vector<8x32xbf16>
    %cst_256 = arith.constant dense<0.000000e+00> : vector<8x32xf32>
    %672 = tpu.matmul %669, %671, %cst_256 {dimension_numbers = #tpu.dot_dimension_numbers<[1], [0], [0], [1], [0, 0, 1, 1], [], []>} : vector<8x8xbf16>, vector<8x32xbf16>, vector<8x32xf32> -> vector<8x32xf32>
    %673 = arith.addf %649, %672 : vector<8x32xf32>
    %674 = vector.extract_strided_slice %619 {offsets = [0, 16], sizes = [8, 8], strides = [1, 1]} : vector<8x32xf32> to vector<8x8xf32>
    %675 = arith.truncf %674 : vector<8x8xf32> to vector<8x8xbf16>
    %676 = vector.extract_strided_slice %623 {offsets = [0, 16], sizes = [8, 8], strides = [1, 1]} : vector<8x32xf32> to vector<8x8xf32>
    %677 = arith.truncf %676 : vector<8x8xf32> to vector<8x8xbf16>
    %678 = vector.extract_strided_slice %624 {offsets = [0, 16], sizes = [8, 8], strides = [1, 1]} : vector<8x32xf32> to vector<8x8xf32>
    %679 = arith.truncf %678 : vector<8x8xf32> to vector<8x8xbf16>
    %cst_257 = arith.constant dense<0.000000e+00> : vector<8x8xf32>
    %680 = tpu.matmul %675, %677, %cst_257 {dimension_numbers = #tpu.dot_dimension_numbers<[1], [1], [0], [0], [0, 0, 1, 0], [], []>} : vector<8x8xbf16>, vector<8x8xbf16>, vector<8x8xf32> -> vector<8x8xf32>
    %cst_258 = arith.constant dense<0xFF800000> : vector<8xf32>
    %681 = vector.multi_reduction <maximumf>, %680, %cst_258 [1] : vector<8x8xf32> to vector<8xf32>
    %682 = vector.shape_cast %681 : vector<8xf32> to vector<8x1xf32>
    %683 = vector.broadcast %682 : vector<8x1xf32> to vector<8x8xf32>
    %684 = arith.subf %680, %683 : vector<8x8xf32>
    %685 = math.exp %684 : vector<8x8xf32>
    %cst_259 = arith.constant dense<0.000000e+00> : vector<8xf32>
    %686 = vector.multi_reduction <add>, %685, %cst_259 [1] : vector<8x8xf32> to vector<8xf32>
    %687 = vector.shape_cast %686 : vector<8xf32> to vector<8x1xf32>
    %688 = tpu.reciprocal %687 {approx = true} : vector<8x1xf32> -> vector<8x1xf32>
    %689 = vector.broadcast %688 : vector<8x1xf32> to vector<8x8xf32>
    %690 = arith.mulf %685, %689 : vector<8x8xf32>
    %691 = arith.truncf %690 : vector<8x8xf32> to vector<8x8xbf16>
    %cst_260 = arith.constant dense<0.000000e+00> : vector<8x8xf32>
    %692 = tpu.matmul %691, %679, %cst_260 {dimension_numbers = #tpu.dot_dimension_numbers<[1], [0], [0], [1], [0, 0, 1, 1], [], []>} : vector<8x8xbf16>, vector<8x8xbf16>, vector<8x8xf32> -> vector<8x8xf32>
    %693 = arith.truncf %692 : vector<8x8xf32> to vector<8x8xbf16>
    %694 = vector.extract_strided_slice %609 {offsets = [2, 0, 0], sizes = [1, 8, 32], strides = [1, 1, 1]} : vector<4x8x32xbf16> to vector<1x8x32xbf16>
    %695 = vector.shape_cast %694 : vector<1x8x32xbf16> to vector<8x32xbf16>
    %cst_261 = arith.constant dense<0.000000e+00> : vector<8x32xf32>
    %696 = tpu.matmul %693, %695, %cst_261 {dimension_numbers = #tpu.dot_dimension_numbers<[1], [0], [0], [1], [0, 0, 1, 1], [], []>} : vector<8x8xbf16>, vector<8x32xbf16>, vector<8x32xf32> -> vector<8x32xf32>
    %697 = arith.addf %673, %696 : vector<8x32xf32>
    %698 = vector.extract_strided_slice %619 {offsets = [0, 24], sizes = [8, 8], strides = [1, 1]} : vector<8x32xf32> to vector<8x8xf32>
    %699 = arith.truncf %698 : vector<8x8xf32> to vector<8x8xbf16>
    %700 = vector.extract_strided_slice %623 {offsets = [0, 24], sizes = [8, 8], strides = [1, 1]} : vector<8x32xf32> to vector<8x8xf32>
    %701 = arith.truncf %700 : vector<8x8xf32> to vector<8x8xbf16>
    %702 = vector.extract_strided_slice %624 {offsets = [0, 24], sizes = [8, 8], strides = [1, 1]} : vector<8x32xf32> to vector<8x8xf32>
    %703 = arith.truncf %702 : vector<8x8xf32> to vector<8x8xbf16>
    %cst_262 = arith.constant dense<0.000000e+00> : vector<8x8xf32>
    %704 = tpu.matmul %699, %701, %cst_262 {dimension_numbers = #tpu.dot_dimension_numbers<[1], [1], [0], [0], [0, 0, 1, 0], [], []>} : vector<8x8xbf16>, vector<8x8xbf16>, vector<8x8xf32> -> vector<8x8xf32>
    %cst_263 = arith.constant dense<0xFF800000> : vector<8xf32>
    %705 = vector.multi_reduction <maximumf>, %704, %cst_263 [1] : vector<8x8xf32> to vector<8xf32>
    %706 = vector.shape_cast %705 : vector<8xf32> to vector<8x1xf32>
    %707 = vector.broadcast %706 : vector<8x1xf32> to vector<8x8xf32>
    %708 = arith.subf %704, %707 : vector<8x8xf32>
    %709 = math.exp %708 : vector<8x8xf32>
    %cst_264 = arith.constant dense<0.000000e+00> : vector<8xf32>
    %710 = vector.multi_reduction <add>, %709, %cst_264 [1] : vector<8x8xf32> to vector<8xf32>
    %711 = vector.shape_cast %710 : vector<8xf32> to vector<8x1xf32>
    %712 = tpu.reciprocal %711 {approx = true} : vector<8x1xf32> -> vector<8x1xf32>
    %713 = vector.broadcast %712 : vector<8x1xf32> to vector<8x8xf32>
    %714 = arith.mulf %709, %713 : vector<8x8xf32>
    %715 = arith.truncf %714 : vector<8x8xf32> to vector<8x8xbf16>
    %cst_265 = arith.constant dense<0.000000e+00> : vector<8x8xf32>
    %716 = tpu.matmul %715, %703, %cst_265 {dimension_numbers = #tpu.dot_dimension_numbers<[1], [0], [0], [1], [0, 0, 1, 1], [], []>} : vector<8x8xbf16>, vector<8x8xbf16>, vector<8x8xf32> -> vector<8x8xf32>
    %717 = arith.truncf %716 : vector<8x8xf32> to vector<8x8xbf16>
    %718 = vector.extract_strided_slice %609 {offsets = [3, 0, 0], sizes = [1, 8, 32], strides = [1, 1, 1]} : vector<4x8x32xbf16> to vector<1x8x32xbf16>
    %719 = vector.shape_cast %718 : vector<1x8x32xbf16> to vector<8x32xbf16>
    %cst_266 = arith.constant dense<0.000000e+00> : vector<8x32xf32>
    %720 = tpu.matmul %717, %719, %cst_266 {dimension_numbers = #tpu.dot_dimension_numbers<[1], [0], [0], [1], [0, 0, 1, 1], [], []>} : vector<8x8xbf16>, vector<8x32xbf16>, vector<8x32xf32> -> vector<8x32xf32>
    %721 = arith.addf %697, %720 : vector<8x32xf32>
    %722 = vector.broadcast %611 : vector<1x32xf32> to vector<8x32xf32>
    %723 = arith.addf %721, %722 : vector<8x32xf32>
    %724 = arith.addf %723, %599 : vector<8x32xf32>
    %cst_267 = arith.constant dense<0.000000e+00> : vector<8xf32>
    %725 = vector.multi_reduction <add>, %724, %cst_267 [1] : vector<8x32xf32> to vector<8xf32>
    %726 = vector.shape_cast %725 : vector<8xf32> to vector<8x1xf32>
    %cst_268 = arith.constant 3.200000e+01 : f32
    %727 = vector.broadcast %cst_268 : f32 to vector<8x1xf32>
    %728 = arith.divf %726, %727 : vector<8x1xf32>
    %729 = vector.broadcast %728 : vector<8x1xf32> to vector<8x32xf32>
    %730 = arith.subf %724, %729 : vector<8x32xf32>
    %731 = arith.mulf %730, %730 : vector<8x32xf32>
    %cst_269 = arith.constant dense<0.000000e+00> : vector<8xf32>
    %732 = vector.multi_reduction <add>, %731, %cst_269 [1] : vector<8x32xf32> to vector<8xf32>
    %733 = vector.shape_cast %732 : vector<8xf32> to vector<8x1xf32>
    %cst_270 = arith.constant 3.200000e+01 : f32
    %734 = vector.broadcast %cst_270 : f32 to vector<8x1xf32>
    %735 = arith.divf %733, %734 : vector<8x1xf32>
    %736 = vector.broadcast %728 : vector<8x1xf32> to vector<8x32xf32>
    %737 = arith.subf %724, %736 : vector<8x32xf32>
    %cst_271 = arith.constant 9.99999974E-6 : f32
    %738 = vector.broadcast %cst_271 : f32 to vector<8x1xf32>
    %739 = arith.addf %735, %738 : vector<8x1xf32>
    %740 = math.rsqrt %739 : vector<8x1xf32>
    %741 = vector.broadcast %740 : vector<8x1xf32> to vector<8x32xf32>
    %742 = arith.mulf %737, %741 : vector<8x32xf32>
    %743 = vector.broadcast %613 : vector<1x32xf32> to vector<8x32xf32>
    %744 = arith.mulf %742, %743 : vector<8x32xf32>
    %745 = vector.broadcast %615 : vector<1x32xf32> to vector<8x32xf32>
    %746 = arith.addf %744, %745 : vector<8x32xf32>
    %c0_272 = arith.constant 0 : index
    %c0_273 = arith.constant 0 : index
    %c0_274 = arith.constant 0 : index
    %747 = vector.load %arg33[%c0_272, %c0_273, %c0_274] : memref<2x32x64xbf16, #tpu.memory_space<vmem>>, vector<1x32x64xbf16>
    %748 = vector.shape_cast %747 : vector<1x32x64xbf16> to vector<32x64xbf16>
    %c0_275 = arith.constant 0 : index
    %c0_276 = arith.constant 0 : index
    %c0_277 = arith.constant 0 : index
    %749 = vector.load %arg34[%c0_275, %c0_276, %c0_277] : memref<2x1x64xf32, #tpu.memory_space<vmem>>, vector<1x1x64xf32>
    %750 = vector.shape_cast %749 : vector<1x1x64xf32> to vector<1x64xf32>
    %c0_278 = arith.constant 0 : index
    %c0_279 = arith.constant 0 : index
    %c0_280 = arith.constant 0 : index
    %751 = vector.load %arg35[%c0_278, %c0_279, %c0_280] : memref<2x64x32xbf16, #tpu.memory_space<vmem>>, vector<1x64x32xbf16>
    %752 = vector.shape_cast %751 : vector<1x64x32xbf16> to vector<64x32xbf16>
    %c0_281 = arith.constant 0 : index
    %c0_282 = arith.constant 0 : index
    %c0_283 = arith.constant 0 : index
    %753 = vector.load %arg36[%c0_281, %c0_282, %c0_283] : memref<2x1x32xf32, #tpu.memory_space<vmem>>, vector<1x1x32xf32>
    %754 = vector.shape_cast %753 : vector<1x1x32xf32> to vector<1x32xf32>
    %c0_284 = arith.constant 0 : index
    %c0_285 = arith.constant 0 : index
    %c0_286 = arith.constant 0 : index
    %755 = vector.load %arg37[%c0_284, %c0_285, %c0_286] : memref<2x1x32xf32, #tpu.memory_space<vmem>>, vector<1x1x32xf32>
    %756 = vector.shape_cast %755 : vector<1x1x32xf32> to vector<1x32xf32>
    %c0_287 = arith.constant 0 : index
    %c0_288 = arith.constant 0 : index
    %c0_289 = arith.constant 0 : index
    %757 = vector.load %arg38[%c0_287, %c0_288, %c0_289] : memref<2x1x32xf32, #tpu.memory_space<vmem>>, vector<1x1x32xf32>
    %758 = vector.shape_cast %757 : vector<1x1x32xf32> to vector<1x32xf32>
    %759 = arith.truncf %746 : vector<8x32xf32> to vector<8x32xbf16>
    %cst_290 = arith.constant dense<0.000000e+00> : vector<8x64xf32>
    %760 = tpu.matmul %759, %748, %cst_290 {dimension_numbers = #tpu.dot_dimension_numbers<[1], [0], [0], [1], [0, 0, 1, 1], [], []>} : vector<8x32xbf16>, vector<32x64xbf16>, vector<8x64xf32> -> vector<8x64xf32>
    %761 = vector.broadcast %750 : vector<1x64xf32> to vector<8x64xf32>
    %762 = arith.addf %760, %761 : vector<8x64xf32>
    %cst_291 = arith.constant 5.000000e-01 : f32
    %763 = vector.broadcast %cst_291 : f32 to vector<8x64xf32>
    %764 = arith.mulf %763, %762 : vector<8x64xf32>
    %cst_292 = arith.constant 4.471500e-02 : f32
    %765 = vector.broadcast %cst_292 : f32 to vector<8x64xf32>
    %766 = arith.mulf %765, %762 : vector<8x64xf32>
    %767 = arith.mulf %766, %762 : vector<8x64xf32>
    %768 = arith.mulf %767, %762 : vector<8x64xf32>
    %769 = arith.addf %762, %768 : vector<8x64xf32>
    %cst_293 = arith.constant 0.797884583 : f32
    %770 = vector.broadcast %cst_293 : f32 to vector<8x64xf32>
    %771 = arith.mulf %770, %769 : vector<8x64xf32>
    %772 = math.tanh %771 : vector<8x64xf32>
    %cst_294 = arith.constant 1.000000e+00 : f32
    %773 = vector.broadcast %cst_294 : f32 to vector<8x64xf32>
    %774 = arith.addf %773, %772 : vector<8x64xf32>
    %775 = arith.mulf %764, %774 : vector<8x64xf32>
    %776 = arith.truncf %775 : vector<8x64xf32> to vector<8x64xbf16>
    %cst_295 = arith.constant dense<0.000000e+00> : vector<8x32xf32>
    %777 = tpu.matmul %776, %752, %cst_295 {dimension_numbers = #tpu.dot_dimension_numbers<[1], [0], [0], [1], [0, 0, 1, 1], [], []>} : vector<8x64xbf16>, vector<64x32xbf16>, vector<8x32xf32> -> vector<8x32xf32>
    %778 = vector.broadcast %754 : vector<1x32xf32> to vector<8x32xf32>
    %779 = arith.addf %777, %778 : vector<8x32xf32>
    %780 = arith.addf %779, %746 : vector<8x32xf32>
    %cst_296 = arith.constant dense<0.000000e+00> : vector<8xf32>
    %781 = vector.multi_reduction <add>, %780, %cst_296 [1] : vector<8x32xf32> to vector<8xf32>
    %782 = vector.shape_cast %781 : vector<8xf32> to vector<8x1xf32>
    %cst_297 = arith.constant 3.200000e+01 : f32
    %783 = vector.broadcast %cst_297 : f32 to vector<8x1xf32>
    %784 = arith.divf %782, %783 : vector<8x1xf32>
    %785 = vector.broadcast %784 : vector<8x1xf32> to vector<8x32xf32>
    %786 = arith.subf %780, %785 : vector<8x32xf32>
    %787 = arith.mulf %786, %786 : vector<8x32xf32>
    %cst_298 = arith.constant dense<0.000000e+00> : vector<8xf32>
    %788 = vector.multi_reduction <add>, %787, %cst_298 [1] : vector<8x32xf32> to vector<8xf32>
    %789 = vector.shape_cast %788 : vector<8xf32> to vector<8x1xf32>
    %cst_299 = arith.constant 3.200000e+01 : f32
    %790 = vector.broadcast %cst_299 : f32 to vector<8x1xf32>
    %791 = arith.divf %789, %790 : vector<8x1xf32>
    %792 = vector.broadcast %784 : vector<8x1xf32> to vector<8x32xf32>
    %793 = arith.subf %780, %792 : vector<8x32xf32>
    %cst_300 = arith.constant 9.99999974E-6 : f32
    %794 = vector.broadcast %cst_300 : f32 to vector<8x1xf32>
    %795 = arith.addf %791, %794 : vector<8x1xf32>
    %796 = math.rsqrt %795 : vector<8x1xf32>
    %797 = vector.broadcast %796 : vector<8x1xf32> to vector<8x32xf32>
    %798 = arith.mulf %793, %797 : vector<8x32xf32>
    %799 = vector.broadcast %756 : vector<1x32xf32> to vector<8x32xf32>
    %800 = arith.mulf %798, %799 : vector<8x32xf32>
    %801 = vector.broadcast %758 : vector<1x32xf32> to vector<8x32xf32>
    %802 = arith.addf %800, %801 : vector<8x32xf32>
    %c1_301 = arith.constant 1 : index
    %c0_302 = arith.constant 0 : index
    %c0_303 = arith.constant 0 : index
    %803 = vector.load %arg19[%c1_301, %c0_302, %c0_303] : memref<2x32x96xbf16, #tpu.memory_space<vmem>>, vector<1x32x96xbf16>
    %804 = vector.shape_cast %803 : vector<1x32x96xbf16> to vector<32x96xbf16>
    %c1_304 = arith.constant 1 : index
    %c0_305 = arith.constant 0 : index
    %c0_306 = arith.constant 0 : index
    %805 = vector.load %arg20[%c1_304, %c0_305, %c0_306] : memref<2x1x96xf32, #tpu.memory_space<vmem>>, vector<1x1x96xf32>
    %806 = vector.shape_cast %805 : vector<1x1x96xf32> to vector<1x96xf32>
    %c1_307 = arith.constant 1 : index
    %c0_308 = arith.constant 0 : index
    %c0_309 = arith.constant 0 : index
    %c0_310 = arith.constant 0 : index
    %807 = vector.load %arg21[%c1_307, %c0_308, %c0_309, %c0_310] : memref<2x4x8x32xbf16, #tpu.memory_space<vmem>>, vector<1x4x8x32xbf16>
    %808 = vector.shape_cast %807 : vector<1x4x8x32xbf16> to vector<4x8x32xbf16>
    %c1_311 = arith.constant 1 : index
    %c0_312 = arith.constant 0 : index
    %c0_313 = arith.constant 0 : index
    %809 = vector.load %arg22[%c1_311, %c0_312, %c0_313] : memref<2x1x32xf32, #tpu.memory_space<vmem>>, vector<1x1x32xf32>
    %810 = vector.shape_cast %809 : vector<1x1x32xf32> to vector<1x32xf32>
    %c1_314 = arith.constant 1 : index
    %c0_315 = arith.constant 0 : index
    %c0_316 = arith.constant 0 : index
    %811 = vector.load %arg23[%c1_314, %c0_315, %c0_316] : memref<2x1x32xf32, #tpu.memory_space<vmem>>, vector<1x1x32xf32>
    %812 = vector.shape_cast %811 : vector<1x1x32xf32> to vector<1x32xf32>
    %c1_317 = arith.constant 1 : index
    %c0_318 = arith.constant 0 : index
    %c0_319 = arith.constant 0 : index
    %813 = vector.load %arg24[%c1_317, %c0_318, %c0_319] : memref<2x1x32xf32, #tpu.memory_space<vmem>>, vector<1x1x32xf32>
    %814 = vector.shape_cast %813 : vector<1x1x32xf32> to vector<1x32xf32>
    %815 = arith.truncf %802 : vector<8x32xf32> to vector<8x32xbf16>
    %cst_320 = arith.constant dense<0.000000e+00> : vector<8x96xf32>
    %816 = tpu.matmul %815, %804, %cst_320 {dimension_numbers = #tpu.dot_dimension_numbers<[1], [0], [0], [1], [0, 0, 1, 1], [], []>} : vector<8x32xbf16>, vector<32x96xbf16>, vector<8x96xf32> -> vector<8x96xf32>
    %817 = vector.broadcast %806 : vector<1x96xf32> to vector<8x96xf32>
    %818 = arith.addf %816, %817 : vector<8x96xf32>
    %819 = vector.extract_strided_slice %818 {offsets = [0, 0], sizes = [8, 32], strides = [1, 1]} : vector<8x96xf32> to vector<8x32xf32>
    %820 = vector.extract_strided_slice %818 {offsets = [0, 32], sizes = [8, 32], strides = [1, 1]} : vector<8x96xf32> to vector<8x32xf32>
    %821 = vector.extract_strided_slice %818 {offsets = [0, 64], sizes = [8, 32], strides = [1, 1]} : vector<8x96xf32> to vector<8x32xf32>
    %cst_321 = arith.constant 0.000000e+00 : f32
    %822 = vector.broadcast %cst_321 : f32 to vector<8x32xf32>
    %823 = vector.extract_strided_slice %819 {offsets = [0, 0], sizes = [8, 8], strides = [1, 1]} : vector<8x32xf32> to vector<8x8xf32>
    %824 = arith.truncf %823 : vector<8x8xf32> to vector<8x8xbf16>
    %825 = vector.extract_strided_slice %820 {offsets = [0, 0], sizes = [8, 8], strides = [1, 1]} : vector<8x32xf32> to vector<8x8xf32>
    %826 = arith.truncf %825 : vector<8x8xf32> to vector<8x8xbf16>
    %827 = vector.extract_strided_slice %821 {offsets = [0, 0], sizes = [8, 8], strides = [1, 1]} : vector<8x32xf32> to vector<8x8xf32>
    %828 = arith.truncf %827 : vector<8x8xf32> to vector<8x8xbf16>
    %cst_322 = arith.constant dense<0.000000e+00> : vector<8x8xf32>
    %829 = tpu.matmul %824, %826, %cst_322 {dimension_numbers = #tpu.dot_dimension_numbers<[1], [1], [0], [0], [0, 0, 1, 0], [], []>} : vector<8x8xbf16>, vector<8x8xbf16>, vector<8x8xf32> -> vector<8x8xf32>
    %830 = arith.addf %829, %427 : vector<8x8xf32>
    %cst_323 = arith.constant dense<0xFF800000> : vector<8xf32>
    %831 = vector.multi_reduction <maximumf>, %830, %cst_323 [1] : vector<8x8xf32> to vector<8xf32>
    %832 = vector.shape_cast %831 : vector<8xf32> to vector<8x1xf32>
    %833 = vector.broadcast %832 : vector<8x1xf32> to vector<8x8xf32>
    %834 = arith.subf %830, %833 : vector<8x8xf32>
    %835 = math.exp %834 : vector<8x8xf32>
    %cst_324 = arith.constant dense<0.000000e+00> : vector<8xf32>
    %836 = vector.multi_reduction <add>, %835, %cst_324 [1] : vector<8x8xf32> to vector<8xf32>
    %837 = vector.shape_cast %836 : vector<8xf32> to vector<8x1xf32>
    %838 = tpu.reciprocal %837 {approx = true} : vector<8x1xf32> -> vector<8x1xf32>
    %839 = vector.broadcast %838 : vector<8x1xf32> to vector<8x8xf32>
    %840 = arith.mulf %835, %839 : vector<8x8xf32>
    %841 = arith.truncf %840 : vector<8x8xf32> to vector<8x8xbf16>
    %cst_325 = arith.constant dense<0.000000e+00> : vector<8x8xf32>
    %842 = tpu.matmul %841, %828, %cst_325 {dimension_numbers = #tpu.dot_dimension_numbers<[1], [0], [0], [1], [0, 0, 1, 1], [], []>} : vector<8x8xbf16>, vector<8x8xbf16>, vector<8x8xf32> -> vector<8x8xf32>
    %843 = arith.truncf %842 : vector<8x8xf32> to vector<8x8xbf16>
    %844 = vector.extract_strided_slice %808 {offsets = [0, 0, 0], sizes = [1, 8, 32], strides = [1, 1, 1]} : vector<4x8x32xbf16> to vector<1x8x32xbf16>
    %845 = vector.shape_cast %844 : vector<1x8x32xbf16> to vector<8x32xbf16>
    %cst_326 = arith.constant dense<0.000000e+00> : vector<8x32xf32>
    %846 = tpu.matmul %843, %845, %cst_326 {dimension_numbers = #tpu.dot_dimension_numbers<[1], [0], [0], [1], [0, 0, 1, 1], [], []>} : vector<8x8xbf16>, vector<8x32xbf16>, vector<8x32xf32> -> vector<8x32xf32>
    %847 = arith.addf %822, %846 : vector<8x32xf32>
    %848 = vector.extract_strided_slice %819 {offsets = [0, 8], sizes = [8, 8], strides = [1, 1]} : vector<8x32xf32> to vector<8x8xf32>
    %849 = arith.truncf %848 : vector<8x8xf32> to vector<8x8xbf16>
    %850 = vector.extract_strided_slice %820 {offsets = [0, 8], sizes = [8, 8], strides = [1, 1]} : vector<8x32xf32> to vector<8x8xf32>
    %851 = arith.truncf %850 : vector<8x8xf32> to vector<8x8xbf16>
    %852 = vector.extract_strided_slice %821 {offsets = [0, 8], sizes = [8, 8], strides = [1, 1]} : vector<8x32xf32> to vector<8x8xf32>
    %853 = arith.truncf %852 : vector<8x8xf32> to vector<8x8xbf16>
    %cst_327 = arith.constant dense<0.000000e+00> : vector<8x8xf32>
    %854 = tpu.matmul %849, %851, %cst_327 {dimension_numbers = #tpu.dot_dimension_numbers<[1], [1], [0], [0], [0, 0, 1, 0], [], []>} : vector<8x8xbf16>, vector<8x8xbf16>, vector<8x8xf32> -> vector<8x8xf32>
    %855 = arith.addf %854, %427 : vector<8x8xf32>
    %cst_328 = arith.constant dense<0xFF800000> : vector<8xf32>
    %856 = vector.multi_reduction <maximumf>, %855, %cst_328 [1] : vector<8x8xf32> to vector<8xf32>
    %857 = vector.shape_cast %856 : vector<8xf32> to vector<8x1xf32>
    %858 = vector.broadcast %857 : vector<8x1xf32> to vector<8x8xf32>
    %859 = arith.subf %855, %858 : vector<8x8xf32>
    %860 = math.exp %859 : vector<8x8xf32>
    %cst_329 = arith.constant dense<0.000000e+00> : vector<8xf32>
    %861 = vector.multi_reduction <add>, %860, %cst_329 [1] : vector<8x8xf32> to vector<8xf32>
    %862 = vector.shape_cast %861 : vector<8xf32> to vector<8x1xf32>
    %863 = tpu.reciprocal %862 {approx = true} : vector<8x1xf32> -> vector<8x1xf32>
    %864 = vector.broadcast %863 : vector<8x1xf32> to vector<8x8xf32>
    %865 = arith.mulf %860, %864 : vector<8x8xf32>
    %866 = arith.truncf %865 : vector<8x8xf32> to vector<8x8xbf16>
    %cst_330 = arith.constant dense<0.000000e+00> : vector<8x8xf32>
    %867 = tpu.matmul %866, %853, %cst_330 {dimension_numbers = #tpu.dot_dimension_numbers<[1], [0], [0], [1], [0, 0, 1, 1], [], []>} : vector<8x8xbf16>, vector<8x8xbf16>, vector<8x8xf32> -> vector<8x8xf32>
    %868 = arith.truncf %867 : vector<8x8xf32> to vector<8x8xbf16>
    %869 = vector.extract_strided_slice %808 {offsets = [1, 0, 0], sizes = [1, 8, 32], strides = [1, 1, 1]} : vector<4x8x32xbf16> to vector<1x8x32xbf16>
    %870 = vector.shape_cast %869 : vector<1x8x32xbf16> to vector<8x32xbf16>
    %cst_331 = arith.constant dense<0.000000e+00> : vector<8x32xf32>
    %871 = tpu.matmul %868, %870, %cst_331 {dimension_numbers = #tpu.dot_dimension_numbers<[1], [0], [0], [1], [0, 0, 1, 1], [], []>} : vector<8x8xbf16>, vector<8x32xbf16>, vector<8x32xf32> -> vector<8x32xf32>
    %872 = arith.addf %847, %871 : vector<8x32xf32>
    %873 = vector.extract_strided_slice %819 {offsets = [0, 16], sizes = [8, 8], strides = [1, 1]} : vector<8x32xf32> to vector<8x8xf32>
    %874 = arith.truncf %873 : vector<8x8xf32> to vector<8x8xbf16>
    %875 = vector.extract_strided_slice %820 {offsets = [0, 16], sizes = [8, 8], strides = [1, 1]} : vector<8x32xf32> to vector<8x8xf32>
    %876 = arith.truncf %875 : vector<8x8xf32> to vector<8x8xbf16>
    %877 = vector.extract_strided_slice %821 {offsets = [0, 16], sizes = [8, 8], strides = [1, 1]} : vector<8x32xf32> to vector<8x8xf32>
    %878 = arith.truncf %877 : vector<8x8xf32> to vector<8x8xbf16>
    %cst_332 = arith.constant dense<0.000000e+00> : vector<8x8xf32>
    %879 = tpu.matmul %874, %876, %cst_332 {dimension_numbers = #tpu.dot_dimension_numbers<[1], [1], [0], [0], [0, 0, 1, 0], [], []>} : vector<8x8xbf16>, vector<8x8xbf16>, vector<8x8xf32> -> vector<8x8xf32>
    %880 = arith.addf %879, %427 : vector<8x8xf32>
    %cst_333 = arith.constant dense<0xFF800000> : vector<8xf32>
    %881 = vector.multi_reduction <maximumf>, %880, %cst_333 [1] : vector<8x8xf32> to vector<8xf32>
    %882 = vector.shape_cast %881 : vector<8xf32> to vector<8x1xf32>
    %883 = vector.broadcast %882 : vector<8x1xf32> to vector<8x8xf32>
    %884 = arith.subf %880, %883 : vector<8x8xf32>
    %885 = math.exp %884 : vector<8x8xf32>
    %cst_334 = arith.constant dense<0.000000e+00> : vector<8xf32>
    %886 = vector.multi_reduction <add>, %885, %cst_334 [1] : vector<8x8xf32> to vector<8xf32>
    %887 = vector.shape_cast %886 : vector<8xf32> to vector<8x1xf32>
    %888 = tpu.reciprocal %887 {approx = true} : vector<8x1xf32> -> vector<8x1xf32>
    %889 = vector.broadcast %888 : vector<8x1xf32> to vector<8x8xf32>
    %890 = arith.mulf %885, %889 : vector<8x8xf32>
    %891 = arith.truncf %890 : vector<8x8xf32> to vector<8x8xbf16>
    %cst_335 = arith.constant dense<0.000000e+00> : vector<8x8xf32>
    %892 = tpu.matmul %891, %878, %cst_335 {dimension_numbers = #tpu.dot_dimension_numbers<[1], [0], [0], [1], [0, 0, 1, 1], [], []>} : vector<8x8xbf16>, vector<8x8xbf16>, vector<8x8xf32> -> vector<8x8xf32>
    %893 = arith.truncf %892 : vector<8x8xf32> to vector<8x8xbf16>
    %894 = vector.extract_strided_slice %808 {offsets = [2, 0, 0], sizes = [1, 8, 32], strides = [1, 1, 1]} : vector<4x8x32xbf16> to vector<1x8x32xbf16>
    %895 = vector.shape_cast %894 : vector<1x8x32xbf16> to vector<8x32xbf16>
    %cst_336 = arith.constant dense<0.000000e+00> : vector<8x32xf32>
    %896 = tpu.matmul %893, %895, %cst_336 {dimension_numbers = #tpu.dot_dimension_numbers<[1], [0], [0], [1], [0, 0, 1, 1], [], []>} : vector<8x8xbf16>, vector<8x32xbf16>, vector<8x32xf32> -> vector<8x32xf32>
    %897 = arith.addf %872, %896 : vector<8x32xf32>
    %898 = vector.extract_strided_slice %819 {offsets = [0, 24], sizes = [8, 8], strides = [1, 1]} : vector<8x32xf32> to vector<8x8xf32>
    %899 = arith.truncf %898 : vector<8x8xf32> to vector<8x8xbf16>
    %900 = vector.extract_strided_slice %820 {offsets = [0, 24], sizes = [8, 8], strides = [1, 1]} : vector<8x32xf32> to vector<8x8xf32>
    %901 = arith.truncf %900 : vector<8x8xf32> to vector<8x8xbf16>
    %902 = vector.extract_strided_slice %821 {offsets = [0, 24], sizes = [8, 8], strides = [1, 1]} : vector<8x32xf32> to vector<8x8xf32>
    %903 = arith.truncf %902 : vector<8x8xf32> to vector<8x8xbf16>
    %cst_337 = arith.constant dense<0.000000e+00> : vector<8x8xf32>
    %904 = tpu.matmul %899, %901, %cst_337 {dimension_numbers = #tpu.dot_dimension_numbers<[1], [1], [0], [0], [0, 0, 1, 0], [], []>} : vector<8x8xbf16>, vector<8x8xbf16>, vector<8x8xf32> -> vector<8x8xf32>
    %905 = arith.addf %904, %427 : vector<8x8xf32>
    %cst_338 = arith.constant dense<0xFF800000> : vector<8xf32>
    %906 = vector.multi_reduction <maximumf>, %905, %cst_338 [1] : vector<8x8xf32> to vector<8xf32>
    %907 = vector.shape_cast %906 : vector<8xf32> to vector<8x1xf32>
    %908 = vector.broadcast %907 : vector<8x1xf32> to vector<8x8xf32>
    %909 = arith.subf %905, %908 : vector<8x8xf32>
    %910 = math.exp %909 : vector<8x8xf32>
    %cst_339 = arith.constant dense<0.000000e+00> : vector<8xf32>
    %911 = vector.multi_reduction <add>, %910, %cst_339 [1] : vector<8x8xf32> to vector<8xf32>
    %912 = vector.shape_cast %911 : vector<8xf32> to vector<8x1xf32>
    %913 = tpu.reciprocal %912 {approx = true} : vector<8x1xf32> -> vector<8x1xf32>
    %914 = vector.broadcast %913 : vector<8x1xf32> to vector<8x8xf32>
    %915 = arith.mulf %910, %914 : vector<8x8xf32>
    %916 = arith.truncf %915 : vector<8x8xf32> to vector<8x8xbf16>
    %cst_340 = arith.constant dense<0.000000e+00> : vector<8x8xf32>
    %917 = tpu.matmul %916, %903, %cst_340 {dimension_numbers = #tpu.dot_dimension_numbers<[1], [0], [0], [1], [0, 0, 1, 1], [], []>} : vector<8x8xbf16>, vector<8x8xbf16>, vector<8x8xf32> -> vector<8x8xf32>
    %918 = arith.truncf %917 : vector<8x8xf32> to vector<8x8xbf16>
    %919 = vector.extract_strided_slice %808 {offsets = [3, 0, 0], sizes = [1, 8, 32], strides = [1, 1, 1]} : vector<4x8x32xbf16> to vector<1x8x32xbf16>
    %920 = vector.shape_cast %919 : vector<1x8x32xbf16> to vector<8x32xbf16>
    %cst_341 = arith.constant dense<0.000000e+00> : vector<8x32xf32>
    %921 = tpu.matmul %918, %920, %cst_341 {dimension_numbers = #tpu.dot_dimension_numbers<[1], [0], [0], [1], [0, 0, 1, 1], [], []>} : vector<8x8xbf16>, vector<8x32xbf16>, vector<8x32xf32> -> vector<8x32xf32>
    %922 = arith.addf %897, %921 : vector<8x32xf32>
    %923 = vector.broadcast %810 : vector<1x32xf32> to vector<8x32xf32>
    %924 = arith.addf %922, %923 : vector<8x32xf32>
    %925 = arith.addf %924, %802 : vector<8x32xf32>
    %cst_342 = arith.constant dense<0.000000e+00> : vector<8xf32>
    %926 = vector.multi_reduction <add>, %925, %cst_342 [1] : vector<8x32xf32> to vector<8xf32>
    %927 = vector.shape_cast %926 : vector<8xf32> to vector<8x1xf32>
    %cst_343 = arith.constant 3.200000e+01 : f32
    %928 = vector.broadcast %cst_343 : f32 to vector<8x1xf32>
    %929 = arith.divf %927, %928 : vector<8x1xf32>
    %930 = vector.broadcast %929 : vector<8x1xf32> to vector<8x32xf32>
    %931 = arith.subf %925, %930 : vector<8x32xf32>
    %932 = arith.mulf %931, %931 : vector<8x32xf32>
    %cst_344 = arith.constant dense<0.000000e+00> : vector<8xf32>
    %933 = vector.multi_reduction <add>, %932, %cst_344 [1] : vector<8x32xf32> to vector<8xf32>
    %934 = vector.shape_cast %933 : vector<8xf32> to vector<8x1xf32>
    %cst_345 = arith.constant 3.200000e+01 : f32
    %935 = vector.broadcast %cst_345 : f32 to vector<8x1xf32>
    %936 = arith.divf %934, %935 : vector<8x1xf32>
    %937 = vector.broadcast %929 : vector<8x1xf32> to vector<8x32xf32>
    %938 = arith.subf %925, %937 : vector<8x32xf32>
    %cst_346 = arith.constant 9.99999974E-6 : f32
    %939 = vector.broadcast %cst_346 : f32 to vector<8x1xf32>
    %940 = arith.addf %936, %939 : vector<8x1xf32>
    %941 = math.rsqrt %940 : vector<8x1xf32>
    %942 = vector.broadcast %941 : vector<8x1xf32> to vector<8x32xf32>
    %943 = arith.mulf %938, %942 : vector<8x32xf32>
    %944 = vector.broadcast %812 : vector<1x32xf32> to vector<8x32xf32>
    %945 = arith.mulf %943, %944 : vector<8x32xf32>
    %946 = vector.broadcast %814 : vector<1x32xf32> to vector<8x32xf32>
    %947 = arith.addf %945, %946 : vector<8x32xf32>
    %c1_347 = arith.constant 1 : index
    %c0_348 = arith.constant 0 : index
    %c0_349 = arith.constant 0 : index
    %948 = vector.load %arg25[%c1_347, %c0_348, %c0_349] : memref<2x32x32xbf16, #tpu.memory_space<vmem>>, vector<1x32x32xbf16>
    %949 = vector.shape_cast %948 : vector<1x32x32xbf16> to vector<32x32xbf16>
    %c1_350 = arith.constant 1 : index
    %c0_351 = arith.constant 0 : index
    %c0_352 = arith.constant 0 : index
    %950 = vector.load %arg26[%c1_350, %c0_351, %c0_352] : memref<2x1x32xf32, #tpu.memory_space<vmem>>, vector<1x1x32xf32>
    %951 = vector.shape_cast %950 : vector<1x1x32xf32> to vector<1x32xf32>
    %c1_353 = arith.constant 1 : index
    %c0_354 = arith.constant 0 : index
    %c0_355 = arith.constant 0 : index
    %952 = vector.load %arg27[%c1_353, %c0_354, %c0_355] : memref<2x32x64xbf16, #tpu.memory_space<vmem>>, vector<1x32x64xbf16>
    %953 = vector.shape_cast %952 : vector<1x32x64xbf16> to vector<32x64xbf16>
    %c1_356 = arith.constant 1 : index
    %c0_357 = arith.constant 0 : index
    %c0_358 = arith.constant 0 : index
    %954 = vector.load %arg28[%c1_356, %c0_357, %c0_358] : memref<2x1x64xf32, #tpu.memory_space<vmem>>, vector<1x1x64xf32>
    %955 = vector.shape_cast %954 : vector<1x1x64xf32> to vector<1x64xf32>
    %c1_359 = arith.constant 1 : index
    %c0_360 = arith.constant 0 : index
    %c0_361 = arith.constant 0 : index
    %c0_362 = arith.constant 0 : index
    %956 = vector.load %arg29[%c1_359, %c0_360, %c0_361, %c0_362] : memref<2x4x8x32xbf16, #tpu.memory_space<vmem>>, vector<1x4x8x32xbf16>
    %957 = vector.shape_cast %956 : vector<1x4x8x32xbf16> to vector<4x8x32xbf16>
    %c1_363 = arith.constant 1 : index
    %c0_364 = arith.constant 0 : index
    %c0_365 = arith.constant 0 : index
    %958 = vector.load %arg30[%c1_363, %c0_364, %c0_365] : memref<2x1x32xf32, #tpu.memory_space<vmem>>, vector<1x1x32xf32>
    %959 = vector.shape_cast %958 : vector<1x1x32xf32> to vector<1x32xf32>
    %c1_366 = arith.constant 1 : index
    %c0_367 = arith.constant 0 : index
    %c0_368 = arith.constant 0 : index
    %960 = vector.load %arg31[%c1_366, %c0_367, %c0_368] : memref<2x1x32xf32, #tpu.memory_space<vmem>>, vector<1x1x32xf32>
    %961 = vector.shape_cast %960 : vector<1x1x32xf32> to vector<1x32xf32>
    %c1_369 = arith.constant 1 : index
    %c0_370 = arith.constant 0 : index
    %c0_371 = arith.constant 0 : index
    %962 = vector.load %arg32[%c1_369, %c0_370, %c0_371] : memref<2x1x32xf32, #tpu.memory_space<vmem>>, vector<1x1x32xf32>
    %963 = vector.shape_cast %962 : vector<1x1x32xf32> to vector<1x32xf32>
    %964 = arith.truncf %947 : vector<8x32xf32> to vector<8x32xbf16>
    %cst_372 = arith.constant dense<0.000000e+00> : vector<8x32xf32>
    %965 = tpu.matmul %964, %949, %cst_372 {dimension_numbers = #tpu.dot_dimension_numbers<[1], [0], [0], [1], [0, 0, 1, 1], [], []>} : vector<8x32xbf16>, vector<32x32xbf16>, vector<8x32xf32> -> vector<8x32xf32>
    %966 = vector.broadcast %951 : vector<1x32xf32> to vector<8x32xf32>
    %967 = arith.addf %965, %966 : vector<8x32xf32>
    %cst_373 = arith.constant dense<0.000000e+00> : vector<8x64xf32>
    %968 = tpu.matmul %421, %953, %cst_373 {dimension_numbers = #tpu.dot_dimension_numbers<[1], [0], [0], [1], [0, 0, 1, 1], [], []>} : vector<8x32xbf16>, vector<32x64xbf16>, vector<8x64xf32> -> vector<8x64xf32>
    %969 = vector.broadcast %955 : vector<1x64xf32> to vector<8x64xf32>
    %970 = arith.addf %968, %969 : vector<8x64xf32>
    %971 = vector.extract_strided_slice %970 {offsets = [0, 0], sizes = [8, 32], strides = [1, 1]} : vector<8x64xf32> to vector<8x32xf32>
    %972 = vector.extract_strided_slice %970 {offsets = [0, 32], sizes = [8, 32], strides = [1, 1]} : vector<8x64xf32> to vector<8x32xf32>
    %cst_374 = arith.constant 0.000000e+00 : f32
    %973 = vector.broadcast %cst_374 : f32 to vector<8x32xf32>
    %974 = vector.extract_strided_slice %967 {offsets = [0, 0], sizes = [8, 8], strides = [1, 1]} : vector<8x32xf32> to vector<8x8xf32>
    %975 = arith.truncf %974 : vector<8x8xf32> to vector<8x8xbf16>
    %976 = vector.extract_strided_slice %971 {offsets = [0, 0], sizes = [8, 8], strides = [1, 1]} : vector<8x32xf32> to vector<8x8xf32>
    %977 = arith.truncf %976 : vector<8x8xf32> to vector<8x8xbf16>
    %978 = vector.extract_strided_slice %972 {offsets = [0, 0], sizes = [8, 8], strides = [1, 1]} : vector<8x32xf32> to vector<8x8xf32>
    %979 = arith.truncf %978 : vector<8x8xf32> to vector<8x8xbf16>
    %cst_375 = arith.constant dense<0.000000e+00> : vector<8x8xf32>
    %980 = tpu.matmul %975, %977, %cst_375 {dimension_numbers = #tpu.dot_dimension_numbers<[1], [1], [0], [0], [0, 0, 1, 0], [], []>} : vector<8x8xbf16>, vector<8x8xbf16>, vector<8x8xf32> -> vector<8x8xf32>
    %cst_376 = arith.constant dense<0xFF800000> : vector<8xf32>
    %981 = vector.multi_reduction <maximumf>, %980, %cst_376 [1] : vector<8x8xf32> to vector<8xf32>
    %982 = vector.shape_cast %981 : vector<8xf32> to vector<8x1xf32>
    %983 = vector.broadcast %982 : vector<8x1xf32> to vector<8x8xf32>
    %984 = arith.subf %980, %983 : vector<8x8xf32>
    %985 = math.exp %984 : vector<8x8xf32>
    %cst_377 = arith.constant dense<0.000000e+00> : vector<8xf32>
    %986 = vector.multi_reduction <add>, %985, %cst_377 [1] : vector<8x8xf32> to vector<8xf32>
    %987 = vector.shape_cast %986 : vector<8xf32> to vector<8x1xf32>
    %988 = tpu.reciprocal %987 {approx = true} : vector<8x1xf32> -> vector<8x1xf32>
    %989 = vector.broadcast %988 : vector<8x1xf32> to vector<8x8xf32>
    %990 = arith.mulf %985, %989 : vector<8x8xf32>
    %991 = arith.truncf %990 : vector<8x8xf32> to vector<8x8xbf16>
    %cst_378 = arith.constant dense<0.000000e+00> : vector<8x8xf32>
    %992 = tpu.matmul %991, %979, %cst_378 {dimension_numbers = #tpu.dot_dimension_numbers<[1], [0], [0], [1], [0, 0, 1, 1], [], []>} : vector<8x8xbf16>, vector<8x8xbf16>, vector<8x8xf32> -> vector<8x8xf32>
    %993 = arith.truncf %992 : vector<8x8xf32> to vector<8x8xbf16>
    %994 = vector.extract_strided_slice %957 {offsets = [0, 0, 0], sizes = [1, 8, 32], strides = [1, 1, 1]} : vector<4x8x32xbf16> to vector<1x8x32xbf16>
    %995 = vector.shape_cast %994 : vector<1x8x32xbf16> to vector<8x32xbf16>
    %cst_379 = arith.constant dense<0.000000e+00> : vector<8x32xf32>
    %996 = tpu.matmul %993, %995, %cst_379 {dimension_numbers = #tpu.dot_dimension_numbers<[1], [0], [0], [1], [0, 0, 1, 1], [], []>} : vector<8x8xbf16>, vector<8x32xbf16>, vector<8x32xf32> -> vector<8x32xf32>
    %997 = arith.addf %973, %996 : vector<8x32xf32>
    %998 = vector.extract_strided_slice %967 {offsets = [0, 8], sizes = [8, 8], strides = [1, 1]} : vector<8x32xf32> to vector<8x8xf32>
    %999 = arith.truncf %998 : vector<8x8xf32> to vector<8x8xbf16>
    %1000 = vector.extract_strided_slice %971 {offsets = [0, 8], sizes = [8, 8], strides = [1, 1]} : vector<8x32xf32> to vector<8x8xf32>
    %1001 = arith.truncf %1000 : vector<8x8xf32> to vector<8x8xbf16>
    %1002 = vector.extract_strided_slice %972 {offsets = [0, 8], sizes = [8, 8], strides = [1, 1]} : vector<8x32xf32> to vector<8x8xf32>
    %1003 = arith.truncf %1002 : vector<8x8xf32> to vector<8x8xbf16>
    %cst_380 = arith.constant dense<0.000000e+00> : vector<8x8xf32>
    %1004 = tpu.matmul %999, %1001, %cst_380 {dimension_numbers = #tpu.dot_dimension_numbers<[1], [1], [0], [0], [0, 0, 1, 0], [], []>} : vector<8x8xbf16>, vector<8x8xbf16>, vector<8x8xf32> -> vector<8x8xf32>
    %cst_381 = arith.constant dense<0xFF800000> : vector<8xf32>
    %1005 = vector.multi_reduction <maximumf>, %1004, %cst_381 [1] : vector<8x8xf32> to vector<8xf32>
    %1006 = vector.shape_cast %1005 : vector<8xf32> to vector<8x1xf32>
    %1007 = vector.broadcast %1006 : vector<8x1xf32> to vector<8x8xf32>
    %1008 = arith.subf %1004, %1007 : vector<8x8xf32>
    %1009 = math.exp %1008 : vector<8x8xf32>
    %cst_382 = arith.constant dense<0.000000e+00> : vector<8xf32>
    %1010 = vector.multi_reduction <add>, %1009, %cst_382 [1] : vector<8x8xf32> to vector<8xf32>
    %1011 = vector.shape_cast %1010 : vector<8xf32> to vector<8x1xf32>
    %1012 = tpu.reciprocal %1011 {approx = true} : vector<8x1xf32> -> vector<8x1xf32>
    %1013 = vector.broadcast %1012 : vector<8x1xf32> to vector<8x8xf32>
    %1014 = arith.mulf %1009, %1013 : vector<8x8xf32>
    %1015 = arith.truncf %1014 : vector<8x8xf32> to vector<8x8xbf16>
    %cst_383 = arith.constant dense<0.000000e+00> : vector<8x8xf32>
    %1016 = tpu.matmul %1015, %1003, %cst_383 {dimension_numbers = #tpu.dot_dimension_numbers<[1], [0], [0], [1], [0, 0, 1, 1], [], []>} : vector<8x8xbf16>, vector<8x8xbf16>, vector<8x8xf32> -> vector<8x8xf32>
    %1017 = arith.truncf %1016 : vector<8x8xf32> to vector<8x8xbf16>
    %1018 = vector.extract_strided_slice %957 {offsets = [1, 0, 0], sizes = [1, 8, 32], strides = [1, 1, 1]} : vector<4x8x32xbf16> to vector<1x8x32xbf16>
    %1019 = vector.shape_cast %1018 : vector<1x8x32xbf16> to vector<8x32xbf16>
    %cst_384 = arith.constant dense<0.000000e+00> : vector<8x32xf32>
    %1020 = tpu.matmul %1017, %1019, %cst_384 {dimension_numbers = #tpu.dot_dimension_numbers<[1], [0], [0], [1], [0, 0, 1, 1], [], []>} : vector<8x8xbf16>, vector<8x32xbf16>, vector<8x32xf32> -> vector<8x32xf32>
    %1021 = arith.addf %997, %1020 : vector<8x32xf32>
    %1022 = vector.extract_strided_slice %967 {offsets = [0, 16], sizes = [8, 8], strides = [1, 1]} : vector<8x32xf32> to vector<8x8xf32>
    %1023 = arith.truncf %1022 : vector<8x8xf32> to vector<8x8xbf16>
    %1024 = vector.extract_strided_slice %971 {offsets = [0, 16], sizes = [8, 8], strides = [1, 1]} : vector<8x32xf32> to vector<8x8xf32>
    %1025 = arith.truncf %1024 : vector<8x8xf32> to vector<8x8xbf16>
    %1026 = vector.extract_strided_slice %972 {offsets = [0, 16], sizes = [8, 8], strides = [1, 1]} : vector<8x32xf32> to vector<8x8xf32>
    %1027 = arith.truncf %1026 : vector<8x8xf32> to vector<8x8xbf16>
    %cst_385 = arith.constant dense<0.000000e+00> : vector<8x8xf32>
    %1028 = tpu.matmul %1023, %1025, %cst_385 {dimension_numbers = #tpu.dot_dimension_numbers<[1], [1], [0], [0], [0, 0, 1, 0], [], []>} : vector<8x8xbf16>, vector<8x8xbf16>, vector<8x8xf32> -> vector<8x8xf32>
    %cst_386 = arith.constant dense<0xFF800000> : vector<8xf32>
    %1029 = vector.multi_reduction <maximumf>, %1028, %cst_386 [1] : vector<8x8xf32> to vector<8xf32>
    %1030 = vector.shape_cast %1029 : vector<8xf32> to vector<8x1xf32>
    %1031 = vector.broadcast %1030 : vector<8x1xf32> to vector<8x8xf32>
    %1032 = arith.subf %1028, %1031 : vector<8x8xf32>
    %1033 = math.exp %1032 : vector<8x8xf32>
    %cst_387 = arith.constant dense<0.000000e+00> : vector<8xf32>
    %1034 = vector.multi_reduction <add>, %1033, %cst_387 [1] : vector<8x8xf32> to vector<8xf32>
    %1035 = vector.shape_cast %1034 : vector<8xf32> to vector<8x1xf32>
    %1036 = tpu.reciprocal %1035 {approx = true} : vector<8x1xf32> -> vector<8x1xf32>
    %1037 = vector.broadcast %1036 : vector<8x1xf32> to vector<8x8xf32>
    %1038 = arith.mulf %1033, %1037 : vector<8x8xf32>
    %1039 = arith.truncf %1038 : vector<8x8xf32> to vector<8x8xbf16>
    %cst_388 = arith.constant dense<0.000000e+00> : vector<8x8xf32>
    %1040 = tpu.matmul %1039, %1027, %cst_388 {dimension_numbers = #tpu.dot_dimension_numbers<[1], [0], [0], [1], [0, 0, 1, 1], [], []>} : vector<8x8xbf16>, vector<8x8xbf16>, vector<8x8xf32> -> vector<8x8xf32>
    %1041 = arith.truncf %1040 : vector<8x8xf32> to vector<8x8xbf16>
    %1042 = vector.extract_strided_slice %957 {offsets = [2, 0, 0], sizes = [1, 8, 32], strides = [1, 1, 1]} : vector<4x8x32xbf16> to vector<1x8x32xbf16>
    %1043 = vector.shape_cast %1042 : vector<1x8x32xbf16> to vector<8x32xbf16>
    %cst_389 = arith.constant dense<0.000000e+00> : vector<8x32xf32>
    %1044 = tpu.matmul %1041, %1043, %cst_389 {dimension_numbers = #tpu.dot_dimension_numbers<[1], [0], [0], [1], [0, 0, 1, 1], [], []>} : vector<8x8xbf16>, vector<8x32xbf16>, vector<8x32xf32> -> vector<8x32xf32>
    %1045 = arith.addf %1021, %1044 : vector<8x32xf32>
    %1046 = vector.extract_strided_slice %967 {offsets = [0, 24], sizes = [8, 8], strides = [1, 1]} : vector<8x32xf32> to vector<8x8xf32>
    %1047 = arith.truncf %1046 : vector<8x8xf32> to vector<8x8xbf16>
    %1048 = vector.extract_strided_slice %971 {offsets = [0, 24], sizes = [8, 8], strides = [1, 1]} : vector<8x32xf32> to vector<8x8xf32>
    %1049 = arith.truncf %1048 : vector<8x8xf32> to vector<8x8xbf16>
    %1050 = vector.extract_strided_slice %972 {offsets = [0, 24], sizes = [8, 8], strides = [1, 1]} : vector<8x32xf32> to vector<8x8xf32>
    %1051 = arith.truncf %1050 : vector<8x8xf32> to vector<8x8xbf16>
    %cst_390 = arith.constant dense<0.000000e+00> : vector<8x8xf32>
    %1052 = tpu.matmul %1047, %1049, %cst_390 {dimension_numbers = #tpu.dot_dimension_numbers<[1], [1], [0], [0], [0, 0, 1, 0], [], []>} : vector<8x8xbf16>, vector<8x8xbf16>, vector<8x8xf32> -> vector<8x8xf32>
    %cst_391 = arith.constant dense<0xFF800000> : vector<8xf32>
    %1053 = vector.multi_reduction <maximumf>, %1052, %cst_391 [1] : vector<8x8xf32> to vector<8xf32>
    %1054 = vector.shape_cast %1053 : vector<8xf32> to vector<8x1xf32>
    %1055 = vector.broadcast %1054 : vector<8x1xf32> to vector<8x8xf32>
    %1056 = arith.subf %1052, %1055 : vector<8x8xf32>
    %1057 = math.exp %1056 : vector<8x8xf32>
    %cst_392 = arith.constant dense<0.000000e+00> : vector<8xf32>
    %1058 = vector.multi_reduction <add>, %1057, %cst_392 [1] : vector<8x8xf32> to vector<8xf32>
    %1059 = vector.shape_cast %1058 : vector<8xf32> to vector<8x1xf32>
    %1060 = tpu.reciprocal %1059 {approx = true} : vector<8x1xf32> -> vector<8x1xf32>
    %1061 = vector.broadcast %1060 : vector<8x1xf32> to vector<8x8xf32>
    %1062 = arith.mulf %1057, %1061 : vector<8x8xf32>
    %1063 = arith.truncf %1062 : vector<8x8xf32> to vector<8x8xbf16>
    %cst_393 = arith.constant dense<0.000000e+00> : vector<8x8xf32>
    %1064 = tpu.matmul %1063, %1051, %cst_393 {dimension_numbers = #tpu.dot_dimension_numbers<[1], [0], [0], [1], [0, 0, 1, 1], [], []>} : vector<8x8xbf16>, vector<8x8xbf16>, vector<8x8xf32> -> vector<8x8xf32>
    %1065 = arith.truncf %1064 : vector<8x8xf32> to vector<8x8xbf16>
    %1066 = vector.extract_strided_slice %957 {offsets = [3, 0, 0], sizes = [1, 8, 32], strides = [1, 1, 1]} : vector<4x8x32xbf16> to vector<1x8x32xbf16>
    %1067 = vector.shape_cast %1066 : vector<1x8x32xbf16> to vector<8x32xbf16>
    %cst_394 = arith.constant dense<0.000000e+00> : vector<8x32xf32>
    %1068 = tpu.matmul %1065, %1067, %cst_394 {dimension_numbers = #tpu.dot_dimension_numbers<[1], [0], [0], [1], [0, 0, 1, 1], [], []>} : vector<8x8xbf16>, vector<8x32xbf16>, vector<8x32xf32> -> vector<8x32xf32>
    %1069 = arith.addf %1045, %1068 : vector<8x32xf32>
    %1070 = vector.broadcast %959 : vector<1x32xf32> to vector<8x32xf32>
    %1071 = arith.addf %1069, %1070 : vector<8x32xf32>
    %1072 = arith.addf %1071, %947 : vector<8x32xf32>
    %cst_395 = arith.constant dense<0.000000e+00> : vector<8xf32>
    %1073 = vector.multi_reduction <add>, %1072, %cst_395 [1] : vector<8x32xf32> to vector<8xf32>
    %1074 = vector.shape_cast %1073 : vector<8xf32> to vector<8x1xf32>
    %cst_396 = arith.constant 3.200000e+01 : f32
    %1075 = vector.broadcast %cst_396 : f32 to vector<8x1xf32>
    %1076 = arith.divf %1074, %1075 : vector<8x1xf32>
    %1077 = vector.broadcast %1076 : vector<8x1xf32> to vector<8x32xf32>
    %1078 = arith.subf %1072, %1077 : vector<8x32xf32>
    %1079 = arith.mulf %1078, %1078 : vector<8x32xf32>
    %cst_397 = arith.constant dense<0.000000e+00> : vector<8xf32>
    %1080 = vector.multi_reduction <add>, %1079, %cst_397 [1] : vector<8x32xf32> to vector<8xf32>
    %1081 = vector.shape_cast %1080 : vector<8xf32> to vector<8x1xf32>
    %cst_398 = arith.constant 3.200000e+01 : f32
    %1082 = vector.broadcast %cst_398 : f32 to vector<8x1xf32>
    %1083 = arith.divf %1081, %1082 : vector<8x1xf32>
    %1084 = vector.broadcast %1076 : vector<8x1xf32> to vector<8x32xf32>
    %1085 = arith.subf %1072, %1084 : vector<8x32xf32>
    %cst_399 = arith.constant 9.99999974E-6 : f32
    %1086 = vector.broadcast %cst_399 : f32 to vector<8x1xf32>
    %1087 = arith.addf %1083, %1086 : vector<8x1xf32>
    %1088 = math.rsqrt %1087 : vector<8x1xf32>
    %1089 = vector.broadcast %1088 : vector<8x1xf32> to vector<8x32xf32>
    %1090 = arith.mulf %1085, %1089 : vector<8x32xf32>
    %1091 = vector.broadcast %961 : vector<1x32xf32> to vector<8x32xf32>
    %1092 = arith.mulf %1090, %1091 : vector<8x32xf32>
    %1093 = vector.broadcast %963 : vector<1x32xf32> to vector<8x32xf32>
    %1094 = arith.addf %1092, %1093 : vector<8x32xf32>
    %c1_400 = arith.constant 1 : index
    %c0_401 = arith.constant 0 : index
    %c0_402 = arith.constant 0 : index
    %1095 = vector.load %arg33[%c1_400, %c0_401, %c0_402] : memref<2x32x64xbf16, #tpu.memory_space<vmem>>, vector<1x32x64xbf16>
    %1096 = vector.shape_cast %1095 : vector<1x32x64xbf16> to vector<32x64xbf16>
    %c1_403 = arith.constant 1 : index
    %c0_404 = arith.constant 0 : index
    %c0_405 = arith.constant 0 : index
    %1097 = vector.load %arg34[%c1_403, %c0_404, %c0_405] : memref<2x1x64xf32, #tpu.memory_space<vmem>>, vector<1x1x64xf32>
    %1098 = vector.shape_cast %1097 : vector<1x1x64xf32> to vector<1x64xf32>
    %c1_406 = arith.constant 1 : index
    %c0_407 = arith.constant 0 : index
    %c0_408 = arith.constant 0 : index
    %1099 = vector.load %arg35[%c1_406, %c0_407, %c0_408] : memref<2x64x32xbf16, #tpu.memory_space<vmem>>, vector<1x64x32xbf16>
    %1100 = vector.shape_cast %1099 : vector<1x64x32xbf16> to vector<64x32xbf16>
    %c1_409 = arith.constant 1 : index
    %c0_410 = arith.constant 0 : index
    %c0_411 = arith.constant 0 : index
    %1101 = vector.load %arg36[%c1_409, %c0_410, %c0_411] : memref<2x1x32xf32, #tpu.memory_space<vmem>>, vector<1x1x32xf32>
    %1102 = vector.shape_cast %1101 : vector<1x1x32xf32> to vector<1x32xf32>
    %c1_412 = arith.constant 1 : index
    %c0_413 = arith.constant 0 : index
    %c0_414 = arith.constant 0 : index
    %1103 = vector.load %arg37[%c1_412, %c0_413, %c0_414] : memref<2x1x32xf32, #tpu.memory_space<vmem>>, vector<1x1x32xf32>
    %1104 = vector.shape_cast %1103 : vector<1x1x32xf32> to vector<1x32xf32>
    %c1_415 = arith.constant 1 : index
    %c0_416 = arith.constant 0 : index
    %c0_417 = arith.constant 0 : index
    %1105 = vector.load %arg38[%c1_415, %c0_416, %c0_417] : memref<2x1x32xf32, #tpu.memory_space<vmem>>, vector<1x1x32xf32>
    %1106 = vector.shape_cast %1105 : vector<1x1x32xf32> to vector<1x32xf32>
    %1107 = arith.truncf %1094 : vector<8x32xf32> to vector<8x32xbf16>
    %cst_418 = arith.constant dense<0.000000e+00> : vector<8x64xf32>
    %1108 = tpu.matmul %1107, %1096, %cst_418 {dimension_numbers = #tpu.dot_dimension_numbers<[1], [0], [0], [1], [0, 0, 1, 1], [], []>} : vector<8x32xbf16>, vector<32x64xbf16>, vector<8x64xf32> -> vector<8x64xf32>
    %1109 = vector.broadcast %1098 : vector<1x64xf32> to vector<8x64xf32>
    %1110 = arith.addf %1108, %1109 : vector<8x64xf32>
    %cst_419 = arith.constant 5.000000e-01 : f32
    %1111 = vector.broadcast %cst_419 : f32 to vector<8x64xf32>
    %1112 = arith.mulf %1111, %1110 : vector<8x64xf32>
    %cst_420 = arith.constant 4.471500e-02 : f32
    %1113 = vector.broadcast %cst_420 : f32 to vector<8x64xf32>
    %1114 = arith.mulf %1113, %1110 : vector<8x64xf32>
    %1115 = arith.mulf %1114, %1110 : vector<8x64xf32>
    %1116 = arith.mulf %1115, %1110 : vector<8x64xf32>
    %1117 = arith.addf %1110, %1116 : vector<8x64xf32>
    %cst_421 = arith.constant 0.797884583 : f32
    %1118 = vector.broadcast %cst_421 : f32 to vector<8x64xf32>
    %1119 = arith.mulf %1118, %1117 : vector<8x64xf32>
    %1120 = math.tanh %1119 : vector<8x64xf32>
    %cst_422 = arith.constant 1.000000e+00 : f32
    %1121 = vector.broadcast %cst_422 : f32 to vector<8x64xf32>
    %1122 = arith.addf %1121, %1120 : vector<8x64xf32>
    %1123 = arith.mulf %1112, %1122 : vector<8x64xf32>
    %1124 = arith.truncf %1123 : vector<8x64xf32> to vector<8x64xbf16>
    %cst_423 = arith.constant dense<0.000000e+00> : vector<8x32xf32>
    %1125 = tpu.matmul %1124, %1100, %cst_423 {dimension_numbers = #tpu.dot_dimension_numbers<[1], [0], [0], [1], [0, 0, 1, 1], [], []>} : vector<8x64xbf16>, vector<64x32xbf16>, vector<8x32xf32> -> vector<8x32xf32>
    %1126 = vector.broadcast %1102 : vector<1x32xf32> to vector<8x32xf32>
    %1127 = arith.addf %1125, %1126 : vector<8x32xf32>
    %1128 = arith.addf %1127, %1094 : vector<8x32xf32>
    %cst_424 = arith.constant dense<0.000000e+00> : vector<8xf32>
    %1129 = vector.multi_reduction <add>, %1128, %cst_424 [1] : vector<8x32xf32> to vector<8xf32>
    %1130 = vector.shape_cast %1129 : vector<8xf32> to vector<8x1xf32>
    %cst_425 = arith.constant 3.200000e+01 : f32
    %1131 = vector.broadcast %cst_425 : f32 to vector<8x1xf32>
    %1132 = arith.divf %1130, %1131 : vector<8x1xf32>
    %1133 = vector.broadcast %1132 : vector<8x1xf32> to vector<8x32xf32>
    %1134 = arith.subf %1128, %1133 : vector<8x32xf32>
    %1135 = arith.mulf %1134, %1134 : vector<8x32xf32>
    %cst_426 = arith.constant dense<0.000000e+00> : vector<8xf32>
    %1136 = vector.multi_reduction <add>, %1135, %cst_426 [1] : vector<8x32xf32> to vector<8xf32>
    %1137 = vector.shape_cast %1136 : vector<8xf32> to vector<8x1xf32>
    %cst_427 = arith.constant 3.200000e+01 : f32
    %1138 = vector.broadcast %cst_427 : f32 to vector<8x1xf32>
    %1139 = arith.divf %1137, %1138 : vector<8x1xf32>
    %1140 = vector.broadcast %1132 : vector<8x1xf32> to vector<8x32xf32>
    %1141 = arith.subf %1128, %1140 : vector<8x32xf32>
    %cst_428 = arith.constant 9.99999974E-6 : f32
    %1142 = vector.broadcast %cst_428 : f32 to vector<8x1xf32>
    %1143 = arith.addf %1139, %1142 : vector<8x1xf32>
    %1144 = math.rsqrt %1143 : vector<8x1xf32>
    %1145 = vector.broadcast %1144 : vector<8x1xf32> to vector<8x32xf32>
    %1146 = arith.mulf %1141, %1145 : vector<8x32xf32>
    %1147 = vector.broadcast %1104 : vector<1x32xf32> to vector<8x32xf32>
    %1148 = arith.mulf %1146, %1147 : vector<8x32xf32>
    %1149 = vector.broadcast %1106 : vector<1x32xf32> to vector<8x32xf32>
    %1150 = arith.addf %1148, %1149 : vector<8x32xf32>
    %1151 = arith.truncf %1150 : vector<8x32xf32> to vector<8x32xbf16>
    %c0_429 = arith.constant 0 : index
    %c0_430 = arith.constant 0 : index
    %1152 = vector.load %arg39[%c0_429, %c0_430] : memref<128x32xbf16, #tpu.memory_space<vmem>>, vector<128x32xbf16>
    %cst_431 = arith.constant dense<0.000000e+00> : vector<8x128xf32>
    %1153 = tpu.matmul %1151, %1152, %cst_431 {dimension_numbers = #tpu.dot_dimension_numbers<[1], [1], [0], [0], [0, 0, 1, 0], [], []>} : vector<8x32xbf16>, vector<128x32xbf16>, vector<8x128xf32> -> vector<8x128xf32>
    %c0_432 = arith.constant 0 : index
    %c0_433 = arith.constant 0 : index
    %1154 = vector.load %arg40[%c0_432, %c0_433] : memref<1x128xf32, #tpu.memory_space<vmem>>, vector<1x128xf32>
    %1155 = vector.broadcast %1154 : vector<1x128xf32> to vector<8x128xf32>
    %1156 = arith.addf %1153, %1155 : vector<8x128xf32>
    %1157 = arith.truncf %1156 : vector<8x128xf32> to vector<8x128xbf16>
    %c0_434 = arith.constant 0 : index
    %c0_435 = arith.constant 0 : index
    %c0_436 = arith.constant 0 : index
    %1158 = vector.load %arg41[%c0_434, %c0_435, %c0_436] : memref<1x8x128xbf16, #tpu.memory_space<vmem>>, vector<1x8x128xbf16>
    %1159 = vector.shape_cast %1158 : vector<1x8x128xbf16> to vector<8x128xbf16>
    %1160 = vector.shape_cast %1157 : vector<8x128xbf16> to vector<1x8x128xbf16>
    tpu.vector_store %arg41[%c0_434, %c0_435, %c0_436], %1160 {strides = array<i32>} : memref<1x8x128xbf16, #tpu.memory_space<vmem>>, vector<1x8x128xbf16>,
    return
  }
  func.func @transform_0(%arg0: i32) -> (i32, i32, i32) {
    %c0_i32 = arith.constant 0 : i32
    %c0_i32_0 = arith.constant 0 : i32
    %c0_i32_1 = arith.constant 0 : i32
    return %arg0, %c0_i32, %c0_i32_0 : i32, i32, i32
  }
  func.func @transform_1(%arg0: i32) -> (i32, i32, i32) {
    %c0_i32 = arith.constant 0 : i32
    %c0_i32_0 = arith.constant 0 : i32
    %c0_i32_1 = arith.constant 0 : i32
    return %arg0, %c0_i32, %c0_i32_0 : i32, i32, i32
  }
  func.func @transform_2(%arg0: i32) -> (i32, i32) {
    %c0_i32 = arith.constant 0 : i32
    %c0_i32_0 = arith.constant 0 : i32
    %c0_i32_1 = arith.constant 0 : i32
    return %c0_i32, %c0_i32_0 : i32, i32
  }
  func.func @transform_3(%arg0: i32) -> (i32, i32) {
    %c0_i32 = arith.constant 0 : i32
    %c0_i32_0 = arith.constant 0 : i32
    %c0_i32_1 = arith.constant 0 : i32
    return %c0_i32, %c0_i32_0 : i32, i32
  }
  func.func @transform_4(%arg0: i32) -> (i32, i32, i32) {
    %c0_i32 = arith.constant 0 : i32
    %c0_i32_0 = arith.constant 0 : i32
    %c0_i32_1 = arith.constant 0 : i32
    %c0_i32_2 = arith.constant 0 : i32
    return %c0_i32, %c0_i32_0, %c0_i32_1 : i32, i32, i32
  }
  func.func @transform_5(%arg0: i32) -> (i32, i32, i32) {
    %c0_i32 = arith.constant 0 : i32
    %c0_i32_0 = arith.constant 0 : i32
    %c0_i32_1 = arith.constant 0 : i32
    %c0_i32_2 = arith.constant 0 : i32
    return %c0_i32, %c0_i32_0, %c0_i32_1 : i32, i32, i32
  }
  func.func @transform_6(%arg0: i32) -> (i32, i32, i32, i32) {
    %c0_i32 = arith.constant 0 : i32
    %c0_i32_0 = arith.constant 0 : i32
    %c0_i32_1 = arith.constant 0 : i32
    %c0_i32_2 = arith.constant 0 : i32
    %c0_i32_3 = arith.constant 0 : i32
    return %c0_i32, %c0_i32_0, %c0_i32_1, %c0_i32_2 : i32, i32, i32, i32
  }
  func.func @transform_7(%arg0: i32) -> (i32, i32, i32) {
    %c0_i32 = arith.constant 0 : i32
    %c0_i32_0 = arith.constant 0 : i32
    %c0_i32_1 = arith.constant 0 : i32
    %c0_i32_2 = arith.constant 0 : i32
    return %c0_i32, %c0_i32_0, %c0_i32_1 : i32, i32, i32
  }
  func.func @transform_8(%arg0: i32) -> (i32, i32, i32) {
    %c0_i32 = arith.constant 0 : i32
    %c0_i32_0 = arith.constant 0 : i32
    %c0_i32_1 = arith.constant 0 : i32
    %c0_i32_2 = arith.constant 0 : i32
    return %c0_i32, %c0_i32_0, %c0_i32_1 : i32, i32, i32
  }
  func.func @transform_9(%arg0: i32) -> (i32, i32, i32) {
    %c0_i32 = arith.constant 0 : i32
    %c0_i32_0 = arith.constant 0 : i32
    %c0_i32_1 = arith.constant 0 : i32
    %c0_i32_2 = arith.constant 0 : i32
    return %c0_i32, %c0_i32_0, %c0_i32_1 : i32, i32, i32
  }
  func.func @transform_10(%arg0: i32) -> (i32, i32, i32) {
    %c0_i32 = arith.constant 0 : i32
    %c0_i32_0 = arith.constant 0 : i32
    %c0_i32_1 = arith.constant 0 : i32
    %c0_i32_2 = arith.constant 0 : i32
    return %c0_i32, %c0_i32_0, %c0_i32_1 : i32, i32, i32
  }
  func.func @transform_11(%arg0: i32) -> (i32, i32, i32) {
    %c0_i32 = arith.constant 0 : i32
    %c0_i32_0 = arith.constant 0 : i32
    %c0_i32_1 = arith.constant 0 : i32
    %c0_i32_2 = arith.constant 0 : i32
    return %c0_i32, %c0_i32_0, %c0_i32_1 : i32, i32, i32
  }
  func.func @transform_12(%arg0: i32) -> (i32, i32, i32) {
    %c0_i32 = arith.constant 0 : i32
    %c0_i32_0 = arith.constant 0 : i32
    %c0_i32_1 = arith.constant 0 : i32
    %c0_i32_2 = arith.constant 0 : i32
    return %c0_i32, %c0_i32_0, %c0_i32_1 : i32, i32, i32
  }
  func.func @transform_13(%arg0: i32) -> (i32, i32, i32) {
    %c0_i32 = arith.constant 0 : i32
    %c0_i32_0 = arith.constant 0 : i32
    %c0_i32_1 = arith.constant 0 : i32
    %c0_i32_2 = arith.constant 0 : i32
    return %c0_i32, %c0_i32_0, %c0_i32_1 : i32, i32, i32
  }
  func.func @transform_14(%arg0: i32) -> (i32, i32, i32) {
    %c0_i32 = arith.constant 0 : i32
    %c0_i32_0 = arith.constant 0 : i32
    %c0_i32_1 = arith.constant 0 : i32
    %c0_i32_2 = arith.constant 0 : i32
    return %c0_i32, %c0_i32_0, %c0_i32_1 : i32, i32, i32
  }
  func.func @transform_15(%arg0: i32) -> (i32, i32, i32) {
    %c0_i32 = arith.constant 0 : i32
    %c0_i32_0 = arith.constant 0 : i32
    %c0_i32_1 = arith.constant 0 : i32
    %c0_i32_2 = arith.constant 0 : i32
    return %c0_i32, %c0_i32_0, %c0_i32_1 : i32, i32, i32
  }
  func.func @transform_16(%arg0: i32) -> (i32, i32) {
    %c0_i32 = arith.constant 0 : i32
    %c0_i32_0 = arith.constant 0 : i32
    %c0_i32_1 = arith.constant 0 : i32
    return %c0_i32, %c0_i32_0 : i32, i32
  }
  func.func @transform_17(%arg0: i32) -> (i32, i32) {
    %c0_i32 = arith.constant 0 : i32
    %c0_i32_0 = arith.constant 0 : i32
    %c0_i32_1 = arith.constant 0 : i32
    return %c0_i32, %c0_i32_0 : i32, i32
  }
  func.func @transform_18(%arg0: i32) -> (i32, i32, i32) {
    %c0_i32 = arith.constant 0 : i32
    %c0_i32_0 = arith.constant 0 : i32
    %c0_i32_1 = arith.constant 0 : i32
    %c0_i32_2 = arith.constant 0 : i32
    return %c0_i32, %c0_i32_0, %c0_i32_1 : i32, i32, i32
  }
  func.func @transform_19(%arg0: i32) -> (i32, i32, i32) {
    %c0_i32 = arith.constant 0 : i32
    %c0_i32_0 = arith.constant 0 : i32
    %c0_i32_1 = arith.constant 0 : i32
    %c0_i32_2 = arith.constant 0 : i32
    return %c0_i32, %c0_i32_0, %c0_i32_1 : i32, i32, i32
  }
  func.func @transform_20(%arg0: i32) -> (i32, i32, i32, i32) {
    %c0_i32 = arith.constant 0 : i32
    %c0_i32_0 = arith.constant 0 : i32
    %c0_i32_1 = arith.constant 0 : i32
    %c0_i32_2 = arith.constant 0 : i32
    %c0_i32_3 = arith.constant 0 : i32
    return %c0_i32, %c0_i32_0, %c0_i32_1, %c0_i32_2 : i32, i32, i32, i32
  }
  func.func @transform_21(%arg0: i32) -> (i32, i32, i32) {
    %c0_i32 = arith.constant 0 : i32
    %c0_i32_0 = arith.constant 0 : i32
    %c0_i32_1 = arith.constant 0 : i32
    %c0_i32_2 = arith.constant 0 : i32
    return %c0_i32, %c0_i32_0, %c0_i32_1 : i32, i32, i32
  }
  func.func @transform_22(%arg0: i32) -> (i32, i32, i32) {
    %c0_i32 = arith.constant 0 : i32
    %c0_i32_0 = arith.constant 0 : i32
    %c0_i32_1 = arith.constant 0 : i32
    %c0_i32_2 = arith.constant 0 : i32
    return %c0_i32, %c0_i32_0, %c0_i32_1 : i32, i32, i32
  }
  func.func @transform_23(%arg0: i32) -> (i32, i32, i32) {
    %c0_i32 = arith.constant 0 : i32
    %c0_i32_0 = arith.constant 0 : i32
    %c0_i32_1 = arith.constant 0 : i32
    %c0_i32_2 = arith.constant 0 : i32
    return %c0_i32, %c0_i32_0, %c0_i32_1 : i32, i32, i32
  }
  func.func @transform_24(%arg0: i32) -> (i32, i32, i32) {
    %c0_i32 = arith.constant 0 : i32
    %c0_i32_0 = arith.constant 0 : i32
    %c0_i32_1 = arith.constant 0 : i32
    %c0_i32_2 = arith.constant 0 : i32
    return %c0_i32, %c0_i32_0, %c0_i32_1 : i32, i32, i32
  }
  func.func @transform_25(%arg0: i32) -> (i32, i32, i32) {
    %c0_i32 = arith.constant 0 : i32
    %c0_i32_0 = arith.constant 0 : i32
    %c0_i32_1 = arith.constant 0 : i32
    %c0_i32_2 = arith.constant 0 : i32
    return %c0_i32, %c0_i32_0, %c0_i32_1 : i32, i32, i32
  }
  func.func @transform_26(%arg0: i32) -> (i32, i32, i32) {
    %c0_i32 = arith.constant 0 : i32
    %c0_i32_0 = arith.constant 0 : i32
    %c0_i32_1 = arith.constant 0 : i32
    %c0_i32_2 = arith.constant 0 : i32
    return %c0_i32, %c0_i32_0, %c0_i32_1 : i32, i32, i32
  }
  func.func @transform_27(%arg0: i32) -> (i32, i32, i32) {
    %c0_i32 = arith.constant 0 : i32
    %c0_i32_0 = arith.constant 0 : i32
    %c0_i32_1 = arith.constant 0 : i32
    %c0_i32_2 = arith.constant 0 : i32
    return %c0_i32, %c0_i32_0, %c0_i32_1 : i32, i32, i32
  }
  func.func @transform_28(%arg0: i32) -> (i32, i32, i32, i32) {
    %c0_i32 = arith.constant 0 : i32
    %c0_i32_0 = arith.constant 0 : i32
    %c0_i32_1 = arith.constant 0 : i32
    %c0_i32_2 = arith.constant 0 : i32
    %c0_i32_3 = arith.constant 0 : i32
    return %c0_i32, %c0_i32_0, %c0_i32_1, %c0_i32_2 : i32, i32, i32, i32
  }
  func.func @transform_29(%arg0: i32) -> (i32, i32, i32) {
    %c0_i32 = arith.constant 0 : i32
    %c0_i32_0 = arith.constant 0 : i32
    %c0_i32_1 = arith.constant 0 : i32
    %c0_i32_2 = arith.constant 0 : i32
    return %c0_i32, %c0_i32_0, %c0_i32_1 : i32, i32, i32
  }
  func.func @transform_30(%arg0: i32) -> (i32, i32, i32) {
    %c0_i32 = arith.constant 0 : i32
    %c0_i32_0 = arith.constant 0 : i32
    %c0_i32_1 = arith.constant 0 : i32
    %c0_i32_2 = arith.constant 0 : i32
    return %c0_i32, %c0_i32_0, %c0_i32_1 : i32, i32, i32
  }
  func.func @transform_31(%arg0: i32) -> (i32, i32, i32) {
    %c0_i32 = arith.constant 0 : i32
    %c0_i32_0 = arith.constant 0 : i32
    %c0_i32_1 = arith.constant 0 : i32
    %c0_i32_2 = arith.constant 0 : i32
    return %c0_i32, %c0_i32_0, %c0_i32_1 : i32, i32, i32
  }
  func.func @transform_32(%arg0: i32) -> (i32, i32, i32) {
    %c0_i32 = arith.constant 0 : i32
    %c0_i32_0 = arith.constant 0 : i32
    %c0_i32_1 = arith.constant 0 : i32
    %c0_i32_2 = arith.constant 0 : i32
    return %c0_i32, %c0_i32_0, %c0_i32_1 : i32, i32, i32
  }
  func.func @transform_33(%arg0: i32) -> (i32, i32, i32) {
    %c0_i32 = arith.constant 0 : i32
    %c0_i32_0 = arith.constant 0 : i32
    %c0_i32_1 = arith.constant 0 : i32
    %c0_i32_2 = arith.constant 0 : i32
    return %c0_i32, %c0_i32_0, %c0_i32_1 : i32, i32, i32
  }
  func.func @transform_34(%arg0: i32) -> (i32, i32, i32) {
    %c0_i32 = arith.constant 0 : i32
    %c0_i32_0 = arith.constant 0 : i32
    %c0_i32_1 = arith.constant 0 : i32
    %c0_i32_2 = arith.constant 0 : i32
    return %c0_i32, %c0_i32_0, %c0_i32_1 : i32, i32, i32
  }
  func.func @transform_35(%arg0: i32) -> (i32, i32, i32) {
    %c0_i32 = arith.constant 0 : i32
    %c0_i32_0 = arith.constant 0 : i32
    %c0_i32_1 = arith.constant 0 : i32
    %c0_i32_2 = arith.constant 0 : i32
    return %c0_i32, %c0_i32_0, %c0_i32_1 : i32, i32, i32
  }
  func.func @transform_36(%arg0: i32) -> (i32, i32, i32) {
    %c0_i32 = arith.constant 0 : i32
    %c0_i32_0 = arith.constant 0 : i32
    %c0_i32_1 = arith.constant 0 : i32
    %c0_i32_2 = arith.constant 0 : i32
    return %c0_i32, %c0_i32_0, %c0_i32_1 : i32, i32, i32
  }
  func.func @transform_37(%arg0: i32) -> (i32, i32, i32) {
    %c0_i32 = arith.constant 0 : i32
    %c0_i32_0 = arith.constant 0 : i32
    %c0_i32_1 = arith.constant 0 : i32
    %c0_i32_2 = arith.constant 0 : i32
    return %c0_i32, %c0_i32_0, %c0_i32_1 : i32, i32, i32
  }
  func.func @transform_38(%arg0: i32) -> (i32, i32) {
    %c0_i32 = arith.constant 0 : i32
    %c0_i32_0 = arith.constant 0 : i32
    %c0_i32_1 = arith.constant 0 : i32
    return %c0_i32, %c0_i32_0 : i32, i32
  }
  func.func @transform_39(%arg0: i32) -> (i32, i32) {
    %c0_i32 = arith.constant 0 : i32
    %c0_i32_0 = arith.constant 0 : i32
    %c0_i32_1 = arith.constant 0 : i32
    return %c0_i32, %c0_i32_0 : i32, i32
  }
  func.func @transform_40(%arg0: i32) -> (i32, i32, i32) {
    %c0_i32 = arith.constant 0 : i32
    %c0_i32_0 = arith.constant 0 : i32
    %c0_i32_1 = arith.constant 0 : i32
    return %arg0, %c0_i32, %c0_i32_0 : i32, i32, i32
  }
}

</mosaic_0001>

<llo_original>
// kernel: bart_forward.1
$region0: #{bart_forward.1}
  #allocation0 [shape = 'u32[]', space=smem, size = 0x4, offset = 0x4, fixed_abs, tag = 'smem constant byte address 0x4 - core index']
  #allocation1 [shape = 'u32[144,128]{1,0:T(1,128)}', space=vmem, size = 0x12000, scoped, tag = 'internal scratch']
  %s0 = inlined_call_operand.smem [shape: u32[41], index: -1, kind: input, shape index: {}]
  %s1 = sld [smem:[%s0]]
  %s2 = scalar_lea.smem %s0, 1
  %s3 = sld [smem:[%s2]]
  %s4 = scalar_lea.smem %s0, 2
  %s5 = sld [smem:[%s4]]
  %s6 = scalar_lea.smem %s0, 3
  %s7 = sld [smem:[%s6]]
  %s8 = scalar_lea.smem %s0, 4
  %s9 = sld [smem:[%s8]]
  %s10 = scalar_lea.smem %s0, 5
  %s11 = sld [smem:[%s10]]
  %s12 = scalar_lea.smem %s0, 6
  %s13 = sld [smem:[%s12]]
  %s14 = scalar_lea.smem %s0, 7
  %s15 = sld [smem:[%s14]]
  %s16 = scalar_lea.smem %s0, 8
  %s17 = sld [smem:[%s16]]
  %s18 = scalar_lea.smem %s0, 9
  %s19 = sld [smem:[%s18]]
  %s20 = scalar_lea.smem %s0, 10
  %s21 = sld [smem:[%s20]]
  %s22 = scalar_lea.smem %s0, 11
  %s23 = sld [smem:[%s22]]
  %s24 = scalar_lea.smem %s0, 12
  %s25 = sld [smem:[%s24]]
  %s26 = scalar_lea.smem %s0, 13
  %s27 = sld [smem:[%s26]]
  %s28 = scalar_lea.smem %s0, 14
  %s29 = sld [smem:[%s28]]
  %s30 = scalar_lea.smem %s0, 15
  %s31 = sld [smem:[%s30]]
  %s32 = scalar_lea.smem %s0, 16
  %s33 = sld [smem:[%s32]]
  %s34 = scalar_lea.smem %s0, 17
  %s35 = sld [smem:[%s34]]
  %s36 = scalar_lea.smem %s0, 18
  %s37 = sld [smem:[%s36]]
  %s38 = scalar_lea.smem %s0, 19
  %s39 = sld [smem:[%s38]]
  %s40 = scalar_lea.smem %s0, 20
  %s41 = sld [smem:[%s40]]
  %s42 = scalar_lea.smem %s0, 21
  %s43 = sld [smem:[%s42]]
  %s44 = scalar_lea.smem %s0, 22
  %s45 = sld [smem:[%s44]]
  %s46 = scalar_lea.smem %s0, 23
  %s47 = sld [smem:[%s46]]
  %s48 = scalar_lea.smem %s0, 24
  %s49 = sld [smem:[%s48]]
  %s50 = scalar_lea.smem %s0, 25
  %s51 = sld [smem:[%s50]]
  %s52 = scalar_lea.smem %s0, 26
  %s53 = sld [smem:[%s52]]
  %s54 = scalar_lea.smem %s0, 27
  %s55 = sld [smem:[%s54]]
  %s56 = scalar_lea.smem %s0, 28
  %s57 = sld [smem:[%s56]]
  %s58 = scalar_lea.smem %s0, 29
  %s59 = sld [smem:[%s58]]
  %s60 = scalar_lea.smem %s0, 30
  %s61 = sld [smem:[%s60]]
  %s62 = scalar_lea.smem %s0, 31
  %s63 = sld [smem:[%s62]]
  %s64 = scalar_lea.smem %s0, 32
  %s65 = sld [smem:[%s64]]
  %s66 = scalar_lea.smem %s0, 33
  %s67 = sld [smem:[%s66]]
  %s68 = scalar_lea.smem %s0, 34
  %s69 = sld [smem:[%s68]]
  %s70 = scalar_lea.smem %s0, 35
  %s71 = sld [smem:[%s70]]
  %s72 = scalar_lea.smem %s0, 36
  %s73 = sld [smem:[%s72]]
  %s74 = scalar_lea.smem %s0, 37
  %s75 = sld [smem:[%s74]]
  %s76 = scalar_lea.smem %s0, 38
  %s77 = sld [smem:[%s76]]
  %s78 = scalar_lea.smem %s0, 39
  %s79 = sld [smem:[%s78]]
  %s80 = scalar_lea.smem %s0, 40
  %s81 = sld [smem:[%s80]]
  %s82 = sld [smem:[#allocation0]]
  $region193: #{bart_forward.1} parent=0
    _
  %s84 = ssub.s32 1, %s82
  %s85 = scalar_select 0, %s84, %s82
  $region1: #{bart_forward.1} parent=0
    #allocation2 [shape = 'u8[4096]{0}', space=vmem, size = 0x1000, scoped, tag = 'output window, operand 0']
    #allocation3 [shape = 's32[2]{0}', space=sflag, size = 0x8, scoped, tag = 'scoped memory for bart_forward.1']
    %86 = vsyncpa [#allocation3], 0
    %s87 = scalar_lea.sflag [#allocation3], 1
    %88 = vsyncpa %s87, 0
    loop: start=0, step=1, limit=4
    $region2: #{bart_forward.1} parent=1 // loop_pre_header
      _
    $region3: #{bart_forward.1} parent=1 // loop_header
      %s90 = sphi 0, %s94
      %p91 = scmp.ge.s32.totalorder %s90, 4
      %s100 = sphi 0, %s102
      %s103 = sphi 0, %s100
      %s104 = sphi 0, %s103
      %s120 = sphi 0, %s104
      %s126 = sphi 0, %s128
      %s129 = sphi 0, %s126
      %s130 = sphi 0, %s129
      %s146 = sphi 0, %s130
      %s150 = sphi 0, %s150
      %s152 = sphi 0, %s150
      %s153 = sphi 0, %s152
      %s167 = sphi 0, %s153
      %s171 = sphi 0, %s171
      %s173 = sphi 0, %s171
      %s174 = sphi 0, %s173
      %s188 = sphi 0, %s174
      %s192 = sphi 0, %s192
      %s194 = sphi 0, %s192
      %s195 = sphi 0, %s194
      %s209 = sphi 0, %s195
      %s213 = sphi 0, %s213
      %s215 = sphi 0, %s213
      %s216 = sphi 0, %s215
      %s230 = sphi 0, %s216
      %s234 = sphi 0, %s234
      %s236 = sphi 0, %s234
      %s237 = sphi 0, %s236
      %s251 = sphi 0, %s237
      %s255 = sphi 0, %s255
      %s257 = sphi 0, %s255
      %s258 = sphi 0, %s257
      %s272 = sphi 0, %s258
      %s276 = sphi 0, %s276
      %s278 = sphi 0, %s276
      %s279 = sphi 0, %s278
      %s293 = sphi 0, %s279
      %s297 = sphi 0, %s297
      %s299 = sphi 0, %s297
      %s300 = sphi 0, %s299
      %s314 = sphi 0, %s300
      %s318 = sphi 0, %s318
      %s320 = sphi 0, %s318
      %s321 = sphi 0, %s320
      %s335 = sphi 0, %s321
      %s339 = sphi 0, %s339
      %s341 = sphi 0, %s339
      %s342 = sphi 0, %s341
      %s356 = sphi 0, %s342
      %s360 = sphi 0, %s360
      %s362 = sphi 0, %s360
      %s363 = sphi 0, %s362
      %s377 = sphi 0, %s363
      %s381 = sphi 0, %s381
      %s383 = sphi 0, %s381
      %s384 = sphi 0, %s383
      %s398 = sphi 0, %s384
      %s402 = sphi 0, %s402
      %s404 = sphi 0, %s402
      %s405 = sphi 0, %s404
      %s419 = sphi 0, %s405
      %s423 = sphi 0, %s423
      %s425 = sphi 0, %s423
      %s426 = sphi 0, %s425
      %s440 = sphi 0, %s426
      %s444 = sphi 0, %s444
      %s446 = sphi 0, %s444
      %s447 = sphi 0, %s446
      %s461 = sphi 0, %s447
      %s465 = sphi 0, %s465
      %s467 = sphi 0, %s465
      %s468 = sphi 0, %s467
      %s482 = sphi 0, %s468
      %s486 = sphi 0, %s486
      %s488 = sphi 0, %s486
      %s489 = sphi 0, %s488
      %s503 = sphi 0, %s489
      %s507 = sphi 0, %s507
      %s509 = sphi 0, %s507
      %s510 = sphi 0, %s509
      %s524 = sphi 0, %s510
      %s528 = sphi 0, %s528
      %s530 = sphi 0, %s528
      %s531 = sphi 0, %s530
      %s545 = sphi 0, %s531
      %s549 = sphi 0, %s549
      %s551 = sphi 0, %s549
      %s552 = sphi 0, %s551
      %s566 = sphi 0, %s552
      %s570 = sphi 0, %s570
      %s572 = sphi 0, %s570
      %s573 = sphi 0, %s572
      %s587 = sphi 0, %s573
      %s591 = sphi 0, %s591
      %s593 = sphi 0, %s591
      %s594 = sphi 0, %s593
      %s608 = sphi 0, %s594
      %s612 = sphi 0, %s612
      %s614 = sphi 0, %s612
      %s615 = sphi 0, %s614
      %s629 = sphi 0, %s615
      %s633 = sphi 0, %s633
      %s635 = sphi 0, %s633
      %s636 = sphi 0, %s635
      %s650 = sphi 0, %s636
      %s654 = sphi 0, %s654
      %s656 = sphi 0, %s654
      %s657 = sphi 0, %s656
      %s671 = sphi 0, %s657
      %s675 = sphi 0, %s675
      %s677 = sphi 0, %s675
      %s678 = sphi 0, %s677
      %s692 = sphi 0, %s678
      %s696 = sphi 0, %s696
      %s698 = sphi 0, %s696
      %s699 = sphi 0, %s698
      %s713 = sphi 0, %s699
      %s717 = sphi 0, %s717
      %s719 = sphi 0, %s717
      %s720 = sphi 0, %s719
      %s734 = sphi 0, %s720
      %s738 = sphi 0, %s738
      %s740 = sphi 0, %s738
      %s741 = sphi 0, %s740
      %s755 = sphi 0, %s741
      %s759 = sphi 0, %s759
      %s761 = sphi 0, %s759
      %s762 = sphi 0, %s761
      %s776 = sphi 0, %s762
      %s780 = sphi 0, %s780
      %s782 = sphi 0, %s780
      %s783 = sphi 0, %s782
      %s797 = sphi 0, %s783
      %s801 = sphi 0, %s801
      %s803 = sphi 0, %s801
      %s804 = sphi 0, %s803
      %s818 = sphi 0, %s804
      %s822 = sphi 0, %s822
      %s824 = sphi 0, %s822
      %s825 = sphi 0, %s824
      %s839 = sphi 0, %s825
      %s843 = sphi 0, %s843
      %s845 = sphi 0, %s843
      %s846 = sphi 0, %s845
      %s860 = sphi 0, %s846
      %s864 = sphi 0, %s864
      %s866 = sphi 0, %s864
      %s867 = sphi 0, %s866
      %s881 = sphi 0, %s867
      %s885 = sphi 0, %s885
      %s887 = sphi 0, %s885
      %s888 = sphi 0, %s887
      %s902 = sphi 0, %s888
      %s906 = sphi 0, %s906
      %s908 = sphi 0, %s906
      %s909 = sphi 0, %s908
      %s923 = sphi 0, %s909
      %s927 = sphi 0, %s927
      %s929 = sphi 0, %s927
      %s930 = sphi 0, %s929
      %s944 = sphi 0, %s930
      %s950 = sphi 0, %s952
      %s953 = sphi 0, %s950
      %s954 = sphi 0, %s953
      %s970 = sphi 0, %s954
    $region4: #{bart_forward.1} parent=1 // loop_header_branch
      %93 = sbr.rel (%p91) target = $region8
    $region5: #{bart_forward.1} parent=1 // loop_body
      %s95 = ssub.s32 %s90, 1
      %s96 = ssub.s32 %s90, 2
      %s97 = sadd.s32 %s90, 1
      %s98 = ssub.s32 %s90, %s97
      %p99 = scmp.eq.s32.totalorder %s98, 0
      %s101 = sadd.s32 %s100, 1
      %s102 = scalar_select %p99, %s100, %s101
      %p105 = pneg %p99
      %p106 = scmp.eq.s32.totalorder %s90, 1
      %p107 = por %p105, %p106
      %p108 = scmp.ne.s32.totalorder %s100, %s103
      %p109 = scmp.eq.s32.totalorder %s90, 0
      %p110 = por %p108, %p109
      %p111 = scmp.ne.s32.totalorder %s100, %s103
      %p112 = scmp.eq.s32.totalorder %s95, 1
      %p113 = por %p111, %p112
      %p114 = scmp.ne.s32.totalorder %s103, %s104
      %p115 = scmp.eq.s32.totalorder %s95, 0
      %p116 = por %p114, %p115
      %p117 = scmp.ne.s32.totalorder %s103, %s104
      %p118 = scmp.eq.s32.totalorder %s96, 1
      %p119 = por %p117, %p118
      %p121 = scmp.ne.s32.totalorder %s104, %s120
      %p122 = scmp.eq.s32.totalorder %s96, 0
      %p123 = por %p121, %p122
      %s124 = ssub.s32 %s90, %s97
      %p125 = scmp.eq.s32.totalorder %s124, 0
      %s127 = sadd.s32 %s126, 1
      %s128 = scalar_select %p125, %s126, %s127
      %p131 = pneg %p125
      %p132 = scmp.eq.s32.totalorder %s90, 1
      %p133 = por %p131, %p132
      %p134 = scmp.ne.s32.totalorder %s126, %s129
      %p135 = scmp.eq.s32.totalorder %s90, 0
      %p136 = por %p134, %p135
      %p137 = scmp.ne.s32.totalorder %s126, %s129
      %p138 = scmp.eq.s32.totalorder %s95, 1
      %p139 = por %p137, %p138
      %p140 = scmp.ne.s32.totalorder %s129, %s130
      %p141 = scmp.eq.s32.totalorder %s95, 0
      %p142 = por %p140, %p141
      %p143 = scmp.ne.s32.totalorder %s129, %s130
      %p144 = scmp.eq.s32.totalorder %s96, 1
      %p145 = por %p143, %p144
      %p147 = scmp.ne.s32.totalorder %s130, %s146
      %p148 = scmp.eq.s32.totalorder %s96, 0
      %p149 = por %p147, %p148
      %s151 = sadd.s32 %s150, 1
      %p154 = scmp.eq.s32.totalorder %s90, 1
      %p155 = scmp.ne.s32.totalorder %s150, %s152
      %p156 = scmp.eq.s32.totalorder %s90, 0
      %p157 = por %p155, %p156
      %p158 = scmp.ne.s32.totalorder %s150, %s152
      %p159 = scmp.eq.s32.totalorder %s95, 1
      %p160 = por %p158, %p159
      %p161 = scmp.ne.s32.totalorder %s152, %s153
      %p162 = scmp.eq.s32.totalorder %s95, 0
      %p163 = por %p161, %p162
      %p164 = scmp.ne.s32.totalorder %s152, %s153
      %p165 = scmp.eq.s32.totalorder %s96, 1
      %p166 = por %p164, %p165
      %p168 = scmp.ne.s32.totalorder %s153, %s167
      %p169 = scmp.eq.s32.totalorder %s96, 0
      %p170 = por %p168, %p169
      %s172 = sadd.s32 %s171, 1
      %p175 = scmp.eq.s32.totalorder %s90, 1
      %p176 = scmp.ne.s32.totalorder %s171, %s173
      %p177 = scmp.eq.s32.totalorder %s90, 0
      %p178 = por %p176, %p177
      %p179 = scmp.ne.s32.totalorder %s171, %s173
      %p180 = scmp.eq.s32.totalorder %s95, 1
      %p181 = por %p179, %p180
      %p182 = scmp.ne.s32.totalorder %s173, %s174
      %p183 = scmp.eq.s32.totalorder %s95, 0
      %p184 = por %p182, %p183
      %p185 = scmp.ne.s32.totalorder %s173, %s174
      %p186 = scmp.eq.s32.totalorder %s96, 1
      %p187 = por %p185, %p186
      %p189 = scmp.ne.s32.totalorder %s174, %s188
      %p190 = scmp.eq.s32.totalorder %s96, 0
      %p191 = por %p189, %p190
      %s193 = sadd.s32 %s192, 1
      %p196 = scmp.eq.s32.totalorder %s90, 1
      %p197 = scmp.ne.s32.totalorder %s192, %s194
      %p198 = scmp.eq.s32.totalorder %s90, 0
      %p199 = por %p197, %p198
      %p200 = scmp.ne.s32.totalorder %s192, %s194
      %p201 = scmp.eq.s32.totalorder %s95, 1
      %p202 = por %p200, %p201
      %p203 = scmp.ne.s32.totalorder %s194, %s195
      %p204 = scmp.eq.s32.totalorder %s95, 0
      %p205 = por %p203, %p204
      %p206 = scmp.ne.s32.totalorder %s194, %s195
      %p207 = scmp.eq.s32.totalorder %s96, 1
      %p208 = por %p206, %p207
      %p210 = scmp.ne.s32.totalorder %s195, %s209
      %p211 = scmp.eq.s32.totalorder %s96, 0
      %p212 = por %p210, %p211
      %s214 = sadd.s32 %s213, 1
      %p217 = scmp.eq.s32.totalorder %s90, 1
      %p218 = scmp.ne.s32.totalorder %s213, %s215
      %p219 = scmp.eq.s32.totalorder %s90, 0
      %p220 = por %p218, %p219
      %p221 = scmp.ne.s32.totalorder %s213, %s215
      %p222 = scmp.eq.s32.totalorder %s95, 1
      %p223 = por %p221, %p222
      %p224 = scmp.ne.s32.totalorder %s215, %s216
      %p225 = scmp.eq.s32.totalorder %s95, 0
      %p226 = por %p224, %p225
      %p227 = scmp.ne.s32.totalorder %s215, %s216
      %p228 = scmp.eq.s32.totalorder %s96, 1
      %p229 = por %p227, %p228
      %p231 = scmp.ne.s32.totalorder %s216, %s230
      %p232 = scmp.eq.s32.totalorder %s96, 0
      %p233 = por %p231, %p232
      %s235 = sadd.s32 %s234, 1
      %p238 = scmp.eq.s32.totalorder %s90, 1
      %p239 = scmp.ne.s32.totalorder %s234, %s236
      %p240 = scmp.eq.s32.totalorder %s90, 0
      %p241 = por %p239, %p240
      %p242 = scmp.ne.s32.totalorder %s234, %s236
      %p243 = scmp.eq.s32.totalorder %s95, 1
      %p244 = por %p242, %p243
      %p245 = scmp.ne.s32.totalorder %s236, %s237
      %p246 = scmp.eq.s32.totalorder %s95, 0
      %p247 = por %p245, %p246
      %p248 = scmp.ne.s32.totalorder %s236, %s237
      %p249 = scmp.eq.s32.totalorder %s96, 1
      %p250 = por %p248, %p249
      %p252 = scmp.ne.s32.totalorder %s237, %s251
      %p253 = scmp.eq.s32.totalorder %s96, 0
      %p254 = por %p252, %p253
      %s256 = sadd.s32 %s255, 1
      %p259 = scmp.eq.s32.totalorder %s90, 1
      %p260 = scmp.ne.s32.totalorder %s255, %s257
      %p261 = scmp.eq.s32.totalorder %s90, 0
      %p262 = por %p260, %p261
      %p263 = scmp.ne.s32.totalorder %s255, %s257
      %p264 = scmp.eq.s32.totalorder %s95, 1
      %p265 = por %p263, %p264
      %p266 = scmp.ne.s32.totalorder %s257, %s258
      %p267 = scmp.eq.s32.totalorder %s95, 0
      %p268 = por %p266, %p267
      %p269 = scmp.ne.s32.totalorder %s257, %s258
      %p270 = scmp.eq.s32.totalorder %s96, 1
      %p271 = por %p269, %p270
      %p273 = scmp.ne.s32.totalorder %s258, %s272
      %p274 = scmp.eq.s32.totalorder %s96, 0
      %p275 = por %p273, %p274
      %s277 = sadd.s32 %s276, 1
      %p280 = scmp.eq.s32.totalorder %s90, 1
      %p281 = scmp.ne.s32.totalorder %s276, %s278
      %p282 = scmp.eq.s32.totalorder %s90, 0
      %p283 = por %p281, %p282
      %p284 = scmp.ne.s32.totalorder %s276, %s278
      %p285 = scmp.eq.s32.totalorder %s95, 1
      %p286 = por %p284, %p285
      %p287 = scmp.ne.s32.totalorder %s278, %s279
      %p288 = scmp.eq.s32.totalorder %s95, 0
      %p289 = por %p287, %p288
      %p290 = scmp.ne.s32.totalorder %s278, %s279
      %p291 = scmp.eq.s32.totalorder %s96, 1
      %p292 = por %p290, %p291
      %p294 = scmp.ne.s32.totalorder %s279, %s293
      %p295 = scmp.eq.s32.totalorder %s96, 0
      %p296 = por %p294, %p295
      %s298 = sadd.s32 %s297, 1
      %p301 = scmp.eq.s32.totalorder %s90, 1
      %p302 = scmp.ne.s32.totalorder %s297, %s299
      %p303 = scmp.eq.s32.totalorder %s90, 0
      %p304 = por %p302, %p303
      %p305 = scmp.ne.s32.totalorder %s297, %s299
      %p306 = scmp.eq.s32.totalorder %s95, 1
      %p307 = por %p305, %p306
      %p308 = scmp.ne.s32.totalorder %s299, %s300
      %p309 = scmp.eq.s32.totalorder %s95, 0
      %p310 = por %p308, %p309
      %p311 = scmp.ne.s32.totalorder %s299, %s300
      %p312 = scmp.eq.s32.totalorder %s96, 1
      %p313 = por %p311, %p312
      %p315 = scmp.ne.s32.totalorder %s300, %s314
      %p316 = scmp.eq.s32.totalorder %s96, 0
      %p317 = por %p315, %p316
      %s319 = sadd.s32 %s318, 1
      %p322 = scmp.eq.s32.totalorder %s90, 1
      %p323 = scmp.ne.s32.totalorder %s318, %s320
      %p324 = scmp.eq.s32.totalorder %s90, 0
      %p325 = por %p323, %p324
      %p326 = scmp.ne.s32.totalorder %s318, %s320
      %p327 = scmp.eq.s32.totalorder %s95, 1
      %p328 = por %p326, %p327
      %p329 = scmp.ne.s32.totalorder %s320, %s321
      %p330 = scmp.eq.s32.totalorder %s95, 0
      %p331 = por %p329, %p330
      %p332 = scmp.ne.s32.totalorder %s320, %s321
      %p333 = scmp.eq.s32.totalorder %s96, 1
      %p334 = por %p332, %p333
      %p336 = scmp.ne.s32.totalorder %s321, %s335
      %p337 = scmp.eq.s32.totalorder %s96, 0
      %p338 = por %p336, %p337
      %s340 = sadd.s32 %s339, 1
      %p343 = scmp.eq.s32.totalorder %s90, 1
      %p344 = scmp.ne.s32.totalorder %s339, %s341
      %p345 = scmp.eq.s32.totalorder %s90, 0
      %p346 = por %p344, %p345
      %p347 = scmp.ne.s32.totalorder %s339, %s341
      %p348 = scmp.eq.s32.totalorder %s95, 1
      %p349 = por %p347, %p348
      %p350 = scmp.ne.s32.totalorder %s341, %s342
      %p351 = scmp.eq.s32.totalorder %s95, 0
      %p352 = por %p350, %p351
      %p353 = scmp.ne.s32.totalorder %s341, %s342
      %p354 = scmp.eq.s32.totalorder %s96, 1
      %p355 = por %p353, %p354
      %p357 = scmp.ne.s32.totalorder %s342, %s356
      %p358 = scmp.eq.s32.totalorder %s96, 0
      %p359 = por %p357, %p358
      %s361 = sadd.s32 %s360, 1
      %p364 = scmp.eq.s32.totalorder %s90, 1
      %p365 = scmp.ne.s32.totalorder %s360, %s362
      %p366 = scmp.eq.s32.totalorder %s90, 0
      %p367 = por %p365, %p366
      %p368 = scmp.ne.s32.totalorder %s360, %s362
      %p369 = scmp.eq.s32.totalorder %s95, 1
      %p370 = por %p368, %p369
      %p371 = scmp.ne.s32.totalorder %s362, %s363
      %p372 = scmp.eq.s32.totalorder %s95, 0
      %p373 = por %p371, %p372
      %p374 = scmp.ne.s32.totalorder %s362, %s363
      %p375 = scmp.eq.s32.totalorder %s96, 1
      %p376 = por %p374, %p375
      %p378 = scmp.ne.s32.totalorder %s363, %s377
      %p379 = scmp.eq.s32.totalorder %s96, 0
      %p380 = por %p378, %p379
      %s382 = sadd.s32 %s381, 1
      %p385 = scmp.eq.s32.totalorder %s90, 1
      %p386 = scmp.ne.s32.totalorder %s381, %s383
      %p387 = scmp.eq.s32.totalorder %s90, 0
      %p388 = por %p386, %p387
      %p389 = scmp.ne.s32.totalorder %s381, %s383
      %p390 = scmp.eq.s32.totalorder %s95, 1
      %p391 = por %p389, %p390
      %p392 = scmp.ne.s32.totalorder %s383, %s384
      %p393 = scmp.eq.s32.totalorder %s95, 0
      %p394 = por %p392, %p393
      %p395 = scmp.ne.s32.totalorder %s383, %s384
      %p396 = scmp.eq.s32.totalorder %s96, 1
      %p397 = por %p395, %p396
      %p399 = scmp.ne.s32.totalorder %s384, %s398
      %p400 = scmp.eq.s32.totalorder %s96, 0
      %p401 = por %p399, %p400
      %s403 = sadd.s32 %s402, 1
      %p406 = scmp.eq.s32.totalorder %s90, 1
      %p407 = scmp.ne.s32.totalorder %s402, %s404
      %p408 = scmp.eq.s32.totalorder %s90, 0
      %p409 = por %p407, %p408
      %p410 = scmp.ne.s32.totalorder %s402, %s404
      %p411 = scmp.eq.s32.totalorder %s95, 1
      %p412 = por %p410, %p411
      %p413 = scmp.ne.s32.totalorder %s404, %s405
      %p414 = scmp.eq.s32.totalorder %s95, 0
      %p415 = por %p413, %p414
      %p416 = scmp.ne.s32.totalorder %s404, %s405
      %p417 = scmp.eq.s32.totalorder %s96, 1
      %p418 = por %p416, %p417
      %p420 = scmp.ne.s32.totalorder %s405, %s419
      %p421 = scmp.eq.s32.totalorder %s96, 0
      %p422 = por %p420, %p421
      %s424 = sadd.s32 %s423, 1
      %p427 = scmp.eq.s32.totalorder %s90, 1
      %p428 = scmp.ne.s32.totalorder %s423, %s425
      %p429 = scmp.eq.s32.totalorder %s90, 0
      %p430 = por %p428, %p429
      %p431 = scmp.ne.s32.totalorder %s423, %s425
      %p432 = scmp.eq.s32.totalorder %s95, 1
      %p433 = por %p431, %p432
      %p434 = scmp.ne.s32.totalorder %s425, %s426
      %p435 = scmp.eq.s32.totalorder %s95, 0
      %p436 = por %p434, %p435
      %p437 = scmp.ne.s32.totalorder %s425, %s426
      %p438 = scmp.eq.s32.totalorder %s96, 1
      %p439 = por %p437, %p438
      %p441 = scmp.ne.s32.totalorder %s426, %s440
      %p442 = scmp.eq.s32.totalorder %s96, 0
      %p443 = por %p441, %p442
      %s445 = sadd.s32 %s444, 1
      %p448 = scmp.eq.s32.totalorder %s90, 1
      %p449 = scmp.ne.s32.totalorder %s444, %s446
      %p450 = scmp.eq.s32.totalorder %s90, 0
      %p451 = por %p449, %p450
      %p452 = scmp.ne.s32.totalorder %s444, %s446
      %p453 = scmp.eq.s32.totalorder %s95, 1
      %p454 = por %p452, %p453
      %p455 = scmp.ne.s32.totalorder %s446, %s447
      %p456 = scmp.eq.s32.totalorder %s95, 0
      %p457 = por %p455, %p456
      %p458 = scmp.ne.s32.totalorder %s446, %s447
      %p459 = scmp.eq.s32.totalorder %s96, 1
      %p460 = por %p458, %p459
      %p462 = scmp.ne.s32.totalorder %s447, %s461
      %p463 = scmp.eq.s32.totalorder %s96, 0
      %p464 = por %p462, %p463
      %s466 = sadd.s32 %s465, 1
      %p469 = scmp.eq.s32.totalorder %s90, 1
      %p470 = scmp.ne.s32.totalorder %s465, %s467
      %p471 = scmp.eq.s32.totalorder %s90, 0
      %p472 = por %p470, %p471
      %p473 = scmp.ne.s32.totalorder %s465, %s467
      %p474 = scmp.eq.s32.totalorder %s95, 1
      %p475 = por %p473, %p474
      %p476 = scmp.ne.s32.totalorder %s467, %s468
      %p477 = scmp.eq.s32.totalorder %s95, 0
      %p478 = por %p476, %p477
      %p479 = scmp.ne.s32.totalorder %s467, %s468
      %p480 = scmp.eq.s32.totalorder %s96, 1
      %p481 = por %p479, %p480
      %p483 = scmp.ne.s32.totalorder %s468, %s482
      %p484 = scmp.eq.s32.totalorder %s96, 0
      %p485 = por %p483, %p484
      %s487 = sadd.s32 %s486, 1
      %p490 = scmp.eq.s32.totalorder %s90, 1
      %p491 = scmp.ne.s32.totalorder %s486, %s488
      %p492 = scmp.eq.s32.totalorder %s90, 0
      %p493 = por %p491, %p492
      %p494 = scmp.ne.s32.totalorder %s486, %s488
      %p495 = scmp.eq.s32.totalorder %s95, 1
      %p496 = por %p494, %p495
      %p497 = scmp.ne.s32.totalorder %s488, %s489
      %p498 = scmp.eq.s32.totalorder %s95, 0
      %p499 = por %p497, %p498
      %p500 = scmp.ne.s32.totalorder %s488, %s489
      %p501 = scmp.eq.s32.totalorder %s96, 1
      %p502 = por %p500, %p501
      %p504 = scmp.ne.s32.totalorder %s489, %s503
      %p505 = scmp.eq.s32.totalorder %s96, 0
      %p506 = por %p504, %p505
      %s508 = sadd.s32 %s507, 1
      %p511 = scmp.eq.s32.totalorder %s90, 1
      %p512 = scmp.ne.s32.totalorder %s507, %s509
      %p513 = scmp.eq.s32.totalorder %s90, 0
      %p514 = por %p512, %p513
      %p515 = scmp.ne.s32.totalorder %s507, %s509
      %p516 = scmp.eq.s32.totalorder %s95, 1
      %p517 = por %p515, %p516
      %p518 = scmp.ne.s32.totalorder %s509, %s510
      %p519 = scmp.eq.s32.totalorder %s95, 0
      %p520 = por %p518, %p519
      %p521 = scmp.ne.s32.totalorder %s509, %s510
      %p522 = scmp.eq.s32.totalorder %s96, 1
      %p523 = por %p521, %p522
      %p525 = scmp.ne.s32.totalorder %s510, %s524
      %p526 = scmp.eq.s32.totalorder %s96, 0
      %p527 = por %p525, %p526
      %s529 = sadd.s32 %s528, 1
      %p532 = scmp.eq.s32.totalorder %s90, 1
      %p533 = scmp.ne.s32.totalorder %s528, %s530
      %p534 = scmp.eq.s32.totalorder %s90, 0
      %p535 = por %p533, %p534
      %p536 = scmp.ne.s32.totalorder %s528, %s530
      %p537 = scmp.eq.s32.totalorder %s95, 1
      %p538 = por %p536, %p537
      %p539 = scmp.ne.s32.totalorder %s530, %s531
      %p540 = scmp.eq.s32.totalorder %s95, 0
      %p541 = por %p539, %p540
      %p542 = scmp.ne.s32.totalorder %s530, %s531
      %p543 = scmp.eq.s32.totalorder %s96, 1
      %p544 = por %p542, %p543
      %p546 = scmp.ne.s32.totalorder %s531, %s545
      %p547 = scmp.eq.s32.totalorder %s96, 0
      %p548 = por %p546, %p547
      %s550 = sadd.s32 %s549, 1
      %p553 = scmp.eq.s32.totalorder %s90, 1
      %p554 = scmp.ne.s32.totalorder %s549, %s551
      %p555 = scmp.eq.s32.totalorder %s90, 0
      %p556 = por %p554, %p555
      %p557 = scmp.ne.s32.totalorder %s549, %s551
      %p558 = scmp.eq.s32.totalorder %s95, 1
      %p559 = por %p557, %p558
      %p560 = scmp.ne.s32.totalorder %s551, %s552
      %p561 = scmp.eq.s32.totalorder %s95, 0
      %p562 = por %p560, %p561
      %p563 = scmp.ne.s32.totalorder %s551, %s552
      %p564 = scmp.eq.s32.totalorder %s96, 1
      %p565 = por %p563, %p564
      %p567 = scmp.ne.s32.totalorder %s552, %s566
      %p568 = scmp.eq.s32.totalorder %s96, 0
      %p569 = por %p567, %p568
      %s571 = sadd.s32 %s570, 1
      %p574 = scmp.eq.s32.totalorder %s90, 1
      %p575 = scmp.ne.s32.totalorder %s570, %s572
      %p576 = scmp.eq.s32.totalorder %s90, 0
      %p577 = por %p575, %p576
      %p578 = scmp.ne.s32.totalorder %s570, %s572
      %p579 = scmp.eq.s32.totalorder %s95, 1
      %p580 = por %p578, %p579
      %p581 = scmp.ne.s32.totalorder %s572, %s573
      %p582 = scmp.eq.s32.totalorder %s95, 0
      %p583 = por %p581, %p582
      %p584 = scmp.ne.s32.totalorder %s572, %s573
      %p585 = scmp.eq.s32.totalorder %s96, 1
      %p586 = por %p584, %p585
      %p588 = scmp.ne.s32.totalorder %s573, %s587
      %p589 = scmp.eq.s32.totalorder %s96, 0
      %p590 = por %p588, %p589
      %s592 = sadd.s32 %s591, 1
      %p595 = scmp.eq.s32.totalorder %s90, 1
      %p596 = scmp.ne.s32.totalorder %s591, %s593
      %p597 = scmp.eq.s32.totalorder %s90, 0
      %p598 = por %p596, %p597
      %p599 = scmp.ne.s32.totalorder %s591, %s593
      %p600 = scmp.eq.s32.totalorder %s95, 1
      %p601 = por %p599, %p600
      %p602 = scmp.ne.s32.totalorder %s593, %s594
      %p603 = scmp.eq.s32.totalorder %s95, 0
      %p604 = por %p602, %p603
      %p605 = scmp.ne.s32.totalorder %s593, %s594
      %p606 = scmp.eq.s32.totalorder %s96, 1
      %p607 = por %p605, %p606
      %p609 = scmp.ne.s32.totalorder %s594, %s608
      %p610 = scmp.eq.s32.totalorder %s96, 0
      %p611 = por %p609, %p610
      %s613 = sadd.s32 %s612, 1
      %p616 = scmp.eq.s32.totalorder %s90, 1
      %p617 = scmp.ne.s32.totalorder %s612, %s614
      %p618 = scmp.eq.s32.totalorder %s90, 0
      %p619 = por %p617, %p618
      %p620 = scmp.ne.s32.totalorder %s612, %s614
      %p621 = scmp.eq.s32.totalorder %s95, 1
      %p622 = por %p620, %p621
      %p623 = scmp.ne.s32.totalorder %s614, %s615
      %p624 = scmp.eq.s32.totalorder %s95, 0
      %p625 = por %p623, %p624
      %p626 = scmp.ne.s32.totalorder %s614, %s615
      %p627 = scmp.eq.s32.totalorder %s96, 1
      %p628 = por %p626, %p627
      %p630 = scmp.ne.s32.totalorder %s615, %s629
      %p631 = scmp.eq.s32.totalorder %s96, 0
      %p632 = por %p630, %p631
      %s634 = sadd.s32 %s633, 1
      %p637 = scmp.eq.s32.totalorder %s90, 1
      %p638 = scmp.ne.s32.totalorder %s633, %s635
      %p639 = scmp.eq.s32.totalorder %s90, 0
      %p640 = por %p638, %p639
      %p641 = scmp.ne.s32.totalorder %s633, %s635
      %p642 = scmp.eq.s32.totalorder %s95, 1
      %p643 = por %p641, %p642
      %p644 = scmp.ne.s32.totalorder %s635, %s636
      %p645 = scmp.eq.s32.totalorder %s95, 0
      %p646 = por %p644, %p645
      %p647 = scmp.ne.s32.totalorder %s635, %s636
      %p648 = scmp.eq.s32.totalorder %s96, 1
      %p649 = por %p647, %p648
      %p651 = scmp.ne.s32.totalorder %s636, %s650
      %p652 = scmp.eq.s32.totalorder %s96, 0
      %p653 = por %p651, %p652
      %s655 = sadd.s32 %s654, 1
      %p658 = scmp.eq.s32.totalorder %s90, 1
      %p659 = scmp.ne.s32.totalorder %s654, %s656
      %p660 = scmp.eq.s32.totalorder %s90, 0
      %p661 = por %p659, %p660
      %p662 = scmp.ne.s32.totalorder %s654, %s656
      %p663 = scmp.eq.s32.totalorder %s95, 1
      %p664 = por %p662, %p663
      %p665 = scmp.ne.s32.totalorder %s656, %s657
      %p666 = scmp.eq.s32.totalorder %s95, 0
      %p667 = por %p665, %p666
      %p668 = scmp.ne.s32.totalorder %s656, %s657
      %p669 = scmp.eq.s32.totalorder %s96, 1
      %p670 = por %p668, %p669
      %p672 = scmp.ne.s32.totalorder %s657, %s671
      %p673 = scmp.eq.s32.totalorder %s96, 0
      %p674 = por %p672, %p673
      %s676 = sadd.s32 %s675, 1
      %p679 = scmp.eq.s32.totalorder %s90, 1
      %p680 = scmp.ne.s32.totalorder %s675, %s677
      %p681 = scmp.eq.s32.totalorder %s90, 0
      %p682 = por %p680, %p681
      %p683 = scmp.ne.s32.totalorder %s675, %s677
      %p684 = scmp.eq.s32.totalorder %s95, 1
      %p685 = por %p683, %p684
      %p686 = scmp.ne.s32.totalorder %s677, %s678
      %p687 = scmp.eq.s32.totalorder %s95, 0
      %p688 = por %p686, %p687
      %p689 = scmp.ne.s32.totalorder %s677, %s678
      %p690 = scmp.eq.s32.totalorder %s96, 1
      %p691 = por %p689, %p690
      %p693 = scmp.ne.s32.totalorder %s678, %s692
      %p694 = scmp.eq.s32.totalorder %s96, 0
      %p695 = por %p693, %p694
      %s697 = sadd.s32 %s696, 1
      %p700 = scmp.eq.s32.totalorder %s90, 1
      %p701 = scmp.ne.s32.totalorder %s696, %s698
      %p702 = scmp.eq.s32.totalorder %s90, 0
      %p703 = por %p701, %p702
      %p704 = scmp.ne.s32.totalorder %s696, %s698
      %p705 = scmp.eq.s32.totalorder %s95, 1
      %p706 = por %p704, %p705
      %p707 = scmp.ne.s32.totalorder %s698, %s699
      %p708 = scmp.eq.s32.totalorder %s95, 0
      %p709 = por %p707, %p708
      %p710 = scmp.ne.s32.totalorder %s698, %s699
      %p711 = scmp.eq.s32.totalorder %s96, 1
      %p712 = por %p710, %p711
      %p714 = scmp.ne.s32.totalorder %s699, %s713
      %p715 = scmp.eq.s32.totalorder %s96, 0
      %p716 = por %p714, %p715
      %s718 = sadd.s32 %s717, 1
      %p721 = scmp.eq.s32.totalorder %s90, 1
      %p722 = scmp.ne.s32.totalorder %s717, %s719
      %p723 = scmp.eq.s32.totalorder %s90, 0
      %p724 = por %p722, %p723
      %p725 = scmp.ne.s32.totalorder %s717, %s719
      %p726 = scmp.eq.s32.totalorder %s95, 1
      %p727 = por %p725, %p726
      %p728 = scmp.ne.s32.totalorder %s719, %s720
      %p729 = scmp.eq.s32.totalorder %s95, 0
      %p730 = por %p728, %p729
      %p731 = scmp.ne.s32.totalorder %s719, %s720
      %p732 = scmp.eq.s32.totalorder %s96, 1
      %p733 = por %p731, %p732
      %p735 = scmp.ne.s32.totalorder %s720, %s734
      %p736 = scmp.eq.s32.totalorder %s96, 0
      %p737 = por %p735, %p736
      %s739 = sadd.s32 %s738, 1
      %p742 = scmp.eq.s32.totalorder %s90, 1
      %p743 = scmp.ne.s32.totalorder %s738, %s740
      %p744 = scmp.eq.s32.totalorder %s90, 0
      %p745 = por %p743, %p744
      %p746 = scmp.ne.s32.totalorder %s738, %s740
      %p747 = scmp.eq.s32.totalorder %s95, 1
      %p748 = por %p746, %p747
      %p749 = scmp.ne.s32.totalorder %s740, %s741
      %p750 = scmp.eq.s32.totalorder %s95, 0
      %p751 = por %p749, %p750
      %p752 = scmp.ne.s32.totalorder %s740, %s741
      %p753 = scmp.eq.s32.totalorder %s96, 1
      %p754 = por %p752, %p753
      %p756 = scmp.ne.s32.totalorder %s741, %s755
      %p757 = scmp.eq.s32.totalorder %s96, 0
      %p758 = por %p756, %p757
      %s760 = sadd.s32 %s759, 1
      %p763 = scmp.eq.s32.totalorder %s90, 1
      %p764 = scmp.ne.s32.totalorder %s759, %s761
      %p765 = scmp.eq.s32.totalorder %s90, 0
      %p766 = por %p764, %p765
      %p767 = scmp.ne.s32.totalorder %s759, %s761
      %p768 = scmp.eq.s32.totalorder %s95, 1
      %p769 = por %p767, %p768
      %p770 = scmp.ne.s32.totalorder %s761, %s762
      %p771 = scmp.eq.s32.totalorder %s95, 0
      %p772 = por %p770, %p771
      %p773 = scmp.ne.s32.totalorder %s761, %s762
      %p774 = scmp.eq.s32.totalorder %s96, 1
      %p775 = por %p773, %p774
      %p777 = scmp.ne.s32.totalorder %s762, %s776
      %p778 = scmp.eq.s32.totalorder %s96, 0
      %p779 = por %p777, %p778
      %s781 = sadd.s32 %s780, 1
      %p784 = scmp.eq.s32.totalorder %s90, 1
      %p785 = scmp.ne.s32.totalorder %s780, %s782
      %p786 = scmp.eq.s32.totalorder %s90, 0
      %p787 = por %p785, %p786
      %p788 = scmp.ne.s32.totalorder %s780, %s782
      %p789 = scmp.eq.s32.totalorder %s95, 1
      %p790 = por %p788, %p789
      %p791 = scmp.ne.s32.totalorder %s782, %s783
      %p792 = scmp.eq.s32.totalorder %s95, 0
      %p793 = por %p791, %p792
      %p794 = scmp.ne.s32.totalorder %s782, %s783
      %p795 = scmp.eq.s32.totalorder %s96, 1
      %p796 = por %p794, %p795
      %p798 = scmp.ne.s32.totalorder %s783, %s797
      %p799 = scmp.eq.s32.totalorder %s96, 0
      %p800 = por %p798, %p799
      %s802 = sadd.s32 %s801, 1
      %p805 = scmp.eq.s32.totalorder %s90, 1
      %p806 = scmp.ne.s32.totalorder %s801, %s803
      %p807 = scmp.eq.s32.totalorder %s90, 0
      %p808 = por %p806, %p807
      %p809 = scmp.ne.s32.totalorder %s801, %s803
      %p810 = scmp.eq.s32.totalorder %s95, 1
      %p811 = por %p809, %p810
      %p812 = scmp.ne.s32.totalorder %s803, %s804
      %p813 = scmp.eq.s32.totalorder %s95, 0
      %p814 = por %p812, %p813
      %p815 = scmp.ne.s32.totalorder %s803, %s804
      %p816 = scmp.eq.s32.totalorder %s96, 1
      %p817 = por %p815, %p816
      %p819 = scmp.ne.s32.totalorder %s804, %s818
      %p820 = scmp.eq.s32.totalorder %s96, 0
      %p821 = por %p819, %p820
      %s823 = sadd.s32 %s822, 1
      %p826 = scmp.eq.s32.totalorder %s90, 1
      %p827 = scmp.ne.s32.totalorder %s822, %s824
      %p828 = scmp.eq.s32.totalorder %s90, 0
      %p829 = por %p827, %p828
      %p830 = scmp.ne.s32.totalorder %s822, %s824
      %p831 = scmp.eq.s32.totalorder %s95, 1
      %p832 = por %p830, %p831
      %p833 = scmp.ne.s32.totalorder %s824, %s825
      %p834 = scmp.eq.s32.totalorder %s95, 0
      %p835 = por %p833, %p834
      %p836 = scmp.ne.s32.totalorder %s824, %s825
      %p837 = scmp.eq.s32.totalorder %s96, 1
      %p838 = por %p836, %p837
      %p840 = scmp.ne.s32.totalorder %s825, %s839
      %p841 = scmp.eq.s32.totalorder %s96, 0
      %p842 = por %p840, %p841
      %s844 = sadd.s32 %s843, 1
      %p847 = scmp.eq.s32.totalorder %s90, 1
      %p848 = scmp.ne.s32.totalorder %s843, %s845
      %p849 = scmp.eq.s32.totalorder %s90, 0
      %p850 = por %p848, %p849
      %p851 = scmp.ne.s32.totalorder %s843, %s845
      %p852 = scmp.eq.s32.totalorder %s95, 1
      %p853 = por %p851, %p852
      %p854 = scmp.ne.s32.totalorder %s845, %s846
      %p855 = scmp.eq.s32.totalorder %s95, 0
      %p856 = por %p854, %p855
      %p857 = scmp.ne.s32.totalorder %s845, %s846
      %p858 = scmp.eq.s32.totalorder %s96, 1
      %p859 = por %p857, %p858
      %p861 = scmp.ne.s32.totalorder %s846, %s860
      %p862 = scmp.eq.s32.totalorder %s96, 0
      %p863 = por %p861, %p862
      %s865 = sadd.s32 %s864, 1
      %p868 = scmp.eq.s32.totalorder %s90, 1
      %p869 = scmp.ne.s32.totalorder %s864, %s866
      %p870 = scmp.eq.s32.totalorder %s90, 0
      %p871 = por %p869, %p870
      %p872 = scmp.ne.s32.totalorder %s864, %s866
      %p873 = scmp.eq.s32.totalorder %s95, 1
      %p874 = por %p872, %p873
      %p875 = scmp.ne.s32.totalorder %s866, %s867
      %p876 = scmp.eq.s32.totalorder %s95, 0
      %p877 = por %p875, %p876
      %p878 = scmp.ne.s32.totalorder %s866, %s867
      %p879 = scmp.eq.s32.totalorder %s96, 1
      %p880 = por %p878, %p879
      %p882 = scmp.ne.s32.totalorder %s867, %s881
      %p883 = scmp.eq.s32.totalorder %s96, 0
      %p884 = por %p882, %p883
      %s886 = sadd.s32 %s885, 1
      %p889 = scmp.eq.s32.totalorder %s90, 1
      %p890 = scmp.ne.s32.totalorder %s885, %s887
      %p891 = scmp.eq.s32.totalorder %s90, 0
      %p892 = por %p890, %p891
      %p893 = scmp.ne.s32.totalorder %s885, %s887
      %p894 = scmp.eq.s32.totalorder %s95, 1
      %p895 = por %p893, %p894
      %p896 = scmp.ne.s32.totalorder %s887, %s888
      %p897 = scmp.eq.s32.totalorder %s95, 0
      %p898 = por %p896, %p897
      %p899 = scmp.ne.s32.totalorder %s887, %s888
      %p900 = scmp.eq.s32.totalorder %s96, 1
      %p901 = por %p899, %p900
      %p903 = scmp.ne.s32.totalorder %s888, %s902
      %p904 = scmp.eq.s32.totalorder %s96, 0
      %p905 = por %p903, %p904
      %s907 = sadd.s32 %s906, 1
      %p910 = scmp.eq.s32.totalorder %s90, 1
      %p911 = scmp.ne.s32.totalorder %s906, %s908
      %p912 = scmp.eq.s32.totalorder %s90, 0
      %p913 = por %p911, %p912
      %p914 = scmp.ne.s32.totalorder %s906, %s908
      %p915 = scmp.eq.s32.totalorder %s95, 1
      %p916 = por %p914, %p915
      %p917 = scmp.ne.s32.totalorder %s908, %s909
      %p918 = scmp.eq.s32.totalorder %s95, 0
      %p919 = por %p917, %p918
      %p920 = scmp.ne.s32.totalorder %s908, %s909
      %p921 = scmp.eq.s32.totalorder %s96, 1
      %p922 = por %p920, %p921
      %p924 = scmp.ne.s32.totalorder %s909, %s923
      %p925 = scmp.eq.s32.totalorder %s96, 0
      %p926 = por %p924, %p925
      %s928 = sadd.s32 %s927, 1
      %p931 = scmp.eq.s32.totalorder %s90, 1
      %p932 = scmp.ne.s32.totalorder %s927, %s929
      %p933 = scmp.eq.s32.totalorder %s90, 0
      %p934 = por %p932, %p933
      %p935 = scmp.ne.s32.totalorder %s927, %s929
      %p936 = scmp.eq.s32.totalorder %s95, 1
      %p937 = por %p935, %p936
      %p938 = scmp.ne.s32.totalorder %s929, %s930
      %p939 = scmp.eq.s32.totalorder %s95, 0
      %p940 = por %p938, %p939
      %p941 = scmp.ne.s32.totalorder %s929, %s930
      %p942 = scmp.eq.s32.totalorder %s96, 1
      %p943 = por %p941, %p942
      %p945 = scmp.ne.s32.totalorder %s930, %s944
      %p946 = scmp.eq.s32.totalorder %s96, 0
      %p947 = por %p945, %p946
      %s948 = ssub.s32 %s90, %s97
      %p949 = scmp.eq.s32.totalorder %s948, 0
      %s951 = sadd.s32 %s950, 1
      %s952 = scalar_select %p949, %s950, %s951
      %p955 = pneg %p949
      %p956 = scmp.eq.s32.totalorder %s90, 1
      %p957 = por %p955, %p956
      %p958 = scmp.ne.s32.totalorder %s950, %s953
      %p959 = scmp.eq.s32.totalorder %s90, 0
      %p960 = por %p958, %p959
      %p961 = scmp.ne.s32.totalorder %s950, %s953
      %p962 = scmp.eq.s32.totalorder %s95, 1
      %p963 = por %p961, %p962
      %p964 = scmp.ne.s32.totalorder %s953, %s954
      %p965 = scmp.eq.s32.totalorder %s95, 0
      %p966 = por %p964, %p965
      %p967 = scmp.ne.s32.totalorder %s953, %s954
      %p968 = scmp.eq.s32.totalorder %s96, 1
      %p969 = por %p967, %p968
      %p971 = scmp.ne.s32.totalorder %s954, %s970
      %p972 = scmp.eq.s32.totalorder %s96, 0
      %p973 = por %p971, %p972
      %p974 = scmp.le.s32.totalorder 1, %s90
      %p975 = scmp.lt.s32.totalorder %s90, 3
      %p976 = pnand %p974, %p975
      %p977 = pneg %p976
      // Predicated region
      $region9: #{bart_forward.1} parent=5 // pred_check
        _
      $region10: #{bart_forward.1} parent=5 // pred_check_branch
        %979 = sbr.rel (%p976) target = $region12
      $region11: #{bart_forward.1} parent=5 // pred_region
        %s980 = ssub.s32 %s90, 1
        // Predicated region
        $region13: #{bart_forward.1} parent=11 // pred_check
          %p981 = pneg %p163
        $region14: #{bart_forward.1} parent=11 // pred_check_branch
          %983 = sbr.rel (%p981) target = $region16
        $region15: #{bart_forward.1} parent=11 // pred_region
          _
        $region16: #{bart_forward.1} parent=11 // pred_fallthru
          _
        // Predicated region
        $region17: #{bart_forward.1} parent=11 // pred_check
          %p984 = pneg %p184
        $region18: #{bart_forward.1} parent=11 // pred_check_branch
          %986 = sbr.rel (%p984) target = $region20
        $region19: #{bart_forward.1} parent=11 // pred_region
          _
        $region20: #{bart_forward.1} parent=11 // pred_fallthru
          _
        // Predicated region
        $region21: #{bart_forward.1} parent=11 // pred_check
          %p987 = pneg %p205
        $region22: #{bart_forward.1} parent=11 // pred_check_branch
          %989 = sbr.rel (%p987) target = $region24
        $region23: #{bart_forward.1} parent=11 // pred_region
          _
        $region24: #{bart_forward.1} parent=11 // pred_fallthru
          _
        // Predicated region
        $region25: #{bart_forward.1} parent=11 // pred_check
          %p990 = pneg %p226
        $region26: #{bart_forward.1} parent=11 // pred_check_branch
          %992 = sbr.rel (%p990) target = $region28
        $region27: #{bart_forward.1} parent=11 // pred_region
          _
        $region28: #{bart_forward.1} parent=11 // pred_fallthru
          _
        // Predicated region
        $region29: #{bart_forward.1} parent=11 // pred_check
          %p993 = pneg %p247
        $region30: #{bart_forward.1} parent=11 // pred_check_branch
          %995 = sbr.rel (%p993) target = $region32
        $region31: #{bart_forward.1} parent=11 // pred_region
          _
        $region32: #{bart_forward.1} parent=11 // pred_fallthru
          _
        // Predicated region
        $region33: #{bart_forward.1} parent=11 // pred_check
          %p996 = pneg %p268
        $region34: #{bart_forward.1} parent=11 // pred_check_branch
          %998 = sbr.rel (%p996) target = $region36
        $region35: #{bart_forward.1} parent=11 // pred_region
          _
        $region36: #{bart_forward.1} parent=11 // pred_fallthru
          _
        // Predicated region
        $region37: #{bart_forward.1} parent=11 // pred_check
          %p999 = pneg %p289
        $region38: #{bart_forward.1} parent=11 // pred_check_branch
          %1001 = sbr.rel (%p999) target = $region40
        $region39: #{bart_forward.1} parent=11 // pred_region
          _
        $region40: #{bart_forward.1} parent=11 // pred_fallthru
          _
        // Predicated region
        $region41: #{bart_forward.1} parent=11 // pred_check
          %p1002 = pneg %p310
        $region42: #{bart_forward.1} parent=11 // pred_check_branch
          %1004 = sbr.rel (%p1002) target = $region44
        $region43: #{bart_forward.1} parent=11 // pred_region
          _
        $region44: #{bart_forward.1} parent=11 // pred_fallthru
          _
        // Predicated region
        $region45: #{bart_forward.1} parent=11 // pred_check
          %p1005 = pneg %p331
        $region46: #{bart_forward.1} parent=11 // pred_check_branch
          %1007 = sbr.rel (%p1005) target = $region48
        $region47: #{bart_forward.1} parent=11 // pred_region
          _
        $region48: #{bart_forward.1} parent=11 // pred_fallthru
          _
        // Predicated region
        $region49: #{bart_forward.1} parent=11 // pred_check
          %p1008 = pneg %p352
        $region50: #{bart_forward.1} parent=11 // pred_check_branch
          %1010 = sbr.rel (%p1008) target = $region52
        $region51: #{bart_forward.1} parent=11 // pred_region
          _
        $region52: #{bart_forward.1} parent=11 // pred_fallthru
          _
        // Predicated region
        $region53: #{bart_forward.1} parent=11 // pred_check
          %p1011 = pneg %p373
        $region54: #{bart_forward.1} parent=11 // pred_check_branch
          %1013 = sbr.rel (%p1011) target = $region56
        $region55: #{bart_forward.1} parent=11 // pred_region
          _
        $region56: #{bart_forward.1} parent=11 // pred_fallthru
          _
        // Predicated region
        $region57: #{bart_forward.1} parent=11 // pred_check
          %p1014 = pneg %p394
        $region58: #{bart_forward.1} parent=11 // pred_check_branch
          %1016 = sbr.rel (%p1014) target = $region60
        $region59: #{bart_forward.1} parent=11 // pred_region
          _
        $region60: #{bart_forward.1} parent=11 // pred_fallthru
          _
        // Predicated region
        $region61: #{bart_forward.1} parent=11 // pred_check
          %p1017 = pneg %p415
        $region62: #{bart_forward.1} parent=11 // pred_check_branch
          %1019 = sbr.rel (%p1017) target = $region64
        $region63: #{bart_forward.1} parent=11 // pred_region
          _
        $region64: #{bart_forward.1} parent=11 // pred_fallthru
          _
        // Predicated region
        $region65: #{bart_forward.1} parent=11 // pred_check
          %p1020 = pneg %p436
        $region66: #{bart_forward.1} parent=11 // pred_check_branch
          %1022 = sbr.rel (%p1020) target = $region68
        $region67: #{bart_forward.1} parent=11 // pred_region
          _
        $region68: #{bart_forward.1} parent=11 // pred_fallthru
          _
        // Predicated region
        $region69: #{bart_forward.1} parent=11 // pred_check
          %p1023 = pneg %p457
        $region70: #{bart_forward.1} parent=11 // pred_check_branch
          %1025 = sbr.rel (%p1023) target = $region72
        $region71: #{bart_forward.1} parent=11 // pred_region
          _
        $region72: #{bart_forward.1} parent=11 // pred_fallthru
          _
        // Predicated region
        $region73: #{bart_forward.1} parent=11 // pred_check
          %p1026 = pneg %p478
        $region74: #{bart_forward.1} parent=11 // pred_check_branch
          %1028 = sbr.rel (%p1026) target = $region76
        $region75: #{bart_forward.1} parent=11 // pred_region
          _
        $region76: #{bart_forward.1} parent=11 // pred_fallthru
          _
        // Predicated region
        $region77: #{bart_forward.1} parent=11 // pred_check
          %p1029 = pneg %p499
        $region78: #{bart_forward.1} parent=11 // pred_check_branch
          %1031 = sbr.rel (%p1029) target = $region80
        $region79: #{bart_forward.1} parent=11 // pred_region
          _
        $region80: #{bart_forward.1} parent=11 // pred_fallthru
          _
        // Predicated region
        $region81: #{bart_forward.1} parent=11 // pred_check
          %p1032 = pneg %p520
        $region82: #{bart_forward.1} parent=11 // pred_check_branch
          %1034 = sbr.rel (%p1032) target = $region84
        $region83: #{bart_forward.1} parent=11 // pred_region
          _
        $region84: #{bart_forward.1} parent=11 // pred_fallthru
          _
        // Predicated region
        $region85: #{bart_forward.1} parent=11 // pred_check
          %p1035 = pneg %p541
        $region86: #{bart_forward.1} parent=11 // pred_check_branch
          %1037 = sbr.rel (%p1035) target = $region88
        $region87: #{bart_forward.1} parent=11 // pred_region
          _
        $region88: #{bart_forward.1} parent=11 // pred_fallthru
          _
        // Predicated region
        $region89: #{bart_forward.1} parent=11 // pred_check
          %p1038 = pneg %p562
        $region90: #{bart_forward.1} parent=11 // pred_check_branch
          %1040 = sbr.rel (%p1038) target = $region92
        $region91: #{bart_forward.1} parent=11 // pred_region
          _
        $region92: #{bart_forward.1} parent=11 // pred_fallthru
          _
        // Predicated region
        $region93: #{bart_forward.1} parent=11 // pred_check
          %p1041 = pneg %p583
        $region94: #{bart_forward.1} parent=11 // pred_check_branch
          %1043 = sbr.rel (%p1041) target = $region96
        $region95: #{bart_forward.1} parent=11 // pred_region
          _
        $region96: #{bart_forward.1} parent=11 // pred_fallthru
          _
        // Predicated region
        $region97: #{bart_forward.1} parent=11 // pred_check
          %p1044 = pneg %p604
        $region98: #{bart_forward.1} parent=11 // pred_check_branch
          %1046 = sbr.rel (%p1044) target = $region100
        $region99: #{bart_forward.1} parent=11 // pred_region
          _
        $region100: #{bart_forward.1} parent=11 // pred_fallthru
          _
        // Predicated region
        $region101: #{bart_forward.1} parent=11 // pred_check
          %p1047 = pneg %p625
        $region102: #{bart_forward.1} parent=11 // pred_check_branch
          %1049 = sbr.rel (%p1047) target = $region104
        $region103: #{bart_forward.1} parent=11 // pred_region
          _
        $region104: #{bart_forward.1} parent=11 // pred_fallthru
          _
        // Predicated region
        $region105: #{bart_forward.1} parent=11 // pred_check
          %p1050 = pneg %p646
        $region106: #{bart_forward.1} parent=11 // pred_check_branch
          %1052 = sbr.rel (%p1050) target = $region108
        $region107: #{bart_forward.1} parent=11 // pred_region
          _
        $region108: #{bart_forward.1} parent=11 // pred_fallthru
          _
        // Predicated region
        $region109: #{bart_forward.1} parent=11 // pred_check
          %p1053 = pneg %p667
        $region110: #{bart_forward.1} parent=11 // pred_check_branch
          %1055 = sbr.rel (%p1053) target = $region112
        $region111: #{bart_forward.1} parent=11 // pred_region
          _
        $region112: #{bart_forward.1} parent=11 // pred_fallthru
          _
        // Predicated region
        $region113: #{bart_forward.1} parent=11 // pred_check
          %p1056 = pneg %p688
        $region114: #{bart_forward.1} parent=11 // pred_check_branch
          %1058 = sbr.rel (%p1056) target = $region116
        $region115: #{bart_forward.1} parent=11 // pred_region
          _
        $region116: #{bart_forward.1} parent=11 // pred_fallthru
          _
        // Predicated region
        $region117: #{bart_forward.1} parent=11 // pred_check
          %p1059 = pneg %p709
        $region118: #{bart_forward.1} parent=11 // pred_check_branch
          %1061 = sbr.rel (%p1059) target = $region120
        $region119: #{bart_forward.1} parent=11 // pred_region
          _
        $region120: #{bart_forward.1} parent=11 // pred_fallthru
          _
        // Predicated region
        $region121: #{bart_forward.1} parent=11 // pred_check
          %p1062 = pneg %p730
        $region122: #{bart_forward.1} parent=11 // pred_check_branch
          %1064 = sbr.rel (%p1062) target = $region124
        $region123: #{bart_forward.1} parent=11 // pred_region
          _
        $region124: #{bart_forward.1} parent=11 // pred_fallthru
          _
        // Predicated region
        $region125: #{bart_forward.1} parent=11 // pred_check
          %p1065 = pneg %p751
        $region126: #{bart_forward.1} parent=11 // pred_check_branch
          %1067 = sbr.rel (%p1065) target = $region128
        $region127: #{bart_forward.1} parent=11 // pred_region
          _
        $region128: #{bart_forward.1} parent=11 // pred_fallthru
          _
        // Predicated region
        $region129: #{bart_forward.1} parent=11 // pred_check
          %p1068 = pneg %p772
        $region130: #{bart_forward.1} parent=11 // pred_check_branch
          %1070 = sbr.rel (%p1068) target = $region132
        $region131: #{bart_forward.1} parent=11 // pred_region
          _
        $region132: #{bart_forward.1} parent=11 // pred_fallthru
          _
        // Predicated region
        $region133: #{bart_forward.1} parent=11 // pred_check
          %p1071 = pneg %p793
        $region134: #{bart_forward.1} parent=11 // pred_check_branch
          %1073 = sbr.rel (%p1071) target = $region136
        $region135: #{bart_forward.1} parent=11 // pred_region
          _
        $region136: #{bart_forward.1} parent=11 // pred_fallthru
          _
        // Predicated region
        $region137: #{bart_forward.1} parent=11 // pred_check
          %p1074 = pneg %p814
        $region138: #{bart_forward.1} parent=11 // pred_check_branch
          %1076 = sbr.rel (%p1074) target = $region140
        $region139: #{bart_forward.1} parent=11 // pred_region
          _
        $region140: #{bart_forward.1} parent=11 // pred_fallthru
          _
        // Predicated region
        $region141: #{bart_forward.1} parent=11 // pred_check
          %p1077 = pneg %p835
        $region142: #{bart_forward.1} parent=11 // pred_check_branch
          %1079 = sbr.rel (%p1077) target = $region144
        $region143: #{bart_forward.1} parent=11 // pred_region
          _
        $region144: #{bart_forward.1} parent=11 // pred_fallthru
          _
        // Predicated region
        $region145: #{bart_forward.1} parent=11 // pred_check
          %p1080 = pneg %p856
        $region146: #{bart_forward.1} parent=11 // pred_check_branch
          %1082 = sbr.rel (%p1080) target = $region148
        $region147: #{bart_forward.1} parent=11 // pred_region
          _
        $region148: #{bart_forward.1} parent=11 // pred_fallthru
          _
        // Predicated region
        $region149: #{bart_forward.1} parent=11 // pred_check
          %p1083 = pneg %p877
        $region150: #{bart_forward.1} parent=11 // pred_check_branch
          %1085 = sbr.rel (%p1083) target = $region152
        $region151: #{bart_forward.1} parent=11 // pred_region
          _
        $region152: #{bart_forward.1} parent=11 // pred_fallthru
          _
        // Predicated region
        $region153: #{bart_forward.1} parent=11 // pred_check
          %p1086 = pneg %p898
        $region154: #{bart_forward.1} parent=11 // pred_check_branch
          %1088 = sbr.rel (%p1086) target = $region156
        $region155: #{bart_forward.1} parent=11 // pred_region
          _
        $region156: #{bart_forward.1} parent=11 // pred_fallthru
          _
        // Predicated region
        $region157: #{bart_forward.1} parent=11 // pred_check
          %p1089 = pneg %p919
        $region158: #{bart_forward.1} parent=11 // pred_check_branch
          %1091 = sbr.rel (%p1089) target = $region160
        $region159: #{bart_forward.1} parent=11 // pred_region
          _
        $region160: #{bart_forward.1} parent=11 // pred_fallthru
          _
        // Predicated region
        $region161: #{bart_forward.1} parent=11 // pred_check
          %p1092 = pneg %p940
        $region162: #{bart_forward.1} parent=11 // pred_check_branch
          %1094 = sbr.rel (%p1092) target = $region164
        $region163: #{bart_forward.1} parent=11 // pred_region
          _
        $region164: #{bart_forward.1} parent=11 // pred_fallthru
          _
      $region12: #{bart_forward.1} parent=5 // pred_fallthru
        _
      %p1095 = scmp.lt.s32.totalorder %s90, 2
      // Predicated region
      $region165: #{bart_forward.1} parent=5 // pred_check
        %p1096 = pneg %p1095
      $region166: #{bart_forward.1} parent=5 // pred_check_branch
        %1098 = sbr.rel (%p1096) target = $region168
      $region167: #{bart_forward.1} parent=5 // pred_region
        // Predicated region
        $region169: #{bart_forward.1} parent=167 // pred_check
          %p1099 = pneg %p110
        $region170: #{bart_forward.1} parent=167 // pred_check_branch
          %1101 = sbr.rel (%p1099) target = $region172
        $region171: #{bart_forward.1} parent=167 // pred_region
          %p1102 = scmp.lt.s32.totalorder %s90, 1
          %s1103 = scalar_select %p1102, %s90, 1
          %s1104 = smul.addr %s1103, 4
          %s1105 = scalar_lea.vmem %s1, %s1104
        $region172: #{bart_forward.1} parent=167 // pred_fallthru
          _
        // Predicated region
        $region173: #{bart_forward.1} parent=167 // pred_check
          %p1106 = pneg %p136
        $region174: #{bart_forward.1} parent=167 // pred_check_branch
          %1108 = sbr.rel (%p1106) target = $region176
        $region175: #{bart_forward.1} parent=167 // pred_region
          %p1109 = scmp.lt.s32.totalorder %s90, 1
          %s1110 = scalar_select %p1109, %s90, 1
          %s1111 = smul.addr %s1110, 4
          %s1112 = scalar_lea.vmem %s3, %s1111
        $region176: #{bart_forward.1} parent=167 // pred_fallthru
          _
      $region168: #{bart_forward.1} parent=5 // pred_fallthru
        _
      %p1113 = scmp.le.s32.totalorder 1, %s90
      %p1114 = scmp.lt.s32.totalorder %s90, 3
      %p1115 = pnand %p1113, %p1114
      %p1116 = pneg %p1115
      // Predicated region
      $region177: #{bart_forward.1} parent=5 // pred_check
        _
      $region178: #{bart_forward.1} parent=5 // pred_check_branch
        %1118 = sbr.rel (%p1115) target = $region180
      $region179: #{bart_forward.1} parent=5 // pred_region
        %s1119 = ssub.s32 %s90, 1
        %p1120 = scmp.lt.s32.totalorder %s95, 1
        %s1121 = scalar_select %p1120, %s95, 1
        %s1122 = smul.addr %s1121, 4
        %s1123 = scalar_lea.vmem %s1, %s1122
        %p1124 = pneg %p116
        %p1125 = pneg %p113
        %p1126 = scmp.lt.s32.totalorder %s95, 1
        %s1127 = scalar_select %p1126, %s95, 1
        %s1128 = smul.addr %s1127, 4
        %s1129 = scalar_lea.vmem %s3, %s1128
        %p1130 = pneg %p142
        %p1131 = pneg %p139
        %p1132 = pneg %p163
        %p1133 = pneg %p160
        %p1134 = pneg %p184
        %p1135 = pneg %p181
        %p1136 = pneg %p205
        %p1137 = pneg %p202
        %p1138 = pneg %p226
        %p1139 = pneg %p223
        %p1140 = pneg %p247
        %p1141 = pneg %p244
        %p1142 = pneg %p268
        %p1143 = pneg %p265
        %p1144 = pneg %p289
        %p1145 = pneg %p286
        %p1146 = pneg %p310
        %p1147 = pneg %p307
        %p1148 = pneg %p331
        %p1149 = pneg %p328
        %p1150 = pneg %p352
        %p1151 = pneg %p349
        %p1152 = pneg %p373
        %p1153 = pneg %p370
        %p1154 = pneg %p394
        %p1155 = pneg %p391
        %p1156 = pneg %p415
        %p1157 = pneg %p412
        %p1158 = pneg %p436
        %p1159 = pneg %p433
        %p1160 = pneg %p457
        %p1161 = pneg %p454
        %p1162 = pneg %p478
        %p1163 = pneg %p475
        %p1164 = pneg %p499
        %p1165 = pneg %p496
        %p1166 = pneg %p520
        %p1167 = pneg %p517
        %p1168 = pneg %p541
        %p1169 = pneg %p538
        %p1170 = pneg %p562
        %p1171 = pneg %p559
        %p1172 = pneg %p583
        %p1173 = pneg %p580
        %p1174 = pneg %p604
        %p1175 = pneg %p601
        %p1176 = pneg %p625
        %p1177 = pneg %p622
        %p1178 = pneg %p646
        %p1179 = pneg %p643
        %p1180 = pneg %p667
        %p1181 = pneg %p664
        %p1182 = pneg %p688
        %p1183 = pneg %p685
        %p1184 = pneg %p709
        %p1185 = pneg %p706
        %p1186 = pneg %p730
        %p1187 = pneg %p727
        %p1188 = pneg %p751
        %p1189 = pneg %p748
        %p1190 = pneg %p772
        %p1191 = pneg %p769
        %p1192 = pneg %p793
        %p1193 = pneg %p790
        %p1194 = pneg %p814
        %p1195 = pneg %p811
        %p1196 = pneg %p835
        %p1197 = pneg %p832
        %p1198 = pneg %p856
        %p1199 = pneg %p853
        %p1200 = pneg %p877
        %p1201 = pneg %p874
        %p1202 = pneg %p898
        %p1203 = pneg %p895
        %p1204 = pneg %p919
        %p1205 = pneg %p916
        %p1206 = pneg %p940
        %p1207 = pneg %p937
        %p1208 = pneg %p966
        %p1209 = pneg %p963
        %s1210 = sand.u32 %s953, 1
        %s1211 = scalar_lea.sflag [#allocation3], %s1210
        %s1212 = sand.u32 %s953, 1
        %s1213 = smul.addr %s1212, 4
        %s1214 = scalar_lea.vmem [#allocation2], %s1213
        %p1215 = scmp.lt.s32.totalorder %s95, 1
        %s1216 = scalar_select %p1215, %s95, 1
        %s1217 = smul.addr %s1216, 4
        %s1218 = scalar_lea.vmem %s1, %s1217
        %p1219 = scmp.lt.s32.totalorder %s95, 1
        %s1220 = scalar_select %p1219, %s95, 1
        %s1221 = smul.addr %s1220, 4
        %s1222 = scalar_lea.vmem %s3, %s1221
        %v1224 = vld [vmem:[%s1218] sm:$0xf]
        %v1225 = vunpack.c.l.bf16 %v1224
        %v1226 = vld [vmem:[%s5] sm:$0x1]
        %v1227 = vld [vmem:[%s7] sm:$0x1]
        %vm1228 = vcmask 261120
        %v1229 = vsel %vm1228, %v1225, 0.0
        %1230 = vadd.xlane.f32.xlu0 %v1229
        %v1231 = vpop.xlane.xlu0 %1230
        %v1232 = vrcp.pop 32.0
        %v1233 = vmul.f32 %v1231, %v1232
        %v1234 = vsub.f32 %v1225, %v1233
        %v1235 = vmul.f32 %v1234, %v1234
        %v1236 = vsel %vm1228, %v1235, 0.0
        %1237 = vadd.xlane.f32.xlu0 %v1236
        %v1238 = vpop.xlane.xlu0 %1237
        %v1239 = vmul.f32 %v1238, %v1232
        %v1240 = vadd.f32 %v1239, 1e-05
        %v1241 = vrsqrt.pop %v1240
        %v1242 = vmul.f32 %v1234, %v1241
        %v1244 = vlaneseq
        %v1245 = vshrl.u32 %v1244, 7
        %v1246 = vsub.s32 0, %v1245
        %v1247 = vrot.slane %v1226, %v1246
        %v1249 = vmul.f32 %v1242, %v1247
        %v1251 = vlaneseq
        %v1252 = vshrl.u32 %v1251, 7
        %v1253 = vsub.s32 0, %v1252
        %v1254 = vrot.slane %v1227, %v1253
        %v1256 = vadd.f32 %v1249, %v1254
        %v1257 = vld [vmem:[%s9] sm:$0xf]
        %v1258 = vld [vmem:[%s9 + $0x4] sm:$0xf]
        %v1259 = vld [vmem:[%s9 + $0x8] sm:$0xf]
        %v1260 = vld [vmem:[%s9 + $0xc] sm:$0xf]
        %v1261 = vld [vmem:[%s11] sm:$0x1]
        %v1262 = vld [vmem:[%s13] sm:$0xf]
        %v1263 = vld [vmem:[%s13 + $0x4] sm:$0xf]
        %v1264 = vld [vmem:[%s13 + $0x8] sm:$0xf]
        %v1265 = vld [vmem:[%s13 + $0xc] sm:$0xf]
        %v1266 = vld [vmem:[%s15] sm:$0x1]
        %v1267 = vld [vmem:[%s17] sm:$0x1]
        %v1268 = vld [vmem:[%s19] sm:$0x1]
        %v1269 = vpack.c.bf16 %v1256, %v1256
        %v1271 = vlaneseq
        %v1272 = vshrl.u32 %v1271, 7
        %v1273 = vsub.s32 0, %v1272
        %v1274 = vrot.slane %v1261, %v1273
        %v1280 = vunpack.c.l.b16 %v1257
        %v1281 = vunpack.c.l.b16 %v1258
        %v1282 = vunpack.c.l.b16 %v1259
        %v1283 = vunpack.c.l.b16 %v1260
        %v1284 = vpack.c.b16 %v1281, %v1280
        %v1285 = vpack.c.b16 %v1283, %v1282
        %v1289 = vsel %vm1228, %v1269, 0
        %1291 = vmatprep.subr.bf16.mxu0 0
        %1292 = vmatpush1.bf16.msra.mxu0 %v1284
        %1293 = vmatprep.subr.bf16.mxu0 0
        %1294 = vmatpush1.bf16.msra.mxu0 %v1285
        %1295 = vmatprep.subr.bf16.mxu0 0
        %1296 = vmatpush1.bf16.msra.mxu0 0
        %1297 = vmatprep.subr.bf16.mxu0 0
        %1298 = vmatpush1.bf16.msra.mxu0 0
        %1299 = vmatprep.subr.bf16.mxu0 0
        %1300 = vmatpush1.bf16.msra.mxu0 0
        %1301 = vmatprep.subr.bf16.mxu0 0
        %1302 = vmatpush1.bf16.msra.mxu0 0
        %1303 = vmatprep.subr.bf16.mxu0 0
        %1304 = vmatpush1.bf16.msra.mxu0 0
        %1305 = vmatprep.subr.bf16.mxu0 0
        %1306 = vmatpush1.bf16.msra.mxu0 0
        %1307 = vmatprep.subr.bf16.mxu0 0
        %1308 = vmatpush1.bf16.msra.mxu0 0
        %1309 = vmatprep.subr.bf16.mxu0 0
        %1310 = vmatpush1.bf16.msra.mxu0 0
        %1311 = vmatprep.subr.bf16.mxu0 0
        %1312 = vmatpush1.bf16.msra.mxu0 0
        %1313 = vmatprep.subr.bf16.mxu0 0
        %1314 = vmatpush1.bf16.msra.mxu0 0
        %1315 = vmatprep.subr.bf16.mxu0 0
        %1316 = vmatpush1.bf16.msra.mxu0 0
        %1317 = vmatprep.subr.bf16.mxu0 0
        %1318 = vmatpush1.bf16.msra.mxu0 0
        %1319 = vmatprep.subr.bf16.mxu0 0
        %1320 = vmatpush1.bf16.msra.mxu0 0
        %1321 = vmatprep.subr.bf16.mxu0 0
        %1322 = vmatpush1.bf16.msra.mxu0 0
        %1323 = vmatprep.mubr.bf16.mxu0 0
        %1324 = vmatmul.mubr.bf16.gmra.mrb[0].mxu0 %v1289
        %v1325 = vpop.f32.mrb[0].mxu0
        %v1326 = vadd.f32 %v1274, %v1325
        %v1327 = vpop.f32.mrb[0].mxu0
        %v1328 = vpop.f32.mrb[0].mxu0
        %v1329 = vpop.f32.mrb[0].mxu0
        %1330 = vdwg.mxu0
        %v1331 = vpack.c.bf16 %v1326, %v1326
        %1333 = vrot.lane.b32.xlu0 %v1331, 96
        %v1334 = vpop.permute.xlu0 %1333
        %vm1335 = vcmask 64512
        %v1337 = vsel %vm1335, %v1331, 0
        %v1340 = vsel %vm1335, %v1334, 0
        %1342 = vmatprep.subr.bf16.mxu0 0
        %1343 = vmatpush1.bf16.xpose.msra.mxu0 %v1340
        %1344 = vmatprep.subr.bf16.mxu0 0
        %1345 = vmatpush1.bf16.xpose.msra.mxu0 0
        %1346 = vmatprep.subr.bf16.mxu0 0
        %1347 = vmatpush1.bf16.xpose.msra.mxu0 0
        %1348 = vmatprep.subr.bf16.mxu0 0
        %1349 = vmatpush1.bf16.xpose.msra.mxu0 0
        %1350 = vmatprep.subr.bf16.mxu0 0
        %1351 = vmatpush1.bf16.xpose.msra.mxu0 0
        %1352 = vmatprep.subr.bf16.mxu0 0
        %1353 = vmatpush1.bf16.xpose.msra.mxu0 0
        %1354 = vmatprep.subr.bf16.mxu0 0
        %1355 = vmatpush1.bf16.xpose.msra.mxu0 0
        %1356 = vmatprep.subr.bf16.mxu0 0
        %1357 = vmatpush1.bf16.xpose.msra.mxu0 0
        %1358 = vmatprep.subr.bf16.mxu0 0
        %1359 = vmatpush1.bf16.xpose.msra.mxu0 0
        %1360 = vmatprep.subr.bf16.mxu0 0
        %1361 = vmatpush1.bf16.xpose.msra.mxu0 0
        %1362 = vmatprep.subr.bf16.mxu0 0
        %1363 = vmatpush1.bf16.xpose.msra.mxu0 0
        %1364 = vmatprep.subr.bf16.mxu0 0
        %1365 = vmatpush1.bf16.xpose.msra.mxu0 0
        %1366 = vmatprep.subr.bf16.mxu0 0
        %1367 = vmatpush1.bf16.xpose.msra.mxu0 0
        %1368 = vmatprep.subr.bf16.mxu0 0
        %1369 = vmatpush1.bf16.xpose.msra.mxu0 0
        %1370 = vmatprep.subr.bf16.mxu0 0
        %1371 = vmatpush1.bf16.xpose.msra.mxu0 0
        %1372 = vmatprep.subr.bf16.mxu0 0
        %1373 = vmatpush1.bf16.xpose.msra.mxu0 0
        %1374 = vmatprep.mubr.bf16.mxu0 0
        %1375 = vmatmul.mubr.bf16.gmra.mrb[0].mxu0 %v1337
        %v1376 = vpop.f32.mrb[0].mxu0
        %v1377 = vadd.f32 0.0, %v1376
        %v1378 = vpop.f32.mrb[0].mxu0
        %v1379 = vpop.f32.mrb[0].mxu0
        %v1380 = vpop.f32.mrb[0].mxu0
        %1381 = vdwg.mxu0
        %v1382 = vsel %vm1335, %v1377, -inf
        %1383 = vmax.xlane.f32.xlu0 %v1382
        %v1384 = vpop.xlane.xlu0 %1383
        %v1385 = vsub.f32 %v1377, %v1384
        %v1386 = vmul.f32 %v1385, 1.442695
        %v1387 = vpow.pop %v1386
        %v1388 = vsel %vm1335, %v1387, 0.0
        %1389 = vadd.xlane.f32.xlu0 %v1388
        %v1390 = vpop.xlane.xlu0 %1389
        %v1391 = vrcp.pop %v1390
        %v1392 = vmul.f32 %v1387, %v1391
        %v1393 = vpack.c.bf16 %v1392, %v1392
        %1394 = vrot.lane.b32.xlu0 %v1331, 64
        %v1395 = vpop.permute.xlu0 %1394
        %v1397 = vsel %vm1335, %v1393, 0
        %vm1399 = vcmask 1043456
        %v1401 = vsel %vm1399, %v1395, 0
        %1403 = vmatprep.subr.bf16.mxu0 0
        %1404 = vmatpush1.bf16.msra.mxu0 %v1401
        %1405 = vmatprep.subr.bf16.mxu0 0
        %1406 = vmatpush1.bf16.msra.mxu0 0
        %1407 = vmatprep.subr.bf16.mxu0 0
        %1408 = vmatpush1.bf16.msra.mxu0 0
        %1409 = vmatprep.subr.bf16.mxu0 0
        %1410 = vmatpush1.bf16.msra.mxu0 0
        %1411 = vmatprep.subr.bf16.mxu0 0
        %1412 = vmatpush1.bf16.msra.mxu0 0
        %1413 = vmatprep.subr.bf16.mxu0 0
        %1414 = vmatpush1.bf16.msra.mxu0 0
        %1415 = vmatprep.subr.bf16.mxu0 0
        %1416 = vmatpush1.bf16.msra.mxu0 0
        %1417 = vmatprep.subr.bf16.mxu0 0
        %1418 = vmatpush1.bf16.msra.mxu0 0
        %1419 = vmatprep.subr.bf16.mxu0 0
        %1420 = vmatpush1.bf16.msra.mxu0 0
        %1421 = vmatprep.subr.bf16.mxu0 0
        %1422 = vmatpush1.bf16.msra.mxu0 0
        %1423 = vmatprep.subr.bf16.mxu0 0
        %1424 = vmatpush1.bf16.msra.mxu0 0
        %1425 = vmatprep.subr.bf16.mxu0 0
        %1426 = vmatpush1.bf16.msra.mxu0 0
        %1427 = vmatprep.subr.bf16.mxu0 0
        %1428 = vmatpush1.bf16.msra.mxu0 0
        %1429 = vmatprep.subr.bf16.mxu0 0
        %1430 = vmatpush1.bf16.msra.mxu0 0
        %1431 = vmatprep.subr.bf16.mxu0 0
        %1432 = vmatpush1.bf16.msra.mxu0 0
        %1433 = vmatprep.subr.bf16.mxu0 0
        %1434 = vmatpush1.bf16.msra.mxu0 0
        %1435 = vmatprep.mubr.bf16.mxu0 0
        %1436 = vmatmul.mubr.bf16.gmra.mrb[0].mxu0 %v1397
        %v1437 = vpop.f32.mrb[0].mxu0
        %v1438 = vadd.f32 0.0, %v1437
        %v1439 = vpop.f32.mrb[0].mxu0
        %v1440 = vpop.f32.mrb[0].mxu0
        %v1441 = vpop.f32.mrb[0].mxu0
        %1442 = vdwg.mxu0
        %v1443 = vpack.c.bf16 %v1438, %v1438
        %1444 = vrot.lane.b32.xlu0 %v1331, 120
        %v1445 = vpop.permute.xlu0 %1444
        %1446 = vrot.lane.b32.xlu0 %v1331, 88
        %v1447 = vpop.permute.xlu0 %1446
        %v1449 = vsel %vm1335, %v1445, 0
        %v1452 = vsel %vm1335, %v1447, 0
        %1454 = vmatprep.subr.bf16.mxu0 0
        %1455 = vmatpush1.bf16.xpose.msra.mxu0 %v1452
        %1456 = vmatprep.subr.bf16.mxu0 0
        %1457 = vmatpush1.bf16.xpose.msra.mxu0 0
        %1458 = vmatprep.subr.bf16.mxu0 0
        %1459 = vmatpush1.bf16.xpose.msra.mxu0 0
        %1460 = vmatprep.subr.bf16.mxu0 0
        %1461 = vmatpush1.bf16.xpose.msra.mxu0 0
        %1462 = vmatprep.subr.bf16.mxu0 0
        %1463 = vmatpush1.bf16.xpose.msra.mxu0 0
        %1464 = vmatprep.subr.bf16.mxu0 0
        %1465 = vmatpush1.bf16.xpose.msra.mxu0 0
        %1466 = vmatprep.subr.bf16.mxu0 0
        %1467 = vmatpush1.bf16.xpose.msra.mxu0 0
        %1468 = vmatprep.subr.bf16.mxu0 0
        %1469 = vmatpush1.bf16.xpose.msra.mxu0 0
        %1470 = vmatprep.subr.bf16.mxu0 0
        %1471 = vmatpush1.bf16.xpose.msra.mxu0 0
        %1472 = vmatprep.subr.bf16.mxu0 0
        %1473 = vmatpush1.bf16.xpose.msra.mxu0 0
        %1474 = vmatprep.subr.bf16.mxu0 0
        %1475 = vmatpush1.bf16.xpose.msra.mxu0 0
        %1476 = vmatprep.subr.bf16.mxu0 0
        %1477 = vmatpush1.bf16.xpose.msra.mxu0 0
        %1478 = vmatprep.subr.bf16.mxu0 0
        %1479 = vmatpush1.bf16.xpose.msra.mxu0 0
        %1480 = vmatprep.subr.bf16.mxu0 0
        %1481 = vmatpush1.bf16.xpose.msra.mxu0 0
        %1482 = vmatprep.subr.bf16.mxu0 0
        %1483 = vmatpush1.bf16.xpose.msra.mxu0 0
        %1484 = vmatprep.subr.bf16.mxu0 0
        %1485 = vmatpush1.bf16.xpose.msra.mxu0 0
        %1486 = vmatprep.mubr.bf16.mxu0 0
        %1487 = vmatmul.mubr.bf16.gmra.mrb[0].mxu0 %v1449
        %v1488 = vpop.f32.mrb[0].mxu0
        %v1489 = vadd.f32 0.0, %v1488
        %v1490 = vpop.f32.mrb[0].mxu0
        %v1491 = vpop.f32.mrb[0].mxu0
        %v1492 = vpop.f32.mrb[0].mxu0
        %1493 = vdwg.mxu0
        %v1494 = vsel %vm1335, %v1489, -inf
        %1495 = vmax.xlane.f32.xlu0 %v1494
        %v1496 = vpop.xlane.xlu0 %1495
        %v1497 = vsub.f32 %v1489, %v1496
        %v1498 = vmul.f32 %v1497, 1.442695
        %v1499 = vpow.pop %v1498
        %v1500 = vsel %vm1335, %v1499, 0.0
        %1501 = vadd.xlane.f32.xlu0 %v1500
        %v1502 = vpop.xlane.xlu0 %1501
        %v1503 = vrcp.pop %v1502
        %v1504 = vmul.f32 %v1499, %v1503
        %v1505 = vpack.c.bf16 %v1504, %v1504
        %1506 = vrot.lane.b32.xlu0 %v1331, 56
        %v1507 = vpop.permute.xlu0 %1506
        %v1509 = vsel %vm1335, %v1505, 0
        %v1512 = vsel %vm1399, %v1507, 0
        %1514 = vmatprep.subr.bf16.mxu0 0
        %1515 = vmatpush1.bf16.msra.mxu0 %v1512
        %1516 = vmatprep.subr.bf16.mxu0 0
        %1517 = vmatpush1.bf16.msra.mxu0 0
        %1518 = vmatprep.subr.bf16.mxu0 0
        %1519 = vmatpush1.bf16.msra.mxu0 0
        %1520 = vmatprep.subr.bf16.mxu0 0
        %1521 = vmatpush1.bf16.msra.mxu0 0
        %1522 = vmatprep.subr.bf16.mxu0 0
        %1523 = vmatpush1.bf16.msra.mxu0 0
        %1524 = vmatprep.subr.bf16.mxu0 0
        %1525 = vmatpush1.bf16.msra.mxu0 0
        %1526 = vmatprep.subr.bf16.mxu0 0
        %1527 = vmatpush1.bf16.msra.mxu0 0
        %1528 = vmatprep.subr.bf16.mxu0 0
        %1529 = vmatpush1.bf16.msra.mxu0 0
        %1530 = vmatprep.subr.bf16.mxu0 0
        %1531 = vmatpush1.bf16.msra.mxu0 0
        %1532 = vmatprep.subr.bf16.mxu0 0
        %1533 = vmatpush1.bf16.msra.mxu0 0
        %1534 = vmatprep.subr.bf16.mxu0 0
        %1535 = vmatpush1.bf16.msra.mxu0 0
        %1536 = vmatprep.subr.bf16.mxu0 0
        %1537 = vmatpush1.bf16.msra.mxu0 0
        %1538 = vmatprep.subr.bf16.mxu0 0
        %1539 = vmatpush1.bf16.msra.mxu0 0
        %1540 = vmatprep.subr.bf16.mxu0 0
        %1541 = vmatpush1.bf16.msra.mxu0 0
        %1542 = vmatprep.subr.bf16.mxu0 0
        %1543 = vmatpush1.bf16.msra.mxu0 0
        %1544 = vmatprep.subr.bf16.mxu0 0
        %1545 = vmatpush1.bf16.msra.mxu0 0
        %1546 = vmatprep.mubr.bf16.mxu0 0
        %1547 = vmatmul.mubr.bf16.gmra.mrb[0].mxu0 %v1509
        %v1548 = vpop.f32.mrb[0].mxu0
        %v1549 = vadd.f32 0.0, %v1548
        %v1550 = vpop.f32.mrb[0].mxu0
        %v1551 = vpop.f32.mrb[0].mxu0
        %v1552 = vpop.f32.mrb[0].mxu0
        %1553 = vdwg.mxu0
        %v1554 = vpack.c.bf16 %v1549, %v1549
        %v1556 = vsel %vm1335, %v1554, 0
        %v1559 = vsel %vm1399, %v1263, 0
        %1561 = vmatprep.subr.bf16.mxu0 0
        %1562 = vmatpush1.bf16.msra.mxu0 %v1559
        %1563 = vmatprep.subr.bf16.mxu0 0
        %1564 = vmatpush1.bf16.msra.mxu0 0
        %1565 = vmatprep.subr.bf16.mxu0 0
        %1566 = vmatpush1.bf16.msra.mxu0 0
        %1567 = vmatprep.subr.bf16.mxu0 0
        %1568 = vmatpush1.bf16.msra.mxu0 0
        %1569 = vmatprep.subr.bf16.mxu0 0
        %1570 = vmatpush1.bf16.msra.mxu0 0
        %1571 = vmatprep.subr.bf16.mxu0 0
        %1572 = vmatpush1.bf16.msra.mxu0 0
        %1573 = vmatprep.subr.bf16.mxu0 0
        %1574 = vmatpush1.bf16.msra.mxu0 0
        %1575 = vmatprep.subr.bf16.mxu0 0
        %1576 = vmatpush1.bf16.msra.mxu0 0
        %1577 = vmatprep.subr.bf16.mxu0 0
        %1578 = vmatpush1.bf16.msra.mxu0 0
        %1579 = vmatprep.subr.bf16.mxu0 0
        %1580 = vmatpush1.bf16.msra.mxu0 0
        %1581 = vmatprep.subr.bf16.mxu0 0
        %1582 = vmatpush1.bf16.msra.mxu0 0
        %1583 = vmatprep.subr.bf16.mxu0 0
        %1584 = vmatpush1.bf16.msra.mxu0 0
        %1585 = vmatprep.subr.bf16.mxu0 0
        %1586 = vmatpush1.bf16.msra.mxu0 0
        %1587 = vmatprep.subr.bf16.mxu0 0
        %1588 = vmatpush1.bf16.msra.mxu0 0
        %1589 = vmatprep.subr.bf16.mxu0 0
        %1590 = vmatpush1.bf16.msra.mxu0 0
        %1591 = vmatprep.subr.bf16.mxu0 0
        %1592 = vmatpush1.bf16.msra.mxu0 0
        %1593 = vmatprep.mubr.bf16.mxu0 0
        %1594 = vmatmul.mubr.bf16.gmra.mrb[0].mxu0 %v1556
        %v1595 = vpop.f32.mrb[0].mxu0
        %v1596 = vadd.f32 0.0, %v1595
        %v1597 = vpop.f32.mrb[0].mxu0
        %v1598 = vpop.f32.mrb[0].mxu0
        %v1599 = vpop.f32.mrb[0].mxu0
        %1600 = vdwg.mxu0
        %v1602 = vsel %vm1335, %v1443, 0
        %v1605 = vsel %vm1399, %v1262, 0
        %1607 = vmatprep.subr.bf16.mxu0 0
        %1608 = vmatpush1.bf16.msra.mxu0 %v1605
        %1609 = vmatprep.subr.bf16.mxu0 0
        %1610 = vmatpush1.bf16.msra.mxu0 0
        %1611 = vmatprep.subr.bf16.mxu0 0
        %1612 = vmatpush1.bf16.msra.mxu0 0
        %1613 = vmatprep.subr.bf16.mxu0 0
        %1614 = vmatpush1.bf16.msra.mxu0 0
        %1615 = vmatprep.subr.bf16.mxu0 0
        %1616 = vmatpush1.bf16.msra.mxu0 0
        %1617 = vmatprep.subr.bf16.mxu0 0
        %1618 = vmatpush1.bf16.msra.mxu0 0
        %1619 = vmatprep.subr.bf16.mxu0 0
        %1620 = vmatpush1.bf16.msra.mxu0 0
        %1621 = vmatprep.subr.bf16.mxu0 0
        %1622 = vmatpush1.bf16.msra.mxu0 0
        %1623 = vmatprep.subr.bf16.mxu0 0
        %1624 = vmatpush1.bf16.msra.mxu0 0
        %1625 = vmatprep.subr.bf16.mxu0 0
        %1626 = vmatpush1.bf16.msra.mxu0 0
        %1627 = vmatprep.subr.bf16.mxu0 0
        %1628 = vmatpush1.bf16.msra.mxu0 0
        %1629 = vmatprep.subr.bf16.mxu0 0
        %1630 = vmatpush1.bf16.msra.mxu0 0
        %1631 = vmatprep.subr.bf16.mxu0 0
        %1632 = vmatpush1.bf16.msra.mxu0 0
        %1633 = vmatprep.subr.bf16.mxu0 0
        %1634 = vmatpush1.bf16.msra.mxu0 0
        %1635 = vmatprep.subr.bf16.mxu0 0
        %1636 = vmatpush1.bf16.msra.mxu0 0
        %1637 = vmatprep.subr.bf16.mxu0 0
        %1638 = vmatpush1.bf16.msra.mxu0 0
        %1639 = vmatprep.mubr.bf16.mxu0 0
        %1640 = vmatmul.mubr.bf16.gmra.mrb[0].mxu0 %v1602
        %v1641 = vpop.f32.mrb[0].mxu0
        %v1642 = vadd.f32 %v1596, %v1641
        %v1643 = vpop.f32.mrb[0].mxu0
        %v1644 = vpop.f32.mrb[0].mxu0
        %v1645 = vpop.f32.mrb[0].mxu0
        %1646 = vdwg.mxu0
        %1647 = vrot.lane.b32.xlu0 %v1331, 112
        %v1648 = vpop.permute.xlu0 %1647
        %1649 = vrot.lane.b32.xlu0 %v1331, 80
        %v1650 = vpop.permute.xlu0 %1649
        %v1652 = vsel %vm1335, %v1648, 0
        %v1655 = vsel %vm1335, %v1650, 0
        %1657 = vmatprep.subr.bf16.mxu0 0
        %1658 = vmatpush1.bf16.xpose.msra.mxu0 %v1655
        %1659 = vmatprep.subr.bf16.mxu0 0
        %1660 = vmatpush1.bf16.xpose.msra.mxu0 0
        %1661 = vmatprep.subr.bf16.mxu0 0
        %1662 = vmatpush1.bf16.xpose.msra.mxu0 0
        %1663 = vmatprep.subr.bf16.mxu0 0
        %1664 = vmatpush1.bf16.xpose.msra.mxu0 0
        %1665 = vmatprep.subr.bf16.mxu0 0
        %1666 = vmatpush1.bf16.xpose.msra.mxu0 0
        %1667 = vmatprep.subr.bf16.mxu0 0
        %1668 = vmatpush1.bf16.xpose.msra.mxu0 0
        %1669 = vmatprep.subr.bf16.mxu0 0
        %1670 = vmatpush1.bf16.xpose.msra.mxu0 0
        %1671 = vmatprep.subr.bf16.mxu0 0
        %1672 = vmatpush1.bf16.xpose.msra.mxu0 0
        %1673 = vmatprep.subr.bf16.mxu0 0
        %1674 = vmatpush1.bf16.xpose.msra.mxu0 0
        %1675 = vmatprep.subr.bf16.mxu0 0
        %1676 = vmatpush1.bf16.xpose.msra.mxu0 0
        %1677 = vmatprep.subr.bf16.mxu0 0
        %1678 = vmatpush1.bf16.xpose.msra.mxu0 0
        %1679 = vmatprep.subr.bf16.mxu0 0
        %1680 = vmatpush1.bf16.xpose.msra.mxu0 0
        %1681 = vmatprep.subr.bf16.mxu0 0
        %1682 = vmatpush1.bf16.xpose.msra.mxu0 0
        %1683 = vmatprep.subr.bf16.mxu0 0
        %1684 = vmatpush1.bf16.xpose.msra.mxu0 0
        %1685 = vmatprep.subr.bf16.mxu0 0
        %1686 = vmatpush1.bf16.xpose.msra.mxu0 0
        %1687 = vmatprep.subr.bf16.mxu0 0
        %1688 = vmatpush1.bf16.xpose.msra.mxu0 0
        %1689 = vmatprep.mubr.bf16.mxu0 0
        %1690 = vmatmul.mubr.bf16.gmra.mrb[0].mxu0 %v1652
        %v1691 = vpop.f32.mrb[0].mxu0
        %v1692 = vadd.f32 0.0, %v1691
        %v1693 = vpop.f32.mrb[0].mxu0
        %v1694 = vpop.f32.mrb[0].mxu0
        %v1695 = vpop.f32.mrb[0].mxu0
        %1696 = vdwg.mxu0
        %v1697 = vsel %vm1335, %v1692, -inf
        %1698 = vmax.xlane.f32.xlu0 %v1697
        %v1699 = vpop.xlane.xlu0 %1698
        %v1700 = vsub.f32 %v1692, %v1699
        %v1701 = vmul.f32 %v1700, 1.442695
        %v1702 = vpow.pop %v1701
        %v1703 = vsel %vm1335, %v1702, 0.0
        %1704 = vadd.xlane.f32.xlu0 %v1703
        %v1705 = vpop.xlane.xlu0 %1704
        %v1706 = vrcp.pop %v1705
        %v1707 = vmul.f32 %v1702, %v1706
        %v1708 = vpack.c.bf16 %v1707, %v1707
        %1709 = vrot.lane.b32.xlu0 %v1331, 48
        %v1710 = vpop.permute.xlu0 %1709
        %v1712 = vsel %vm1335, %v1708, 0
        %v1715 = vsel %vm1399, %v1710, 0
        %1717 = vmatprep.subr.bf16.mxu0 0
        %1718 = vmatpush1.bf16.msra.mxu0 %v1715
        %1719 = vmatprep.subr.bf16.mxu0 0
        %1720 = vmatpush1.bf16.msra.mxu0 0
        %1721 = vmatprep.subr.bf16.mxu0 0
        %1722 = vmatpush1.bf16.msra.mxu0 0
        %1723 = vmatprep.subr.bf16.mxu0 0
        %1724 = vmatpush1.bf16.msra.mxu0 0
        %1725 = vmatprep.subr.bf16.mxu0 0
        %1726 = vmatpush1.bf16.msra.mxu0 0
        %1727 = vmatprep.subr.bf16.mxu0 0
        %1728 = vmatpush1.bf16.msra.mxu0 0
        %1729 = vmatprep.subr.bf16.mxu0 0
        %1730 = vmatpush1.bf16.msra.mxu0 0
        %1731 = vmatprep.subr.bf16.mxu0 0
        %1732 = vmatpush1.bf16.msra.mxu0 0
        %1733 = vmatprep.subr.bf16.mxu0 0
        %1734 = vmatpush1.bf16.msra.mxu0 0
        %1735 = vmatprep.subr.bf16.mxu0 0
        %1736 = vmatpush1.bf16.msra.mxu0 0
        %1737 = vmatprep.subr.bf16.mxu0 0
        %1738 = vmatpush1.bf16.msra.mxu0 0
        %1739 = vmatprep.subr.bf16.mxu0 0
        %1740 = vmatpush1.bf16.msra.mxu0 0
        %1741 = vmatprep.subr.bf16.mxu0 0
        %1742 = vmatpush1.bf16.msra.mxu0 0
        %1743 = vmatprep.subr.bf16.mxu0 0
        %1744 = vmatpush1.bf16.msra.mxu0 0
        %1745 = vmatprep.subr.bf16.mxu0 0
        %1746 = vmatpush1.bf16.msra.mxu0 0
        %1747 = vmatprep.subr.bf16.mxu0 0
        %1748 = vmatpush1.bf16.msra.mxu0 0
        %1749 = vmatprep.mubr.bf16.mxu0 0
        %1750 = vmatmul.mubr.bf16.gmra.mrb[0].mxu0 %v1712
        %v1751 = vpop.f32.mrb[0].mxu0
        %v1752 = vadd.f32 0.0, %v1751
        %v1753 = vpop.f32.mrb[0].mxu0
        %v1754 = vpop.f32.mrb[0].mxu0
        %v1755 = vpop.f32.mrb[0].mxu0
        %1756 = vdwg.mxu0
        %v1757 = vpack.c.bf16 %v1752, %v1752
        %v1759 = vsel %vm1335, %v1757, 0
        %v1762 = vsel %vm1399, %v1264, 0
        %1764 = vmatprep.subr.bf16.mxu0 0
        %1765 = vmatpush1.bf16.msra.mxu0 %v1762
        %1766 = vmatprep.subr.bf16.mxu0 0
        %1767 = vmatpush1.bf16.msra.mxu0 0
        %1768 = vmatprep.subr.bf16.mxu0 0
        %1769 = vmatpush1.bf16.msra.mxu0 0
        %1770 = vmatprep.subr.bf16.mxu0 0
        %1771 = vmatpush1.bf16.msra.mxu0 0
        %1772 = vmatprep.subr.bf16.mxu0 0
        %1773 = vmatpush1.bf16.msra.mxu0 0
        %1774 = vmatprep.subr.bf16.mxu0 0
        %1775 = vmatpush1.bf16.msra.mxu0 0
        %1776 = vmatprep.subr.bf16.mxu0 0
        %1777 = vmatpush1.bf16.msra.mxu0 0
        %1778 = vmatprep.subr.bf16.mxu0 0
        %1779 = vmatpush1.bf16.msra.mxu0 0
        %1780 = vmatprep.subr.bf16.mxu0 0
        %1781 = vmatpush1.bf16.msra.mxu0 0
        %1782 = vmatprep.subr.bf16.mxu0 0
        %1783 = vmatpush1.bf16.msra.mxu0 0
        %1784 = vmatprep.subr.bf16.mxu0 0
        %1785 = vmatpush1.bf16.msra.mxu0 0
        %1786 = vmatprep.subr.bf16.mxu0 0
        %1787 = vmatpush1.bf16.msra.mxu0 0
        %1788 = vmatprep.subr.bf16.mxu0 0
        %1789 = vmatpush1.bf16.msra.mxu0 0
        %1790 = vmatprep.subr.bf16.mxu0 0
        %1791 = vmatpush1.bf16.msra.mxu0 0
        %1792 = vmatprep.subr.bf16.mxu0 0
        %1793 = vmatpush1.bf16.msra.mxu0 0
        %1794 = vmatprep.subr.bf16.mxu0 0
        %1795 = vmatpush1.bf16.msra.mxu0 0
        %1796 = vmatprep.mubr.bf16.mxu0 0
        %1797 = vmatmul.mubr.bf16.gmra.mrb[0].mxu0 %v1759
        %v1798 = vpop.f32.mrb[0].mxu0
        %v1799 = vadd.f32 0.0, %v1798
        %v1800 = vpop.f32.mrb[0].mxu0
        %v1801 = vpop.f32.mrb[0].mxu0
        %v1802 = vpop.f32.mrb[0].mxu0
        %1803 = vdwg.mxu0
        %v1804 = vadd.f32 %v1642, %v1799
        %1805 = vrot.lane.b32.xlu0 %v1331, 104
        %v1806 = vpop.permute.xlu0 %1805
        %1807 = vrot.lane.b32.xlu0 %v1331, 72
        %v1808 = vpop.permute.xlu0 %1807
        %v1810 = vsel %vm1335, %v1806, 0
        %v1813 = vsel %vm1335, %v1808, 0
        %1815 = vmatprep.subr.bf16.mxu0 0
        %1816 = vmatpush1.bf16.xpose.msra.mxu0 %v1813
        %1817 = vmatprep.subr.bf16.mxu0 0
        %1818 = vmatpush1.bf16.xpose.msra.mxu0 0
        %1819 = vmatprep.subr.bf16.mxu0 0
        %1820 = vmatpush1.bf16.xpose.msra.mxu0 0
        %1821 = vmatprep.subr.bf16.mxu0 0
        %1822 = vmatpush1.bf16.xpose.msra.mxu0 0
        %1823 = vmatprep.subr.bf16.mxu0 0
        %1824 = vmatpush1.bf16.xpose.msra.mxu0 0
        %1825 = vmatprep.subr.bf16.mxu0 0
        %1826 = vmatpush1.bf16.xpose.msra.mxu0 0
        %1827 = vmatprep.subr.bf16.mxu0 0
        %1828 = vmatpush1.bf16.xpose.msra.mxu0 0
        %1829 = vmatprep.subr.bf16.mxu0 0
        %1830 = vmatpush1.bf16.xpose.msra.mxu0 0
        %1831 = vmatprep.subr.bf16.mxu0 0
        %1832 = vmatpush1.bf16.xpose.msra.mxu0 0
        %1833 = vmatprep.subr.bf16.mxu0 0
        %1834 = vmatpush1.bf16.xpose.msra.mxu0 0
        %1835 = vmatprep.subr.bf16.mxu0 0
        %1836 = vmatpush1.bf16.xpose.msra.mxu0 0
        %1837 = vmatprep.subr.bf16.mxu0 0
        %1838 = vmatpush1.bf16.xpose.msra.mxu0 0
        %1839 = vmatprep.subr.bf16.mxu0 0
        %1840 = vmatpush1.bf16.xpose.msra.mxu0 0
        %1841 = vmatprep.subr.bf16.mxu0 0
        %1842 = vmatpush1.bf16.xpose.msra.mxu0 0
        %1843 = vmatprep.subr.bf16.mxu0 0
        %1844 = vmatpush1.bf16.xpose.msra.mxu0 0
        %1845 = vmatprep.subr.bf16.mxu0 0
        %1846 = vmatpush1.bf16.xpose.msra.mxu0 0
        %1847 = vmatprep.mubr.bf16.mxu0 0
        %1848 = vmatmul.mubr.bf16.gmra.mrb[0].mxu0 %v1810
        %v1849 = vpop.f32.mrb[0].mxu0
        %v1850 = vadd.f32 0.0, %v1849
        %v1851 = vpop.f32.mrb[0].mxu0
        %v1852 = vpop.f32.mrb[0].mxu0
        %v1853 = vpop.f32.mrb[0].mxu0
        %1854 = vdwg.mxu0
        %v1855 = vsel %vm1335, %v1850, -inf
        %1856 = vmax.xlane.f32.xlu0 %v1855
        %v1857 = vpop.xlane.xlu0 %1856
        %v1858 = vsub.f32 %v1850, %v1857
        %v1859 = vmul.f32 %v1858, 1.442695
        %v1860 = vpow.pop %v1859
        %v1861 = vsel %vm1335, %v1860, 0.0
        %1862 = vadd.xlane.f32.xlu0 %v1861
        %v1863 = vpop.xlane.xlu0 %1862
        %v1864 = vrcp.pop %v1863
        %v1865 = vmul.f32 %v1860, %v1864
        %v1866 = vpack.c.bf16 %v1865, %v1865
        %1867 = vrot.lane.b32.xlu0 %v1331, 40
        %v1868 = vpop.permute.xlu0 %1867
        %v1870 = vsel %vm1335, %v1866, 0
        %v1873 = vsel %vm1399, %v1868, 0
        %1875 = vmatprep.subr.bf16.mxu0 0
        %1876 = vmatpush1.bf16.msra.mxu0 %v1873
        %1877 = vmatprep.subr.bf16.mxu0 0
        %1878 = vmatpush1.bf16.msra.mxu0 0
        %1879 = vmatprep.subr.bf16.mxu0 0
        %1880 = vmatpush1.bf16.msra.mxu0 0
        %1881 = vmatprep.subr.bf16.mxu0 0
        %1882 = vmatpush1.bf16.msra.mxu0 0
        %1883 = vmatprep.subr.bf16.mxu0 0
        %1884 = vmatpush1.bf16.msra.mxu0 0
        %1885 = vmatprep.subr.bf16.mxu0 0
        %1886 = vmatpush1.bf16.msra.mxu0 0
        %1887 = vmatprep.subr.bf16.mxu0 0
        %1888 = vmatpush1.bf16.msra.mxu0 0
        %1889 = vmatprep.subr.bf16.mxu0 0
        %1890 = vmatpush1.bf16.msra.mxu0 0
        %1891 = vmatprep.subr.bf16.mxu0 0
        %1892 = vmatpush1.bf16.msra.mxu0 0
        %1893 = vmatprep.subr.bf16.mxu0 0
        %1894 = vmatpush1.bf16.msra.mxu0 0
        %1895 = vmatprep.subr.bf16.mxu0 0
        %1896 = vmatpush1.bf16.msra.mxu0 0
        %1897 = vmatprep.subr.bf16.mxu0 0
        %1898 = vmatpush1.bf16.msra.mxu0 0
        %1899 = vmatprep.subr.bf16.mxu0 0
        %1900 = vmatpush1.bf16.msra.mxu0 0
        %1901 = vmatprep.subr.bf16.mxu0 0
        %1902 = vmatpush1.bf16.msra.mxu0 0
        %1903 = vmatprep.subr.bf16.mxu0 0
        %1904 = vmatpush1.bf16.msra.mxu0 0
        %1905 = vmatprep.subr.bf16.mxu0 0
        %1906 = vmatpush1.bf16.msra.mxu0 0
        %1907 = vmatprep.mubr.bf16.mxu0 0
        %1908 = vmatmul.mubr.bf16.gmra.mrb[0].mxu0 %v1870
        %v1909 = vpop.f32.mrb[0].mxu0
        %v1910 = vadd.f32 0.0, %v1909
        %v1911 = vpop.f32.mrb[0].mxu0
        %v1912 = vpop.f32.mrb[0].mxu0
        %v1913 = vpop.f32.mrb[0].mxu0
        %1914 = vdwg.mxu0
        %v1915 = vpack.c.bf16 %v1910, %v1910
        %v1917 = vsel %vm1335, %v1915, 0
        %v1920 = vsel %vm1399, %v1265, 0
        %1922 = vmatprep.subr.bf16.mxu0 0
        %1923 = vmatpush1.bf16.msra.mxu0 %v1920
        %1924 = vmatprep.subr.bf16.mxu0 0
        %1925 = vmatpush1.bf16.msra.mxu0 0
        %1926 = vmatprep.subr.bf16.mxu0 0
        %1927 = vmatpush1.bf16.msra.mxu0 0
        %1928 = vmatprep.subr.bf16.mxu0 0
        %1929 = vmatpush1.bf16.msra.mxu0 0
        %1930 = vmatprep.subr.bf16.mxu0 0
        %1931 = vmatpush1.bf16.msra.mxu0 0
        %1932 = vmatprep.subr.bf16.mxu0 0
        %1933 = vmatpush1.bf16.msra.mxu0 0
        %1934 = vmatprep.subr.bf16.mxu0 0
        %1935 = vmatpush1.bf16.msra.mxu0 0
        %1936 = vmatprep.subr.bf16.mxu0 0
        %1937 = vmatpush1.bf16.msra.mxu0 0
        %1938 = vmatprep.subr.bf16.mxu0 0
        %1939 = vmatpush1.bf16.msra.mxu0 0
        %1940 = vmatprep.subr.bf16.mxu0 0
        %1941 = vmatpush1.bf16.msra.mxu0 0
        %1942 = vmatprep.subr.bf16.mxu0 0
        %1943 = vmatpush1.bf16.msra.mxu0 0
        %1944 = vmatprep.subr.bf16.mxu0 0
        %1945 = vmatpush1.bf16.msra.mxu0 0
        %1946 = vmatprep.subr.bf16.mxu0 0
        %1947 = vmatpush1.bf16.msra.mxu0 0
        %1948 = vmatprep.subr.bf16.mxu0 0
        %1949 = vmatpush1.bf16.msra.mxu0 0
        %1950 = vmatprep.subr.bf16.mxu0 0
        %1951 = vmatpush1.bf16.msra.mxu0 0
        %1952 = vmatprep.subr.bf16.mxu0 0
        %1953 = vmatpush1.bf16.msra.mxu0 0
        %1954 = vmatprep.mubr.bf16.mxu0 0
        %1955 = vmatmul.mubr.bf16.gmra.mrb[0].mxu0 %v1917
        %v1956 = vpop.f32.mrb[0].mxu0
        %v1957 = vadd.f32 0.0, %v1956
        %v1958 = vpop.f32.mrb[0].mxu0
        %v1959 = vpop.f32.mrb[0].mxu0
        %v1960 = vpop.f32.mrb[0].mxu0
        %1961 = vdwg.mxu0
        %v1962 = vadd.f32 %v1804, %v1957
        %v1964 = vlaneseq
        %v1965 = vshrl.u32 %v1964, 7
        %v1966 = vsub.s32 0, %v1965
        %v1967 = vrot.slane %v1266, %v1966
        %v1969 = vadd.f32 %v1962, %v1967
        %v1970 = vadd.f32 %v1969, %v1256
        %v1971 = vsel %vm1228, %v1970, 0.0
        %1972 = vadd.xlane.f32.xlu0 %v1971
        %v1973 = vpop.xlane.xlu0 %1972
        %v1974 = vmul.f32 %v1973, %v1232
        %v1975 = vsub.f32 %v1970, %v1974
        %v1976 = vmul.f32 %v1975, %v1975
        %v1977 = vsel %vm1228, %v1976, 0.0
        %1978 = vadd.xlane.f32.xlu0 %v1977
        %v1979 = vpop.xlane.xlu0 %1978
        %v1980 = vmul.f32 %v1979, %v1232
        %v1981 = vadd.f32 %v1980, 1e-05
        %v1982 = vrsqrt.pop %v1981
        %v1983 = vmul.f32 %v1975, %v1982
        %v1985 = vlaneseq
        %v1986 = vshrl.u32 %v1985, 7
        %v1987 = vsub.s32 0, %v1986
        %v1988 = vrot.slane %v1267, %v1987
        %v1990 = vmul.f32 %v1983, %v1988
        %v1992 = vlaneseq
        %v1993 = vshrl.u32 %v1992, 7
        %v1994 = vsub.s32 0, %v1993
        %v1995 = vrot.slane %v1268, %v1994
        %v1997 = vadd.f32 %v1990, %v1995
        %v1998 = vld [vmem:[%s21] sm:$0xf]
        %v1999 = vld [vmem:[%s21 + $0x4] sm:$0xf]
        %v2000 = vld [vmem:[%s21 + $0x8] sm:$0xf]
        %v2001 = vld [vmem:[%s21 + $0xc] sm:$0xf]
        %v2002 = vld [vmem:[%s23] sm:$0x1]
        %v2003 = vld [vmem:[%s25] sm:$0xf]
        %v2004 = vld [vmem:[%s25 + $0x4] sm:$0xf]
        %v2005 = vld [vmem:[%s25 + $0x8] sm:$0xf]
        %v2006 = vld [vmem:[%s25 + $0xc] sm:$0xf]
        %v2007 = vld [vmem:[%s25 + $0x10] sm:$0xf]
        %v2008 = vld [vmem:[%s25 + $0x14] sm:$0xf]
        %v2009 = vld [vmem:[%s25 + $0x18] sm:$0xf]
        %v2010 = vld [vmem:[%s25 + $0x1c] sm:$0xf]
        %v2011 = vld [vmem:[%s27] sm:$0x1]
        %v2012 = vld [vmem:[%s29] sm:$0x1]
        %v2013 = vld [vmem:[%s31] sm:$0x1]
        %v2014 = vpack.c.bf16 %v1997, %v1997
        %v2016 = vlaneseq
        %v2017 = vshrl.u32 %v2016, 7
        %v2018 = vsub.s32 0, %v2017
        %v2019 = vrot.slane %v2002, %v2018
        %v2025 = vunpack.c.l.b16 %v1998
        %v2026 = vunpack.c.l.b16 %v1999
        %v2027 = vunpack.c.l.b16 %v2000
        %v2028 = vunpack.c.l.b16 %v2001
        %v2029 = vpack.c.b16 %v2026, %v2025
        %v2030 = vpack.c.b16 %v2028, %v2027
        %v2034 = vsel %vm1228, %v2014, 0
        %2036 = vmatprep.subr.bf16.mxu0 0
        %2037 = vmatpush1.bf16.msra.mxu0 %v2029
        %2038 = vmatprep.subr.bf16.mxu0 0
        %2039 = vmatpush1.bf16.msra.mxu0 %v2030
        %2040 = vmatprep.subr.bf16.mxu0 0
        %2041 = vmatpush1.bf16.msra.mxu0 0
        %2042 = vmatprep.subr.bf16.mxu0 0
        %2043 = vmatpush1.bf16.msra.mxu0 0
        %2044 = vmatprep.subr.bf16.mxu0 0
        %2045 = vmatpush1.bf16.msra.mxu0 0
        %2046 = vmatprep.subr.bf16.mxu0 0
        %2047 = vmatpush1.bf16.msra.mxu0 0
        %2048 = vmatprep.subr.bf16.mxu0 0
        %2049 = vmatpush1.bf16.msra.mxu0 0
        %2050 = vmatprep.subr.bf16.mxu0 0
        %2051 = vmatpush1.bf16.msra.mxu0 0
        %2052 = vmatprep.subr.bf16.mxu0 0
        %2053 = vmatpush1.bf16.msra.mxu0 0
        %2054 = vmatprep.subr.bf16.mxu0 0
        %2055 = vmatpush1.bf16.msra.mxu0 0
        %2056 = vmatprep.subr.bf16.mxu0 0
        %2057 = vmatpush1.bf16.msra.mxu0 0
        %2058 = vmatprep.subr.bf16.mxu0 0
        %2059 = vmatpush1.bf16.msra.mxu0 0
        %2060 = vmatprep.subr.bf16.mxu0 0
        %2061 = vmatpush1.bf16.msra.mxu0 0
        %2062 = vmatprep.subr.bf16.mxu0 0
        %2063 = vmatpush1.bf16.msra.mxu0 0
        %2064 = vmatprep.subr.bf16.mxu0 0
        %2065 = vmatpush1.bf16.msra.mxu0 0
        %2066 = vmatprep.subr.bf16.mxu0 0
        %2067 = vmatpush1.bf16.msra.mxu0 0
        %2068 = vmatprep.mubr.bf16.mxu0 0
        %2069 = vmatmul.mubr.bf16.gmra.mrb[0].mxu0 %v2034
        %v2070 = vpop.f32.mrb[0].mxu0
        %v2071 = vadd.f32 %v2019, %v2070
        %v2072 = vpop.f32.mrb[0].mxu0
        %v2073 = vpop.f32.mrb[0].mxu0
        %v2074 = vpop.f32.mrb[0].mxu0
        %2075 = vdwg.mxu0
        %v2076 = vmul.f32 %v2071, 0.5
        %v2077 = vmul.f32 %v2071, 0.044715
        %v2078 = vmul.f32 %v2077, %v2071
        %v2079 = vmul.f32 %v2078, %v2071
        %v2080 = vadd.f32 %v2071, %v2079
        %v2081 = vmul.f32 %v2080, 0.7978846
        %v2082 = vtanh.pop %v2081
        %v2083 = vadd.f32 %v2082, 1.0
        %v2084 = vmul.f32 %v2076, %v2083
        %v2085 = vpack.c.bf16 %v2084, %v2084
        %v2087 = vlaneseq
        %v2088 = vshrl.u32 %v2087, 7
        %v2089 = vsub.s32 0, %v2088
        %v2090 = vrot.slane %v2011, %v2089
        %v2100 = vunpack.c.l.b16 %v2003
        %v2101 = vunpack.c.l.b16 %v2004
        %v2102 = vunpack.c.l.b16 %v2005
        %v2103 = vunpack.c.l.b16 %v2006
        %v2104 = vunpack.c.l.b16 %v2007
        %v2105 = vunpack.c.l.b16 %v2008
        %v2106 = vunpack.c.l.b16 %v2009
        %v2107 = vunpack.c.l.b16 %v2010
        %v2108 = vpack.c.b16 %v2101, %v2100
        %v2109 = vpack.c.b16 %v2103, %v2102
        %v2110 = vpack.c.b16 %v2105, %v2104
        %v2111 = vpack.c.b16 %v2107, %v2106
        %vm2116 = vcmask 523264
        %v2118 = vsel %vm2116, %v2085, 0
        %2120 = vmatprep.subr.bf16.mxu0 0
        %2121 = vmatpush1.bf16.msra.mxu0 %v2108
        %2122 = vmatprep.subr.bf16.mxu0 0
        %2123 = vmatpush1.bf16.msra.mxu0 %v2109
        %2124 = vmatprep.subr.bf16.mxu0 0
        %2125 = vmatpush1.bf16.msra.mxu0 %v2110
        %2126 = vmatprep.subr.bf16.mxu0 0
        %2127 = vmatpush1.bf16.msra.mxu0 %v2111
        %2128 = vmatprep.subr.bf16.mxu0 0
        %2129 = vmatpush1.bf16.msra.mxu0 0
        %2130 = vmatprep.subr.bf16.mxu0 0
        %2131 = vmatpush1.bf16.msra.mxu0 0
        %2132 = vmatprep.subr.bf16.mxu0 0
        %2133 = vmatpush1.bf16.msra.mxu0 0
        %2134 = vmatprep.subr.bf16.mxu0 0
        %2135 = vmatpush1.bf16.msra.mxu0 0
        %2136 = vmatprep.subr.bf16.mxu0 0
        %2137 = vmatpush1.bf16.msra.mxu0 0
        %2138 = vmatprep.subr.bf16.mxu0 0
        %2139 = vmatpush1.bf16.msra.mxu0 0
        %2140 = vmatprep.subr.bf16.mxu0 0
        %2141 = vmatpush1.bf16.msra.mxu0 0
        %2142 = vmatprep.subr.bf16.mxu0 0
        %2143 = vmatpush1.bf16.msra.mxu0 0
        %2144 = vmatprep.subr.bf16.mxu0 0
        %2145 = vmatpush1.bf16.msra.mxu0 0
        %2146 = vmatprep.subr.bf16.mxu0 0
        %2147 = vmatpush1.bf16.msra.mxu0 0
        %2148 = vmatprep.subr.bf16.mxu0 0
        %2149 = vmatpush1.bf16.msra.mxu0 0
        %2150 = vmatprep.subr.bf16.mxu0 0
        %2151 = vmatpush1.bf16.msra.mxu0 0
        %2152 = vmatprep.mubr.bf16.mxu0 0
        %2153 = vmatmul.mubr.bf16.gmra.mrb[0].mxu0 %v2118
        %v2154 = vpop.f32.mrb[0].mxu0
        %v2155 = vadd.f32 %v2090, %v2154
        %v2156 = vpop.f32.mrb[0].mxu0
        %v2157 = vpop.f32.mrb[0].mxu0
        %v2158 = vpop.f32.mrb[0].mxu0
        %2159 = vdwg.mxu0
        %v2160 = vadd.f32 %v2155, %v1997
        %v2161 = vsel %vm1228, %v2160, 0.0
        %2162 = vadd.xlane.f32.xlu0 %v2161
        %v2163 = vpop.xlane.xlu0 %2162
        %v2164 = vmul.f32 %v2163, %v1232
        %v2165 = vsub.f32 %v2160, %v2164
        %v2166 = vmul.f32 %v2165, %v2165
        %v2167 = vsel %vm1228, %v2166, 0.0
        %2168 = vadd.xlane.f32.xlu0 %v2167
        %v2169 = vpop.xlane.xlu0 %2168
        %v2170 = vmul.f32 %v2169, %v1232
        %v2171 = vadd.f32 %v2170, 1e-05
        %v2172 = vrsqrt.pop %v2171
        %v2173 = vmul.f32 %v2165, %v2172
        %v2175 = vlaneseq
        %v2176 = vshrl.u32 %v2175, 7
        %v2177 = vsub.s32 0, %v2176
        %v2178 = vrot.slane %v2012, %v2177
        %v2180 = vmul.f32 %v2173, %v2178
        %v2182 = vlaneseq
        %v2183 = vshrl.u32 %v2182, 7
        %v2184 = vsub.s32 0, %v2183
        %v2185 = vrot.slane %v2013, %v2184
        %v2187 = vadd.f32 %v2180, %v2185
        %s2188 = scalar_lea.vmem %s9, 16
        %v2189 = vld [vmem:[%s2188] sm:$0xf]
        %v2190 = vld [vmem:[%s2188 + $0x4] sm:$0xf]
        %v2191 = vld [vmem:[%s2188 + $0x8] sm:$0xf]
        %v2192 = vld [vmem:[%s2188 + $0xc] sm:$0xf]
        %s2193 = scalar_lea.vmem %s11, 1
        %v2194 = vld [vmem:[%s2193] sm:$0x1]
        %s2195 = scalar_lea.vmem %s13, 16
        %v2196 = vld [vmem:[%s2195] sm:$0xf]
        %v2197 = vld [vmem:[%s2195 + $0x4] sm:$0xf]
        %v2198 = vld [vmem:[%s2195 + $0x8] sm:$0xf]
        %v2199 = vld [vmem:[%s2195 + $0xc] sm:$0xf]
        %s2200 = scalar_lea.vmem %s15, 1
        %v2201 = vld [vmem:[%s2200] sm:$0x1]
        %s2202 = scalar_lea.vmem %s17, 1
        %v2203 = vld [vmem:[%s2202] sm:$0x1]
        %s2204 = scalar_lea.vmem %s19, 1
        %v2205 = vld [vmem:[%s2204] sm:$0x1]
        %v2206 = vpack.c.bf16 %v2187, %v2187
        %v2208 = vlaneseq
        %v2209 = vshrl.u32 %v2208, 7
        %v2210 = vsub.s32 0, %v2209
        %v2211 = vrot.slane %v2194, %v2210
        %v2217 = vunpack.c.l.b16 %v2189
        %v2218 = vunpack.c.l.b16 %v2190
        %v2219 = vunpack.c.l.b16 %v2191
        %v2220 = vunpack.c.l.b16 %v2192
        %v2221 = vpack.c.b16 %v2218, %v2217
        %v2222 = vpack.c.b16 %v2220, %v2219
        %v2226 = vsel %vm1228, %v2206, 0
        %2228 = vmatprep.subr.bf16.mxu0 0
        %2229 = vmatpush1.bf16.msra.mxu0 %v2221
        %2230 = vmatprep.subr.bf16.mxu0 0
        %2231 = vmatpush1.bf16.msra.mxu0 %v2222
        %2232 = vmatprep.subr.bf16.mxu0 0
        %2233 = vmatpush1.bf16.msra.mxu0 0
        %2234 = vmatprep.subr.bf16.mxu0 0
        %2235 = vmatpush1.bf16.msra.mxu0 0
        %2236 = vmatprep.subr.bf16.mxu0 0
        %2237 = vmatpush1.bf16.msra.mxu0 0
        %2238 = vmatprep.subr.bf16.mxu0 0
        %2239 = vmatpush1.bf16.msra.mxu0 0
        %2240 = vmatprep.subr.bf16.mxu0 0
        %2241 = vmatpush1.bf16.msra.mxu0 0
        %2242 = vmatprep.subr.bf16.mxu0 0
        %2243 = vmatpush1.bf16.msra.mxu0 0
        %2244 = vmatprep.subr.bf16.mxu0 0
        %2245 = vmatpush1.bf16.msra.mxu0 0
        %2246 = vmatprep.subr.bf16.mxu0 0
        %2247 = vmatpush1.bf16.msra.mxu0 0
        %2248 = vmatprep.subr.bf16.mxu0 0
        %2249 = vmatpush1.bf16.msra.mxu0 0
        %2250 = vmatprep.subr.bf16.mxu0 0
        %2251 = vmatpush1.bf16.msra.mxu0 0
        %2252 = vmatprep.subr.bf16.mxu0 0
        %2253 = vmatpush1.bf16.msra.mxu0 0
        %2254 = vmatprep.subr.bf16.mxu0 0
        %2255 = vmatpush1.bf16.msra.mxu0 0
        %2256 = vmatprep.subr.bf16.mxu0 0
        %2257 = vmatpush1.bf16.msra.mxu0 0
        %2258 = vmatprep.subr.bf16.mxu0 0
        %2259 = vmatpush1.bf16.msra.mxu0 0
        %2260 = vmatprep.mubr.bf16.mxu0 0
        %2261 = vmatmul.mubr.bf16.gmra.mrb[0].mxu0 %v2226
        %v2262 = vpop.f32.mrb[0].mxu0
        %v2263 = vadd.f32 %v2211, %v2262
        %v2264 = vpop.f32.mrb[0].mxu0
        %v2265 = vpop.f32.mrb[0].mxu0
        %v2266 = vpop.f32.mrb[0].mxu0
        %2267 = vdwg.mxu0
        %v2268 = vpack.c.bf16 %v2263, %v2263
        %2270 = vrot.lane.b32.xlu0 %v2268, 96
        %v2271 = vpop.permute.xlu0 %2270
        %v2273 = vsel %vm1335, %v2268, 0
        %v2276 = vsel %vm1335, %v2271, 0
        %2278 = vmatprep.subr.bf16.mxu0 0
        %2279 = vmatpush1.bf16.xpose.msra.mxu0 %v2276
        %2280 = vmatprep.subr.bf16.mxu0 0
        %2281 = vmatpush1.bf16.xpose.msra.mxu0 0
        %2282 = vmatprep.subr.bf16.mxu0 0
        %2283 = vmatpush1.bf16.xpose.msra.mxu0 0
        %2284 = vmatprep.subr.bf16.mxu0 0
        %2285 = vmatpush1.bf16.xpose.msra.mxu0 0
        %2286 = vmatprep.subr.bf16.mxu0 0
        %2287 = vmatpush1.bf16.xpose.msra.mxu0 0
        %2288 = vmatprep.subr.bf16.mxu0 0
        %2289 = vmatpush1.bf16.xpose.msra.mxu0 0
        %2290 = vmatprep.subr.bf16.mxu0 0
        %2291 = vmatpush1.bf16.xpose.msra.mxu0 0
        %2292 = vmatprep.subr.bf16.mxu0 0
        %2293 = vmatpush1.bf16.xpose.msra.mxu0 0
        %2294 = vmatprep.subr.bf16.mxu0 0
        %2295 = vmatpush1.bf16.xpose.msra.mxu0 0
        %2296 = vmatprep.subr.bf16.mxu0 0
        %2297 = vmatpush1.bf16.xpose.msra.mxu0 0
        %2298 = vmatprep.subr.bf16.mxu0 0
        %2299 = vmatpush1.bf16.xpose.msra.mxu0 0
        %2300 = vmatprep.subr.bf16.mxu0 0
        %2301 = vmatpush1.bf16.xpose.msra.mxu0 0
        %2302 = vmatprep.subr.bf16.mxu0 0
        %2303 = vmatpush1.bf16.xpose.msra.mxu0 0
        %2304 = vmatprep.subr.bf16.mxu0 0
        %2305 = vmatpush1.bf16.xpose.msra.mxu0 0
        %2306 = vmatprep.subr.bf16.mxu0 0
        %2307 = vmatpush1.bf16.xpose.msra.mxu0 0
        %2308 = vmatprep.subr.bf16.mxu0 0
        %2309 = vmatpush1.bf16.xpose.msra.mxu0 0
        %2310 = vmatprep.mubr.bf16.mxu0 0
        %2311 = vmatmul.mubr.bf16.gmra.mrb[0].mxu0 %v2273
        %v2312 = vpop.f32.mrb[0].mxu0
        %v2313 = vadd.f32 0.0, %v2312
        %v2314 = vpop.f32.mrb[0].mxu0
        %v2315 = vpop.f32.mrb[0].mxu0
        %v2316 = vpop.f32.mrb[0].mxu0
        %2317 = vdwg.mxu0
        %v2318 = vsel %vm1335, %v2313, -inf
        %2319 = vmax.xlane.f32.xlu0 %v2318
        %v2320 = vpop.xlane.xlu0 %2319
        %v2321 = vsub.f32 %v2313, %v2320
        %v2322 = vmul.f32 %v2321, 1.442695
        %v2323 = vpow.pop %v2322
        %v2324 = vsel %vm1335, %v2323, 0.0
        %2325 = vadd.xlane.f32.xlu0 %v2324
        %v2326 = vpop.xlane.xlu0 %2325
        %v2327 = vrcp.pop %v2326
        %v2328 = vmul.f32 %v2323, %v2327
        %v2329 = vpack.c.bf16 %v2328, %v2328
        %2330 = vrot.lane.b32.xlu0 %v2268, 64
        %v2331 = vpop.permute.xlu0 %2330
        %v2333 = vsel %vm1335, %v2329, 0
        %v2336 = vsel %vm1399, %v2331, 0
        %2338 = vmatprep.subr.bf16.mxu0 0
        %2339 = vmatpush1.bf16.msra.mxu0 %v2336
        %2340 = vmatprep.subr.bf16.mxu0 0
        %2341 = vmatpush1.bf16.msra.mxu0 0
        %2342 = vmatprep.subr.bf16.mxu0 0
        %2343 = vmatpush1.bf16.msra.mxu0 0
        %2344 = vmatprep.subr.bf16.mxu0 0
        %2345 = vmatpush1.bf16.msra.mxu0 0
        %2346 = vmatprep.subr.bf16.mxu0 0
        %2347 = vmatpush1.bf16.msra.mxu0 0
        %2348 = vmatprep.subr.bf16.mxu0 0
        %2349 = vmatpush1.bf16.msra.mxu0 0
        %2350 = vmatprep.subr.bf16.mxu0 0
        %2351 = vmatpush1.bf16.msra.mxu0 0
        %2352 = vmatprep.subr.bf16.mxu0 0
        %2353 = vmatpush1.bf16.msra.mxu0 0
        %2354 = vmatprep.subr.bf16.mxu0 0
        %2355 = vmatpush1.bf16.msra.mxu0 0
        %2356 = vmatprep.subr.bf16.mxu0 0
        %2357 = vmatpush1.bf16.msra.mxu0 0
        %2358 = vmatprep.subr.bf16.mxu0 0
        %2359 = vmatpush1.bf16.msra.mxu0 0
        %2360 = vmatprep.subr.bf16.mxu0 0
        %2361 = vmatpush1.bf16.msra.mxu0 0
        %2362 = vmatprep.subr.bf16.mxu0 0
        %2363 = vmatpush1.bf16.msra.mxu0 0
        %2364 = vmatprep.subr.bf16.mxu0 0
        %2365 = vmatpush1.bf16.msra.mxu0 0
        %2366 = vmatprep.subr.bf16.mxu0 0
        %2367 = vmatpush1.bf16.msra.mxu0 0
        %2368 = vmatprep.subr.bf16.mxu0 0
        %2369 = vmatpush1.bf16.msra.mxu0 0
        %2370 = vmatprep.mubr.bf16.mxu0 0
        %2371 = vmatmul.mubr.bf16.gmra.mrb[0].mxu0 %v2333
        %v2372 = vpop.f32.mrb[0].mxu0
        %v2373 = vadd.f32 0.0, %v2372
        %v2374 = vpop.f32.mrb[0].mxu0
        %v2375 = vpop.f32.mrb[0].mxu0
        %v2376 = vpop.f32.mrb[0].mxu0
        %2377 = vdwg.mxu0
        %v2378 = vpack.c.bf16 %v2373, %v2373
        %2379 = vrot.lane.b32.xlu0 %v2268, 120
        %v2380 = vpop.permute.xlu0 %2379
        %2381 = vrot.lane.b32.xlu0 %v2268, 88
        %v2382 = vpop.permute.xlu0 %2381
        %v2384 = vsel %vm1335, %v2380, 0
        %v2387 = vsel %vm1335, %v2382, 0
        %2389 = vmatprep.subr.bf16.mxu0 0
        %2390 = vmatpush1.bf16.xpose.msra.mxu0 %v2387
        %2391 = vmatprep.subr.bf16.mxu0 0
        %2392 = vmatpush1.bf16.xpose.msra.mxu0 0
        %2393 = vmatprep.subr.bf16.mxu0 0
        %2394 = vmatpush1.bf16.xpose.msra.mxu0 0
        %2395 = vmatprep.subr.bf16.mxu0 0
        %2396 = vmatpush1.bf16.xpose.msra.mxu0 0
        %2397 = vmatprep.subr.bf16.mxu0 0
        %2398 = vmatpush1.bf16.xpose.msra.mxu0 0
        %2399 = vmatprep.subr.bf16.mxu0 0
        %2400 = vmatpush1.bf16.xpose.msra.mxu0 0
        %2401 = vmatprep.subr.bf16.mxu0 0
        %2402 = vmatpush1.bf16.xpose.msra.mxu0 0
        %2403 = vmatprep.subr.bf16.mxu0 0
        %2404 = vmatpush1.bf16.xpose.msra.mxu0 0
        %2405 = vmatprep.subr.bf16.mxu0 0
        %2406 = vmatpush1.bf16.xpose.msra.mxu0 0
        %2407 = vmatprep.subr.bf16.mxu0 0
        %2408 = vmatpush1.bf16.xpose.msra.mxu0 0
        %2409 = vmatprep.subr.bf16.mxu0 0
        %2410 = vmatpush1.bf16.xpose.msra.mxu0 0
        %2411 = vmatprep.subr.bf16.mxu0 0
        %2412 = vmatpush1.bf16.xpose.msra.mxu0 0
        %2413 = vmatprep.subr.bf16.mxu0 0
        %2414 = vmatpush1.bf16.xpose.msra.mxu0 0
        %2415 = vmatprep.subr.bf16.mxu0 0
        %2416 = vmatpush1.bf16.xpose.msra.mxu0 0
        %2417 = vmatprep.subr.bf16.mxu0 0
        %2418 = vmatpush1.bf16.xpose.msra.mxu0 0
        %2419 = vmatprep.subr.bf16.mxu0 0
        %2420 = vmatpush1.bf16.xpose.msra.mxu0 0
        %2421 = vmatprep.mubr.bf16.mxu0 0
        %2422 = vmatmul.mubr.bf16.gmra.mrb[0].mxu0 %v2384
        %v2423 = vpop.f32.mrb[0].mxu0
        %v2424 = vadd.f32 0.0, %v2423
        %v2425 = vpop.f32.mrb[0].mxu0
        %v2426 = vpop.f32.mrb[0].mxu0
        %v2427 = vpop.f32.mrb[0].mxu0
        %2428 = vdwg.mxu0
        %v2429 = vsel %vm1335, %v2424, -inf
        %2430 = vmax.xlane.f32.xlu0 %v2429
        %v2431 = vpop.xlane.xlu0 %2430
        %v2432 = vsub.f32 %v2424, %v2431
        %v2433 = vmul.f32 %v2432, 1.442695
        %v2434 = vpow.pop %v2433
        %v2435 = vsel %vm1335, %v2434, 0.0
        %2436 = vadd.xlane.f32.xlu0 %v2435
        %v2437 = vpop.xlane.xlu0 %2436
        %v2438 = vrcp.pop %v2437
        %v2439 = vmul.f32 %v2434, %v2438
        %v2440 = vpack.c.bf16 %v2439, %v2439
        %2441 = vrot.lane.b32.xlu0 %v2268, 56
        %v2442 = vpop.permute.xlu0 %2441
        %v2444 = vsel %vm1335, %v2440, 0
        %v2447 = vsel %vm1399, %v2442, 0
        %2449 = vmatprep.subr.bf16.mxu0 0
        %2450 = vmatpush1.bf16.msra.mxu0 %v2447
        %2451 = vmatprep.subr.bf16.mxu0 0
        %2452 = vmatpush1.bf16.msra.mxu0 0
        %2453 = vmatprep.subr.bf16.mxu0 0
        %2454 = vmatpush1.bf16.msra.mxu0 0
        %2455 = vmatprep.subr.bf16.mxu0 0
        %2456 = vmatpush1.bf16.msra.mxu0 0
        %2457 = vmatprep.subr.bf16.mxu0 0
        %2458 = vmatpush1.bf16.msra.mxu0 0
        %2459 = vmatprep.subr.bf16.mxu0 0
        %2460 = vmatpush1.bf16.msra.mxu0 0
        %2461 = vmatprep.subr.bf16.mxu0 0
        %2462 = vmatpush1.bf16.msra.mxu0 0
        %2463 = vmatprep.subr.bf16.mxu0 0
        %2464 = vmatpush1.bf16.msra.mxu0 0
        %2465 = vmatprep.subr.bf16.mxu0 0
        %2466 = vmatpush1.bf16.msra.mxu0 0
        %2467 = vmatprep.subr.bf16.mxu0 0
        %2468 = vmatpush1.bf16.msra.mxu0 0
        %2469 = vmatprep.subr.bf16.mxu0 0
        %2470 = vmatpush1.bf16.msra.mxu0 0
        %2471 = vmatprep.subr.bf16.mxu0 0
        %2472 = vmatpush1.bf16.msra.mxu0 0
        %2473 = vmatprep.subr.bf16.mxu0 0
        %2474 = vmatpush1.bf16.msra.mxu0 0
        %2475 = vmatprep.subr.bf16.mxu0 0
        %2476 = vmatpush1.bf16.msra.mxu0 0
        %2477 = vmatprep.subr.bf16.mxu0 0
        %2478 = vmatpush1.bf16.msra.mxu0 0
        %2479 = vmatprep.subr.bf16.mxu0 0
        %2480 = vmatpush1.bf16.msra.mxu0 0
        %2481 = vmatprep.mubr.bf16.mxu0 0
        %2482 = vmatmul.mubr.bf16.gmra.mrb[0].mxu0 %v2444
        %v2483 = vpop.f32.mrb[0].mxu0
        %v2484 = vadd.f32 0.0, %v2483
        %v2485 = vpop.f32.mrb[0].mxu0
        %v2486 = vpop.f32.mrb[0].mxu0
        %v2487 = vpop.f32.mrb[0].mxu0
        %2488 = vdwg.mxu0
        %v2489 = vpack.c.bf16 %v2484, %v2484
        %v2491 = vsel %vm1335, %v2489, 0
        %v2494 = vsel %vm1399, %v2197, 0
        %2496 = vmatprep.subr.bf16.mxu0 0
        %2497 = vmatpush1.bf16.msra.mxu0 %v2494
        %2498 = vmatprep.subr.bf16.mxu0 0
        %2499 = vmatpush1.bf16.msra.mxu0 0
        %2500 = vmatprep.subr.bf16.mxu0 0
        %2501 = vmatpush1.bf16.msra.mxu0 0
        %2502 = vmatprep.subr.bf16.mxu0 0
        %2503 = vmatpush1.bf16.msra.mxu0 0
        %2504 = vmatprep.subr.bf16.mxu0 0
        %2505 = vmatpush1.bf16.msra.mxu0 0
        %2506 = vmatprep.subr.bf16.mxu0 0
        %2507 = vmatpush1.bf16.msra.mxu0 0
        %2508 = vmatprep.subr.bf16.mxu0 0
        %2509 = vmatpush1.bf16.msra.mxu0 0
        %2510 = vmatprep.subr.bf16.mxu0 0
        %2511 = vmatpush1.bf16.msra.mxu0 0
        %2512 = vmatprep.subr.bf16.mxu0 0
        %2513 = vmatpush1.bf16.msra.mxu0 0
        %2514 = vmatprep.subr.bf16.mxu0 0
        %2515 = vmatpush1.bf16.msra.mxu0 0
        %2516 = vmatprep.subr.bf16.mxu0 0
        %2517 = vmatpush1.bf16.msra.mxu0 0
        %2518 = vmatprep.subr.bf16.mxu0 0
        %2519 = vmatpush1.bf16.msra.mxu0 0
        %2520 = vmatprep.subr.bf16.mxu0 0
        %2521 = vmatpush1.bf16.msra.mxu0 0
        %2522 = vmatprep.subr.bf16.mxu0 0
        %2523 = vmatpush1.bf16.msra.mxu0 0
        %2524 = vmatprep.subr.bf16.mxu0 0
        %2525 = vmatpush1.bf16.msra.mxu0 0
        %2526 = vmatprep.subr.bf16.mxu0 0
        %2527 = vmatpush1.bf16.msra.mxu0 0
        %2528 = vmatprep.mubr.bf16.mxu0 0
        %2529 = vmatmul.mubr.bf16.gmra.mrb[0].mxu0 %v2491
        %v2530 = vpop.f32.mrb[0].mxu0
        %v2531 = vadd.f32 0.0, %v2530
        %v2532 = vpop.f32.mrb[0].mxu0
        %v2533 = vpop.f32.mrb[0].mxu0
        %v2534 = vpop.f32.mrb[0].mxu0
        %2535 = vdwg.mxu0
        %v2537 = vsel %vm1335, %v2378, 0
        %v2540 = vsel %vm1399, %v2196, 0
        %2542 = vmatprep.subr.bf16.mxu0 0
        %2543 = vmatpush1.bf16.msra.mxu0 %v2540
        %2544 = vmatprep.subr.bf16.mxu0 0
        %2545 = vmatpush1.bf16.msra.mxu0 0
        %2546 = vmatprep.subr.bf16.mxu0 0
        %2547 = vmatpush1.bf16.msra.mxu0 0
        %2548 = vmatprep.subr.bf16.mxu0 0
        %2549 = vmatpush1.bf16.msra.mxu0 0
        %2550 = vmatprep.subr.bf16.mxu0 0
        %2551 = vmatpush1.bf16.msra.mxu0 0
        %2552 = vmatprep.subr.bf16.mxu0 0
        %2553 = vmatpush1.bf16.msra.mxu0 0
        %2554 = vmatprep.subr.bf16.mxu0 0
        %2555 = vmatpush1.bf16.msra.mxu0 0
        %2556 = vmatprep.subr.bf16.mxu0 0
        %2557 = vmatpush1.bf16.msra.mxu0 0
        %2558 = vmatprep.subr.bf16.mxu0 0
        %2559 = vmatpush1.bf16.msra.mxu0 0
        %2560 = vmatprep.subr.bf16.mxu0 0
        %2561 = vmatpush1.bf16.msra.mxu0 0
        %2562 = vmatprep.subr.bf16.mxu0 0
        %2563 = vmatpush1.bf16.msra.mxu0 0
        %2564 = vmatprep.subr.bf16.mxu0 0
        %2565 = vmatpush1.bf16.msra.mxu0 0
        %2566 = vmatprep.subr.bf16.mxu0 0
        %2567 = vmatpush1.bf16.msra.mxu0 0
        %2568 = vmatprep.subr.bf16.mxu0 0
        %2569 = vmatpush1.bf16.msra.mxu0 0
        %2570 = vmatprep.subr.bf16.mxu0 0
        %2571 = vmatpush1.bf16.msra.mxu0 0
        %2572 = vmatprep.subr.bf16.mxu0 0
        %2573 = vmatpush1.bf16.msra.mxu0 0
        %2574 = vmatprep.mubr.bf16.mxu0 0
        %2575 = vmatmul.mubr.bf16.gmra.mrb[0].mxu0 %v2537
        %v2576 = vpop.f32.mrb[0].mxu0
        %v2577 = vadd.f32 %v2531, %v2576
        %v2578 = vpop.f32.mrb[0].mxu0
        %v2579 = vpop.f32.mrb[0].mxu0
        %v2580 = vpop.f32.mrb[0].mxu0
        %2581 = vdwg.mxu0
        %2582 = vrot.lane.b32.xlu0 %v2268, 112
        %v2583 = vpop.permute.xlu0 %2582
        %2584 = vrot.lane.b32.xlu0 %v2268, 80
        %v2585 = vpop.permute.xlu0 %2584
        %v2587 = vsel %vm1335, %v2583, 0
        %v2590 = vsel %vm1335, %v2585, 0
        %2592 = vmatprep.subr.bf16.mxu0 0
        %2593 = vmatpush1.bf16.xpose.msra.mxu0 %v2590
        %2594 = vmatprep.subr.bf16.mxu0 0
        %2595 = vmatpush1.bf16.xpose.msra.mxu0 0
        %2596 = vmatprep.subr.bf16.mxu0 0
        %2597 = vmatpush1.bf16.xpose.msra.mxu0 0
        %2598 = vmatprep.subr.bf16.mxu0 0
        %2599 = vmatpush1.bf16.xpose.msra.mxu0 0
        %2600 = vmatprep.subr.bf16.mxu0 0
        %2601 = vmatpush1.bf16.xpose.msra.mxu0 0
        %2602 = vmatprep.subr.bf16.mxu0 0
        %2603 = vmatpush1.bf16.xpose.msra.mxu0 0
        %2604 = vmatprep.subr.bf16.mxu0 0
        %2605 = vmatpush1.bf16.xpose.msra.mxu0 0
        %2606 = vmatprep.subr.bf16.mxu0 0
        %2607 = vmatpush1.bf16.xpose.msra.mxu0 0
        %2608 = vmatprep.subr.bf16.mxu0 0
        %2609 = vmatpush1.bf16.xpose.msra.mxu0 0
        %2610 = vmatprep.subr.bf16.mxu0 0
        %2611 = vmatpush1.bf16.xpose.msra.mxu0 0
        %2612 = vmatprep.subr.bf16.mxu0 0
        %2613 = vmatpush1.bf16.xpose.msra.mxu0 0
        %2614 = vmatprep.subr.bf16.mxu0 0
        %2615 = vmatpush1.bf16.xpose.msra.mxu0 0
        %2616 = vmatprep.subr.bf16.mxu0 0
        %2617 = vmatpush1.bf16.xpose.msra.mxu0 0
        %2618 = vmatprep.subr.bf16.mxu0 0
        %2619 = vmatpush1.bf16.xpose.msra.mxu0 0
        %2620 = vmatprep.subr.bf16.mxu0 0
        %2621 = vmatpush1.bf16.xpose.msra.mxu0 0
        %2622 = vmatprep.subr.bf16.mxu0 0
        %2623 = vmatpush1.bf16.xpose.msra.mxu0 0
        %2624 = vmatprep.mubr.bf16.mxu0 0
        %2625 = vmatmul.mubr.bf16.gmra.mrb[0].mxu0 %v2587
        %v2626 = vpop.f32.mrb[0].mxu0
        %v2627 = vadd.f32 0.0, %v2626
        %v2628 = vpop.f32.mrb[0].mxu0
        %v2629 = vpop.f32.mrb[0].mxu0
        %v2630 = vpop.f32.mrb[0].mxu0
        %2631 = vdwg.mxu0
        %v2632 = vsel %vm1335, %v2627, -inf
        %2633 = vmax.xlane.f32.xlu0 %v2632
        %v2634 = vpop.xlane.xlu0 %2633
        %v2635 = vsub.f32 %v2627, %v2634
        %v2636 = vmul.f32 %v2635, 1.442695
        %v2637 = vpow.pop %v2636
        %v2638 = vsel %vm1335, %v2637, 0.0
        %2639 = vadd.xlane.f32.xlu0 %v2638
        %v2640 = vpop.xlane.xlu0 %2639
        %v2641 = vrcp.pop %v2640
        %v2642 = vmul.f32 %v2637, %v2641
        %v2643 = vpack.c.bf16 %v2642, %v2642
        %2644 = vrot.lane.b32.xlu0 %v2268, 48
        %v2645 = vpop.permute.xlu0 %2644
        %v2647 = vsel %vm1335, %v2643, 0
        %v2650 = vsel %vm1399, %v2645, 0
        %2652 = vmatprep.subr.bf16.mxu0 0
        %2653 = vmatpush1.bf16.msra.mxu0 %v2650
        %2654 = vmatprep.subr.bf16.mxu0 0
        %2655 = vmatpush1.bf16.msra.mxu0 0
        %2656 = vmatprep.subr.bf16.mxu0 0
        %2657 = vmatpush1.bf16.msra.mxu0 0
        %2658 = vmatprep.subr.bf16.mxu0 0
        %2659 = vmatpush1.bf16.msra.mxu0 0
        %2660 = vmatprep.subr.bf16.mxu0 0
        %2661 = vmatpush1.bf16.msra.mxu0 0
        %2662 = vmatprep.subr.bf16.mxu0 0
        %2663 = vmatpush1.bf16.msra.mxu0 0
        %2664 = vmatprep.subr.bf16.mxu0 0
        %2665 = vmatpush1.bf16.msra.mxu0 0
        %2666 = vmatprep.subr.bf16.mxu0 0
        %2667 = vmatpush1.bf16.msra.mxu0 0
        %2668 = vmatprep.subr.bf16.mxu0 0
        %2669 = vmatpush1.bf16.msra.mxu0 0
        %2670 = vmatprep.subr.bf16.mxu0 0
        %2671 = vmatpush1.bf16.msra.mxu0 0
        %2672 = vmatprep.subr.bf16.mxu0 0
        %2673 = vmatpush1.bf16.msra.mxu0 0
        %2674 = vmatprep.subr.bf16.mxu0 0
        %2675 = vmatpush1.bf16.msra.mxu0 0
        %2676 = vmatprep.subr.bf16.mxu0 0
        %2677 = vmatpush1.bf16.msra.mxu0 0
        %2678 = vmatprep.subr.bf16.mxu0 0
        %2679 = vmatpush1.bf16.msra.mxu0 0
        %2680 = vmatprep.subr.bf16.mxu0 0
        %2681 = vmatpush1.bf16.msra.mxu0 0
        %2682 = vmatprep.subr.bf16.mxu0 0
        %2683 = vmatpush1.bf16.msra.mxu0 0
        %2684 = vmatprep.mubr.bf16.mxu0 0
        %2685 = vmatmul.mubr.bf16.gmra.mrb[0].mxu0 %v2647
        %v2686 = vpop.f32.mrb[0].mxu0
        %v2687 = vadd.f32 0.0, %v2686
        %v2688 = vpop.f32.mrb[0].mxu0
        %v2689 = vpop.f32.mrb[0].mxu0
        %v2690 = vpop.f32.mrb[0].mxu0
        %2691 = vdwg.mxu0
        %v2692 = vpack.c.bf16 %v2687, %v2687
        %v2694 = vsel %vm1335, %v2692, 0
        %v2697 = vsel %vm1399, %v2198, 0
        %2699 = vmatprep.subr.bf16.mxu0 0
        %2700 = vmatpush1.bf16.msra.mxu0 %v2697
        %2701 = vmatprep.subr.bf16.mxu0 0
        %2702 = vmatpush1.bf16.msra.mxu0 0
        %2703 = vmatprep.subr.bf16.mxu0 0
        %2704 = vmatpush1.bf16.msra.mxu0 0
        %2705 = vmatprep.subr.bf16.mxu0 0
        %2706 = vmatpush1.bf16.msra.mxu0 0
        %2707 = vmatprep.subr.bf16.mxu0 0
        %2708 = vmatpush1.bf16.msra.mxu0 0
        %2709 = vmatprep.subr.bf16.mxu0 0
        %2710 = vmatpush1.bf16.msra.mxu0 0
        %2711 = vmatprep.subr.bf16.mxu0 0
        %2712 = vmatpush1.bf16.msra.mxu0 0
        %2713 = vmatprep.subr.bf16.mxu0 0
        %2714 = vmatpush1.bf16.msra.mxu0 0
        %2715 = vmatprep.subr.bf16.mxu0 0
        %2716 = vmatpush1.bf16.msra.mxu0 0
        %2717 = vmatprep.subr.bf16.mxu0 0
        %2718 = vmatpush1.bf16.msra.mxu0 0
        %2719 = vmatprep.subr.bf16.mxu0 0
        %2720 = vmatpush1.bf16.msra.mxu0 0
        %2721 = vmatprep.subr.bf16.mxu0 0
        %2722 = vmatpush1.bf16.msra.mxu0 0
        %2723 = vmatprep.subr.bf16.mxu0 0
        %2724 = vmatpush1.bf16.msra.mxu0 0
        %2725 = vmatprep.subr.bf16.mxu0 0
        %2726 = vmatpush1.bf16.msra.mxu0 0
        %2727 = vmatprep.subr.bf16.mxu0 0
        %2728 = vmatpush1.bf16.msra.mxu0 0
        %2729 = vmatprep.subr.bf16.mxu0 0
        %2730 = vmatpush1.bf16.msra.mxu0 0
        %2731 = vmatprep.mubr.bf16.mxu0 0
        %2732 = vmatmul.mubr.bf16.gmra.mrb[0].mxu0 %v2694
        %v2733 = vpop.f32.mrb[0].mxu0
        %v2734 = vadd.f32 0.0, %v2733
        %v2735 = vpop.f32.mrb[0].mxu0
        %v2736 = vpop.f32.mrb[0].mxu0
        %v2737 = vpop.f32.mrb[0].mxu0
        %2738 = vdwg.mxu0
        %v2739 = vadd.f32 %v2577, %v2734
        %2740 = vrot.lane.b32.xlu0 %v2268, 104
        %v2741 = vpop.permute.xlu0 %2740
        %2742 = vrot.lane.b32.xlu0 %v2268, 72
        %v2743 = vpop.permute.xlu0 %2742
        %v2745 = vsel %vm1335, %v2741, 0
        %v2748 = vsel %vm1335, %v2743, 0
        %2750 = vmatprep.subr.bf16.mxu0 0
        %2751 = vmatpush1.bf16.xpose.msra.mxu0 %v2748
        %2752 = vmatprep.subr.bf16.mxu0 0
        %2753 = vmatpush1.bf16.xpose.msra.mxu0 0
        %2754 = vmatprep.subr.bf16.mxu0 0
        %2755 = vmatpush1.bf16.xpose.msra.mxu0 0
        %2756 = vmatprep.subr.bf16.mxu0 0
        %2757 = vmatpush1.bf16.xpose.msra.mxu0 0
        %2758 = vmatprep.subr.bf16.mxu0 0
        %2759 = vmatpush1.bf16.xpose.msra.mxu0 0
        %2760 = vmatprep.subr.bf16.mxu0 0
        %2761 = vmatpush1.bf16.xpose.msra.mxu0 0
        %2762 = vmatprep.subr.bf16.mxu0 0
        %2763 = vmatpush1.bf16.xpose.msra.mxu0 0
        %2764 = vmatprep.subr.bf16.mxu0 0
        %2765 = vmatpush1.bf16.xpose.msra.mxu0 0
        %2766 = vmatprep.subr.bf16.mxu0 0
        %2767 = vmatpush1.bf16.xpose.msra.mxu0 0
        %2768 = vmatprep.subr.bf16.mxu0 0
        %2769 = vmatpush1.bf16.xpose.msra.mxu0 0
        %2770 = vmatprep.subr.bf16.mxu0 0
        %2771 = vmatpush1.bf16.xpose.msra.mxu0 0
        %2772 = vmatprep.subr.bf16.mxu0 0
        %2773 = vmatpush1.bf16.xpose.msra.mxu0 0
        %2774 = vmatprep.subr.bf16.mxu0 0
        %2775 = vmatpush1.bf16.xpose.msra.mxu0 0
        %2776 = vmatprep.subr.bf16.mxu0 0
        %2777 = vmatpush1.bf16.xpose.msra.mxu0 0
        %2778 = vmatprep.subr.bf16.mxu0 0
        %2779 = vmatpush1.bf16.xpose.msra.mxu0 0
        %2780 = vmatprep.subr.bf16.mxu0 0
        %2781 = vmatpush1.bf16.xpose.msra.mxu0 0
        %2782 = vmatprep.mubr.bf16.mxu0 0
        %2783 = vmatmul.mubr.bf16.gmra.mrb[0].mxu0 %v2745
        %v2784 = vpop.f32.mrb[0].mxu0
        %v2785 = vadd.f32 0.0, %v2784
        %v2786 = vpop.f32.mrb[0].mxu0
        %v2787 = vpop.f32.mrb[0].mxu0
        %v2788 = vpop.f32.mrb[0].mxu0
        %2789 = vdwg.mxu0
        %v2790 = vsel %vm1335, %v2785, -inf
        %2791 = vmax.xlane.f32.xlu0 %v2790
        %v2792 = vpop.xlane.xlu0 %2791
        %v2793 = vsub.f32 %v2785, %v2792
        %v2794 = vmul.f32 %v2793, 1.442695
        %v2795 = vpow.pop %v2794
        %v2796 = vsel %vm1335, %v2795, 0.0
        %2797 = vadd.xlane.f32.xlu0 %v2796
        %v2798 = vpop.xlane.xlu0 %2797
        %v2799 = vrcp.pop %v2798
        %v2800 = vmul.f32 %v2795, %v2799
        %v2801 = vpack.c.bf16 %v2800, %v2800
        %2802 = vrot.lane.b32.xlu0 %v2268, 40
        %v2803 = vpop.permute.xlu0 %2802
        %v2805 = vsel %vm1335, %v2801, 0
        %v2808 = vsel %vm1399, %v2803, 0
        %2810 = vmatprep.subr.bf16.mxu0 0
        %2811 = vmatpush1.bf16.msra.mxu0 %v2808
        %2812 = vmatprep.subr.bf16.mxu0 0
        %2813 = vmatpush1.bf16.msra.mxu0 0
        %2814 = vmatprep.subr.bf16.mxu0 0
        %2815 = vmatpush1.bf16.msra.mxu0 0
        %2816 = vmatprep.subr.bf16.mxu0 0
        %2817 = vmatpush1.bf16.msra.mxu0 0
        %2818 = vmatprep.subr.bf16.mxu0 0
        %2819 = vmatpush1.bf16.msra.mxu0 0
        %2820 = vmatprep.subr.bf16.mxu0 0
        %2821 = vmatpush1.bf16.msra.mxu0 0
        %2822 = vmatprep.subr.bf16.mxu0 0
        %2823 = vmatpush1.bf16.msra.mxu0 0
        %2824 = vmatprep.subr.bf16.mxu0 0
        %2825 = vmatpush1.bf16.msra.mxu0 0
        %2826 = vmatprep.subr.bf16.mxu0 0
        %2827 = vmatpush1.bf16.msra.mxu0 0
        %2828 = vmatprep.subr.bf16.mxu0 0
        %2829 = vmatpush1.bf16.msra.mxu0 0
        %2830 = vmatprep.subr.bf16.mxu0 0
        %2831 = vmatpush1.bf16.msra.mxu0 0
        %2832 = vmatprep.subr.bf16.mxu0 0
        %2833 = vmatpush1.bf16.msra.mxu0 0
        %2834 = vmatprep.subr.bf16.mxu0 0
        %2835 = vmatpush1.bf16.msra.mxu0 0
        %2836 = vmatprep.subr.bf16.mxu0 0
        %2837 = vmatpush1.bf16.msra.mxu0 0
        %2838 = vmatprep.subr.bf16.mxu0 0
        %2839 = vmatpush1.bf16.msra.mxu0 0
        %2840 = vmatprep.subr.bf16.mxu0 0
        %2841 = vmatpush1.bf16.msra.mxu0 0
        %2842 = vmatprep.mubr.bf16.mxu0 0
        %2843 = vmatmul.mubr.bf16.gmra.mrb[0].mxu0 %v2805
        %v2844 = vpop.f32.mrb[0].mxu0
        %v2845 = vadd.f32 0.0, %v2844
        %v2846 = vpop.f32.mrb[0].mxu0
        %v2847 = vpop.f32.mrb[0].mxu0
        %v2848 = vpop.f32.mrb[0].mxu0
        %2849 = vdwg.mxu0
        %v2850 = vpack.c.bf16 %v2845, %v2845
        %v2852 = vsel %vm1335, %v2850, 0
        %v2855 = vsel %vm1399, %v2199, 0
        %2857 = vmatprep.subr.bf16.mxu0 0
        %2858 = vmatpush1.bf16.msra.mxu0 %v2855
        %2859 = vmatprep.subr.bf16.mxu0 0
        %2860 = vmatpush1.bf16.msra.mxu0 0
        %2861 = vmatprep.subr.bf16.mxu0 0
        %2862 = vmatpush1.bf16.msra.mxu0 0
        %2863 = vmatprep.subr.bf16.mxu0 0
        %2864 = vmatpush1.bf16.msra.mxu0 0
        %2865 = vmatprep.subr.bf16.mxu0 0
        %2866 = vmatpush1.bf16.msra.mxu0 0
        %2867 = vmatprep.subr.bf16.mxu0 0
        %2868 = vmatpush1.bf16.msra.mxu0 0
        %2869 = vmatprep.subr.bf16.mxu0 0
        %2870 = vmatpush1.bf16.msra.mxu0 0
        %2871 = vmatprep.subr.bf16.mxu0 0
        %2872 = vmatpush1.bf16.msra.mxu0 0
        %2873 = vmatprep.subr.bf16.mxu0 0
        %2874 = vmatpush1.bf16.msra.mxu0 0
        %2875 = vmatprep.subr.bf16.mxu0 0
        %2876 = vmatpush1.bf16.msra.mxu0 0
        %2877 = vmatprep.subr.bf16.mxu0 0
        %2878 = vmatpush1.bf16.msra.mxu0 0
        %2879 = vmatprep.subr.bf16.mxu0 0
        %2880 = vmatpush1.bf16.msra.mxu0 0
        %2881 = vmatprep.subr.bf16.mxu0 0
        %2882 = vmatpush1.bf16.msra.mxu0 0
        %2883 = vmatprep.subr.bf16.mxu0 0
        %2884 = vmatpush1.bf16.msra.mxu0 0
        %2885 = vmatprep.subr.bf16.mxu0 0
        %2886 = vmatpush1.bf16.msra.mxu0 0
        %2887 = vmatprep.subr.bf16.mxu0 0
        %2888 = vmatpush1.bf16.msra.mxu0 0
        %2889 = vmatprep.mubr.bf16.mxu0 0
        %2890 = vmatmul.mubr.bf16.gmra.mrb[0].mxu0 %v2852
        %v2891 = vpop.f32.mrb[0].mxu0
        %v2892 = vadd.f32 0.0, %v2891
        %v2893 = vpop.f32.mrb[0].mxu0
        %v2894 = vpop.f32.mrb[0].mxu0
        %v2895 = vpop.f32.mrb[0].mxu0
        %2896 = vdwg.mxu0
        %v2897 = vadd.f32 %v2739, %v2892
        %v2899 = vlaneseq
        %v2900 = vshrl.u32 %v2899, 7
        %v2901 = vsub.s32 0, %v2900
        %v2902 = vrot.slane %v2201, %v2901
        %v2904 = vadd.f32 %v2897, %v2902
        %v2905 = vadd.f32 %v2904, %v2187
        %v2906 = vsel %vm1228, %v2905, 0.0
        %2907 = vadd.xlane.f32.xlu0 %v2906
        %v2908 = vpop.xlane.xlu0 %2907
        %v2909 = vmul.f32 %v2908, %v1232
        %v2910 = vsub.f32 %v2905, %v2909
        %v2911 = vmul.f32 %v2910, %v2910
        %v2912 = vsel %vm1228, %v2911, 0.0
        %2913 = vadd.xlane.f32.xlu0 %v2912
        %v2914 = vpop.xlane.xlu0 %2913
        %v2915 = vmul.f32 %v2914, %v1232
        %v2916 = vadd.f32 %v2915, 1e-05
        %v2917 = vrsqrt.pop %v2916
        %v2918 = vmul.f32 %v2910, %v2917
        %v2920 = vlaneseq
        %v2921 = vshrl.u32 %v2920, 7
        %v2922 = vsub.s32 0, %v2921
        %v2923 = vrot.slane %v2203, %v2922
        %v2925 = vmul.f32 %v2918, %v2923
        %v2927 = vlaneseq
        %v2928 = vshrl.u32 %v2927, 7
        %v2929 = vsub.s32 0, %v2928
        %v2930 = vrot.slane %v2205, %v2929
        %v2932 = vadd.f32 %v2925, %v2930
        %s2933 = scalar_lea.vmem %s21, 16
        %v2934 = vld [vmem:[%s2933] sm:$0xf]
        %v2935 = vld [vmem:[%s2933 + $0x4] sm:$0xf]
        %v2936 = vld [vmem:[%s2933 + $0x8] sm:$0xf]
        %v2937 = vld [vmem:[%s2933 + $0xc] sm:$0xf]
        %s2938 = scalar_lea.vmem %s23, 1
        %v2939 = vld [vmem:[%s2938] sm:$0x1]
        %s2940 = scalar_lea.vmem %s25, 32
        %v2941 = vld [vmem:[%s2940] sm:$0xf]
        %v2942 = vld [vmem:[%s2940 + $0x4] sm:$0xf]
        %v2943 = vld [vmem:[%s2940 + $0x8] sm:$0xf]
        %v2944 = vld [vmem:[%s2940 + $0xc] sm:$0xf]
        %v2945 = vld [vmem:[%s2940 + $0x10] sm:$0xf]
        %v2946 = vld [vmem:[%s2940 + $0x14] sm:$0xf]
        %v2947 = vld [vmem:[%s2940 + $0x18] sm:$0xf]
        %v2948 = vld [vmem:[%s2940 + $0x1c] sm:$0xf]
        %s2949 = scalar_lea.vmem %s27, 1
        %v2950 = vld [vmem:[%s2949] sm:$0x1]
        %s2951 = scalar_lea.vmem %s29, 1
        %v2952 = vld [vmem:[%s2951] sm:$0x1]
        %s2953 = scalar_lea.vmem %s31, 1
        %v2954 = vld [vmem:[%s2953] sm:$0x1]
        %v2955 = vpack.c.bf16 %v2932, %v2932
        %v2957 = vlaneseq
        %v2958 = vshrl.u32 %v2957, 7
        %v2959 = vsub.s32 0, %v2958
        %v2960 = vrot.slane %v2939, %v2959
        %v2966 = vunpack.c.l.b16 %v2934
        %v2967 = vunpack.c.l.b16 %v2935
        %v2968 = vunpack.c.l.b16 %v2936
        %v2969 = vunpack.c.l.b16 %v2937
        %v2970 = vpack.c.b16 %v2967, %v2966
        %v2971 = vpack.c.b16 %v2969, %v2968
        %v2975 = vsel %vm1228, %v2955, 0
        %2977 = vmatprep.subr.bf16.mxu0 0
        %2978 = vmatpush1.bf16.msra.mxu0 %v2970
        %2979 = vmatprep.subr.bf16.mxu0 0
        %2980 = vmatpush1.bf16.msra.mxu0 %v2971
        %2981 = vmatprep.subr.bf16.mxu0 0
        %2982 = vmatpush1.bf16.msra.mxu0 0
        %2983 = vmatprep.subr.bf16.mxu0 0
        %2984 = vmatpush1.bf16.msra.mxu0 0
        %2985 = vmatprep.subr.bf16.mxu0 0
        %2986 = vmatpush1.bf16.msra.mxu0 0
        %2987 = vmatprep.subr.bf16.mxu0 0
        %2988 = vmatpush1.bf16.msra.mxu0 0
        %2989 = vmatprep.subr.bf16.mxu0 0
        %2990 = vmatpush1.bf16.msra.mxu0 0
        %2991 = vmatprep.subr.bf16.mxu0 0
        %2992 = vmatpush1.bf16.msra.mxu0 0
        %2993 = vmatprep.subr.bf16.mxu0 0
        %2994 = vmatpush1.bf16.msra.mxu0 0
        %2995 = vmatprep.subr.bf16.mxu0 0
        %2996 = vmatpush1.bf16.msra.mxu0 0
        %2997 = vmatprep.subr.bf16.mxu0 0
        %2998 = vmatpush1.bf16.msra.mxu0 0
        %2999 = vmatprep.subr.bf16.mxu0 0
        %3000 = vmatpush1.bf16.msra.mxu0 0
        %3001 = vmatprep.subr.bf16.mxu0 0
        %3002 = vmatpush1.bf16.msra.mxu0 0
        %3003 = vmatprep.subr.bf16.mxu0 0
        %3004 = vmatpush1.bf16.msra.mxu0 0
        %3005 = vmatprep.subr.bf16.mxu0 0
        %3006 = vmatpush1.bf16.msra.mxu0 0
        %3007 = vmatprep.subr.bf16.mxu0 0
        %3008 = vmatpush1.bf16.msra.mxu0 0
        %3009 = vmatprep.mubr.bf16.mxu0 0
        %3010 = vmatmul.mubr.bf16.gmra.mrb[0].mxu0 %v2975
        %v3011 = vpop.f32.mrb[0].mxu0
        %v3012 = vadd.f32 %v2960, %v3011
        %v3013 = vpop.f32.mrb[0].mxu0
        %v3014 = vpop.f32.mrb[0].mxu0
        %v3015 = vpop.f32.mrb[0].mxu0
        %3016 = vdwg.mxu0
        %v3017 = vmul.f32 %v3012, 0.5
        %v3018 = vmul.f32 %v3012, 0.044715
        %v3019 = vmul.f32 %v3018, %v3012
        %v3020 = vmul.f32 %v3019, %v3012
        %v3021 = vadd.f32 %v3012, %v3020
        %v3022 = vmul.f32 %v3021, 0.7978846
        %v3023 = vtanh.pop %v3022
        %v3024 = vadd.f32 %v3023, 1.0
        %v3025 = vmul.f32 %v3017, %v3024
        %v3026 = vpack.c.bf16 %v3025, %v3025
        %v3028 = vlaneseq
        %v3029 = vshrl.u32 %v3028, 7
        %v3030 = vsub.s32 0, %v3029
        %v3031 = vrot.slane %v2950, %v3030
        %v3041 = vunpack.c.l.b16 %v2941
        %v3042 = vunpack.c.l.b16 %v2942
        %v3043 = vunpack.c.l.b16 %v2943
        %v3044 = vunpack.c.l.b16 %v2944
        %v3045 = vunpack.c.l.b16 %v2945
        %v3046 = vunpack.c.l.b16 %v2946
        %v3047 = vunpack.c.l.b16 %v2947
        %v3048 = vunpack.c.l.b16 %v2948
        %v3049 = vpack.c.b16 %v3042, %v3041
        %v3050 = vpack.c.b16 %v3044, %v3043
        %v3051 = vpack.c.b16 %v3046, %v3045
        %v3052 = vpack.c.b16 %v3048, %v3047
        %v3058 = vsel %vm2116, %v3026, 0
        %3060 = vmatprep.subr.bf16.mxu0 0
        %3061 = vmatpush1.bf16.msra.mxu0 %v3049
        %3062 = vmatprep.subr.bf16.mxu0 0
        %3063 = vmatpush1.bf16.msra.mxu0 %v3050
        %3064 = vmatprep.subr.bf16.mxu0 0
        %3065 = vmatpush1.bf16.msra.mxu0 %v3051
        %3066 = vmatprep.subr.bf16.mxu0 0
        %3067 = vmatpush1.bf16.msra.mxu0 %v3052
        %3068 = vmatprep.subr.bf16.mxu0 0
        %3069 = vmatpush1.bf16.msra.mxu0 0
        %3070 = vmatprep.subr.bf16.mxu0 0
        %3071 = vmatpush1.bf16.msra.mxu0 0
        %3072 = vmatprep.subr.bf16.mxu0 0
        %3073 = vmatpush1.bf16.msra.mxu0 0
        %3074 = vmatprep.subr.bf16.mxu0 0
        %3075 = vmatpush1.bf16.msra.mxu0 0
        %3076 = vmatprep.subr.bf16.mxu0 0
        %3077 = vmatpush1.bf16.msra.mxu0 0
        %3078 = vmatprep.subr.bf16.mxu0 0
        %3079 = vmatpush1.bf16.msra.mxu0 0
        %3080 = vmatprep.subr.bf16.mxu0 0
        %3081 = vmatpush1.bf16.msra.mxu0 0
        %3082 = vmatprep.subr.bf16.mxu0 0
        %3083 = vmatpush1.bf16.msra.mxu0 0
        %3084 = vmatprep.subr.bf16.mxu0 0
        %3085 = vmatpush1.bf16.msra.mxu0 0
        %3086 = vmatprep.subr.bf16.mxu0 0
        %3087 = vmatpush1.bf16.msra.mxu0 0
        %3088 = vmatprep.subr.bf16.mxu0 0
        %3089 = vmatpush1.bf16.msra.mxu0 0
        %3090 = vmatprep.subr.bf16.mxu0 0
        %3091 = vmatpush1.bf16.msra.mxu0 0
        %3092 = vmatprep.mubr.bf16.mxu0 0
        %3093 = vmatmul.mubr.bf16.gmra.mrb[0].mxu0 %v3058
        %v3094 = vpop.f32.mrb[0].mxu0
        %v3095 = vadd.f32 %v3031, %v3094
        %v3096 = vpop.f32.mrb[0].mxu0
        %v3097 = vpop.f32.mrb[0].mxu0
        %v3098 = vpop.f32.mrb[0].mxu0
        %3099 = vdwg.mxu0
        %v3100 = vadd.f32 %v3095, %v2932
        %v3101 = vsel %vm1228, %v3100, 0.0
        %3102 = vadd.xlane.f32.xlu0 %v3101
        %v3103 = vpop.xlane.xlu0 %3102
        %v3104 = vmul.f32 %v3103, %v1232
        %v3105 = vsub.f32 %v3100, %v3104
        %v3106 = vmul.f32 %v3105, %v3105
        %v3107 = vsel %vm1228, %v3106, 0.0
        %3108 = vadd.xlane.f32.xlu0 %v3107
        %v3109 = vpop.xlane.xlu0 %3108
        %v3110 = vmul.f32 %v3109, %v1232
        %v3111 = vadd.f32 %v3110, 1e-05
        %v3112 = vrsqrt.pop %v3111
        %v3113 = vmul.f32 %v3105, %v3112
        %v3115 = vlaneseq
        %v3116 = vshrl.u32 %v3115, 7
        %v3117 = vsub.s32 0, %v3116
        %v3118 = vrot.slane %v2952, %v3117
        %v3120 = vmul.f32 %v3113, %v3118
        %v3122 = vlaneseq
        %v3123 = vshrl.u32 %v3122, 7
        %v3124 = vsub.s32 0, %v3123
        %v3125 = vrot.slane %v2954, %v3124
        %v3127 = vadd.f32 %v3120, %v3125
        %v3128 = vpack.c.bf16 %v3127, %v3127
        %v3129 = vlaneseq
        %v3130 = vshrl.u32 %v3129, 7
        %v3131 = vlaneseq
        %v3132 = vand.u32 %v3131, 127
        %vm3133 = vcmp.ge.s32.totalorder %v3130, %v3132
        %v3134 = vsel %vm3133, 0.0, -1e+09
        %v3135 = vld [vmem:[%s1222] sm:$0xf]
        %v3136 = vunpack.c.l.bf16 %v3135
        %v3137 = vld [vmem:[%s33] sm:$0x1]
        %v3138 = vld [vmem:[%s35] sm:$0x1]
        %v3139 = vsel %vm1228, %v3136, 0.0
        %3140 = vadd.xlane.f32.xlu0 %v3139
        %v3141 = vpop.xlane.xlu0 %3140
        %v3142 = vmul.f32 %v3141, %v1232
        %v3143 = vsub.f32 %v3136, %v3142
        %v3144 = vmul.f32 %v3143, %v3143
        %v3145 = vsel %vm1228, %v3144, 0.0
        %3146 = vadd.xlane.f32.xlu0 %v3145
        %v3147 = vpop.xlane.xlu0 %3146
        %v3148 = vmul.f32 %v3147, %v1232
        %v3149 = vadd.f32 %v3148, 1e-05
        %v3150 = vrsqrt.pop %v3149
        %v3151 = vmul.f32 %v3143, %v3150
        %v3153 = vlaneseq
        %v3154 = vshrl.u32 %v3153, 7
        %v3155 = vsub.s32 0, %v3154
        %v3156 = vrot.slane %v3137, %v3155
        %v3158 = vmul.f32 %v3151, %v3156
        %v3160 = vlaneseq
        %v3161 = vshrl.u32 %v3160, 7
        %v3162 = vsub.s32 0, %v3161
        %v3163 = vrot.slane %v3138, %v3162
        %v3165 = vadd.f32 %v3158, %v3163
        %v3166 = vld [vmem:[%s37] sm:$0xf]
        %v3167 = vld [vmem:[%s37 + $0x4] sm:$0xf]
        %v3168 = vld [vmem:[%s37 + $0x8] sm:$0xf]
        %v3169 = vld [vmem:[%s37 + $0xc] sm:$0xf]
        %v3170 = vld [vmem:[%s39] sm:$0x1]
        %v3171 = vld [vmem:[%s41] sm:$0xf]
        %v3172 = vld [vmem:[%s41 + $0x4] sm:$0xf]
        %v3173 = vld [vmem:[%s41 + $0x8] sm:$0xf]
        %v3174 = vld [vmem:[%s41 + $0xc] sm:$0xf]
        %v3175 = vld [vmem:[%s43] sm:$0x1]
        %v3176 = vld [vmem:[%s45] sm:$0x1]
        %v3177 = vld [vmem:[%s47] sm:$0x1]
        %v3178 = vpack.c.bf16 %v3165, %v3165
        %v3180 = vlaneseq
        %v3181 = vshrl.u32 %v3180, 7
        %v3182 = vsub.s32 0, %v3181
        %v3183 = vrot.slane %v3170, %v3182
        %v3189 = vunpack.c.l.b16 %v3166
        %v3190 = vunpack.c.l.b16 %v3167
        %v3191 = vunpack.c.l.b16 %v3168
        %v3192 = vunpack.c.l.b16 %v3169
        %v3193 = vpack.c.b16 %v3190, %v3189
        %v3194 = vpack.c.b16 %v3192, %v3191
        %v3198 = vsel %vm1228, %v3178, 0
        %3200 = vmatprep.subr.bf16.mxu0 0
        %3201 = vmatpush1.bf16.msra.mxu0 %v3193
        %3202 = vmatprep.subr.bf16.mxu0 0
        %3203 = vmatpush1.bf16.msra.mxu0 %v3194
        %3204 = vmatprep.subr.bf16.mxu0 0
        %3205 = vmatpush1.bf16.msra.mxu0 0
        %3206 = vmatprep.subr.bf16.mxu0 0
        %3207 = vmatpush1.bf16.msra.mxu0 0
        %3208 = vmatprep.subr.bf16.mxu0 0
        %3209 = vmatpush1.bf16.msra.mxu0 0
        %3210 = vmatprep.subr.bf16.mxu0 0
        %3211 = vmatpush1.bf16.msra.mxu0 0
        %3212 = vmatprep.subr.bf16.mxu0 0
        %3213 = vmatpush1.bf16.msra.mxu0 0
        %3214 = vmatprep.subr.bf16.mxu0 0
        %3215 = vmatpush1.bf16.msra.mxu0 0
        %3216 = vmatprep.subr.bf16.mxu0 0
        %3217 = vmatpush1.bf16.msra.mxu0 0
        %3218 = vmatprep.subr.bf16.mxu0 0
        %3219 = vmatpush1.bf16.msra.mxu0 0
        %3220 = vmatprep.subr.bf16.mxu0 0
        %3221 = vmatpush1.bf16.msra.mxu0 0
        %3222 = vmatprep.subr.bf16.mxu0 0
        %3223 = vmatpush1.bf16.msra.mxu0 0
        %3224 = vmatprep.subr.bf16.mxu0 0
        %3225 = vmatpush1.bf16.msra.mxu0 0
        %3226 = vmatprep.subr.bf16.mxu0 0
        %3227 = vmatpush1.bf16.msra.mxu0 0
        %3228 = vmatprep.subr.bf16.mxu0 0
        %3229 = vmatpush1.bf16.msra.mxu0 0
        %3230 = vmatprep.subr.bf16.mxu0 0
        %3231 = vmatpush1.bf16.msra.mxu0 0
        %3232 = vmatprep.mubr.bf16.mxu0 0
        %3233 = vmatmul.mubr.bf16.gmra.mrb[0].mxu0 %v3198
        %v3234 = vpop.f32.mrb[0].mxu0
        %v3235 = vadd.f32 %v3183, %v3234
        %v3236 = vpop.f32.mrb[0].mxu0
        %v3237 = vpop.f32.mrb[0].mxu0
        %v3238 = vpop.f32.mrb[0].mxu0
        %3239 = vdwg.mxu0
        %v3240 = vpack.c.bf16 %v3235, %v3235
        %3242 = vrot.lane.b32.xlu0 %v3240, 96
        %v3243 = vpop.permute.xlu0 %3242
        %v3245 = vsel %vm1335, %v3240, 0
        %v3248 = vsel %vm1335, %v3243, 0
        %3250 = vmatprep.subr.bf16.mxu0 0
        %3251 = vmatpush1.bf16.xpose.msra.mxu0 %v3248
        %3252 = vmatprep.subr.bf16.mxu0 0
        %3253 = vmatpush1.bf16.xpose.msra.mxu0 0
        %3254 = vmatprep.subr.bf16.mxu0 0
        %3255 = vmatpush1.bf16.xpose.msra.mxu0 0
        %3256 = vmatprep.subr.bf16.mxu0 0
        %3257 = vmatpush1.bf16.xpose.msra.mxu0 0
        %3258 = vmatprep.subr.bf16.mxu0 0
        %3259 = vmatpush1.bf16.xpose.msra.mxu0 0
        %3260 = vmatprep.subr.bf16.mxu0 0
        %3261 = vmatpush1.bf16.xpose.msra.mxu0 0
        %3262 = vmatprep.subr.bf16.mxu0 0
        %3263 = vmatpush1.bf16.xpose.msra.mxu0 0
        %3264 = vmatprep.subr.bf16.mxu0 0
        %3265 = vmatpush1.bf16.xpose.msra.mxu0 0
        %3266 = vmatprep.subr.bf16.mxu0 0
        %3267 = vmatpush1.bf16.xpose.msra.mxu0 0
        %3268 = vmatprep.subr.bf16.mxu0 0
        %3269 = vmatpush1.bf16.xpose.msra.mxu0 0
        %3270 = vmatprep.subr.bf16.mxu0 0
        %3271 = vmatpush1.bf16.xpose.msra.mxu0 0
        %3272 = vmatprep.subr.bf16.mxu0 0
        %3273 = vmatpush1.bf16.xpose.msra.mxu0 0
        %3274 = vmatprep.subr.bf16.mxu0 0
        %3275 = vmatpush1.bf16.xpose.msra.mxu0 0
        %3276 = vmatprep.subr.bf16.mxu0 0
        %3277 = vmatpush1.bf16.xpose.msra.mxu0 0
        %3278 = vmatprep.subr.bf16.mxu0 0
        %3279 = vmatpush1.bf16.xpose.msra.mxu0 0
        %3280 = vmatprep.subr.bf16.mxu0 0
        %3281 = vmatpush1.bf16.xpose.msra.mxu0 0
        %3282 = vmatprep.mubr.bf16.mxu0 0
        %3283 = vmatmul.mubr.bf16.gmra.mrb[0].mxu0 %v3245
        %v3284 = vpop.f32.mrb[0].mxu0
        %v3285 = vadd.f32 %v3134, %v3284
        %v3286 = vpop.f32.mrb[0].mxu0
        %v3287 = vpop.f32.mrb[0].mxu0
        %v3288 = vpop.f32.mrb[0].mxu0
        %3289 = vdwg.mxu0
        %v3290 = vsel %vm1335, %v3285, -inf
        %3291 = vmax.xlane.f32.xlu0 %v3290
        %v3292 = vpop.xlane.xlu0 %3291
        %v3293 = vsub.f32 %v3285, %v3292
        %v3294 = vmul.f32 %v3293, 1.442695
        %v3295 = vpow.pop %v3294
        %v3296 = vsel %vm1335, %v3295, 0.0
        %3297 = vadd.xlane.f32.xlu0 %v3296
        %v3298 = vpop.xlane.xlu0 %3297
        %v3299 = vrcp.pop %v3298
        %v3300 = vmul.f32 %v3295, %v3299
        %v3301 = vpack.c.bf16 %v3300, %v3300
        %3302 = vrot.lane.b32.xlu0 %v3240, 64
        %v3303 = vpop.permute.xlu0 %3302
        %v3305 = vsel %vm1335, %v3301, 0
        %v3308 = vsel %vm1399, %v3303, 0
        %3310 = vmatprep.subr.bf16.mxu0 0
        %3311 = vmatpush1.bf16.msra.mxu0 %v3308
        %3312 = vmatprep.subr.bf16.mxu0 0
        %3313 = vmatpush1.bf16.msra.mxu0 0
        %3314 = vmatprep.subr.bf16.mxu0 0
        %3315 = vmatpush1.bf16.msra.mxu0 0
        %3316 = vmatprep.subr.bf16.mxu0 0
        %3317 = vmatpush1.bf16.msra.mxu0 0
        %3318 = vmatprep.subr.bf16.mxu0 0
        %3319 = vmatpush1.bf16.msra.mxu0 0
        %3320 = vmatprep.subr.bf16.mxu0 0
        %3321 = vmatpush1.bf16.msra.mxu0 0
        %3322 = vmatprep.subr.bf16.mxu0 0
        %3323 = vmatpush1.bf16.msra.mxu0 0
        %3324 = vmatprep.subr.bf16.mxu0 0
        %3325 = vmatpush1.bf16.msra.mxu0 0
        %3326 = vmatprep.subr.bf16.mxu0 0
        %3327 = vmatpush1.bf16.msra.mxu0 0
        %3328 = vmatprep.subr.bf16.mxu0 0
        %3329 = vmatpush1.bf16.msra.mxu0 0
        %3330 = vmatprep.subr.bf16.mxu0 0
        %3331 = vmatpush1.bf16.msra.mxu0 0
        %3332 = vmatprep.subr.bf16.mxu0 0
        %3333 = vmatpush1.bf16.msra.mxu0 0
        %3334 = vmatprep.subr.bf16.mxu0 0
        %3335 = vmatpush1.bf16.msra.mxu0 0
        %3336 = vmatprep.subr.bf16.mxu0 0
        %3337 = vmatpush1.bf16.msra.mxu0 0
        %3338 = vmatprep.subr.bf16.mxu0 0
        %3339 = vmatpush1.bf16.msra.mxu0 0
        %3340 = vmatprep.subr.bf16.mxu0 0
        %3341 = vmatpush1.bf16.msra.mxu0 0
        %3342 = vmatprep.mubr.bf16.mxu0 0
        %3343 = vmatmul.mubr.bf16.gmra.mrb[0].mxu0 %v3305
        %v3344 = vpop.f32.mrb[0].mxu0
        %v3345 = vadd.f32 0.0, %v3344
        %v3346 = vpop.f32.mrb[0].mxu0
        %v3347 = vpop.f32.mrb[0].mxu0
        %v3348 = vpop.f32.mrb[0].mxu0
        %3349 = vdwg.mxu0
        %v3350 = vpack.c.bf16 %v3345, %v3345
        %3351 = vrot.lane.b32.xlu0 %v3240, 120
        %v3352 = vpop.permute.xlu0 %3351
        %3353 = vrot.lane.b32.xlu0 %v3240, 88
        %v3354 = vpop.permute.xlu0 %3353
        %v3356 = vsel %vm1335, %v3352, 0
        %v3359 = vsel %vm1335, %v3354, 0
        %3361 = vmatprep.subr.bf16.mxu0 0
        %3362 = vmatpush1.bf16.xpose.msra.mxu0 %v3359
        %3363 = vmatprep.subr.bf16.mxu0 0
        %3364 = vmatpush1.bf16.xpose.msra.mxu0 0
        %3365 = vmatprep.subr.bf16.mxu0 0
        %3366 = vmatpush1.bf16.xpose.msra.mxu0 0
        %3367 = vmatprep.subr.bf16.mxu0 0
        %3368 = vmatpush1.bf16.xpose.msra.mxu0 0
        %3369 = vmatprep.subr.bf16.mxu0 0
        %3370 = vmatpush1.bf16.xpose.msra.mxu0 0
        %3371 = vmatprep.subr.bf16.mxu0 0
        %3372 = vmatpush1.bf16.xpose.msra.mxu0 0
        %3373 = vmatprep.subr.bf16.mxu0 0
        %3374 = vmatpush1.bf16.xpose.msra.mxu0 0
        %3375 = vmatprep.subr.bf16.mxu0 0
        %3376 = vmatpush1.bf16.xpose.msra.mxu0 0
        %3377 = vmatprep.subr.bf16.mxu0 0
        %3378 = vmatpush1.bf16.xpose.msra.mxu0 0
        %3379 = vmatprep.subr.bf16.mxu0 0
        %3380 = vmatpush1.bf16.xpose.msra.mxu0 0
        %3381 = vmatprep.subr.bf16.mxu0 0
        %3382 = vmatpush1.bf16.xpose.msra.mxu0 0
        %3383 = vmatprep.subr.bf16.mxu0 0
        %3384 = vmatpush1.bf16.xpose.msra.mxu0 0
        %3385 = vmatprep.subr.bf16.mxu0 0
        %3386 = vmatpush1.bf16.xpose.msra.mxu0 0
        %3387 = vmatprep.subr.bf16.mxu0 0
        %3388 = vmatpush1.bf16.xpose.msra.mxu0 0
        %3389 = vmatprep.subr.bf16.mxu0 0
        %3390 = vmatpush1.bf16.xpose.msra.mxu0 0
        %3391 = vmatprep.subr.bf16.mxu0 0
        %3392 = vmatpush1.bf16.xpose.msra.mxu0 0
        %3393 = vmatprep.mubr.bf16.mxu0 0
        %3394 = vmatmul.mubr.bf16.gmra.mrb[0].mxu0 %v3356
        %v3395 = vpop.f32.mrb[0].mxu0
        %v3396 = vadd.f32 %v3134, %v3395
        %v3397 = vpop.f32.mrb[0].mxu0
        %v3398 = vpop.f32.mrb[0].mxu0
        %v3399 = vpop.f32.mrb[0].mxu0
        %3400 = vdwg.mxu0
        %v3401 = vsel %vm1335, %v3396, -inf
        %3402 = vmax.xlane.f32.xlu0 %v3401
        %v3403 = vpop.xlane.xlu0 %3402
        %v3404 = vsub.f32 %v3396, %v3403
        %v3405 = vmul.f32 %v3404, 1.442695
        %v3406 = vpow.pop %v3405
        %v3407 = vsel %vm1335, %v3406, 0.0
        %3408 = vadd.xlane.f32.xlu0 %v3407
        %v3409 = vpop.xlane.xlu0 %3408
        %v3410 = vrcp.pop %v3409
        %v3411 = vmul.f32 %v3406, %v3410
        %v3412 = vpack.c.bf16 %v3411, %v3411
        %3413 = vrot.lane.b32.xlu0 %v3240, 56
        %v3414 = vpop.permute.xlu0 %3413
        %v3416 = vsel %vm1335, %v3412, 0
        %v3419 = vsel %vm1399, %v3414, 0
        %3421 = vmatprep.subr.bf16.mxu0 0
        %3422 = vmatpush1.bf16.msra.mxu0 %v3419
        %3423 = vmatprep.subr.bf16.mxu0 0
        %3424 = vmatpush1.bf16.msra.mxu0 0
        %3425 = vmatprep.subr.bf16.mxu0 0
        %3426 = vmatpush1.bf16.msra.mxu0 0
        %3427 = vmatprep.subr.bf16.mxu0 0
        %3428 = vmatpush1.bf16.msra.mxu0 0
        %3429 = vmatprep.subr.bf16.mxu0 0
        %3430 = vmatpush1.bf16.msra.mxu0 0
        %3431 = vmatprep.subr.bf16.mxu0 0
        %3432 = vmatpush1.bf16.msra.mxu0 0
        %3433 = vmatprep.subr.bf16.mxu0 0
        %3434 = vmatpush1.bf16.msra.mxu0 0
        %3435 = vmatprep.subr.bf16.mxu0 0
        %3436 = vmatpush1.bf16.msra.mxu0 0
        %3437 = vmatprep.subr.bf16.mxu0 0
        %3438 = vmatpush1.bf16.msra.mxu0 0
        %3439 = vmatprep.subr.bf16.mxu0 0
        %3440 = vmatpush1.bf16.msra.mxu0 0
        %3441 = vmatprep.subr.bf16.mxu0 0
        %3442 = vmatpush1.bf16.msra.mxu0 0
        %3443 = vmatprep.subr.bf16.mxu0 0
        %3444 = vmatpush1.bf16.msra.mxu0 0
        %3445 = vmatprep.subr.bf16.mxu0 0
        %3446 = vmatpush1.bf16.msra.mxu0 0
        %3447 = vmatprep.subr.bf16.mxu0 0
        %3448 = vmatpush1.bf16.msra.mxu0 0
        %3449 = vmatprep.subr.bf16.mxu0 0
        %3450 = vmatpush1.bf16.msra.mxu0 0
        %3451 = vmatprep.subr.bf16.mxu0 0
        %3452 = vmatpush1.bf16.msra.mxu0 0
        %3453 = vmatprep.mubr.bf16.mxu0 0
        %3454 = vmatmul.mubr.bf16.gmra.mrb[0].mxu0 %v3416
        %v3455 = vpop.f32.mrb[0].mxu0
        %v3456 = vadd.f32 0.0, %v3455
        %v3457 = vpop.f32.mrb[0].mxu0
        %v3458 = vpop.f32.mrb[0].mxu0
        %v3459 = vpop.f32.mrb[0].mxu0
        %3460 = vdwg.mxu0
        %v3461 = vpack.c.bf16 %v3456, %v3456
        %v3463 = vsel %vm1335, %v3461, 0
        %v3466 = vsel %vm1399, %v3172, 0
        %3468 = vmatprep.subr.bf16.mxu0 0
        %3469 = vmatpush1.bf16.msra.mxu0 %v3466
        %3470 = vmatprep.subr.bf16.mxu0 0
        %3471 = vmatpush1.bf16.msra.mxu0 0
        %3472 = vmatprep.subr.bf16.mxu0 0
        %3473 = vmatpush1.bf16.msra.mxu0 0
        %3474 = vmatprep.subr.bf16.mxu0 0
        %3475 = vmatpush1.bf16.msra.mxu0 0
        %3476 = vmatprep.subr.bf16.mxu0 0
        %3477 = vmatpush1.bf16.msra.mxu0 0
        %3478 = vmatprep.subr.bf16.mxu0 0
        %3479 = vmatpush1.bf16.msra.mxu0 0
        %3480 = vmatprep.subr.bf16.mxu0 0
        %3481 = vmatpush1.bf16.msra.mxu0 0
        %3482 = vmatprep.subr.bf16.mxu0 0
        %3483 = vmatpush1.bf16.msra.mxu0 0
        %3484 = vmatprep.subr.bf16.mxu0 0
        %3485 = vmatpush1.bf16.msra.mxu0 0
        %3486 = vmatprep.subr.bf16.mxu0 0
        %3487 = vmatpush1.bf16.msra.mxu0 0
        %3488 = vmatprep.subr.bf16.mxu0 0
        %3489 = vmatpush1.bf16.msra.mxu0 0
        %3490 = vmatprep.subr.bf16.mxu0 0
        %3491 = vmatpush1.bf16.msra.mxu0 0
        %3492 = vmatprep.subr.bf16.mxu0 0
        %3493 = vmatpush1.bf16.msra.mxu0 0
        %3494 = vmatprep.subr.bf16.mxu0 0
        %3495 = vmatpush1.bf16.msra.mxu0 0
        %3496 = vmatprep.subr.bf16.mxu0 0
        %3497 = vmatpush1.bf16.msra.mxu0 0
        %3498 = vmatprep.subr.bf16.mxu0 0
        %3499 = vmatpush1.bf16.msra.mxu0 0
        %3500 = vmatprep.mubr.bf16.mxu0 0
        %3501 = vmatmul.mubr.bf16.gmra.mrb[0].mxu0 %v3463
        %v3502 = vpop.f32.mrb[0].mxu0
        %v3503 = vadd.f32 0.0, %v3502
        %v3504 = vpop.f32.mrb[0].mxu0
        %v3505 = vpop.f32.mrb[0].mxu0
        %v3506 = vpop.f32.mrb[0].mxu0
        %3507 = vdwg.mxu0
        %v3509 = vsel %vm1335, %v3350, 0
        %v3512 = vsel %vm1399, %v3171, 0
        %3514 = vmatprep.subr.bf16.mxu0 0
        %3515 = vmatpush1.bf16.msra.mxu0 %v3512
        %3516 = vmatprep.subr.bf16.mxu0 0
        %3517 = vmatpush1.bf16.msra.mxu0 0
        %3518 = vmatprep.subr.bf16.mxu0 0
        %3519 = vmatpush1.bf16.msra.mxu0 0
        %3520 = vmatprep.subr.bf16.mxu0 0
        %3521 = vmatpush1.bf16.msra.mxu0 0
        %3522 = vmatprep.subr.bf16.mxu0 0
        %3523 = vmatpush1.bf16.msra.mxu0 0
        %3524 = vmatprep.subr.bf16.mxu0 0
        %3525 = vmatpush1.bf16.msra.mxu0 0
        %3526 = vmatprep.subr.bf16.mxu0 0
        %3527 = vmatpush1.bf16.msra.mxu0 0
        %3528 = vmatprep.subr.bf16.mxu0 0
        %3529 = vmatpush1.bf16.msra.mxu0 0
        %3530 = vmatprep.subr.bf16.mxu0 0
        %3531 = vmatpush1.bf16.msra.mxu0 0
        %3532 = vmatprep.subr.bf16.mxu0 0
        %3533 = vmatpush1.bf16.msra.mxu0 0
        %3534 = vmatprep.subr.bf16.mxu0 0
        %3535 = vmatpush1.bf16.msra.mxu0 0
        %3536 = vmatprep.subr.bf16.mxu0 0
        %3537 = vmatpush1.bf16.msra.mxu0 0
        %3538 = vmatprep.subr.bf16.mxu0 0
        %3539 = vmatpush1.bf16.msra.mxu0 0
        %3540 = vmatprep.subr.bf16.mxu0 0
        %3541 = vmatpush1.bf16.msra.mxu0 0
        %3542 = vmatprep.subr.bf16.mxu0 0
        %3543 = vmatpush1.bf16.msra.mxu0 0
        %3544 = vmatprep.subr.bf16.mxu0 0
        %3545 = vmatpush1.bf16.msra.mxu0 0
        %3546 = vmatprep.mubr.bf16.mxu0 0
        %3547 = vmatmul.mubr.bf16.gmra.mrb[0].mxu0 %v3509
        %v3548 = vpop.f32.mrb[0].mxu0
        %v3549 = vadd.f32 %v3503, %v3548
        %v3550 = vpop.f32.mrb[0].mxu0
        %v3551 = vpop.f32.mrb[0].mxu0
        %v3552 = vpop.f32.mrb[0].mxu0
        %3553 = vdwg.mxu0
        %3554 = vrot.lane.b32.xlu0 %v3240, 112
        %v3555 = vpop.permute.xlu0 %3554
        %3556 = vrot.lane.b32.xlu0 %v3240, 80
        %v3557 = vpop.permute.xlu0 %3556
        %v3559 = vsel %vm1335, %v3555, 0
        %v3562 = vsel %vm1335, %v3557, 0
        %3564 = vmatprep.subr.bf16.mxu0 0
        %3565 = vmatpush1.bf16.xpose.msra.mxu0 %v3562
        %3566 = vmatprep.subr.bf16.mxu0 0
        %3567 = vmatpush1.bf16.xpose.msra.mxu0 0
        %3568 = vmatprep.subr.bf16.mxu0 0
        %3569 = vmatpush1.bf16.xpose.msra.mxu0 0
        %3570 = vmatprep.subr.bf16.mxu0 0
        %3571 = vmatpush1.bf16.xpose.msra.mxu0 0
        %3572 = vmatprep.subr.bf16.mxu0 0
        %3573 = vmatpush1.bf16.xpose.msra.mxu0 0
        %3574 = vmatprep.subr.bf16.mxu0 0
        %3575 = vmatpush1.bf16.xpose.msra.mxu0 0
        %3576 = vmatprep.subr.bf16.mxu0 0
        %3577 = vmatpush1.bf16.xpose.msra.mxu0 0
        %3578 = vmatprep.subr.bf16.mxu0 0
        %3579 = vmatpush1.bf16.xpose.msra.mxu0 0
        %3580 = vmatprep.subr.bf16.mxu0 0
        %3581 = vmatpush1.bf16.xpose.msra.mxu0 0
        %3582 = vmatprep.subr.bf16.mxu0 0
        %3583 = vmatpush1.bf16.xpose.msra.mxu0 0
        %3584 = vmatprep.subr.bf16.mxu0 0
        %3585 = vmatpush1.bf16.xpose.msra.mxu0 0
        %3586 = vmatprep.subr.bf16.mxu0 0
        %3587 = vmatpush1.bf16.xpose.msra.mxu0 0
        %3588 = vmatprep.subr.bf16.mxu0 0
        %3589 = vmatpush1.bf16.xpose.msra.mxu0 0
        %3590 = vmatprep.subr.bf16.mxu0 0
        %3591 = vmatpush1.bf16.xpose.msra.mxu0 0
        %3592 = vmatprep.subr.bf16.mxu0 0
        %3593 = vmatpush1.bf16.xpose.msra.mxu0 0
        %3594 = vmatprep.subr.bf16.mxu0 0
        %3595 = vmatpush1.bf16.xpose.msra.mxu0 0
        %3596 = vmatprep.mubr.bf16.mxu0 0
        %3597 = vmatmul.mubr.bf16.gmra.mrb[0].mxu0 %v3559
        %v3598 = vpop.f32.mrb[0].mxu0
        %v3599 = vadd.f32 %v3134, %v3598
        %v3600 = vpop.f32.mrb[0].mxu0
        %v3601 = vpop.f32.mrb[0].mxu0
        %v3602 = vpop.f32.mrb[0].mxu0
        %3603 = vdwg.mxu0
        %v3604 = vsel %vm1335, %v3599, -inf
        %3605 = vmax.xlane.f32.xlu0 %v3604
        %v3606 = vpop.xlane.xlu0 %3605
        %v3607 = vsub.f32 %v3599, %v3606
        %v3608 = vmul.f32 %v3607, 1.442695
        %v3609 = vpow.pop %v3608
        %v3610 = vsel %vm1335, %v3609, 0.0
        %3611 = vadd.xlane.f32.xlu0 %v3610
        %v3612 = vpop.xlane.xlu0 %3611
        %v3613 = vrcp.pop %v3612
        %v3614 = vmul.f32 %v3609, %v3613
        %v3615 = vpack.c.bf16 %v3614, %v3614
        %3616 = vrot.lane.b32.xlu0 %v3240, 48
        %v3617 = vpop.permute.xlu0 %3616
        %v3619 = vsel %vm1335, %v3615, 0
        %v3622 = vsel %vm1399, %v3617, 0
        %3624 = vmatprep.subr.bf16.mxu0 0
        %3625 = vmatpush1.bf16.msra.mxu0 %v3622
        %3626 = vmatprep.subr.bf16.mxu0 0
        %3627 = vmatpush1.bf16.msra.mxu0 0
        %3628 = vmatprep.subr.bf16.mxu0 0
        %3629 = vmatpush1.bf16.msra.mxu0 0
        %3630 = vmatprep.subr.bf16.mxu0 0
        %3631 = vmatpush1.bf16.msra.mxu0 0
        %3632 = vmatprep.subr.bf16.mxu0 0
        %3633 = vmatpush1.bf16.msra.mxu0 0
        %3634 = vmatprep.subr.bf16.mxu0 0
        %3635 = vmatpush1.bf16.msra.mxu0 0
        %3636 = vmatprep.subr.bf16.mxu0 0
        %3637 = vmatpush1.bf16.msra.mxu0 0
        %3638 = vmatprep.subr.bf16.mxu0 0
        %3639 = vmatpush1.bf16.msra.mxu0 0
        %3640 = vmatprep.subr.bf16.mxu0 0
        %3641 = vmatpush1.bf16.msra.mxu0 0
        %3642 = vmatprep.subr.bf16.mxu0 0
        %3643 = vmatpush1.bf16.msra.mxu0 0
        %3644 = vmatprep.subr.bf16.mxu0 0
        %3645 = vmatpush1.bf16.msra.mxu0 0
        %3646 = vmatprep.subr.bf16.mxu0 0
        %3647 = vmatpush1.bf16.msra.mxu0 0
        %3648 = vmatprep.subr.bf16.mxu0 0
        %3649 = vmatpush1.bf16.msra.mxu0 0
        %3650 = vmatprep.subr.bf16.mxu0 0
        %3651 = vmatpush1.bf16.msra.mxu0 0
        %3652 = vmatprep.subr.bf16.mxu0 0
        %3653 = vmatpush1.bf16.msra.mxu0 0
        %3654 = vmatprep.subr.bf16.mxu0 0
        %3655 = vmatpush1.bf16.msra.mxu0 0
        %3656 = vmatprep.mubr.bf16.mxu0 0
        %3657 = vmatmul.mubr.bf16.gmra.mrb[0].mxu0 %v3619
        %v3658 = vpop.f32.mrb[0].mxu0
        %v3659 = vadd.f32 0.0, %v3658
        %v3660 = vpop.f32.mrb[0].mxu0
        %v3661 = vpop.f32.mrb[0].mxu0
        %v3662 = vpop.f32.mrb[0].mxu0
        %3663 = vdwg.mxu0
        %v3664 = vpack.c.bf16 %v3659, %v3659
        %v3666 = vsel %vm1335, %v3664, 0
        %v3669 = vsel %vm1399, %v3173, 0
        %3671 = vmatprep.subr.bf16.mxu0 0
        %3672 = vmatpush1.bf16.msra.mxu0 %v3669
        %3673 = vmatprep.subr.bf16.mxu0 0
        %3674 = vmatpush1.bf16.msra.mxu0 0
        %3675 = vmatprep.subr.bf16.mxu0 0
        %3676 = vmatpush1.bf16.msra.mxu0 0
        %3677 = vmatprep.subr.bf16.mxu0 0
        %3678 = vmatpush1.bf16.msra.mxu0 0
        %3679 = vmatprep.subr.bf16.mxu0 0
        %3680 = vmatpush1.bf16.msra.mxu0 0
        %3681 = vmatprep.subr.bf16.mxu0 0
        %3682 = vmatpush1.bf16.msra.mxu0 0
        %3683 = vmatprep.subr.bf16.mxu0 0
        %3684 = vmatpush1.bf16.msra.mxu0 0
        %3685 = vmatprep.subr.bf16.mxu0 0
        %3686 = vmatpush1.bf16.msra.mxu0 0
        %3687 = vmatprep.subr.bf16.mxu0 0
        %3688 = vmatpush1.bf16.msra.mxu0 0
        %3689 = vmatprep.subr.bf16.mxu0 0
        %3690 = vmatpush1.bf16.msra.mxu0 0
        %3691 = vmatprep.subr.bf16.mxu0 0
        %3692 = vmatpush1.bf16.msra.mxu0 0
        %3693 = vmatprep.subr.bf16.mxu0 0
        %3694 = vmatpush1.bf16.msra.mxu0 0
        %3695 = vmatprep.subr.bf16.mxu0 0
        %3696 = vmatpush1.bf16.msra.mxu0 0
        %3697 = vmatprep.subr.bf16.mxu0 0
        %3698 = vmatpush1.bf16.msra.mxu0 0
        %3699 = vmatprep.subr.bf16.mxu0 0
        %3700 = vmatpush1.bf16.msra.mxu0 0
        %3701 = vmatprep.subr.bf16.mxu0 0
        %3702 = vmatpush1.bf16.msra.mxu0 0
        %3703 = vmatprep.mubr.bf16.mxu0 0
        %3704 = vmatmul.mubr.bf16.gmra.mrb[0].mxu0 %v3666
        %v3705 = vpop.f32.mrb[0].mxu0
        %v3706 = vadd.f32 0.0, %v3705
        %v3707 = vpop.f32.mrb[0].mxu0
        %v3708 = vpop.f32.mrb[0].mxu0
        %v3709 = vpop.f32.mrb[0].mxu0
        %3710 = vdwg.mxu0
        %v3711 = vadd.f32 %v3549, %v3706
        %3712 = vrot.lane.b32.xlu0 %v3240, 104
        %v3713 = vpop.permute.xlu0 %3712
        %3714 = vrot.lane.b32.xlu0 %v3240, 72
        %v3715 = vpop.permute.xlu0 %3714
        %v3717 = vsel %vm1335, %v3713, 0
        %v3720 = vsel %vm1335, %v3715, 0
        %3722 = vmatprep.subr.bf16.mxu0 0
        %3723 = vmatpush1.bf16.xpose.msra.mxu0 %v3720
        %3724 = vmatprep.subr.bf16.mxu0 0
        %3725 = vmatpush1.bf16.xpose.msra.mxu0 0
        %3726 = vmatprep.subr.bf16.mxu0 0
        %3727 = vmatpush1.bf16.xpose.msra.mxu0 0
        %3728 = vmatprep.subr.bf16.mxu0 0
        %3729 = vmatpush1.bf16.xpose.msra.mxu0 0
        %3730 = vmatprep.subr.bf16.mxu0 0
        %3731 = vmatpush1.bf16.xpose.msra.mxu0 0
        %3732 = vmatprep.subr.bf16.mxu0 0
        %3733 = vmatpush1.bf16.xpose.msra.mxu0 0
        %3734 = vmatprep.subr.bf16.mxu0 0
        %3735 = vmatpush1.bf16.xpose.msra.mxu0 0
        %3736 = vmatprep.subr.bf16.mxu0 0
        %3737 = vmatpush1.bf16.xpose.msra.mxu0 0
        %3738 = vmatprep.subr.bf16.mxu0 0
        %3739 = vmatpush1.bf16.xpose.msra.mxu0 0
        %3740 = vmatprep.subr.bf16.mxu0 0
        %3741 = vmatpush1.bf16.xpose.msra.mxu0 0
        %3742 = vmatprep.subr.bf16.mxu0 0
        %3743 = vmatpush1.bf16.xpose.msra.mxu0 0
        %3744 = vmatprep.subr.bf16.mxu0 0
        %3745 = vmatpush1.bf16.xpose.msra.mxu0 0
        %3746 = vmatprep.subr.bf16.mxu0 0
        %3747 = vmatpush1.bf16.xpose.msra.mxu0 0
        %3748 = vmatprep.subr.bf16.mxu0 0
        %3749 = vmatpush1.bf16.xpose.msra.mxu0 0
        %3750 = vmatprep.subr.bf16.mxu0 0
        %3751 = vmatpush1.bf16.xpose.msra.mxu0 0
        %3752 = vmatprep.subr.bf16.mxu0 0
        %3753 = vmatpush1.bf16.xpose.msra.mxu0 0
        %3754 = vmatprep.mubr.bf16.mxu0 0
        %3755 = vmatmul.mubr.bf16.gmra.mrb[0].mxu0 %v3717
        %v3756 = vpop.f32.mrb[0].mxu0
        %v3757 = vadd.f32 %v3134, %v3756
        %v3758 = vpop.f32.mrb[0].mxu0
        %v3759 = vpop.f32.mrb[0].mxu0
        %v3760 = vpop.f32.mrb[0].mxu0
        %3761 = vdwg.mxu0
        %v3762 = vsel %vm1335, %v3757, -inf
        %3763 = vmax.xlane.f32.xlu0 %v3762
        %v3764 = vpop.xlane.xlu0 %3763
        %v3765 = vsub.f32 %v3757, %v3764
        %v3766 = vmul.f32 %v3765, 1.442695
        %v3767 = vpow.pop %v3766
        %v3768 = vsel %vm1335, %v3767, 0.0
        %3769 = vadd.xlane.f32.xlu0 %v3768
        %v3770 = vpop.xlane.xlu0 %3769
        %v3771 = vrcp.pop %v3770
        %v3772 = vmul.f32 %v3767, %v3771
        %v3773 = vpack.c.bf16 %v3772, %v3772
        %3774 = vrot.lane.b32.xlu0 %v3240, 40
        %v3775 = vpop.permute.xlu0 %3774
        %v3777 = vsel %vm1335, %v3773, 0
        %v3780 = vsel %vm1399, %v3775, 0
        %3782 = vmatprep.subr.bf16.mxu0 0
        %3783 = vmatpush1.bf16.msra.mxu0 %v3780
        %3784 = vmatprep.subr.bf16.mxu0 0
        %3785 = vmatpush1.bf16.msra.mxu0 0
        %3786 = vmatprep.subr.bf16.mxu0 0
        %3787 = vmatpush1.bf16.msra.mxu0 0
        %3788 = vmatprep.subr.bf16.mxu0 0
        %3789 = vmatpush1.bf16.msra.mxu0 0
        %3790 = vmatprep.subr.bf16.mxu0 0
        %3791 = vmatpush1.bf16.msra.mxu0 0
        %3792 = vmatprep.subr.bf16.mxu0 0
        %3793 = vmatpush1.bf16.msra.mxu0 0
        %3794 = vmatprep.subr.bf16.mxu0 0
        %3795 = vmatpush1.bf16.msra.mxu0 0
        %3796 = vmatprep.subr.bf16.mxu0 0
        %3797 = vmatpush1.bf16.msra.mxu0 0
        %3798 = vmatprep.subr.bf16.mxu0 0
        %3799 = vmatpush1.bf16.msra.mxu0 0
        %3800 = vmatprep.subr.bf16.mxu0 0
        %3801 = vmatpush1.bf16.msra.mxu0 0
        %3802 = vmatprep.subr.bf16.mxu0 0
        %3803 = vmatpush1.bf16.msra.mxu0 0
        %3804 = vmatprep.subr.bf16.mxu0 0
        %3805 = vmatpush1.bf16.msra.mxu0 0
        %3806 = vmatprep.subr.bf16.mxu0 0
        %3807 = vmatpush1.bf16.msra.mxu0 0
        %3808 = vmatprep.subr.bf16.mxu0 0
        %3809 = vmatpush1.bf16.msra.mxu0 0
        %3810 = vmatprep.subr.bf16.mxu0 0
        %3811 = vmatpush1.bf16.msra.mxu0 0
        %3812 = vmatprep.subr.bf16.mxu0 0
        %3813 = vmatpush1.bf16.msra.mxu0 0
        %3814 = vmatprep.mubr.bf16.mxu0 0
        %3815 = vmatmul.mubr.bf16.gmra.mrb[0].mxu0 %v3777
        %v3816 = vpop.f32.mrb[0].mxu0
        %v3817 = vadd.f32 0.0, %v3816
        %v3818 = vpop.f32.mrb[0].mxu0
        %v3819 = vpop.f32.mrb[0].mxu0
        %v3820 = vpop.f32.mrb[0].mxu0
        %3821 = vdwg.mxu0
        %v3822 = vpack.c.bf16 %v3817, %v3817
        %v3824 = vsel %vm1335, %v3822, 0
        %v3827 = vsel %vm1399, %v3174, 0
        %3829 = vmatprep.subr.bf16.mxu0 0
        %3830 = vmatpush1.bf16.msra.mxu0 %v3827
        %3831 = vmatprep.subr.bf16.mxu0 0
        %3832 = vmatpush1.bf16.msra.mxu0 0
        %3833 = vmatprep.subr.bf16.mxu0 0
        %3834 = vmatpush1.bf16.msra.mxu0 0
        %3835 = vmatprep.subr.bf16.mxu0 0
        %3836 = vmatpush1.bf16.msra.mxu0 0
        %3837 = vmatprep.subr.bf16.mxu0 0
        %3838 = vmatpush1.bf16.msra.mxu0 0
        %3839 = vmatprep.subr.bf16.mxu0 0
        %3840 = vmatpush1.bf16.msra.mxu0 0
        %3841 = vmatprep.subr.bf16.mxu0 0
        %3842 = vmatpush1.bf16.msra.mxu0 0
        %3843 = vmatprep.subr.bf16.mxu0 0
        %3844 = vmatpush1.bf16.msra.mxu0 0
        %3845 = vmatprep.subr.bf16.mxu0 0
        %3846 = vmatpush1.bf16.msra.mxu0 0
        %3847 = vmatprep.subr.bf16.mxu0 0
        %3848 = vmatpush1.bf16.msra.mxu0 0
        %3849 = vmatprep.subr.bf16.mxu0 0
        %3850 = vmatpush1.bf16.msra.mxu0 0
        %3851 = vmatprep.subr.bf16.mxu0 0
        %3852 = vmatpush1.bf16.msra.mxu0 0
        %3853 = vmatprep.subr.bf16.mxu0 0
        %3854 = vmatpush1.bf16.msra.mxu0 0
        %3855 = vmatprep.subr.bf16.mxu0 0
        %3856 = vmatpush1.bf16.msra.mxu0 0
        %3857 = vmatprep.subr.bf16.mxu0 0
        %3858 = vmatpush1.bf16.msra.mxu0 0
        %3859 = vmatprep.subr.bf16.mxu0 0
        %3860 = vmatpush1.bf16.msra.mxu0 0
        %3861 = vmatprep.mubr.bf16.mxu0 0
        %3862 = vmatmul.mubr.bf16.gmra.mrb[0].mxu0 %v3824
        %v3863 = vpop.f32.mrb[0].mxu0
        %v3864 = vadd.f32 0.0, %v3863
        %v3865 = vpop.f32.mrb[0].mxu0
        %v3866 = vpop.f32.mrb[0].mxu0
        %v3867 = vpop.f32.mrb[0].mxu0
        %3868 = vdwg.mxu0
        %v3869 = vadd.f32 %v3711, %v3864
        %v3871 = vlaneseq
        %v3872 = vshrl.u32 %v3871, 7
        %v3873 = vsub.s32 0, %v3872
        %v3874 = vrot.slane %v3175, %v3873
        %v3876 = vadd.f32 %v3869, %v3874
        %v3877 = vadd.f32 %v3876, %v3165
        %v3878 = vsel %vm1228, %v3877, 0.0
        %3879 = vadd.xlane.f32.xlu0 %v3878
        %v3880 = vpop.xlane.xlu0 %3879
        %v3881 = vmul.f32 %v3880, %v1232
        %v3882 = vsub.f32 %v3877, %v3881
        %v3883 = vmul.f32 %v3882, %v3882
        %v3884 = vsel %vm1228, %v3883, 0.0
        %3885 = vadd.xlane.f32.xlu0 %v3884
        %v3886 = vpop.xlane.xlu0 %3885
        %v3887 = vmul.f32 %v3886, %v1232
        %v3888 = vadd.f32 %v3887, 1e-05
        %v3889 = vrsqrt.pop %v3888
        %v3890 = vmul.f32 %v3882, %v3889
        %v3892 = vlaneseq
        %v3893 = vshrl.u32 %v3892, 7
        %v3894 = vsub.s32 0, %v3893
        %v3895 = vrot.slane %v3176, %v3894
        %v3897 = vmul.f32 %v3890, %v3895
        %v3899 = vlaneseq
        %v3900 = vshrl.u32 %v3899, 7
        %v3901 = vsub.s32 0, %v3900
        %v3902 = vrot.slane %v3177, %v3901
        %v3904 = vadd.f32 %v3897, %v3902
        %v3905 = vld [vmem:[%s49] sm:$0xf]
        %v3906 = vld [vmem:[%s49 + $0x4] sm:$0xf]
        %v3907 = vld [vmem:[%s49 + $0x8] sm:$0xf]
        %v3908 = vld [vmem:[%s49 + $0xc] sm:$0xf]
        %v3909 = vld [vmem:[%s51] sm:$0x1]
        %v3910 = vld [vmem:[%s53] sm:$0xf]
        %v3911 = vld [vmem:[%s53 + $0x4] sm:$0xf]
        %v3912 = vld [vmem:[%s53 + $0x8] sm:$0xf]
        %v3913 = vld [vmem:[%s53 + $0xc] sm:$0xf]
        %v3914 = vld [vmem:[%s55] sm:$0x1]
        %v3915 = vld [vmem:[%s57] sm:$0xf]
        %v3916 = vld [vmem:[%s57 + $0x4] sm:$0xf]
        %v3917 = vld [vmem:[%s57 + $0x8] sm:$0xf]
        %v3918 = vld [vmem:[%s57 + $0xc] sm:$0xf]
        %v3919 = vld [vmem:[%s59] sm:$0x1]
        %v3920 = vld [vmem:[%s61] sm:$0x1]
        %v3921 = vld [vmem:[%s63] sm:$0x1]
        %v3922 = vpack.c.bf16 %v3904, %v3904
        %v3924 = vlaneseq
        %v3925 = vshrl.u32 %v3924, 7
        %v3926 = vsub.s32 0, %v3925
        %v3927 = vrot.slane %v3909, %v3926
        %v3933 = vunpack.c.l.b16 %v3905
        %v3934 = vunpack.c.l.b16 %v3906
        %v3935 = vunpack.c.l.b16 %v3907
        %v3936 = vunpack.c.l.b16 %v3908
        %v3937 = vpack.c.b16 %v3934, %v3933
        %v3938 = vpack.c.b16 %v3936, %v3935
        %v3942 = vsel %vm1228, %v3922, 0
        %3944 = vmatprep.subr.bf16.mxu0 0
        %3945 = vmatpush1.bf16.msra.mxu0 %v3937
        %3946 = vmatprep.subr.bf16.mxu0 0
        %3947 = vmatpush1.bf16.msra.mxu0 %v3938
        %3948 = vmatprep.subr.bf16.mxu0 0
        %3949 = vmatpush1.bf16.msra.mxu0 0
        %3950 = vmatprep.subr.bf16.mxu0 0
        %3951 = vmatpush1.bf16.msra.mxu0 0
        %3952 = vmatprep.subr.bf16.mxu0 0
        %3953 = vmatpush1.bf16.msra.mxu0 0
        %3954 = vmatprep.subr.bf16.mxu0 0
        %3955 = vmatpush1.bf16.msra.mxu0 0
        %3956 = vmatprep.subr.bf16.mxu0 0
        %3957 = vmatpush1.bf16.msra.mxu0 0
        %3958 = vmatprep.subr.bf16.mxu0 0
        %3959 = vmatpush1.bf16.msra.mxu0 0
        %3960 = vmatprep.subr.bf16.mxu0 0
        %3961 = vmatpush1.bf16.msra.mxu0 0
        %3962 = vmatprep.subr.bf16.mxu0 0
        %3963 = vmatpush1.bf16.msra.mxu0 0
        %3964 = vmatprep.subr.bf16.mxu0 0
        %3965 = vmatpush1.bf16.msra.mxu0 0
        %3966 = vmatprep.subr.bf16.mxu0 0
        %3967 = vmatpush1.bf16.msra.mxu0 0
        %3968 = vmatprep.subr.bf16.mxu0 0
        %3969 = vmatpush1.bf16.msra.mxu0 0
        %3970 = vmatprep.subr.bf16.mxu0 0
        %3971 = vmatpush1.bf16.msra.mxu0 0
        %3972 = vmatprep.subr.bf16.mxu0 0
        %3973 = vmatpush1.bf16.msra.mxu0 0
        %3974 = vmatprep.subr.bf16.mxu0 0
        %3975 = vmatpush1.bf16.msra.mxu0 0
        %3976 = vmatprep.mubr.bf16.mxu0 0
        %3977 = vmatmul.mubr.bf16.gmra.mrb[0].mxu0 %v3942
        %v3978 = vpop.f32.mrb[0].mxu0
        %v3979 = vadd.f32 %v3927, %v3978
        %v3980 = vpop.f32.mrb[0].mxu0
        %v3981 = vpop.f32.mrb[0].mxu0
        %v3982 = vpop.f32.mrb[0].mxu0
        %3983 = vdwg.mxu0
        %v3985 = vlaneseq
        %v3986 = vshrl.u32 %v3985, 7
        %v3987 = vsub.s32 0, %v3986
        %v3988 = vrot.slane %v3914, %v3987
        %v3994 = vunpack.c.l.b16 %v3910
        %v3995 = vunpack.c.l.b16 %v3911
        %v3996 = vunpack.c.l.b16 %v3912
        %v3997 = vunpack.c.l.b16 %v3913
        %v3998 = vpack.c.b16 %v3995, %v3994
        %v3999 = vpack.c.b16 %v3997, %v3996
        %v4003 = vsel %vm1228, %v3128, 0
        %4005 = vmatprep.subr.bf16.mxu0 0
        %4006 = vmatpush1.bf16.msra.mxu0 %v3998
        %4007 = vmatprep.subr.bf16.mxu0 0
        %4008 = vmatpush1.bf16.msra.mxu0 %v3999
        %4009 = vmatprep.subr.bf16.mxu0 0
        %4010 = vmatpush1.bf16.msra.mxu0 0
        %4011 = vmatprep.subr.bf16.mxu0 0
        %4012 = vmatpush1.bf16.msra.mxu0 0
        %4013 = vmatprep.subr.bf16.mxu0 0
        %4014 = vmatpush1.bf16.msra.mxu0 0
        %4015 = vmatprep.subr.bf16.mxu0 0
        %4016 = vmatpush1.bf16.msra.mxu0 0
        %4017 = vmatprep.subr.bf16.mxu0 0
        %4018 = vmatpush1.bf16.msra.mxu0 0
        %4019 = vmatprep.subr.bf16.mxu0 0
        %4020 = vmatpush1.bf16.msra.mxu0 0
        %4021 = vmatprep.subr.bf16.mxu0 0
        %4022 = vmatpush1.bf16.msra.mxu0 0
        %4023 = vmatprep.subr.bf16.mxu0 0
        %4024 = vmatpush1.bf16.msra.mxu0 0
        %4025 = vmatprep.subr.bf16.mxu0 0
        %4026 = vmatpush1.bf16.msra.mxu0 0
        %4027 = vmatprep.subr.bf16.mxu0 0
        %4028 = vmatpush1.bf16.msra.mxu0 0
        %4029 = vmatprep.subr.bf16.mxu0 0
        %4030 = vmatpush1.bf16.msra.mxu0 0
        %4031 = vmatprep.subr.bf16.mxu0 0
        %4032 = vmatpush1.bf16.msra.mxu0 0
        %4033 = vmatprep.subr.bf16.mxu0 0
        %4034 = vmatpush1.bf16.msra.mxu0 0
        %4035 = vmatprep.subr.bf16.mxu0 0
        %4036 = vmatpush1.bf16.msra.mxu0 0
        %4037 = vmatprep.mubr.bf16.mxu0 0
        %4038 = vmatmul.mubr.bf16.gmra.mrb[0].mxu0 %v4003
        %v4039 = vpop.f32.mrb[0].mxu0
        %v4040 = vadd.f32 %v3988, %v4039
        %v4041 = vpop.f32.mrb[0].mxu0
        %v4042 = vpop.f32.mrb[0].mxu0
        %v4043 = vpop.f32.mrb[0].mxu0
        %4044 = vdwg.mxu0
        %v4045 = vpack.c.bf16 %v3979, %v3979
        %v4046 = vpack.c.bf16 %v4040, %v4040
        %v4048 = vsel %vm1335, %v4045, 0
        %v4051 = vsel %vm1335, %v4046, 0
        %4053 = vmatprep.subr.bf16.mxu0 0
        %4054 = vmatpush1.bf16.xpose.msra.mxu0 %v4051
        %4055 = vmatprep.subr.bf16.mxu0 0
        %4056 = vmatpush1.bf16.xpose.msra.mxu0 0
        %4057 = vmatprep.subr.bf16.mxu0 0
        %4058 = vmatpush1.bf16.xpose.msra.mxu0 0
        %4059 = vmatprep.subr.bf16.mxu0 0
        %4060 = vmatpush1.bf16.xpose.msra.mxu0 0
        %4061 = vmatprep.subr.bf16.mxu0 0
        %4062 = vmatpush1.bf16.xpose.msra.mxu0 0
        %4063 = vmatprep.subr.bf16.mxu0 0
        %4064 = vmatpush1.bf16.xpose.msra.mxu0 0
        %4065 = vmatprep.subr.bf16.mxu0 0
        %4066 = vmatpush1.bf16.xpose.msra.mxu0 0
        %4067 = vmatprep.subr.bf16.mxu0 0
        %4068 = vmatpush1.bf16.xpose.msra.mxu0 0
        %4069 = vmatprep.subr.bf16.mxu0 0
        %4070 = vmatpush1.bf16.xpose.msra.mxu0 0
        %4071 = vmatprep.subr.bf16.mxu0 0
        %4072 = vmatpush1.bf16.xpose.msra.mxu0 0
        %4073 = vmatprep.subr.bf16.mxu0 0
        %4074 = vmatpush1.bf16.xpose.msra.mxu0 0
        %4075 = vmatprep.subr.bf16.mxu0 0
        %4076 = vmatpush1.bf16.xpose.msra.mxu0 0
        %4077 = vmatprep.subr.bf16.mxu0 0
        %4078 = vmatpush1.bf16.xpose.msra.mxu0 0
        %4079 = vmatprep.subr.bf16.mxu0 0
        %4080 = vmatpush1.bf16.xpose.msra.mxu0 0
        %4081 = vmatprep.subr.bf16.mxu0 0
        %4082 = vmatpush1.bf16.xpose.msra.mxu0 0
        %4083 = vmatprep.subr.bf16.mxu0 0
        %4084 = vmatpush1.bf16.xpose.msra.mxu0 0
        %4085 = vmatprep.mubr.bf16.mxu0 0
        %4086 = vmatmul.mubr.bf16.gmra.mrb[0].mxu0 %v4048
        %v4087 = vpop.f32.mrb[0].mxu0
        %v4088 = vadd.f32 0.0, %v4087
        %v4089 = vpop.f32.mrb[0].mxu0
        %v4090 = vpop.f32.mrb[0].mxu0
        %v4091 = vpop.f32.mrb[0].mxu0
        %4092 = vdwg.mxu0
        %v4093 = vsel %vm1335, %v4088, -inf
        %4094 = vmax.xlane.f32.xlu0 %v4093
        %v4095 = vpop.xlane.xlu0 %4094
        %v4096 = vsub.f32 %v4088, %v4095
        %v4097 = vmul.f32 %v4096, 1.442695
        %v4098 = vpow.pop %v4097
        %v4099 = vsel %vm1335, %v4098, 0.0
        %4100 = vadd.xlane.f32.xlu0 %v4099
        %v4101 = vpop.xlane.xlu0 %4100
        %v4102 = vrcp.pop %v4101
        %v4103 = vmul.f32 %v4098, %v4102
        %v4104 = vpack.c.bf16 %v4103, %v4103
        %4106 = vrot.lane.b32.xlu0 %v4046, 96
        %v4107 = vpop.permute.xlu0 %4106
        %v4109 = vsel %vm1335, %v4104, 0
        %v4112 = vsel %vm1399, %v4107, 0
        %4114 = vmatprep.subr.bf16.mxu0 0
        %4115 = vmatpush1.bf16.msra.mxu0 %v4112
        %4116 = vmatprep.subr.bf16.mxu0 0
        %4117 = vmatpush1.bf16.msra.mxu0 0
        %4118 = vmatprep.subr.bf16.mxu0 0
        %4119 = vmatpush1.bf16.msra.mxu0 0
        %4120 = vmatprep.subr.bf16.mxu0 0
        %4121 = vmatpush1.bf16.msra.mxu0 0
        %4122 = vmatprep.subr.bf16.mxu0 0
        %4123 = vmatpush1.bf16.msra.mxu0 0
        %4124 = vmatprep.subr.bf16.mxu0 0
        %4125 = vmatpush1.bf16.msra.mxu0 0
        %4126 = vmatprep.subr.bf16.mxu0 0
        %4127 = vmatpush1.bf16.msra.mxu0 0
        %4128 = vmatprep.subr.bf16.mxu0 0
        %4129 = vmatpush1.bf16.msra.mxu0 0
        %4130 = vmatprep.subr.bf16.mxu0 0
        %4131 = vmatpush1.bf16.msra.mxu0 0
        %4132 = vmatprep.subr.bf16.mxu0 0
        %4133 = vmatpush1.bf16.msra.mxu0 0
        %4134 = vmatprep.subr.bf16.mxu0 0
        %4135 = vmatpush1.bf16.msra.mxu0 0
        %4136 = vmatprep.subr.bf16.mxu0 0
        %4137 = vmatpush1.bf16.msra.mxu0 0
        %4138 = vmatprep.subr.bf16.mxu0 0
        %4139 = vmatpush1.bf16.msra.mxu0 0
        %4140 = vmatprep.subr.bf16.mxu0 0
        %4141 = vmatpush1.bf16.msra.mxu0 0
        %4142 = vmatprep.subr.bf16.mxu0 0
        %4143 = vmatpush1.bf16.msra.mxu0 0
        %4144 = vmatprep.subr.bf16.mxu0 0
        %4145 = vmatpush1.bf16.msra.mxu0 0
        %4146 = vmatprep.mubr.bf16.mxu0 0
        %4147 = vmatmul.mubr.bf16.gmra.mrb[0].mxu0 %v4109
        %v4148 = vpop.f32.mrb[0].mxu0
        %v4149 = vadd.f32 0.0, %v4148
        %v4150 = vpop.f32.mrb[0].mxu0
        %v4151 = vpop.f32.mrb[0].mxu0
        %v4152 = vpop.f32.mrb[0].mxu0
        %4153 = vdwg.mxu0
        %v4154 = vpack.c.bf16 %v4149, %v4149
        %4156 = vrot.lane.b32.xlu0 %v4045, 120
        %v4157 = vpop.permute.xlu0 %4156
        %4158 = vrot.lane.b32.xlu0 %v4046, 120
        %v4159 = vpop.permute.xlu0 %4158
        %v4161 = vsel %vm1335, %v4157, 0
        %v4164 = vsel %vm1335, %v4159, 0
        %4166 = vmatprep.subr.bf16.mxu0 0
        %4167 = vmatpush1.bf16.xpose.msra.mxu0 %v4164
        %4168 = vmatprep.subr.bf16.mxu0 0
        %4169 = vmatpush1.bf16.xpose.msra.mxu0 0
        %4170 = vmatprep.subr.bf16.mxu0 0
        %4171 = vmatpush1.bf16.xpose.msra.mxu0 0
        %4172 = vmatprep.subr.bf16.mxu0 0
        %4173 = vmatpush1.bf16.xpose.msra.mxu0 0
        %4174 = vmatprep.subr.bf16.mxu0 0
        %4175 = vmatpush1.bf16.xpose.msra.mxu0 0
        %4176 = vmatprep.subr.bf16.mxu0 0
        %4177 = vmatpush1.bf16.xpose.msra.mxu0 0
        %4178 = vmatprep.subr.bf16.mxu0 0
        %4179 = vmatpush1.bf16.xpose.msra.mxu0 0
        %4180 = vmatprep.subr.bf16.mxu0 0
        %4181 = vmatpush1.bf16.xpose.msra.mxu0 0
        %4182 = vmatprep.subr.bf16.mxu0 0
        %4183 = vmatpush1.bf16.xpose.msra.mxu0 0
        %4184 = vmatprep.subr.bf16.mxu0 0
        %4185 = vmatpush1.bf16.xpose.msra.mxu0 0
        %4186 = vmatprep.subr.bf16.mxu0 0
        %4187 = vmatpush1.bf16.xpose.msra.mxu0 0
        %4188 = vmatprep.subr.bf16.mxu0 0
        %4189 = vmatpush1.bf16.xpose.msra.mxu0 0
        %4190 = vmatprep.subr.bf16.mxu0 0
        %4191 = vmatpush1.bf16.xpose.msra.mxu0 0
        %4192 = vmatprep.subr.bf16.mxu0 0
        %4193 = vmatpush1.bf16.xpose.msra.mxu0 0
        %4194 = vmatprep.subr.bf16.mxu0 0
        %4195 = vmatpush1.bf16.xpose.msra.mxu0 0
        %4196 = vmatprep.subr.bf16.mxu0 0
        %4197 = vmatpush1.bf16.xpose.msra.mxu0 0
        %4198 = vmatprep.mubr.bf16.mxu0 0
        %4199 = vmatmul.mubr.bf16.gmra.mrb[0].mxu0 %v4161
        %v4200 = vpop.f32.mrb[0].mxu0
        %v4201 = vadd.f32 0.0, %v4200
        %v4202 = vpop.f32.mrb[0].mxu0
        %v4203 = vpop.f32.mrb[0].mxu0
        %v4204 = vpop.f32.mrb[0].mxu0
        %4205 = vdwg.mxu0
        %v4206 = vsel %vm1335, %v4201, -inf
        %4207 = vmax.xlane.f32.xlu0 %v4206
        %v4208 = vpop.xlane.xlu0 %4207
        %v4209 = vsub.f32 %v4201, %v4208
        %v4210 = vmul.f32 %v4209, 1.442695
        %v4211 = vpow.pop %v4210
        %v4212 = vsel %vm1335, %v4211, 0.0
        %4213 = vadd.xlane.f32.xlu0 %v4212
        %v4214 = vpop.xlane.xlu0 %4213
        %v4215 = vrcp.pop %v4214
        %v4216 = vmul.f32 %v4211, %v4215
        %v4217 = vpack.c.bf16 %v4216, %v4216
        %4218 = vrot.lane.b32.xlu0 %v4046, 88
        %v4219 = vpop.permute.xlu0 %4218
        %v4221 = vsel %vm1335, %v4217, 0
        %v4224 = vsel %vm1399, %v4219, 0
        %4226 = vmatprep.subr.bf16.mxu0 0
        %4227 = vmatpush1.bf16.msra.mxu0 %v4224
        %4228 = vmatprep.subr.bf16.mxu0 0
        %4229 = vmatpush1.bf16.msra.mxu0 0
        %4230 = vmatprep.subr.bf16.mxu0 0
        %4231 = vmatpush1.bf16.msra.mxu0 0
        %4232 = vmatprep.subr.bf16.mxu0 0
        %4233 = vmatpush1.bf16.msra.mxu0 0
        %4234 = vmatprep.subr.bf16.mxu0 0
        %4235 = vmatpush1.bf16.msra.mxu0 0
        %4236 = vmatprep.subr.bf16.mxu0 0
        %4237 = vmatpush1.bf16.msra.mxu0 0
        %4238 = vmatprep.subr.bf16.mxu0 0
        %4239 = vmatpush1.bf16.msra.mxu0 0
        %4240 = vmatprep.subr.bf16.mxu0 0
        %4241 = vmatpush1.bf16.msra.mxu0 0
        %4242 = vmatprep.subr.bf16.mxu0 0
        %4243 = vmatpush1.bf16.msra.mxu0 0
        %4244 = vmatprep.subr.bf16.mxu0 0
        %4245 = vmatpush1.bf16.msra.mxu0 0
        %4246 = vmatprep.subr.bf16.mxu0 0
        %4247 = vmatpush1.bf16.msra.mxu0 0
        %4248 = vmatprep.subr.bf16.mxu0 0
        %4249 = vmatpush1.bf16.msra.mxu0 0
        %4250 = vmatprep.subr.bf16.mxu0 0
        %4251 = vmatpush1.bf16.msra.mxu0 0
        %4252 = vmatprep.subr.bf16.mxu0 0
        %4253 = vmatpush1.bf16.msra.mxu0 0
        %4254 = vmatprep.subr.bf16.mxu0 0
        %4255 = vmatpush1.bf16.msra.mxu0 0
        %4256 = vmatprep.subr.bf16.mxu0 0
        %4257 = vmatpush1.bf16.msra.mxu0 0
        %4258 = vmatprep.mubr.bf16.mxu0 0
        %4259 = vmatmul.mubr.bf16.gmra.mrb[0].mxu0 %v4221
        %v4260 = vpop.f32.mrb[0].mxu0
        %v4261 = vadd.f32 0.0, %v4260
        %v4262 = vpop.f32.mrb[0].mxu0
        %v4263 = vpop.f32.mrb[0].mxu0
        %v4264 = vpop.f32.mrb[0].mxu0
        %4265 = vdwg.mxu0
        %v4266 = vpack.c.bf16 %v4261, %v4261
        %v4268 = vsel %vm1335, %v4266, 0
        %v4271 = vsel %vm1399, %v3916, 0
        %4273 = vmatprep.subr.bf16.mxu0 0
        %4274 = vmatpush1.bf16.msra.mxu0 %v4271
        %4275 = vmatprep.subr.bf16.mxu0 0
        %4276 = vmatpush1.bf16.msra.mxu0 0
        %4277 = vmatprep.subr.bf16.mxu0 0
        %4278 = vmatpush1.bf16.msra.mxu0 0
        %4279 = vmatprep.subr.bf16.mxu0 0
        %4280 = vmatpush1.bf16.msra.mxu0 0
        %4281 = vmatprep.subr.bf16.mxu0 0
        %4282 = vmatpush1.bf16.msra.mxu0 0
        %4283 = vmatprep.subr.bf16.mxu0 0
        %4284 = vmatpush1.bf16.msra.mxu0 0
        %4285 = vmatprep.subr.bf16.mxu0 0
        %4286 = vmatpush1.bf16.msra.mxu0 0
        %4287 = vmatprep.subr.bf16.mxu0 0
        %4288 = vmatpush1.bf16.msra.mxu0 0
        %4289 = vmatprep.subr.bf16.mxu0 0
        %4290 = vmatpush1.bf16.msra.mxu0 0
        %4291 = vmatprep.subr.bf16.mxu0 0
        %4292 = vmatpush1.bf16.msra.mxu0 0
        %4293 = vmatprep.subr.bf16.mxu0 0
        %4294 = vmatpush1.bf16.msra.mxu0 0
        %4295 = vmatprep.subr.bf16.mxu0 0
        %4296 = vmatpush1.bf16.msra.mxu0 0
        %4297 = vmatprep.subr.bf16.mxu0 0
        %4298 = vmatpush1.bf16.msra.mxu0 0
        %4299 = vmatprep.subr.bf16.mxu0 0
        %4300 = vmatpush1.bf16.msra.mxu0 0
        %4301 = vmatprep.subr.bf16.mxu0 0
        %4302 = vmatpush1.bf16.msra.mxu0 0
        %4303 = vmatprep.subr.bf16.mxu0 0
        %4304 = vmatpush1.bf16.msra.mxu0 0
        %4305 = vmatprep.mubr.bf16.mxu0 0
        %4306 = vmatmul.mubr.bf16.gmra.mrb[0].mxu0 %v4268
        %v4307 = vpop.f32.mrb[0].mxu0
        %v4308 = vadd.f32 0.0, %v4307
        %v4309 = vpop.f32.mrb[0].mxu0
        %v4310 = vpop.f32.mrb[0].mxu0
        %v4311 = vpop.f32.mrb[0].mxu0
        %4312 = vdwg.mxu0
        %v4314 = vsel %vm1335, %v4154, 0
        %v4317 = vsel %vm1399, %v3915, 0
        %4319 = vmatprep.subr.bf16.mxu0 0
        %4320 = vmatpush1.bf16.msra.mxu0 %v4317
        %4321 = vmatprep.subr.bf16.mxu0 0
        %4322 = vmatpush1.bf16.msra.mxu0 0
        %4323 = vmatprep.subr.bf16.mxu0 0
        %4324 = vmatpush1.bf16.msra.mxu0 0
        %4325 = vmatprep.subr.bf16.mxu0 0
        %4326 = vmatpush1.bf16.msra.mxu0 0
        %4327 = vmatprep.subr.bf16.mxu0 0
        %4328 = vmatpush1.bf16.msra.mxu0 0
        %4329 = vmatprep.subr.bf16.mxu0 0
        %4330 = vmatpush1.bf16.msra.mxu0 0
        %4331 = vmatprep.subr.bf16.mxu0 0
        %4332 = vmatpush1.bf16.msra.mxu0 0
        %4333 = vmatprep.subr.bf16.mxu0 0
        %4334 = vmatpush1.bf16.msra.mxu0 0
        %4335 = vmatprep.subr.bf16.mxu0 0
        %4336 = vmatpush1.bf16.msra.mxu0 0
        %4337 = vmatprep.subr.bf16.mxu0 0
        %4338 = vmatpush1.bf16.msra.mxu0 0
        %4339 = vmatprep.subr.bf16.mxu0 0
        %4340 = vmatpush1.bf16.msra.mxu0 0
        %4341 = vmatprep.subr.bf16.mxu0 0
        %4342 = vmatpush1.bf16.msra.mxu0 0
        %4343 = vmatprep.subr.bf16.mxu0 0
        %4344 = vmatpush1.bf16.msra.mxu0 0
        %4345 = vmatprep.subr.bf16.mxu0 0
        %4346 = vmatpush1.bf16.msra.mxu0 0
        %4347 = vmatprep.subr.bf16.mxu0 0
        %4348 = vmatpush1.bf16.msra.mxu0 0
        %4349 = vmatprep.subr.bf16.mxu0 0
        %4350 = vmatpush1.bf16.msra.mxu0 0
        %4351 = vmatprep.mubr.bf16.mxu0 0
        %4352 = vmatmul.mubr.bf16.gmra.mrb[0].mxu0 %v4314
        %v4353 = vpop.f32.mrb[0].mxu0
        %v4354 = vadd.f32 %v4308, %v4353
        %v4355 = vpop.f32.mrb[0].mxu0
        %v4356 = vpop.f32.mrb[0].mxu0
        %v4357 = vpop.f32.mrb[0].mxu0
        %4358 = vdwg.mxu0
        %4359 = vrot.lane.b32.xlu0 %v4045, 112
        %v4360 = vpop.permute.xlu0 %4359
        %4361 = vrot.lane.b32.xlu0 %v4046, 112
        %v4362 = vpop.permute.xlu0 %4361
        %v4364 = vsel %vm1335, %v4360, 0
        %v4367 = vsel %vm1335, %v4362, 0
        %4369 = vmatprep.subr.bf16.mxu0 0
        %4370 = vmatpush1.bf16.xpose.msra.mxu0 %v4367
        %4371 = vmatprep.subr.bf16.mxu0 0
        %4372 = vmatpush1.bf16.xpose.msra.mxu0 0
        %4373 = vmatprep.subr.bf16.mxu0 0
        %4374 = vmatpush1.bf16.xpose.msra.mxu0 0
        %4375 = vmatprep.subr.bf16.mxu0 0
        %4376 = vmatpush1.bf16.xpose.msra.mxu0 0
        %4377 = vmatprep.subr.bf16.mxu0 0
        %4378 = vmatpush1.bf16.xpose.msra.mxu0 0
        %4379 = vmatprep.subr.bf16.mxu0 0
        %4380 = vmatpush1.bf16.xpose.msra.mxu0 0
        %4381 = vmatprep.subr.bf16.mxu0 0
        %4382 = vmatpush1.bf16.xpose.msra.mxu0 0
        %4383 = vmatprep.subr.bf16.mxu0 0
        %4384 = vmatpush1.bf16.xpose.msra.mxu0 0
        %4385 = vmatprep.subr.bf16.mxu0 0
        %4386 = vmatpush1.bf16.xpose.msra.mxu0 0
        %4387 = vmatprep.subr.bf16.mxu0 0
        %4388 = vmatpush1.bf16.xpose.msra.mxu0 0
        %4389 = vmatprep.subr.bf16.mxu0 0
        %4390 = vmatpush1.bf16.xpose.msra.mxu0 0
        %4391 = vmatprep.subr.bf16.mxu0 0
        %4392 = vmatpush1.bf16.xpose.msra.mxu0 0
        %4393 = vmatprep.subr.bf16.mxu0 0
        %4394 = vmatpush1.bf16.xpose.msra.mxu0 0
        %4395 = vmatprep.subr.bf16.mxu0 0
        %4396 = vmatpush1.bf16.xpose.msra.mxu0 0
        %4397 = vmatprep.subr.bf16.mxu0 0
        %4398 = vmatpush1.bf16.xpose.msra.mxu0 0
        %4399 = vmatprep.subr.bf16.mxu0 0
        %4400 = vmatpush1.bf16.xpose.msra.mxu0 0
        %4401 = vmatprep.mubr.bf16.mxu0 0
        %4402 = vmatmul.mubr.bf16.gmra.mrb[0].mxu0 %v4364
        %v4403 = vpop.f32.mrb[0].mxu0
        %v4404 = vadd.f32 0.0, %v4403
        %v4405 = vpop.f32.mrb[0].mxu0
        %v4406 = vpop.f32.mrb[0].mxu0
        %v4407 = vpop.f32.mrb[0].mxu0
        %4408 = vdwg.mxu0
        %v4409 = vsel %vm1335, %v4404, -inf
        %4410 = vmax.xlane.f32.xlu0 %v4409
        %v4411 = vpop.xlane.xlu0 %4410
        %v4412 = vsub.f32 %v4404, %v4411
        %v4413 = vmul.f32 %v4412, 1.442695
        %v4414 = vpow.pop %v4413
        %v4415 = vsel %vm1335, %v4414, 0.0
        %4416 = vadd.xlane.f32.xlu0 %v4415
        %v4417 = vpop.xlane.xlu0 %4416
        %v4418 = vrcp.pop %v4417
        %v4419 = vmul.f32 %v4414, %v4418
        %v4420 = vpack.c.bf16 %v4419, %v4419
        %4421 = vrot.lane.b32.xlu0 %v4046, 80
        %v4422 = vpop.permute.xlu0 %4421
        %v4424 = vsel %vm1335, %v4420, 0
        %v4427 = vsel %vm1399, %v4422, 0
        %4429 = vmatprep.subr.bf16.mxu0 0
        %4430 = vmatpush1.bf16.msra.mxu0 %v4427
        %4431 = vmatprep.subr.bf16.mxu0 0
        %4432 = vmatpush1.bf16.msra.mxu0 0
        %4433 = vmatprep.subr.bf16.mxu0 0
        %4434 = vmatpush1.bf16.msra.mxu0 0
        %4435 = vmatprep.subr.bf16.mxu0 0
        %4436 = vmatpush1.bf16.msra.mxu0 0
        %4437 = vmatprep.subr.bf16.mxu0 0
        %4438 = vmatpush1.bf16.msra.mxu0 0
        %4439 = vmatprep.subr.bf16.mxu0 0
        %4440 = vmatpush1.bf16.msra.mxu0 0
        %4441 = vmatprep.subr.bf16.mxu0 0
        %4442 = vmatpush1.bf16.msra.mxu0 0
        %4443 = vmatprep.subr.bf16.mxu0 0
        %4444 = vmatpush1.bf16.msra.mxu0 0
        %4445 = vmatprep.subr.bf16.mxu0 0
        %4446 = vmatpush1.bf16.msra.mxu0 0
        %4447 = vmatprep.subr.bf16.mxu0 0
        %4448 = vmatpush1.bf16.msra.mxu0 0
        %4449 = vmatprep.subr.bf16.mxu0 0
        %4450 = vmatpush1.bf16.msra.mxu0 0
        %4451 = vmatprep.subr.bf16.mxu0 0
        %4452 = vmatpush1.bf16.msra.mxu0 0
        %4453 = vmatprep.subr.bf16.mxu0 0
        %4454 = vmatpush1.bf16.msra.mxu0 0
        %4455 = vmatprep.subr.bf16.mxu0 0
        %4456 = vmatpush1.bf16.msra.mxu0 0
        %4457 = vmatprep.subr.bf16.mxu0 0
        %4458 = vmatpush1.bf16.msra.mxu0 0
        %4459 = vmatprep.subr.bf16.mxu0 0
        %4460 = vmatpush1.bf16.msra.mxu0 0
        %4461 = vmatprep.mubr.bf16.mxu0 0
        %4462 = vmatmul.mubr.bf16.gmra.mrb[0].mxu0 %v4424
        %v4463 = vpop.f32.mrb[0].mxu0
        %v4464 = vadd.f32 0.0, %v4463
        %v4465 = vpop.f32.mrb[0].mxu0
        %v4466 = vpop.f32.mrb[0].mxu0
        %v4467 = vpop.f32.mrb[0].mxu0
        %4468 = vdwg.mxu0
        %v4469 = vpack.c.bf16 %v4464, %v4464
        %v4471 = vsel %vm1335, %v4469, 0
        %v4474 = vsel %vm1399, %v3917, 0
        %4476 = vmatprep.subr.bf16.mxu0 0
        %4477 = vmatpush1.bf16.msra.mxu0 %v4474
        %4478 = vmatprep.subr.bf16.mxu0 0
        %4479 = vmatpush1.bf16.msra.mxu0 0
        %4480 = vmatprep.subr.bf16.mxu0 0
        %4481 = vmatpush1.bf16.msra.mxu0 0
        %4482 = vmatprep.subr.bf16.mxu0 0
        %4483 = vmatpush1.bf16.msra.mxu0 0
        %4484 = vmatprep.subr.bf16.mxu0 0
        %4485 = vmatpush1.bf16.msra.mxu0 0
        %4486 = vmatprep.subr.bf16.mxu0 0
        %4487 = vmatpush1.bf16.msra.mxu0 0
        %4488 = vmatprep.subr.bf16.mxu0 0
        %4489 = vmatpush1.bf16.msra.mxu0 0
        %4490 = vmatprep.subr.bf16.mxu0 0
        %4491 = vmatpush1.bf16.msra.mxu0 0
        %4492 = vmatprep.subr.bf16.mxu0 0
        %4493 = vmatpush1.bf16.msra.mxu0 0
        %4494 = vmatprep.subr.bf16.mxu0 0
        %4495 = vmatpush1.bf16.msra.mxu0 0
        %4496 = vmatprep.subr.bf16.mxu0 0
        %4497 = vmatpush1.bf16.msra.mxu0 0
        %4498 = vmatprep.subr.bf16.mxu0 0
        %4499 = vmatpush1.bf16.msra.mxu0 0
        %4500 = vmatprep.subr.bf16.mxu0 0
        %4501 = vmatpush1.bf16.msra.mxu0 0
        %4502 = vmatprep.subr.bf16.mxu0 0
        %4503 = vmatpush1.bf16.msra.mxu0 0
        %4504 = vmatprep.subr.bf16.mxu0 0
        %4505 = vmatpush1.bf16.msra.mxu0 0
        %4506 = vmatprep.subr.bf16.mxu0 0
        %4507 = vmatpush1.bf16.msra.mxu0 0
        %4508 = vmatprep.mubr.bf16.mxu0 0
        %4509 = vmatmul.mubr.bf16.gmra.mrb[0].mxu0 %v4471
        %v4510 = vpop.f32.mrb[0].mxu0
        %v4511 = vadd.f32 0.0, %v4510
        %v4512 = vpop.f32.mrb[0].mxu0
        %v4513 = vpop.f32.mrb[0].mxu0
        %v4514 = vpop.f32.mrb[0].mxu0
        %4515 = vdwg.mxu0
        %v4516 = vadd.f32 %v4354, %v4511
        %4517 = vrot.lane.b32.xlu0 %v4045, 104
        %v4518 = vpop.permute.xlu0 %4517
        %4519 = vrot.lane.b32.xlu0 %v4046, 104
        %v4520 = vpop.permute.xlu0 %4519
        %v4522 = vsel %vm1335, %v4518, 0
        %v4525 = vsel %vm1335, %v4520, 0
        %4527 = vmatprep.subr.bf16.mxu0 0
        %4528 = vmatpush1.bf16.xpose.msra.mxu0 %v4525
        %4529 = vmatprep.subr.bf16.mxu0 0
        %4530 = vmatpush1.bf16.xpose.msra.mxu0 0
        %4531 = vmatprep.subr.bf16.mxu0 0
        %4532 = vmatpush1.bf16.xpose.msra.mxu0 0
        %4533 = vmatprep.subr.bf16.mxu0 0
        %4534 = vmatpush1.bf16.xpose.msra.mxu0 0
        %4535 = vmatprep.subr.bf16.mxu0 0
        %4536 = vmatpush1.bf16.xpose.msra.mxu0 0
        %4537 = vmatprep.subr.bf16.mxu0 0
        %4538 = vmatpush1.bf16.xpose.msra.mxu0 0
        %4539 = vmatprep.subr.bf16.mxu0 0
        %4540 = vmatpush1.bf16.xpose.msra.mxu0 0
        %4541 = vmatprep.subr.bf16.mxu0 0
        %4542 = vmatpush1.bf16.xpose.msra.mxu0 0
        %4543 = vmatprep.subr.bf16.mxu0 0
        %4544 = vmatpush1.bf16.xpose.msra.mxu0 0
        %4545 = vmatprep.subr.bf16.mxu0 0
        %4546 = vmatpush1.bf16.xpose.msra.mxu0 0
        %4547 = vmatprep.subr.bf16.mxu0 0
        %4548 = vmatpush1.bf16.xpose.msra.mxu0 0
        %4549 = vmatprep.subr.bf16.mxu0 0
        %4550 = vmatpush1.bf16.xpose.msra.mxu0 0
        %4551 = vmatprep.subr.bf16.mxu0 0
        %4552 = vmatpush1.bf16.xpose.msra.mxu0 0
        %4553 = vmatprep.subr.bf16.mxu0 0
        %4554 = vmatpush1.bf16.xpose.msra.mxu0 0
        %4555 = vmatprep.subr.bf16.mxu0 0
        %4556 = vmatpush1.bf16.xpose.msra.mxu0 0
        %4557 = vmatprep.subr.bf16.mxu0 0
        %4558 = vmatpush1.bf16.xpose.msra.mxu0 0
        %4559 = vmatprep.mubr.bf16.mxu0 0
        %4560 = vmatmul.mubr.bf16.gmra.mrb[0].mxu0 %v4522
        %v4561 = vpop.f32.mrb[0].mxu0
        %v4562 = vadd.f32 0.0, %v4561
        %v4563 = vpop.f32.mrb[0].mxu0
        %v4564 = vpop.f32.mrb[0].mxu0
        %v4565 = vpop.f32.mrb[0].mxu0
        %4566 = vdwg.mxu0
        %v4567 = vsel %vm1335, %v4562, -inf
        %4568 = vmax.xlane.f32.xlu0 %v4567
        %v4569 = vpop.xlane.xlu0 %4568
        %v4570 = vsub.f32 %v4562, %v4569
        %v4571 = vmul.f32 %v4570, 1.442695
        %v4572 = vpow.pop %v4571
        %v4573 = vsel %vm1335, %v4572, 0.0
        %4574 = vadd.xlane.f32.xlu0 %v4573
        %v4575 = vpop.xlane.xlu0 %4574
        %v4576 = vrcp.pop %v4575
        %v4577 = vmul.f32 %v4572, %v4576
        %v4578 = vpack.c.bf16 %v4577, %v4577
        %4579 = vrot.lane.b32.xlu0 %v4046, 72
        %v4580 = vpop.permute.xlu0 %4579
        %v4582 = vsel %vm1335, %v4578, 0
        %v4585 = vsel %vm1399, %v4580, 0
        %4587 = vmatprep.subr.bf16.mxu0 0
        %4588 = vmatpush1.bf16.msra.mxu0 %v4585
        %4589 = vmatprep.subr.bf16.mxu0 0
        %4590 = vmatpush1.bf16.msra.mxu0 0
        %4591 = vmatprep.subr.bf16.mxu0 0
        %4592 = vmatpush1.bf16.msra.mxu0 0
        %4593 = vmatprep.subr.bf16.mxu0 0
        %4594 = vmatpush1.bf16.msra.mxu0 0
        %4595 = vmatprep.subr.bf16.mxu0 0
        %4596 = vmatpush1.bf16.msra.mxu0 0
        %4597 = vmatprep.subr.bf16.mxu0 0
        %4598 = vmatpush1.bf16.msra.mxu0 0
        %4599 = vmatprep.subr.bf16.mxu0 0
        %4600 = vmatpush1.bf16.msra.mxu0 0
        %4601 = vmatprep.subr.bf16.mxu0 0
        %4602 = vmatpush1.bf16.msra.mxu0 0
        %4603 = vmatprep.subr.bf16.mxu0 0
        %4604 = vmatpush1.bf16.msra.mxu0 0
        %4605 = vmatprep.subr.bf16.mxu0 0
        %4606 = vmatpush1.bf16.msra.mxu0 0
        %4607 = vmatprep.subr.bf16.mxu0 0
        %4608 = vmatpush1.bf16.msra.mxu0 0
        %4609 = vmatprep.subr.bf16.mxu0 0
        %4610 = vmatpush1.bf16.msra.mxu0 0
        %4611 = vmatprep.subr.bf16.mxu0 0
        %4612 = vmatpush1.bf16.msra.mxu0 0
        %4613 = vmatprep.subr.bf16.mxu0 0
        %4614 = vmatpush1.bf16.msra.mxu0 0
        %4615 = vmatprep.subr.bf16.mxu0 0
        %4616 = vmatpush1.bf16.msra.mxu0 0
        %4617 = vmatprep.subr.bf16.mxu0 0
        %4618 = vmatpush1.bf16.msra.mxu0 0
        %4619 = vmatprep.mubr.bf16.mxu0 0
        %4620 = vmatmul.mubr.bf16.gmra.mrb[0].mxu0 %v4582
        %v4621 = vpop.f32.mrb[0].mxu0
        %v4622 = vadd.f32 0.0, %v4621
        %v4623 = vpop.f32.mrb[0].mxu0
        %v4624 = vpop.f32.mrb[0].mxu0
        %v4625 = vpop.f32.mrb[0].mxu0
        %4626 = vdwg.mxu0
        %v4627 = vpack.c.bf16 %v4622, %v4622
        %v4629 = vsel %vm1335, %v4627, 0
        %v4632 = vsel %vm1399, %v3918, 0
        %4634 = vmatprep.subr.bf16.mxu0 0
        %4635 = vmatpush1.bf16.msra.mxu0 %v4632
        %4636 = vmatprep.subr.bf16.mxu0 0
        %4637 = vmatpush1.bf16.msra.mxu0 0
        %4638 = vmatprep.subr.bf16.mxu0 0
        %4639 = vmatpush1.bf16.msra.mxu0 0
        %4640 = vmatprep.subr.bf16.mxu0 0
        %4641 = vmatpush1.bf16.msra.mxu0 0
        %4642 = vmatprep.subr.bf16.mxu0 0
        %4643 = vmatpush1.bf16.msra.mxu0 0
        %4644 = vmatprep.subr.bf16.mxu0 0
        %4645 = vmatpush1.bf16.msra.mxu0 0
        %4646 = vmatprep.subr.bf16.mxu0 0
        %4647 = vmatpush1.bf16.msra.mxu0 0
        %4648 = vmatprep.subr.bf16.mxu0 0
        %4649 = vmatpush1.bf16.msra.mxu0 0
        %4650 = vmatprep.subr.bf16.mxu0 0
        %4651 = vmatpush1.bf16.msra.mxu0 0
        %4652 = vmatprep.subr.bf16.mxu0 0
        %4653 = vmatpush1.bf16.msra.mxu0 0
        %4654 = vmatprep.subr.bf16.mxu0 0
        %4655 = vmatpush1.bf16.msra.mxu0 0
        %4656 = vmatprep.subr.bf16.mxu0 0
        %4657 = vmatpush1.bf16.msra.mxu0 0
        %4658 = vmatprep.subr.bf16.mxu0 0
        %4659 = vmatpush1.bf16.msra.mxu0 0
        %4660 = vmatprep.subr.bf16.mxu0 0
        %4661 = vmatpush1.bf16.msra.mxu0 0
        %4662 = vmatprep.subr.bf16.mxu0 0
        %4663 = vmatpush1.bf16.msra.mxu0 0
        %4664 = vmatprep.subr.bf16.mxu0 0
        %4665 = vmatpush1.bf16.msra.mxu0 0
        %4666 = vmatprep.mubr.bf16.mxu0 0
        %4667 = vmatmul.mubr.bf16.gmra.mrb[0].mxu0 %v4629
        %v4668 = vpop.f32.mrb[0].mxu0
        %v4669 = vadd.f32 0.0, %v4668
        %v4670 = vpop.f32.mrb[0].mxu0
        %v4671 = vpop.f32.mrb[0].mxu0
        %v4672 = vpop.f32.mrb[0].mxu0
        %4673 = vdwg.mxu0
        %v4674 = vadd.f32 %v4516, %v4669
        %v4676 = vlaneseq
        %v4677 = vshrl.u32 %v4676, 7
        %v4678 = vsub.s32 0, %v4677
        %v4679 = vrot.slane %v3919, %v4678
        %v4681 = vadd.f32 %v4674, %v4679
        %v4682 = vadd.f32 %v4681, %v3904
        %v4683 = vsel %vm1228, %v4682, 0.0
        %4684 = vadd.xlane.f32.xlu0 %v4683
        %v4685 = vpop.xlane.xlu0 %4684
        %v4686 = vmul.f32 %v4685, %v1232
        %v4687 = vsub.f32 %v4682, %v4686
        %v4688 = vmul.f32 %v4687, %v4687
        %v4689 = vsel %vm1228, %v4688, 0.0
        %4690 = vadd.xlane.f32.xlu0 %v4689
        %v4691 = vpop.xlane.xlu0 %4690
        %v4692 = vmul.f32 %v4691, %v1232
        %v4693 = vadd.f32 %v4692, 1e-05
        %v4694 = vrsqrt.pop %v4693
        %v4695 = vmul.f32 %v4687, %v4694
        %v4697 = vlaneseq
        %v4698 = vshrl.u32 %v4697, 7
        %v4699 = vsub.s32 0, %v4698
        %v4700 = vrot.slane %v3920, %v4699
        %v4702 = vmul.f32 %v4695, %v4700
        %v4704 = vlaneseq
        %v4705 = vshrl.u32 %v4704, 7
        %v4706 = vsub.s32 0, %v4705
        %v4707 = vrot.slane %v3921, %v4706
        %v4709 = vadd.f32 %v4702, %v4707
        %v4710 = vld [vmem:[%s65] sm:$0xf]
        %v4711 = vld [vmem:[%s65 + $0x4] sm:$0xf]
        %v4712 = vld [vmem:[%s65 + $0x8] sm:$0xf]
        %v4713 = vld [vmem:[%s65 + $0xc] sm:$0xf]
        %v4714 = vld [vmem:[%s67] sm:$0x1]
        %v4715 = vld [vmem:[%s69] sm:$0xf]
        %v4716 = vld [vmem:[%s69 + $0x4] sm:$0xf]
        %v4717 = vld [vmem:[%s69 + $0x8] sm:$0xf]
        %v4718 = vld [vmem:[%s69 + $0xc] sm:$0xf]
        %v4719 = vld [vmem:[%s69 + $0x10] sm:$0xf]
        %v4720 = vld [vmem:[%s69 + $0x14] sm:$0xf]
        %v4721 = vld [vmem:[%s69 + $0x18] sm:$0xf]
        %v4722 = vld [vmem:[%s69 + $0x1c] sm:$0xf]
        %v4723 = vld [vmem:[%s71] sm:$0x1]
        %v4724 = vld [vmem:[%s73] sm:$0x1]
        %v4725 = vld [vmem:[%s75] sm:$0x1]
        %v4726 = vpack.c.bf16 %v4709, %v4709
        %v4728 = vlaneseq
        %v4729 = vshrl.u32 %v4728, 7
        %v4730 = vsub.s32 0, %v4729
        %v4731 = vrot.slane %v4714, %v4730
        %v4737 = vunpack.c.l.b16 %v4710
        %v4738 = vunpack.c.l.b16 %v4711
        %v4739 = vunpack.c.l.b16 %v4712
        %v4740 = vunpack.c.l.b16 %v4713
        %v4741 = vpack.c.b16 %v4738, %v4737
        %v4742 = vpack.c.b16 %v4740, %v4739
        %v4746 = vsel %vm1228, %v4726, 0
        %4748 = vmatprep.subr.bf16.mxu0 0
        %4749 = vmatpush1.bf16.msra.mxu0 %v4741
        %4750 = vmatprep.subr.bf16.mxu0 0
        %4751 = vmatpush1.bf16.msra.mxu0 %v4742
        %4752 = vmatprep.subr.bf16.mxu0 0
        %4753 = vmatpush1.bf16.msra.mxu0 0
        %4754 = vmatprep.subr.bf16.mxu0 0
        %4755 = vmatpush1.bf16.msra.mxu0 0
        %4756 = vmatprep.subr.bf16.mxu0 0
        %4757 = vmatpush1.bf16.msra.mxu0 0
        %4758 = vmatprep.subr.bf16.mxu0 0
        %4759 = vmatpush1.bf16.msra.mxu0 0
        %4760 = vmatprep.subr.bf16.mxu0 0
        %4761 = vmatpush1.bf16.msra.mxu0 0
        %4762 = vmatprep.subr.bf16.mxu0 0
        %4763 = vmatpush1.bf16.msra.mxu0 0
        %4764 = vmatprep.subr.bf16.mxu0 0
        %4765 = vmatpush1.bf16.msra.mxu0 0
        %4766 = vmatprep.subr.bf16.mxu0 0
        %4767 = vmatpush1.bf16.msra.mxu0 0
        %4768 = vmatprep.subr.bf16.mxu0 0
        %4769 = vmatpush1.bf16.msra.mxu0 0
        %4770 = vmatprep.subr.bf16.mxu0 0
        %4771 = vmatpush1.bf16.msra.mxu0 0
        %4772 = vmatprep.subr.bf16.mxu0 0
        %4773 = vmatpush1.bf16.msra.mxu0 0
        %4774 = vmatprep.subr.bf16.mxu0 0
        %4775 = vmatpush1.bf16.msra.mxu0 0
        %4776 = vmatprep.subr.bf16.mxu0 0
        %4777 = vmatpush1.bf16.msra.mxu0 0
        %4778 = vmatprep.subr.bf16.mxu0 0
        %4779 = vmatpush1.bf16.msra.mxu0 0
        %4780 = vmatprep.mubr.bf16.mxu0 0
        %4781 = vmatmul.mubr.bf16.gmra.mrb[0].mxu0 %v4746
        %v4782 = vpop.f32.mrb[0].mxu0
        %v4783 = vadd.f32 %v4731, %v4782
        %v4784 = vpop.f32.mrb[0].mxu0
        %v4785 = vpop.f32.mrb[0].mxu0
        %v4786 = vpop.f32.mrb[0].mxu0
        %4787 = vdwg.mxu0
        %v4788 = vmul.f32 %v4783, 0.5
        %v4789 = vmul.f32 %v4783, 0.044715
        %v4790 = vmul.f32 %v4789, %v4783
        %v4791 = vmul.f32 %v4790, %v4783
        %v4792 = vadd.f32 %v4783, %v4791
        %v4793 = vmul.f32 %v4792, 0.7978846
        %v4794 = vtanh.pop %v4793
        %v4795 = vadd.f32 %v4794, 1.0
        %v4796 = vmul.f32 %v4788, %v4795
        %v4797 = vpack.c.bf16 %v4796, %v4796
        %v4799 = vlaneseq
        %v4800 = vshrl.u32 %v4799, 7
        %v4801 = vsub.s32 0, %v4800
        %v4802 = vrot.slane %v4723, %v4801
        %v4812 = vunpack.c.l.b16 %v4715
        %v4813 = vunpack.c.l.b16 %v4716
        %v4814 = vunpack.c.l.b16 %v4717
        %v4815 = vunpack.c.l.b16 %v4718
        %v4816 = vunpack.c.l.b16 %v4719
        %v4817 = vunpack.c.l.b16 %v4720
        %v4818 = vunpack.c.l.b16 %v4721
        %v4819 = vunpack.c.l.b16 %v4722
        %v4820 = vpack.c.b16 %v4813, %v4812
        %v4821 = vpack.c.b16 %v4815, %v4814
        %v4822 = vpack.c.b16 %v4817, %v4816
        %v4823 = vpack.c.b16 %v4819, %v4818
        %v4829 = vsel %vm2116, %v4797, 0
        %4831 = vmatprep.subr.bf16.mxu0 0
        %4832 = vmatpush1.bf16.msra.mxu0 %v4820
        %4833 = vmatprep.subr.bf16.mxu0 0
        %4834 = vmatpush1.bf16.msra.mxu0 %v4821
        %4835 = vmatprep.subr.bf16.mxu0 0
        %4836 = vmatpush1.bf16.msra.mxu0 %v4822
        %4837 = vmatprep.subr.bf16.mxu0 0
        %4838 = vmatpush1.bf16.msra.mxu0 %v4823
        %4839 = vmatprep.subr.bf16.mxu0 0
        %4840 = vmatpush1.bf16.msra.mxu0 0
        %4841 = vmatprep.subr.bf16.mxu0 0
        %4842 = vmatpush1.bf16.msra.mxu0 0
        %4843 = vmatprep.subr.bf16.mxu0 0
        %4844 = vmatpush1.bf16.msra.mxu0 0
        %4845 = vmatprep.subr.bf16.mxu0 0
        %4846 = vmatpush1.bf16.msra.mxu0 0
        %4847 = vmatprep.subr.bf16.mxu0 0
        %4848 = vmatpush1.bf16.msra.mxu0 0
        %4849 = vmatprep.subr.bf16.mxu0 0
        %4850 = vmatpush1.bf16.msra.mxu0 0
        %4851 = vmatprep.subr.bf16.mxu0 0
        %4852 = vmatpush1.bf16.msra.mxu0 0
        %4853 = vmatprep.subr.bf16.mxu0 0
        %4854 = vmatpush1.bf16.msra.mxu0 0
        %4855 = vmatprep.subr.bf16.mxu0 0
        %4856 = vmatpush1.bf16.msra.mxu0 0
        %4857 = vmatprep.subr.bf16.mxu0 0
        %4858 = vmatpush1.bf16.msra.mxu0 0
        %4859 = vmatprep.subr.bf16.mxu0 0
        %4860 = vmatpush1.bf16.msra.mxu0 0
        %4861 = vmatprep.subr.bf16.mxu0 0
        %4862 = vmatpush1.bf16.msra.mxu0 0
        %4863 = vmatprep.mubr.bf16.mxu0 0
        %4864 = vmatmul.mubr.bf16.gmra.mrb[0].mxu0 %v4829
        %v4865 = vpop.f32.mrb[0].mxu0
        %v4866 = vadd.f32 %v4802, %v4865
        %v4867 = vpop.f32.mrb[0].mxu0
        %v4868 = vpop.f32.mrb[0].mxu0
        %v4869 = vpop.f32.mrb[0].mxu0
        %4870 = vdwg.mxu0
        %v4871 = vadd.f32 %v4866, %v4709
        %v4872 = vsel %vm1228, %v4871, 0.0
        %4873 = vadd.xlane.f32.xlu0 %v4872
        %v4874 = vpop.xlane.xlu0 %4873
        %v4875 = vmul.f32 %v4874, %v1232
        %v4876 = vsub.f32 %v4871, %v4875
        %v4877 = vmul.f32 %v4876, %v4876
        %v4878 = vsel %vm1228, %v4877, 0.0
        %4879 = vadd.xlane.f32.xlu0 %v4878
        %v4880 = vpop.xlane.xlu0 %4879
        %v4881 = vmul.f32 %v4880, %v1232
        %v4882 = vadd.f32 %v4881, 1e-05
        %v4883 = vrsqrt.pop %v4882
        %v4884 = vmul.f32 %v4876, %v4883
        %v4886 = vlaneseq
        %v4887 = vshrl.u32 %v4886, 7
        %v4888 = vsub.s32 0, %v4887
        %v4889 = vrot.slane %v4724, %v4888
        %v4891 = vmul.f32 %v4884, %v4889
        %v4893 = vlaneseq
        %v4894 = vshrl.u32 %v4893, 7
        %v4895 = vsub.s32 0, %v4894
        %v4896 = vrot.slane %v4725, %v4895
        %v4898 = vadd.f32 %v4891, %v4896
        %s4899 = scalar_lea.vmem %s37, 16
        %v4900 = vld [vmem:[%s4899] sm:$0xf]
        %v4901 = vld [vmem:[%s4899 + $0x4] sm:$0xf]
        %v4902 = vld [vmem:[%s4899 + $0x8] sm:$0xf]
        %v4903 = vld [vmem:[%s4899 + $0xc] sm:$0xf]
        %s4904 = scalar_lea.vmem %s39, 1
        %v4905 = vld [vmem:[%s4904] sm:$0x1]
        %s4906 = scalar_lea.vmem %s41, 16
        %v4907 = vld [vmem:[%s4906] sm:$0xf]
        %v4908 = vld [vmem:[%s4906 + $0x4] sm:$0xf]
        %v4909 = vld [vmem:[%s4906 + $0x8] sm:$0xf]
        %v4910 = vld [vmem:[%s4906 + $0xc] sm:$0xf]
        %s4911 = scalar_lea.vmem %s43, 1
        %v4912 = vld [vmem:[%s4911] sm:$0x1]
        %s4913 = scalar_lea.vmem %s45, 1
        %v4914 = vld [vmem:[%s4913] sm:$0x1]
        %s4915 = scalar_lea.vmem %s47, 1
        %v4916 = vld [vmem:[%s4915] sm:$0x1]
        %v4917 = vpack.c.bf16 %v4898, %v4898
        %v4919 = vlaneseq
        %v4920 = vshrl.u32 %v4919, 7
        %v4921 = vsub.s32 0, %v4920
        %v4922 = vrot.slane %v4905, %v4921
        %v4928 = vunpack.c.l.b16 %v4900
        %v4929 = vunpack.c.l.b16 %v4901
        %v4930 = vunpack.c.l.b16 %v4902
        %v4931 = vunpack.c.l.b16 %v4903
        %v4932 = vpack.c.b16 %v4929, %v4928
        %v4933 = vpack.c.b16 %v4931, %v4930
        %v4937 = vsel %vm1228, %v4917, 0
        %4939 = vmatprep.subr.bf16.mxu0 0
        %4940 = vmatpush1.bf16.msra.mxu0 %v4932
        %4941 = vmatprep.subr.bf16.mxu0 0
        %4942 = vmatpush1.bf16.msra.mxu0 %v4933
        %4943 = vmatprep.subr.bf16.mxu0 0
        %4944 = vmatpush1.bf16.msra.mxu0 0
        %4945 = vmatprep.subr.bf16.mxu0 0
        %4946 = vmatpush1.bf16.msra.mxu0 0
        %4947 = vmatprep.subr.bf16.mxu0 0
        %4948 = vmatpush1.bf16.msra.mxu0 0
        %4949 = vmatprep.subr.bf16.mxu0 0
        %4950 = vmatpush1.bf16.msra.mxu0 0
        %4951 = vmatprep.subr.bf16.mxu0 0
        %4952 = vmatpush1.bf16.msra.mxu0 0
        %4953 = vmatprep.subr.bf16.mxu0 0
        %4954 = vmatpush1.bf16.msra.mxu0 0
        %4955 = vmatprep.subr.bf16.mxu0 0
        %4956 = vmatpush1.bf16.msra.mxu0 0
        %4957 = vmatprep.subr.bf16.mxu0 0
        %4958 = vmatpush1.bf16.msra.mxu0 0
        %4959 = vmatprep.subr.bf16.mxu0 0
        %4960 = vmatpush1.bf16.msra.mxu0 0
        %4961 = vmatprep.subr.bf16.mxu0 0
        %4962 = vmatpush1.bf16.msra.mxu0 0
        %4963 = vmatprep.subr.bf16.mxu0 0
        %4964 = vmatpush1.bf16.msra.mxu0 0
        %4965 = vmatprep.subr.bf16.mxu0 0
        %4966 = vmatpush1.bf16.msra.mxu0 0
        %4967 = vmatprep.subr.bf16.mxu0 0
        %4968 = vmatpush1.bf16.msra.mxu0 0
        %4969 = vmatprep.subr.bf16.mxu0 0
        %4970 = vmatpush1.bf16.msra.mxu0 0
        %4971 = vmatprep.mubr.bf16.mxu0 0
        %4972 = vmatmul.mubr.bf16.gmra.mrb[0].mxu0 %v4937
        %v4973 = vpop.f32.mrb[0].mxu0
        %v4974 = vadd.f32 %v4922, %v4973
        %v4975 = vpop.f32.mrb[0].mxu0
        %v4976 = vpop.f32.mrb[0].mxu0
        %v4977 = vpop.f32.mrb[0].mxu0
        %4978 = vdwg.mxu0
        %v4979 = vpack.c.bf16 %v4974, %v4974
        %4981 = vrot.lane.b32.xlu0 %v4979, 96
        %v4982 = vpop.permute.xlu0 %4981
        %v4984 = vsel %vm1335, %v4979, 0
        %v4987 = vsel %vm1335, %v4982, 0
        %4989 = vmatprep.subr.bf16.mxu0 0
        %4990 = vmatpush1.bf16.xpose.msra.mxu0 %v4987
        %4991 = vmatprep.subr.bf16.mxu0 0
        %4992 = vmatpush1.bf16.xpose.msra.mxu0 0
        %4993 = vmatprep.subr.bf16.mxu0 0
        %4994 = vmatpush1.bf16.xpose.msra.mxu0 0
        %4995 = vmatprep.subr.bf16.mxu0 0
        %4996 = vmatpush1.bf16.xpose.msra.mxu0 0
        %4997 = vmatprep.subr.bf16.mxu0 0
        %4998 = vmatpush1.bf16.xpose.msra.mxu0 0
        %4999 = vmatprep.subr.bf16.mxu0 0
        %5000 = vmatpush1.bf16.xpose.msra.mxu0 0
        %5001 = vmatprep.subr.bf16.mxu0 0
        %5002 = vmatpush1.bf16.xpose.msra.mxu0 0
        %5003 = vmatprep.subr.bf16.mxu0 0
        %5004 = vmatpush1.bf16.xpose.msra.mxu0 0
        %5005 = vmatprep.subr.bf16.mxu0 0
        %5006 = vmatpush1.bf16.xpose.msra.mxu0 0
        %5007 = vmatprep.subr.bf16.mxu0 0
        %5008 = vmatpush1.bf16.xpose.msra.mxu0 0
        %5009 = vmatprep.subr.bf16.mxu0 0
        %5010 = vmatpush1.bf16.xpose.msra.mxu0 0
        %5011 = vmatprep.subr.bf16.mxu0 0
        %5012 = vmatpush1.bf16.xpose.msra.mxu0 0
        %5013 = vmatprep.subr.bf16.mxu0 0
        %5014 = vmatpush1.bf16.xpose.msra.mxu0 0
        %5015 = vmatprep.subr.bf16.mxu0 0
        %5016 = vmatpush1.bf16.xpose.msra.mxu0 0
        %5017 = vmatprep.subr.bf16.mxu0 0
        %5018 = vmatpush1.bf16.xpose.msra.mxu0 0
        %5019 = vmatprep.subr.bf16.mxu0 0
        %5020 = vmatpush1.bf16.xpose.msra.mxu0 0
        %5021 = vmatprep.mubr.bf16.mxu0 0
        %5022 = vmatmul.mubr.bf16.gmra.mrb[0].mxu0 %v4984
        %v5023 = vpop.f32.mrb[0].mxu0
        %v5024 = vadd.f32 %v3134, %v5023
        %v5025 = vpop.f32.mrb[0].mxu0
        %v5026 = vpop.f32.mrb[0].mxu0
        %v5027 = vpop.f32.mrb[0].mxu0
        %5028 = vdwg.mxu0
        %v5029 = vsel %vm1335, %v5024, -inf
        %5030 = vmax.xlane.f32.xlu0 %v5029
        %v5031 = vpop.xlane.xlu0 %5030
        %v5032 = vsub.f32 %v5024, %v5031
        %v5033 = vmul.f32 %v5032, 1.442695
        %v5034 = vpow.pop %v5033
        %v5035 = vsel %vm1335, %v5034, 0.0
        %5036 = vadd.xlane.f32.xlu0 %v5035
        %v5037 = vpop.xlane.xlu0 %5036
        %v5038 = vrcp.pop %v5037
        %v5039 = vmul.f32 %v5034, %v5038
        %v5040 = vpack.c.bf16 %v5039, %v5039
        %5041 = vrot.lane.b32.xlu0 %v4979, 64
        %v5042 = vpop.permute.xlu0 %5041
        %v5044 = vsel %vm1335, %v5040, 0
        %v5047 = vsel %vm1399, %v5042, 0
        %5049 = vmatprep.subr.bf16.mxu0 0
        %5050 = vmatpush1.bf16.msra.mxu0 %v5047
        %5051 = vmatprep.subr.bf16.mxu0 0
        %5052 = vmatpush1.bf16.msra.mxu0 0
        %5053 = vmatprep.subr.bf16.mxu0 0
        %5054 = vmatpush1.bf16.msra.mxu0 0
        %5055 = vmatprep.subr.bf16.mxu0 0
        %5056 = vmatpush1.bf16.msra.mxu0 0
        %5057 = vmatprep.subr.bf16.mxu0 0
        %5058 = vmatpush1.bf16.msra.mxu0 0
        %5059 = vmatprep.subr.bf16.mxu0 0
        %5060 = vmatpush1.bf16.msra.mxu0 0
        %5061 = vmatprep.subr.bf16.mxu0 0
        %5062 = vmatpush1.bf16.msra.mxu0 0
        %5063 = vmatprep.subr.bf16.mxu0 0
        %5064 = vmatpush1.bf16.msra.mxu0 0
        %5065 = vmatprep.subr.bf16.mxu0 0
        %5066 = vmatpush1.bf16.msra.mxu0 0
        %5067 = vmatprep.subr.bf16.mxu0 0
        %5068 = vmatpush1.bf16.msra.mxu0 0
        %5069 = vmatprep.subr.bf16.mxu0 0
        %5070 = vmatpush1.bf16.msra.mxu0 0
        %5071 = vmatprep.subr.bf16.mxu0 0
        %5072 = vmatpush1.bf16.msra.mxu0 0
        %5073 = vmatprep.subr.bf16.mxu0 0
        %5074 = vmatpush1.bf16.msra.mxu0 0
        %5075 = vmatprep.subr.bf16.mxu0 0
        %5076 = vmatpush1.bf16.msra.mxu0 0
        %5077 = vmatprep.subr.bf16.mxu0 0
        %5078 = vmatpush1.bf16.msra.mxu0 0
        %5079 = vmatprep.subr.bf16.mxu0 0
        %5080 = vmatpush1.bf16.msra.mxu0 0
        %5081 = vmatprep.mubr.bf16.mxu0 0
        %5082 = vmatmul.mubr.bf16.gmra.mrb[0].mxu0 %v5044
        %v5083 = vpop.f32.mrb[0].mxu0
        %v5084 = vadd.f32 0.0, %v5083
        %v5085 = vpop.f32.mrb[0].mxu0
        %v5086 = vpop.f32.mrb[0].mxu0
        %v5087 = vpop.f32.mrb[0].mxu0
        %5088 = vdwg.mxu0
        %v5089 = vpack.c.bf16 %v5084, %v5084
        %5090 = vrot.lane.b32.xlu0 %v4979, 120
        %v5091 = vpop.permute.xlu0 %5090
        %5092 = vrot.lane.b32.xlu0 %v4979, 88
        %v5093 = vpop.permute.xlu0 %5092
        %v5095 = vsel %vm1335, %v5091, 0
        %v5098 = vsel %vm1335, %v5093, 0
        %5100 = vmatprep.subr.bf16.mxu0 0
        %5101 = vmatpush1.bf16.xpose.msra.mxu0 %v5098
        %5102 = vmatprep.subr.bf16.mxu0 0
        %5103 = vmatpush1.bf16.xpose.msra.mxu0 0
        %5104 = vmatprep.subr.bf16.mxu0 0
        %5105 = vmatpush1.bf16.xpose.msra.mxu0 0
        %5106 = vmatprep.subr.bf16.mxu0 0
        %5107 = vmatpush1.bf16.xpose.msra.mxu0 0
        %5108 = vmatprep.subr.bf16.mxu0 0
        %5109 = vmatpush1.bf16.xpose.msra.mxu0 0
        %5110 = vmatprep.subr.bf16.mxu0 0
        %5111 = vmatpush1.bf16.xpose.msra.mxu0 0
        %5112 = vmatprep.subr.bf16.mxu0 0
        %5113 = vmatpush1.bf16.xpose.msra.mxu0 0
        %5114 = vmatprep.subr.bf16.mxu0 0
        %5115 = vmatpush1.bf16.xpose.msra.mxu0 0
        %5116 = vmatprep.subr.bf16.mxu0 0
        %5117 = vmatpush1.bf16.xpose.msra.mxu0 0
        %5118 = vmatprep.subr.bf16.mxu0 0
        %5119 = vmatpush1.bf16.xpose.msra.mxu0 0
        %5120 = vmatprep.subr.bf16.mxu0 0
        %5121 = vmatpush1.bf16.xpose.msra.mxu0 0
        %5122 = vmatprep.subr.bf16.mxu0 0
        %5123 = vmatpush1.bf16.xpose.msra.mxu0 0
        %5124 = vmatprep.subr.bf16.mxu0 0
        %5125 = vmatpush1.bf16.xpose.msra.mxu0 0
        %5126 = vmatprep.subr.bf16.mxu0 0
        %5127 = vmatpush1.bf16.xpose.msra.mxu0 0
        %5128 = vmatprep.subr.bf16.mxu0 0
        %5129 = vmatpush1.bf16.xpose.msra.mxu0 0
        %5130 = vmatprep.subr.bf16.mxu0 0
        %5131 = vmatpush1.bf16.xpose.msra.mxu0 0
        %5132 = vmatprep.mubr.bf16.mxu0 0
        %5133 = vmatmul.mubr.bf16.gmra.mrb[0].mxu0 %v5095
        %v5134 = vpop.f32.mrb[0].mxu0
        %v5135 = vadd.f32 %v3134, %v5134
        %v5136 = vpop.f32.mrb[0].mxu0
        %v5137 = vpop.f32.mrb[0].mxu0
        %v5138 = vpop.f32.mrb[0].mxu0
        %5139 = vdwg.mxu0
        %v5140 = vsel %vm1335, %v5135, -inf
        %5141 = vmax.xlane.f32.xlu0 %v5140
        %v5142 = vpop.xlane.xlu0 %5141
        %v5143 = vsub.f32 %v5135, %v5142
        %v5144 = vmul.f32 %v5143, 1.442695
        %v5145 = vpow.pop %v5144
        %v5146 = vsel %vm1335, %v5145, 0.0
        %5147 = vadd.xlane.f32.xlu0 %v5146
        %v5148 = vpop.xlane.xlu0 %5147
        %v5149 = vrcp.pop %v5148
        %v5150 = vmul.f32 %v5145, %v5149
        %v5151 = vpack.c.bf16 %v5150, %v5150
        %5152 = vrot.lane.b32.xlu0 %v4979, 56
        %v5153 = vpop.permute.xlu0 %5152
        %v5155 = vsel %vm1335, %v5151, 0
        %v5158 = vsel %vm1399, %v5153, 0
        %5160 = vmatprep.subr.bf16.mxu0 0
        %5161 = vmatpush1.bf16.msra.mxu0 %v5158
        %5162 = vmatprep.subr.bf16.mxu0 0
        %5163 = vmatpush1.bf16.msra.mxu0 0
        %5164 = vmatprep.subr.bf16.mxu0 0
        %5165 = vmatpush1.bf16.msra.mxu0 0
        %5166 = vmatprep.subr.bf16.mxu0 0
        %5167 = vmatpush1.bf16.msra.mxu0 0
        %5168 = vmatprep.subr.bf16.mxu0 0
        %5169 = vmatpush1.bf16.msra.mxu0 0
        %5170 = vmatprep.subr.bf16.mxu0 0
        %5171 = vmatpush1.bf16.msra.mxu0 0
        %5172 = vmatprep.subr.bf16.mxu0 0
        %5173 = vmatpush1.bf16.msra.mxu0 0
        %5174 = vmatprep.subr.bf16.mxu0 0
        %5175 = vmatpush1.bf16.msra.mxu0 0
        %5176 = vmatprep.subr.bf16.mxu0 0
        %5177 = vmatpush1.bf16.msra.mxu0 0
        %5178 = vmatprep.subr.bf16.mxu0 0
        %5179 = vmatpush1.bf16.msra.mxu0 0
        %5180 = vmatprep.subr.bf16.mxu0 0
        %5181 = vmatpush1.bf16.msra.mxu0 0
        %5182 = vmatprep.subr.bf16.mxu0 0
        %5183 = vmatpush1.bf16.msra.mxu0 0
        %5184 = vmatprep.subr.bf16.mxu0 0
        %5185 = vmatpush1.bf16.msra.mxu0 0
        %5186 = vmatprep.subr.bf16.mxu0 0
        %5187 = vmatpush1.bf16.msra.mxu0 0
        %5188 = vmatprep.subr.bf16.mxu0 0
        %5189 = vmatpush1.bf16.msra.mxu0 0
        %5190 = vmatprep.subr.bf16.mxu0 0
        %5191 = vmatpush1.bf16.msra.mxu0 0
        %5192 = vmatprep.mubr.bf16.mxu0 0
        %5193 = vmatmul.mubr.bf16.gmra.mrb[0].mxu0 %v5155
        %v5194 = vpop.f32.mrb[0].mxu0
        %v5195 = vadd.f32 0.0, %v5194
        %v5196 = vpop.f32.mrb[0].mxu0
        %v5197 = vpop.f32.mrb[0].mxu0
        %v5198 = vpop.f32.mrb[0].mxu0
        %5199 = vdwg.mxu0
        %v5200 = vpack.c.bf16 %v5195, %v5195
        %v5202 = vsel %vm1335, %v5200, 0
        %v5205 = vsel %vm1399, %v4908, 0
        %5207 = vmatprep.subr.bf16.mxu0 0
        %5208 = vmatpush1.bf16.msra.mxu0 %v5205
        %5209 = vmatprep.subr.bf16.mxu0 0
        %5210 = vmatpush1.bf16.msra.mxu0 0
        %5211 = vmatprep.subr.bf16.mxu0 0
        %5212 = vmatpush1.bf16.msra.mxu0 0
        %5213 = vmatprep.subr.bf16.mxu0 0
        %5214 = vmatpush1.bf16.msra.mxu0 0
        %5215 = vmatprep.subr.bf16.mxu0 0
        %5216 = vmatpush1.bf16.msra.mxu0 0
        %5217 = vmatprep.subr.bf16.mxu0 0
        %5218 = vmatpush1.bf16.msra.mxu0 0
        %5219 = vmatprep.subr.bf16.mxu0 0
        %5220 = vmatpush1.bf16.msra.mxu0 0
        %5221 = vmatprep.subr.bf16.mxu0 0
        %5222 = vmatpush1.bf16.msra.mxu0 0
        %5223 = vmatprep.subr.bf16.mxu0 0
        %5224 = vmatpush1.bf16.msra.mxu0 0
        %5225 = vmatprep.subr.bf16.mxu0 0
        %5226 = vmatpush1.bf16.msra.mxu0 0
        %5227 = vmatprep.subr.bf16.mxu0 0
        %5228 = vmatpush1.bf16.msra.mxu0 0
        %5229 = vmatprep.subr.bf16.mxu0 0
        %5230 = vmatpush1.bf16.msra.mxu0 0
        %5231 = vmatprep.subr.bf16.mxu0 0
        %5232 = vmatpush1.bf16.msra.mxu0 0
        %5233 = vmatprep.subr.bf16.mxu0 0
        %5234 = vmatpush1.bf16.msra.mxu0 0
        %5235 = vmatprep.subr.bf16.mxu0 0
        %5236 = vmatpush1.bf16.msra.mxu0 0
        %5237 = vmatprep.subr.bf16.mxu0 0
        %5238 = vmatpush1.bf16.msra.mxu0 0
        %5239 = vmatprep.mubr.bf16.mxu0 0
        %5240 = vmatmul.mubr.bf16.gmra.mrb[0].mxu0 %v5202
        %v5241 = vpop.f32.mrb[0].mxu0
        %v5242 = vadd.f32 0.0, %v5241
        %v5243 = vpop.f32.mrb[0].mxu0
        %v5244 = vpop.f32.mrb[0].mxu0
        %v5245 = vpop.f32.mrb[0].mxu0
        %5246 = vdwg.mxu0
        %v5248 = vsel %vm1335, %v5089, 0
        %v5251 = vsel %vm1399, %v4907, 0
        %5253 = vmatprep.subr.bf16.mxu0 0
        %5254 = vmatpush1.bf16.msra.mxu0 %v5251
        %5255 = vmatprep.subr.bf16.mxu0 0
        %5256 = vmatpush1.bf16.msra.mxu0 0
        %5257 = vmatprep.subr.bf16.mxu0 0
        %5258 = vmatpush1.bf16.msra.mxu0 0
        %5259 = vmatprep.subr.bf16.mxu0 0
        %5260 = vmatpush1.bf16.msra.mxu0 0
        %5261 = vmatprep.subr.bf16.mxu0 0
        %5262 = vmatpush1.bf16.msra.mxu0 0
        %5263 = vmatprep.subr.bf16.mxu0 0
        %5264 = vmatpush1.bf16.msra.mxu0 0
        %5265 = vmatprep.subr.bf16.mxu0 0
        %5266 = vmatpush1.bf16.msra.mxu0 0
        %5267 = vmatprep.subr.bf16.mxu0 0
        %5268 = vmatpush1.bf16.msra.mxu0 0
        %5269 = vmatprep.subr.bf16.mxu0 0
        %5270 = vmatpush1.bf16.msra.mxu0 0
        %5271 = vmatprep.subr.bf16.mxu0 0
        %5272 = vmatpush1.bf16.msra.mxu0 0
        %5273 = vmatprep.subr.bf16.mxu0 0
        %5274 = vmatpush1.bf16.msra.mxu0 0
        %5275 = vmatprep.subr.bf16.mxu0 0
        %5276 = vmatpush1.bf16.msra.mxu0 0
        %5277 = vmatprep.subr.bf16.mxu0 0
        %5278 = vmatpush1.bf16.msra.mxu0 0
        %5279 = vmatprep.subr.bf16.mxu0 0
        %5280 = vmatpush1.bf16.msra.mxu0 0
        %5281 = vmatprep.subr.bf16.mxu0 0
        %5282 = vmatpush1.bf16.msra.mxu0 0
        %5283 = vmatprep.subr.bf16.mxu0 0
        %5284 = vmatpush1.bf16.msra.mxu0 0
        %5285 = vmatprep.mubr.bf16.mxu0 0
        %5286 = vmatmul.mubr.bf16.gmra.mrb[0].mxu0 %v5248
        %v5287 = vpop.f32.mrb[0].mxu0
        %v5288 = vadd.f32 %v5242, %v5287
        %v5289 = vpop.f32.mrb[0].mxu0
        %v5290 = vpop.f32.mrb[0].mxu0
        %v5291 = vpop.f32.mrb[0].mxu0
        %5292 = vdwg.mxu0
        %5293 = vrot.lane.b32.xlu0 %v4979, 112
        %v5294 = vpop.permute.xlu0 %5293
        %5295 = vrot.lane.b32.xlu0 %v4979, 80
        %v5296 = vpop.permute.xlu0 %5295
        %v5298 = vsel %vm1335, %v5294, 0
        %v5301 = vsel %vm1335, %v5296, 0
        %5303 = vmatprep.subr.bf16.mxu0 0
        %5304 = vmatpush1.bf16.xpose.msra.mxu0 %v5301
        %5305 = vmatprep.subr.bf16.mxu0 0
        %5306 = vmatpush1.bf16.xpose.msra.mxu0 0
        %5307 = vmatprep.subr.bf16.mxu0 0
        %5308 = vmatpush1.bf16.xpose.msra.mxu0 0
        %5309 = vmatprep.subr.bf16.mxu0 0
        %5310 = vmatpush1.bf16.xpose.msra.mxu0 0
        %5311 = vmatprep.subr.bf16.mxu0 0
        %5312 = vmatpush1.bf16.xpose.msra.mxu0 0
        %5313 = vmatprep.subr.bf16.mxu0 0
        %5314 = vmatpush1.bf16.xpose.msra.mxu0 0
        %5315 = vmatprep.subr.bf16.mxu0 0
        %5316 = vmatpush1.bf16.xpose.msra.mxu0 0
        %5317 = vmatprep.subr.bf16.mxu0 0
        %5318 = vmatpush1.bf16.xpose.msra.mxu0 0
        %5319 = vmatprep.subr.bf16.mxu0 0
        %5320 = vmatpush1.bf16.xpose.msra.mxu0 0
        %5321 = vmatprep.subr.bf16.mxu0 0
        %5322 = vmatpush1.bf16.xpose.msra.mxu0 0
        %5323 = vmatprep.subr.bf16.mxu0 0
        %5324 = vmatpush1.bf16.xpose.msra.mxu0 0
        %5325 = vmatprep.subr.bf16.mxu0 0
        %5326 = vmatpush1.bf16.xpose.msra.mxu0 0
        %5327 = vmatprep.subr.bf16.mxu0 0
        %5328 = vmatpush1.bf16.xpose.msra.mxu0 0
        %5329 = vmatprep.subr.bf16.mxu0 0
        %5330 = vmatpush1.bf16.xpose.msra.mxu0 0
        %5331 = vmatprep.subr.bf16.mxu0 0
        %5332 = vmatpush1.bf16.xpose.msra.mxu0 0
        %5333 = vmatprep.subr.bf16.mxu0 0
        %5334 = vmatpush1.bf16.xpose.msra.mxu0 0
        %5335 = vmatprep.mubr.bf16.mxu0 0
        %5336 = vmatmul.mubr.bf16.gmra.mrb[0].mxu0 %v5298
        %v5337 = vpop.f32.mrb[0].mxu0
        %v5338 = vadd.f32 %v3134, %v5337
        %v5339 = vpop.f32.mrb[0].mxu0
        %v5340 = vpop.f32.mrb[0].mxu0
        %v5341 = vpop.f32.mrb[0].mxu0
        %5342 = vdwg.mxu0
        %v5343 = vsel %vm1335, %v5338, -inf
        %5344 = vmax.xlane.f32.xlu0 %v5343
        %v5345 = vpop.xlane.xlu0 %5344
        %v5346 = vsub.f32 %v5338, %v5345
        %v5347 = vmul.f32 %v5346, 1.442695
        %v5348 = vpow.pop %v5347
        %v5349 = vsel %vm1335, %v5348, 0.0
        %5350 = vadd.xlane.f32.xlu0 %v5349
        %v5351 = vpop.xlane.xlu0 %5350
        %v5352 = vrcp.pop %v5351
        %v5353 = vmul.f32 %v5348, %v5352
        %v5354 = vpack.c.bf16 %v5353, %v5353
        %5355 = vrot.lane.b32.xlu0 %v4979, 48
        %v5356 = vpop.permute.xlu0 %5355
        %v5358 = vsel %vm1335, %v5354, 0
        %v5361 = vsel %vm1399, %v5356, 0
        %5363 = vmatprep.subr.bf16.mxu0 0
        %5364 = vmatpush1.bf16.msra.mxu0 %v5361
        %5365 = vmatprep.subr.bf16.mxu0 0
        %5366 = vmatpush1.bf16.msra.mxu0 0
        %5367 = vmatprep.subr.bf16.mxu0 0
        %5368 = vmatpush1.bf16.msra.mxu0 0
        %5369 = vmatprep.subr.bf16.mxu0 0
        %5370 = vmatpush1.bf16.msra.mxu0 0
        %5371 = vmatprep.subr.bf16.mxu0 0
        %5372 = vmatpush1.bf16.msra.mxu0 0
        %5373 = vmatprep.subr.bf16.mxu0 0
        %5374 = vmatpush1.bf16.msra.mxu0 0
        %5375 = vmatprep.subr.bf16.mxu0 0
        %5376 = vmatpush1.bf16.msra.mxu0 0
        %5377 = vmatprep.subr.bf16.mxu0 0
        %5378 = vmatpush1.bf16.msra.mxu0 0
        %5379 = vmatprep.subr.bf16.mxu0 0
        %5380 = vmatpush1.bf16.msra.mxu0 0
        %5381 = vmatprep.subr.bf16.mxu0 0
        %5382 = vmatpush1.bf16.msra.mxu0 0
        %5383 = vmatprep.subr.bf16.mxu0 0
        %5384 = vmatpush1.bf16.msra.mxu0 0
        %5385 = vmatprep.subr.bf16.mxu0 0
        %5386 = vmatpush1.bf16.msra.mxu0 0
        %5387 = vmatprep.subr.bf16.mxu0 0
        %5388 = vmatpush1.bf16.msra.mxu0 0
        %5389 = vmatprep.subr.bf16.mxu0 0
        %5390 = vmatpush1.bf16.msra.mxu0 0
        %5391 = vmatprep.subr.bf16.mxu0 0
        %5392 = vmatpush1.bf16.msra.mxu0 0
        %5393 = vmatprep.subr.bf16.mxu0 0
        %5394 = vmatpush1.bf16.msra.mxu0 0
        %5395 = vmatprep.mubr.bf16.mxu0 0
        %5396 = vmatmul.mubr.bf16.gmra.mrb[0].mxu0 %v5358
        %v5397 = vpop.f32.mrb[0].mxu0
        %v5398 = vadd.f32 0.0, %v5397
        %v5399 = vpop.f32.mrb[0].mxu0
        %v5400 = vpop.f32.mrb[0].mxu0
        %v5401 = vpop.f32.mrb[0].mxu0
        %5402 = vdwg.mxu0
        %v5403 = vpack.c.bf16 %v5398, %v5398
        %v5405 = vsel %vm1335, %v5403, 0
        %v5408 = vsel %vm1399, %v4909, 0
        %5410 = vmatprep.subr.bf16.mxu0 0
        %5411 = vmatpush1.bf16.msra.mxu0 %v5408
        %5412 = vmatprep.subr.bf16.mxu0 0
        %5413 = vmatpush1.bf16.msra.mxu0 0
        %5414 = vmatprep.subr.bf16.mxu0 0
        %5415 = vmatpush1.bf16.msra.mxu0 0
        %5416 = vmatprep.subr.bf16.mxu0 0
        %5417 = vmatpush1.bf16.msra.mxu0 0
        %5418 = vmatprep.subr.bf16.mxu0 0
        %5419 = vmatpush1.bf16.msra.mxu0 0
        %5420 = vmatprep.subr.bf16.mxu0 0
        %5421 = vmatpush1.bf16.msra.mxu0 0
        %5422 = vmatprep.subr.bf16.mxu0 0
        %5423 = vmatpush1.bf16.msra.mxu0 0
        %5424 = vmatprep.subr.bf16.mxu0 0
        %5425 = vmatpush1.bf16.msra.mxu0 0
        %5426 = vmatprep.subr.bf16.mxu0 0
        %5427 = vmatpush1.bf16.msra.mxu0 0
        %5428 = vmatprep.subr.bf16.mxu0 0
        %5429 = vmatpush1.bf16.msra.mxu0 0
        %5430 = vmatprep.subr.bf16.mxu0 0
        %5431 = vmatpush1.bf16.msra.mxu0 0
        %5432 = vmatprep.subr.bf16.mxu0 0
        %5433 = vmatpush1.bf16.msra.mxu0 0
        %5434 = vmatprep.subr.bf16.mxu0 0
        %5435 = vmatpush1.bf16.msra.mxu0 0
        %5436 = vmatprep.subr.bf16.mxu0 0
        %5437 = vmatpush1.bf16.msra.mxu0 0
        %5438 = vmatprep.subr.bf16.mxu0 0
        %5439 = vmatpush1.bf16.msra.mxu0 0
        %5440 = vmatprep.subr.bf16.mxu0 0
        %5441 = vmatpush1.bf16.msra.mxu0 0
        %5442 = vmatprep.mubr.bf16.mxu0 0
        %5443 = vmatmul.mubr.bf16.gmra.mrb[0].mxu0 %v5405
        %v5444 = vpop.f32.mrb[0].mxu0
        %v5445 = vadd.f32 0.0, %v5444
        %v5446 = vpop.f32.mrb[0].mxu0
        %v5447 = vpop.f32.mrb[0].mxu0
        %v5448 = vpop.f32.mrb[0].mxu0
        %5449 = vdwg.mxu0
        %v5450 = vadd.f32 %v5288, %v5445
        %5451 = vrot.lane.b32.xlu0 %v4979, 104
        %v5452 = vpop.permute.xlu0 %5451
        %5453 = vrot.lane.b32.xlu0 %v4979, 72
        %v5454 = vpop.permute.xlu0 %5453
        %v5456 = vsel %vm1335, %v5452, 0
        %v5459 = vsel %vm1335, %v5454, 0
        %5461 = vmatprep.subr.bf16.mxu0 0
        %5462 = vmatpush1.bf16.xpose.msra.mxu0 %v5459
        %5463 = vmatprep.subr.bf16.mxu0 0
        %5464 = vmatpush1.bf16.xpose.msra.mxu0 0
        %5465 = vmatprep.subr.bf16.mxu0 0
        %5466 = vmatpush1.bf16.xpose.msra.mxu0 0
        %5467 = vmatprep.subr.bf16.mxu0 0
        %5468 = vmatpush1.bf16.xpose.msra.mxu0 0
        %5469 = vmatprep.subr.bf16.mxu0 0
        %5470 = vmatpush1.bf16.xpose.msra.mxu0 0
        %5471 = vmatprep.subr.bf16.mxu0 0
        %5472 = vmatpush1.bf16.xpose.msra.mxu0 0
        %5473 = vmatprep.subr.bf16.mxu0 0
        %5474 = vmatpush1.bf16.xpose.msra.mxu0 0
        %5475 = vmatprep.subr.bf16.mxu0 0
        %5476 = vmatpush1.bf16.xpose.msra.mxu0 0
        %5477 = vmatprep.subr.bf16.mxu0 0
        %5478 = vmatpush1.bf16.xpose.msra.mxu0 0
        %5479 = vmatprep.subr.bf16.mxu0 0
        %5480 = vmatpush1.bf16.xpose.msra.mxu0 0
        %5481 = vmatprep.subr.bf16.mxu0 0
        %5482 = vmatpush1.bf16.xpose.msra.mxu0 0
        %5483 = vmatprep.subr.bf16.mxu0 0
        %5484 = vmatpush1.bf16.xpose.msra.mxu0 0
        %5485 = vmatprep.subr.bf16.mxu0 0
        %5486 = vmatpush1.bf16.xpose.msra.mxu0 0
        %5487 = vmatprep.subr.bf16.mxu0 0
        %5488 = vmatpush1.bf16.xpose.msra.mxu0 0
        %5489 = vmatprep.subr.bf16.mxu0 0
        %5490 = vmatpush1.bf16.xpose.msra.mxu0 0
        %5491 = vmatprep.subr.bf16.mxu0 0
        %5492 = vmatpush1.bf16.xpose.msra.mxu0 0
        %5493 = vmatprep.mubr.bf16.mxu0 0
        %5494 = vmatmul.mubr.bf16.gmra.mrb[0].mxu0 %v5456
        %v5495 = vpop.f32.mrb[0].mxu0
        %v5496 = vadd.f32 %v3134, %v5495
        %v5497 = vpop.f32.mrb[0].mxu0
        %v5498 = vpop.f32.mrb[0].mxu0
        %v5499 = vpop.f32.mrb[0].mxu0
        %5500 = vdwg.mxu0
        %v5501 = vsel %vm1335, %v5496, -inf
        %5502 = vmax.xlane.f32.xlu0 %v5501
        %v5503 = vpop.xlane.xlu0 %5502
        %v5504 = vsub.f32 %v5496, %v5503
        %v5505 = vmul.f32 %v5504, 1.442695
        %v5506 = vpow.pop %v5505
        %v5507 = vsel %vm1335, %v5506, 0.0
        %5508 = vadd.xlane.f32.xlu0 %v5507
        %v5509 = vpop.xlane.xlu0 %5508
        %v5510 = vrcp.pop %v5509
        %v5511 = vmul.f32 %v5506, %v5510
        %v5512 = vpack.c.bf16 %v5511, %v5511
        %5513 = vrot.lane.b32.xlu0 %v4979, 40
        %v5514 = vpop.permute.xlu0 %5513
        %v5516 = vsel %vm1335, %v5512, 0
        %v5519 = vsel %vm1399, %v5514, 0
        %5521 = vmatprep.subr.bf16.mxu0 0
        %5522 = vmatpush1.bf16.msra.mxu0 %v5519
        %5523 = vmatprep.subr.bf16.mxu0 0
        %5524 = vmatpush1.bf16.msra.mxu0 0
        %5525 = vmatprep.subr.bf16.mxu0 0
        %5526 = vmatpush1.bf16.msra.mxu0 0
        %5527 = vmatprep.subr.bf16.mxu0 0
        %5528 = vmatpush1.bf16.msra.mxu0 0
        %5529 = vmatprep.subr.bf16.mxu0 0
        %5530 = vmatpush1.bf16.msra.mxu0 0
        %5531 = vmatprep.subr.bf16.mxu0 0
        %5532 = vmatpush1.bf16.msra.mxu0 0
        %5533 = vmatprep.subr.bf16.mxu0 0
        %5534 = vmatpush1.bf16.msra.mxu0 0
        %5535 = vmatprep.subr.bf16.mxu0 0
        %5536 = vmatpush1.bf16.msra.mxu0 0
        %5537 = vmatprep.subr.bf16.mxu0 0
        %5538 = vmatpush1.bf16.msra.mxu0 0
        %5539 = vmatprep.subr.bf16.mxu0 0
        %5540 = vmatpush1.bf16.msra.mxu0 0
        %5541 = vmatprep.subr.bf16.mxu0 0
        %5542 = vmatpush1.bf16.msra.mxu0 0
        %5543 = vmatprep.subr.bf16.mxu0 0
        %5544 = vmatpush1.bf16.msra.mxu0 0
        %5545 = vmatprep.subr.bf16.mxu0 0
        %5546 = vmatpush1.bf16.msra.mxu0 0
        %5547 = vmatprep.subr.bf16.mxu0 0
        %5548 = vmatpush1.bf16.msra.mxu0 0
        %5549 = vmatprep.subr.bf16.mxu0 0
        %5550 = vmatpush1.bf16.msra.mxu0 0
        %5551 = vmatprep.subr.bf16.mxu0 0
        %5552 = vmatpush1.bf16.msra.mxu0 0
        %5553 = vmatprep.mubr.bf16.mxu0 0
        %5554 = vmatmul.mubr.bf16.gmra.mrb[0].mxu0 %v5516
        %v5555 = vpop.f32.mrb[0].mxu0
        %v5556 = vadd.f32 0.0, %v5555
        %v5557 = vpop.f32.mrb[0].mxu0
        %v5558 = vpop.f32.mrb[0].mxu0
        %v5559 = vpop.f32.mrb[0].mxu0
        %5560 = vdwg.mxu0
        %v5561 = vpack.c.bf16 %v5556, %v5556
        %v5563 = vsel %vm1335, %v5561, 0
        %v5566 = vsel %vm1399, %v4910, 0
        %5568 = vmatprep.subr.bf16.mxu0 0
        %5569 = vmatpush1.bf16.msra.mxu0 %v5566
        %5570 = vmatprep.subr.bf16.mxu0 0
        %5571 = vmatpush1.bf16.msra.mxu0 0
        %5572 = vmatprep.subr.bf16.mxu0 0
        %5573 = vmatpush1.bf16.msra.mxu0 0
        %5574 = vmatprep.subr.bf16.mxu0 0
        %5575 = vmatpush1.bf16.msra.mxu0 0
        %5576 = vmatprep.subr.bf16.mxu0 0
        %5577 = vmatpush1.bf16.msra.mxu0 0
        %5578 = vmatprep.subr.bf16.mxu0 0
        %5579 = vmatpush1.bf16.msra.mxu0 0
        %5580 = vmatprep.subr.bf16.mxu0 0
        %5581 = vmatpush1.bf16.msra.mxu0 0
        %5582 = vmatprep.subr.bf16.mxu0 0
        %5583 = vmatpush1.bf16.msra.mxu0 0
        %5584 = vmatprep.subr.bf16.mxu0 0
        %5585 = vmatpush1.bf16.msra.mxu0 0
        %5586 = vmatprep.subr.bf16.mxu0 0
        %5587 = vmatpush1.bf16.msra.mxu0 0
        %5588 = vmatprep.subr.bf16.mxu0 0
        %5589 = vmatpush1.bf16.msra.mxu0 0
        %5590 = vmatprep.subr.bf16.mxu0 0
        %5591 = vmatpush1.bf16.msra.mxu0 0
        %5592 = vmatprep.subr.bf16.mxu0 0
        %5593 = vmatpush1.bf16.msra.mxu0 0
        %5594 = vmatprep.subr.bf16.mxu0 0
        %5595 = vmatpush1.bf16.msra.mxu0 0
        %5596 = vmatprep.subr.bf16.mxu0 0
        %5597 = vmatpush1.bf16.msra.mxu0 0
        %5598 = vmatprep.subr.bf16.mxu0 0
        %5599 = vmatpush1.bf16.msra.mxu0 0
        %5600 = vmatprep.mubr.bf16.mxu0 0
        %5601 = vmatmul.mubr.bf16.gmra.mrb[0].mxu0 %v5563
        %v5602 = vpop.f32.mrb[0].mxu0
        %v5603 = vadd.f32 0.0, %v5602
        %v5604 = vpop.f32.mrb[0].mxu0
        %v5605 = vpop.f32.mrb[0].mxu0
        %v5606 = vpop.f32.mrb[0].mxu0
        %5607 = vdwg.mxu0
        %v5608 = vadd.f32 %v5450, %v5603
        %v5610 = vlaneseq
        %v5611 = vshrl.u32 %v5610, 7
        %v5612 = vsub.s32 0, %v5611
        %v5613 = vrot.slane %v4912, %v5612
        %v5615 = vadd.f32 %v5608, %v5613
        %v5616 = vadd.f32 %v5615, %v4898
        %v5617 = vsel %vm1228, %v5616, 0.0
        %5618 = vadd.xlane.f32.xlu0 %v5617
        %v5619 = vpop.xlane.xlu0 %5618
        %v5620 = vmul.f32 %v5619, %v1232
        %v5621 = vsub.f32 %v5616, %v5620
        %v5622 = vmul.f32 %v5621, %v5621
        %v5623 = vsel %vm1228, %v5622, 0.0
        %5624 = vadd.xlane.f32.xlu0 %v5623
        %v5625 = vpop.xlane.xlu0 %5624
        %v5626 = vmul.f32 %v5625, %v1232
        %v5627 = vadd.f32 %v5626, 1e-05
        %v5628 = vrsqrt.pop %v5627
        %v5629 = vmul.f32 %v5621, %v5628
        %v5631 = vlaneseq
        %v5632 = vshrl.u32 %v5631, 7
        %v5633 = vsub.s32 0, %v5632
        %v5634 = vrot.slane %v4914, %v5633
        %v5636 = vmul.f32 %v5629, %v5634
        %v5638 = vlaneseq
        %v5639 = vshrl.u32 %v5638, 7
        %v5640 = vsub.s32 0, %v5639
        %v5641 = vrot.slane %v4916, %v5640
        %v5643 = vadd.f32 %v5636, %v5641
        %s5644 = scalar_lea.vmem %s49, 16
        %v5645 = vld [vmem:[%s5644] sm:$0xf]
        %v5646 = vld [vmem:[%s5644 + $0x4] sm:$0xf]
        %v5647 = vld [vmem:[%s5644 + $0x8] sm:$0xf]
        %v5648 = vld [vmem:[%s5644 + $0xc] sm:$0xf]
        %s5649 = scalar_lea.vmem %s51, 1
        %v5650 = vld [vmem:[%s5649] sm:$0x1]
        %s5651 = scalar_lea.vmem %s53, 16
        %v5652 = vld [vmem:[%s5651] sm:$0xf]
        %v5653 = vld [vmem:[%s5651 + $0x4] sm:$0xf]
        %v5654 = vld [vmem:[%s5651 + $0x8] sm:$0xf]
        %v5655 = vld [vmem:[%s5651 + $0xc] sm:$0xf]
        %s5656 = scalar_lea.vmem %s55, 1
        %v5657 = vld [vmem:[%s5656] sm:$0x1]
        %s5658 = scalar_lea.vmem %s57, 16
        %v5659 = vld [vmem:[%s5658] sm:$0xf]
        %v5660 = vld [vmem:[%s5658 + $0x4] sm:$0xf]
        %v5661 = vld [vmem:[%s5658 + $0x8] sm:$0xf]
        %v5662 = vld [vmem:[%s5658 + $0xc] sm:$0xf]
        %s5663 = scalar_lea.vmem %s59, 1
        %v5664 = vld [vmem:[%s5663] sm:$0x1]
        %s5665 = scalar_lea.vmem %s61, 1
        %v5666 = vld [vmem:[%s5665] sm:$0x1]
        %s5667 = scalar_lea.vmem %s63, 1
        %v5668 = vld [vmem:[%s5667] sm:$0x1]
        %v5669 = vpack.c.bf16 %v5643, %v5643
        %v5671 = vlaneseq
        %v5672 = vshrl.u32 %v5671, 7
        %v5673 = vsub.s32 0, %v5672
        %v5674 = vrot.slane %v5650, %v5673
        %v5680 = vunpack.c.l.b16 %v5645
        %v5681 = vunpack.c.l.b16 %v5646
        %v5682 = vunpack.c.l.b16 %v5647
        %v5683 = vunpack.c.l.b16 %v5648
        %v5684 = vpack.c.b16 %v5681, %v5680
        %v5685 = vpack.c.b16 %v5683, %v5682
        %v5689 = vsel %vm1228, %v5669, 0
        %5691 = vmatprep.subr.bf16.mxu0 0
        %5692 = vmatpush1.bf16.msra.mxu0 %v5684
        %5693 = vmatprep.subr.bf16.mxu0 0
        %5694 = vmatpush1.bf16.msra.mxu0 %v5685
        %5695 = vmatprep.subr.bf16.mxu0 0
        %5696 = vmatpush1.bf16.msra.mxu0 0
        %5697 = vmatprep.subr.bf16.mxu0 0
        %5698 = vmatpush1.bf16.msra.mxu0 0
        %5699 = vmatprep.subr.bf16.mxu0 0
        %5700 = vmatpush1.bf16.msra.mxu0 0
        %5701 = vmatprep.subr.bf16.mxu0 0
        %5702 = vmatpush1.bf16.msra.mxu0 0
        %5703 = vmatprep.subr.bf16.mxu0 0
        %5704 = vmatpush1.bf16.msra.mxu0 0
        %5705 = vmatprep.subr.bf16.mxu0 0
        %5706 = vmatpush1.bf16.msra.mxu0 0
        %5707 = vmatprep.subr.bf16.mxu0 0
        %5708 = vmatpush1.bf16.msra.mxu0 0
        %5709 = vmatprep.subr.bf16.mxu0 0
        %5710 = vmatpush1.bf16.msra.mxu0 0
        %5711 = vmatprep.subr.bf16.mxu0 0
        %5712 = vmatpush1.bf16.msra.mxu0 0
        %5713 = vmatprep.subr.bf16.mxu0 0
        %5714 = vmatpush1.bf16.msra.mxu0 0
        %5715 = vmatprep.subr.bf16.mxu0 0
        %5716 = vmatpush1.bf16.msra.mxu0 0
        %5717 = vmatprep.subr.bf16.mxu0 0
        %5718 = vmatpush1.bf16.msra.mxu0 0
        %5719 = vmatprep.subr.bf16.mxu0 0
        %5720 = vmatpush1.bf16.msra.mxu0 0
        %5721 = vmatprep.subr.bf16.mxu0 0
        %5722 = vmatpush1.bf16.msra.mxu0 0
        %5723 = vmatprep.mubr.bf16.mxu0 0
        %5724 = vmatmul.mubr.bf16.gmra.mrb[0].mxu0 %v5689
        %v5725 = vpop.f32.mrb[0].mxu0
        %v5726 = vadd.f32 %v5674, %v5725
        %v5727 = vpop.f32.mrb[0].mxu0
        %v5728 = vpop.f32.mrb[0].mxu0
        %v5729 = vpop.f32.mrb[0].mxu0
        %5730 = vdwg.mxu0
        %v5732 = vlaneseq
        %v5733 = vshrl.u32 %v5732, 7
        %v5734 = vsub.s32 0, %v5733
        %v5735 = vrot.slane %v5657, %v5734
        %v5741 = vunpack.c.l.b16 %v5652
        %v5742 = vunpack.c.l.b16 %v5653
        %v5743 = vunpack.c.l.b16 %v5654
        %v5744 = vunpack.c.l.b16 %v5655
        %v5745 = vpack.c.b16 %v5742, %v5741
        %v5746 = vpack.c.b16 %v5744, %v5743
        %5749 = vmatprep.subr.bf16.mxu0 0
        %5750 = vmatpush1.bf16.msra.mxu0 %v5745
        %5751 = vmatprep.subr.bf16.mxu0 0
        %5752 = vmatpush1.bf16.msra.mxu0 %v5746
        %5753 = vmatprep.subr.bf16.mxu0 0
        %5754 = vmatpush1.bf16.msra.mxu0 0
        %5755 = vmatprep.subr.bf16.mxu0 0
        %5756 = vmatpush1.bf16.msra.mxu0 0
        %5757 = vmatprep.subr.bf16.mxu0 0
        %5758 = vmatpush1.bf16.msra.mxu0 0
        %5759 = vmatprep.subr.bf16.mxu0 0
        %5760 = vmatpush1.bf16.msra.mxu0 0
        %5761 = vmatprep.subr.bf16.mxu0 0
        %5762 = vmatpush1.bf16.msra.mxu0 0
        %5763 = vmatprep.subr.bf16.mxu0 0
        %5764 = vmatpush1.bf16.msra.mxu0 0
        %5765 = vmatprep.subr.bf16.mxu0 0
        %5766 = vmatpush1.bf16.msra.mxu0 0
        %5767 = vmatprep.subr.bf16.mxu0 0
        %5768 = vmatpush1.bf16.msra.mxu0 0
        %5769 = vmatprep.subr.bf16.mxu0 0
        %5770 = vmatpush1.bf16.msra.mxu0 0
        %5771 = vmatprep.subr.bf16.mxu0 0
        %5772 = vmatpush1.bf16.msra.mxu0 0
        %5773 = vmatprep.subr.bf16.mxu0 0
        %5774 = vmatpush1.bf16.msra.mxu0 0
        %5775 = vmatprep.subr.bf16.mxu0 0
        %5776 = vmatpush1.bf16.msra.mxu0 0
        %5777 = vmatprep.subr.bf16.mxu0 0
        %5778 = vmatpush1.bf16.msra.mxu0 0
        %5779 = vmatprep.subr.bf16.mxu0 0
        %5780 = vmatpush1.bf16.msra.mxu0 0
        %5781 = vmatprep.mubr.bf16.mxu0 0
        %5782 = vmatmul.mubr.bf16.gmra.mrb[0].mxu0 %v4003
        %v5783 = vpop.f32.mrb[0].mxu0
        %v5784 = vadd.f32 %v5735, %v5783
        %v5785 = vpop.f32.mrb[0].mxu0
        %v5786 = vpop.f32.mrb[0].mxu0
        %v5787 = vpop.f32.mrb[0].mxu0
        %5788 = vdwg.mxu0
        %v5789 = vpack.c.bf16 %v5726, %v5726
        %v5790 = vpack.c.bf16 %v5784, %v5784
        %v5792 = vsel %vm1335, %v5789, 0
        %v5795 = vsel %vm1335, %v5790, 0
        %5797 = vmatprep.subr.bf16.mxu0 0
        %5798 = vmatpush1.bf16.xpose.msra.mxu0 %v5795
        %5799 = vmatprep.subr.bf16.mxu0 0
        %5800 = vmatpush1.bf16.xpose.msra.mxu0 0
        %5801 = vmatprep.subr.bf16.mxu0 0
        %5802 = vmatpush1.bf16.xpose.msra.mxu0 0
        %5803 = vmatprep.subr.bf16.mxu0 0
        %5804 = vmatpush1.bf16.xpose.msra.mxu0 0
        %5805 = vmatprep.subr.bf16.mxu0 0
        %5806 = vmatpush1.bf16.xpose.msra.mxu0 0
        %5807 = vmatprep.subr.bf16.mxu0 0
        %5808 = vmatpush1.bf16.xpose.msra.mxu0 0
        %5809 = vmatprep.subr.bf16.mxu0 0
        %5810 = vmatpush1.bf16.xpose.msra.mxu0 0
        %5811 = vmatprep.subr.bf16.mxu0 0
        %5812 = vmatpush1.bf16.xpose.msra.mxu0 0
        %5813 = vmatprep.subr.bf16.mxu0 0
        %5814 = vmatpush1.bf16.xpose.msra.mxu0 0
        %5815 = vmatprep.subr.bf16.mxu0 0
        %5816 = vmatpush1.bf16.xpose.msra.mxu0 0
        %5817 = vmatprep.subr.bf16.mxu0 0
        %5818 = vmatpush1.bf16.xpose.msra.mxu0 0
        %5819 = vmatprep.subr.bf16.mxu0 0
        %5820 = vmatpush1.bf16.xpose.msra.mxu0 0
        %5821 = vmatprep.subr.bf16.mxu0 0
        %5822 = vmatpush1.bf16.xpose.msra.mxu0 0
        %5823 = vmatprep.subr.bf16.mxu0 0
        %5824 = vmatpush1.bf16.xpose.msra.mxu0 0
        %5825 = vmatprep.subr.bf16.mxu0 0
        %5826 = vmatpush1.bf16.xpose.msra.mxu0 0
        %5827 = vmatprep.subr.bf16.mxu0 0
        %5828 = vmatpush1.bf16.xpose.msra.mxu0 0
        %5829 = vmatprep.mubr.bf16.mxu0 0
        %5830 = vmatmul.mubr.bf16.gmra.mrb[0].mxu0 %v5792
        %v5831 = vpop.f32.mrb[0].mxu0
        %v5832 = vadd.f32 0.0, %v5831
        %v5833 = vpop.f32.mrb[0].mxu0
        %v5834 = vpop.f32.mrb[0].mxu0
        %v5835 = vpop.f32.mrb[0].mxu0
        %5836 = vdwg.mxu0
        %v5837 = vsel %vm1335, %v5832, -inf
        %5838 = vmax.xlane.f32.xlu0 %v5837
        %v5839 = vpop.xlane.xlu0 %5838
        %v5840 = vsub.f32 %v5832, %v5839
        %v5841 = vmul.f32 %v5840, 1.442695
        %v5842 = vpow.pop %v5841
        %v5843 = vsel %vm1335, %v5842, 0.0
        %5844 = vadd.xlane.f32.xlu0 %v5843
        %v5845 = vpop.xlane.xlu0 %5844
        %v5846 = vrcp.pop %v5845
        %v5847 = vmul.f32 %v5842, %v5846
        %v5848 = vpack.c.bf16 %v5847, %v5847
        %5850 = vrot.lane.b32.xlu0 %v5790, 96
        %v5851 = vpop.permute.xlu0 %5850
        %v5853 = vsel %vm1335, %v5848, 0
        %v5856 = vsel %vm1399, %v5851, 0
        %5858 = vmatprep.subr.bf16.mxu0 0
        %5859 = vmatpush1.bf16.msra.mxu0 %v5856
        %5860 = vmatprep.subr.bf16.mxu0 0
        %5861 = vmatpush1.bf16.msra.mxu0 0
        %5862 = vmatprep.subr.bf16.mxu0 0
        %5863 = vmatpush1.bf16.msra.mxu0 0
        %5864 = vmatprep.subr.bf16.mxu0 0
        %5865 = vmatpush1.bf16.msra.mxu0 0
        %5866 = vmatprep.subr.bf16.mxu0 0
        %5867 = vmatpush1.bf16.msra.mxu0 0
        %5868 = vmatprep.subr.bf16.mxu0 0
        %5869 = vmatpush1.bf16.msra.mxu0 0
        %5870 = vmatprep.subr.bf16.mxu0 0
        %5871 = vmatpush1.bf16.msra.mxu0 0
        %5872 = vmatprep.subr.bf16.mxu0 0
        %5873 = vmatpush1.bf16.msra.mxu0 0
        %5874 = vmatprep.subr.bf16.mxu0 0
        %5875 = vmatpush1.bf16.msra.mxu0 0
        %5876 = vmatprep.subr.bf16.mxu0 0
        %5877 = vmatpush1.bf16.msra.mxu0 0
        %5878 = vmatprep.subr.bf16.mxu0 0
        %5879 = vmatpush1.bf16.msra.mxu0 0
        %5880 = vmatprep.subr.bf16.mxu0 0
        %5881 = vmatpush1.bf16.msra.mxu0 0
        %5882 = vmatprep.subr.bf16.mxu0 0
        %5883 = vmatpush1.bf16.msra.mxu0 0
        %5884 = vmatprep.subr.bf16.mxu0 0
        %5885 = vmatpush1.bf16.msra.mxu0 0
        %5886 = vmatprep.subr.bf16.mxu0 0
        %5887 = vmatpush1.bf16.msra.mxu0 0
        %5888 = vmatprep.subr.bf16.mxu0 0
        %5889 = vmatpush1.bf16.msra.mxu0 0
        %5890 = vmatprep.mubr.bf16.mxu0 0
        %5891 = vmatmul.mubr.bf16.gmra.mrb[0].mxu0 %v5853
        %v5892 = vpop.f32.mrb[0].mxu0
        %v5893 = vadd.f32 0.0, %v5892
        %v5894 = vpop.f32.mrb[0].mxu0
        %v5895 = vpop.f32.mrb[0].mxu0
        %v5896 = vpop.f32.mrb[0].mxu0
        %5897 = vdwg.mxu0
        %v5898 = vpack.c.bf16 %v5893, %v5893
        %5900 = vrot.lane.b32.xlu0 %v5789, 120
        %v5901 = vpop.permute.xlu0 %5900
        %5902 = vrot.lane.b32.xlu0 %v5790, 120
        %v5903 = vpop.permute.xlu0 %5902
        %v5905 = vsel %vm1335, %v5901, 0
        %v5908 = vsel %vm1335, %v5903, 0
        %5910 = vmatprep.subr.bf16.mxu0 0
        %5911 = vmatpush1.bf16.xpose.msra.mxu0 %v5908
        %5912 = vmatprep.subr.bf16.mxu0 0
        %5913 = vmatpush1.bf16.xpose.msra.mxu0 0
        %5914 = vmatprep.subr.bf16.mxu0 0
        %5915 = vmatpush1.bf16.xpose.msra.mxu0 0
        %5916 = vmatprep.subr.bf16.mxu0 0
        %5917 = vmatpush1.bf16.xpose.msra.mxu0 0
        %5918 = vmatprep.subr.bf16.mxu0 0
        %5919 = vmatpush1.bf16.xpose.msra.mxu0 0
        %5920 = vmatprep.subr.bf16.mxu0 0
        %5921 = vmatpush1.bf16.xpose.msra.mxu0 0
        %5922 = vmatprep.subr.bf16.mxu0 0
        %5923 = vmatpush1.bf16.xpose.msra.mxu0 0
        %5924 = vmatprep.subr.bf16.mxu0 0
        %5925 = vmatpush1.bf16.xpose.msra.mxu0 0
        %5926 = vmatprep.subr.bf16.mxu0 0
        %5927 = vmatpush1.bf16.xpose.msra.mxu0 0
        %5928 = vmatprep.subr.bf16.mxu0 0
        %5929 = vmatpush1.bf16.xpose.msra.mxu0 0
        %5930 = vmatprep.subr.bf16.mxu0 0
        %5931 = vmatpush1.bf16.xpose.msra.mxu0 0
        %5932 = vmatprep.subr.bf16.mxu0 0
        %5933 = vmatpush1.bf16.xpose.msra.mxu0 0
        %5934 = vmatprep.subr.bf16.mxu0 0
        %5935 = vmatpush1.bf16.xpose.msra.mxu0 0
        %5936 = vmatprep.subr.bf16.mxu0 0
        %5937 = vmatpush1.bf16.xpose.msra.mxu0 0
        %5938 = vmatprep.subr.bf16.mxu0 0
        %5939 = vmatpush1.bf16.xpose.msra.mxu0 0
        %5940 = vmatprep.subr.bf16.mxu0 0
        %5941 = vmatpush1.bf16.xpose.msra.mxu0 0
        %5942 = vmatprep.mubr.bf16.mxu0 0
        %5943 = vmatmul.mubr.bf16.gmra.mrb[0].mxu0 %v5905
        %v5944 = vpop.f32.mrb[0].mxu0
        %v5945 = vadd.f32 0.0, %v5944
        %v5946 = vpop.f32.mrb[0].mxu0
        %v5947 = vpop.f32.mrb[0].mxu0
        %v5948 = vpop.f32.mrb[0].mxu0
        %5949 = vdwg.mxu0
        %v5950 = vsel %vm1335, %v5945, -inf
        %5951 = vmax.xlane.f32.xlu0 %v5950
        %v5952 = vpop.xlane.xlu0 %5951
        %v5953 = vsub.f32 %v5945, %v5952
        %v5954 = vmul.f32 %v5953, 1.442695
        %v5955 = vpow.pop %v5954
        %v5956 = vsel %vm1335, %v5955, 0.0
        %5957 = vadd.xlane.f32.xlu0 %v5956
        %v5958 = vpop.xlane.xlu0 %5957
        %v5959 = vrcp.pop %v5958
        %v5960 = vmul.f32 %v5955, %v5959
        %v5961 = vpack.c.bf16 %v5960, %v5960
        %5962 = vrot.lane.b32.xlu0 %v5790, 88
        %v5963 = vpop.permute.xlu0 %5962
        %v5965 = vsel %vm1335, %v5961, 0
        %v5968 = vsel %vm1399, %v5963, 0
        %5970 = vmatprep.subr.bf16.mxu0 0
        %5971 = vmatpush1.bf16.msra.mxu0 %v5968
        %5972 = vmatprep.subr.bf16.mxu0 0
        %5973 = vmatpush1.bf16.msra.mxu0 0
        %5974 = vmatprep.subr.bf16.mxu0 0
        %5975 = vmatpush1.bf16.msra.mxu0 0
        %5976 = vmatprep.subr.bf16.mxu0 0
        %5977 = vmatpush1.bf16.msra.mxu0 0
        %5978 = vmatprep.subr.bf16.mxu0 0
        %5979 = vmatpush1.bf16.msra.mxu0 0
        %5980 = vmatprep.subr.bf16.mxu0 0
        %5981 = vmatpush1.bf16.msra.mxu0 0
        %5982 = vmatprep.subr.bf16.mxu0 0
        %5983 = vmatpush1.bf16.msra.mxu0 0
        %5984 = vmatprep.subr.bf16.mxu0 0
        %5985 = vmatpush1.bf16.msra.mxu0 0
        %5986 = vmatprep.subr.bf16.mxu0 0
        %5987 = vmatpush1.bf16.msra.mxu0 0
        %5988 = vmatprep.subr.bf16.mxu0 0
        %5989 = vmatpush1.bf16.msra.mxu0 0
        %5990 = vmatprep.subr.bf16.mxu0 0
        %5991 = vmatpush1.bf16.msra.mxu0 0
        %5992 = vmatprep.subr.bf16.mxu0 0
        %5993 = vmatpush1.bf16.msra.mxu0 0
        %5994 = vmatprep.subr.bf16.mxu0 0
        %5995 = vmatpush1.bf16.msra.mxu0 0
        %5996 = vmatprep.subr.bf16.mxu0 0
        %5997 = vmatpush1.bf16.msra.mxu0 0
        %5998 = vmatprep.subr.bf16.mxu0 0
        %5999 = vmatpush1.bf16.msra.mxu0 0
        %6000 = vmatprep.subr.bf16.mxu0 0
        %6001 = vmatpush1.bf16.msra.mxu0 0
        %6002 = vmatprep.mubr.bf16.mxu0 0
        %6003 = vmatmul.mubr.bf16.gmra.mrb[0].mxu0 %v5965
        %v6004 = vpop.f32.mrb[0].mxu0
        %v6005 = vadd.f32 0.0, %v6004
        %v6006 = vpop.f32.mrb[0].mxu0
        %v6007 = vpop.f32.mrb[0].mxu0
        %v6008 = vpop.f32.mrb[0].mxu0
        %6009 = vdwg.mxu0
        %v6010 = vpack.c.bf16 %v6005, %v6005
        %v6012 = vsel %vm1335, %v6010, 0
        %v6015 = vsel %vm1399, %v5660, 0
        %6017 = vmatprep.subr.bf16.mxu0 0
        %6018 = vmatpush1.bf16.msra.mxu0 %v6015
        %6019 = vmatprep.subr.bf16.mxu0 0
        %6020 = vmatpush1.bf16.msra.mxu0 0
        %6021 = vmatprep.subr.bf16.mxu0 0
        %6022 = vmatpush1.bf16.msra.mxu0 0
        %6023 = vmatprep.subr.bf16.mxu0 0
        %6024 = vmatpush1.bf16.msra.mxu0 0
        %6025 = vmatprep.subr.bf16.mxu0 0
        %6026 = vmatpush1.bf16.msra.mxu0 0
        %6027 = vmatprep.subr.bf16.mxu0 0
        %6028 = vmatpush1.bf16.msra.mxu0 0
        %6029 = vmatprep.subr.bf16.mxu0 0
        %6030 = vmatpush1.bf16.msra.mxu0 0
        %6031 = vmatprep.subr.bf16.mxu0 0
        %6032 = vmatpush1.bf16.msra.mxu0 0
        %6033 = vmatprep.subr.bf16.mxu0 0
        %6034 = vmatpush1.bf16.msra.mxu0 0
        %6035 = vmatprep.subr.bf16.mxu0 0
        %6036 = vmatpush1.bf16.msra.mxu0 0
        %6037 = vmatprep.subr.bf16.mxu0 0
        %6038 = vmatpush1.bf16.msra.mxu0 0
        %6039 = vmatprep.subr.bf16.mxu0 0
        %6040 = vmatpush1.bf16.msra.mxu0 0
        %6041 = vmatprep.subr.bf16.mxu0 0
        %6042 = vmatpush1.bf16.msra.mxu0 0
        %6043 = vmatprep.subr.bf16.mxu0 0
        %6044 = vmatpush1.bf16.msra.mxu0 0
        %6045 = vmatprep.subr.bf16.mxu0 0
        %6046 = vmatpush1.bf16.msra.mxu0 0
        %6047 = vmatprep.subr.bf16.mxu0 0
        %6048 = vmatpush1.bf16.msra.mxu0 0
        %6049 = vmatprep.mubr.bf16.mxu0 0
        %6050 = vmatmul.mubr.bf16.gmra.mrb[0].mxu0 %v6012
        %v6051 = vpop.f32.mrb[0].mxu0
        %v6052 = vadd.f32 0.0, %v6051
        %v6053 = vpop.f32.mrb[0].mxu0
        %v6054 = vpop.f32.mrb[0].mxu0
        %v6055 = vpop.f32.mrb[0].mxu0
        %6056 = vdwg.mxu0
        %v6058 = vsel %vm1335, %v5898, 0
        %v6061 = vsel %vm1399, %v5659, 0
        %6063 = vmatprep.subr.bf16.mxu0 0
        %6064 = vmatpush1.bf16.msra.mxu0 %v6061
        %6065 = vmatprep.subr.bf16.mxu0 0
        %6066 = vmatpush1.bf16.msra.mxu0 0
        %6067 = vmatprep.subr.bf16.mxu0 0
        %6068 = vmatpush1.bf16.msra.mxu0 0
        %6069 = vmatprep.subr.bf16.mxu0 0
        %6070 = vmatpush1.bf16.msra.mxu0 0
        %6071 = vmatprep.subr.bf16.mxu0 0
        %6072 = vmatpush1.bf16.msra.mxu0 0
        %6073 = vmatprep.subr.bf16.mxu0 0
        %6074 = vmatpush1.bf16.msra.mxu0 0
        %6075 = vmatprep.subr.bf16.mxu0 0
        %6076 = vmatpush1.bf16.msra.mxu0 0
        %6077 = vmatprep.subr.bf16.mxu0 0
        %6078 = vmatpush1.bf16.msra.mxu0 0
        %6079 = vmatprep.subr.bf16.mxu0 0
        %6080 = vmatpush1.bf16.msra.mxu0 0
        %6081 = vmatprep.subr.bf16.mxu0 0
        %6082 = vmatpush1.bf16.msra.mxu0 0
        %6083 = vmatprep.subr.bf16.mxu0 0
        %6084 = vmatpush1.bf16.msra.mxu0 0
        %6085 = vmatprep.subr.bf16.mxu0 0
        %6086 = vmatpush1.bf16.msra.mxu0 0
        %6087 = vmatprep.subr.bf16.mxu0 0
        %6088 = vmatpush1.bf16.msra.mxu0 0
        %6089 = vmatprep.subr.bf16.mxu0 0
        %6090 = vmatpush1.bf16.msra.mxu0 0
        %6091 = vmatprep.subr.bf16.mxu0 0
        %6092 = vmatpush1.bf16.msra.mxu0 0
        %6093 = vmatprep.subr.bf16.mxu0 0
        %6094 = vmatpush1.bf16.msra.mxu0 0
        %6095 = vmatprep.mubr.bf16.mxu0 0
        %6096 = vmatmul.mubr.bf16.gmra.mrb[0].mxu0 %v6058
        %v6097 = vpop.f32.mrb[0].mxu0
        %v6098 = vadd.f32 %v6052, %v6097
        %v6099 = vpop.f32.mrb[0].mxu0
        %v6100 = vpop.f32.mrb[0].mxu0
        %v6101 = vpop.f32.mrb[0].mxu0
        %6102 = vdwg.mxu0
        %6103 = vrot.lane.b32.xlu0 %v5789, 112
        %v6104 = vpop.permute.xlu0 %6103
        %6105 = vrot.lane.b32.xlu0 %v5790, 112
        %v6106 = vpop.permute.xlu0 %6105
        %v6108 = vsel %vm1335, %v6104, 0
        %v6111 = vsel %vm1335, %v6106, 0
        %6113 = vmatprep.subr.bf16.mxu0 0
        %6114 = vmatpush1.bf16.xpose.msra.mxu0 %v6111
        %6115 = vmatprep.subr.bf16.mxu0 0
        %6116 = vmatpush1.bf16.xpose.msra.mxu0 0
        %6117 = vmatprep.subr.bf16.mxu0 0
        %6118 = vmatpush1.bf16.xpose.msra.mxu0 0
        %6119 = vmatprep.subr.bf16.mxu0 0
        %6120 = vmatpush1.bf16.xpose.msra.mxu0 0
        %6121 = vmatprep.subr.bf16.mxu0 0
        %6122 = vmatpush1.bf16.xpose.msra.mxu0 0
        %6123 = vmatprep.subr.bf16.mxu0 0
        %6124 = vmatpush1.bf16.xpose.msra.mxu0 0
        %6125 = vmatprep.subr.bf16.mxu0 0
        %6126 = vmatpush1.bf16.xpose.msra.mxu0 0
        %6127 = vmatprep.subr.bf16.mxu0 0
        %6128 = vmatpush1.bf16.xpose.msra.mxu0 0
        %6129 = vmatprep.subr.bf16.mxu0 0
        %6130 = vmatpush1.bf16.xpose.msra.mxu0 0
        %6131 = vmatprep.subr.bf16.mxu0 0
        %6132 = vmatpush1.bf16.xpose.msra.mxu0 0
        %6133 = vmatprep.subr.bf16.mxu0 0
        %6134 = vmatpush1.bf16.xpose.msra.mxu0 0
        %6135 = vmatprep.subr.bf16.mxu0 0
        %6136 = vmatpush1.bf16.xpose.msra.mxu0 0
        %6137 = vmatprep.subr.bf16.mxu0 0
        %6138 = vmatpush1.bf16.xpose.msra.mxu0 0
        %6139 = vmatprep.subr.bf16.mxu0 0
        %6140 = vmatpush1.bf16.xpose.msra.mxu0 0
        %6141 = vmatprep.subr.bf16.mxu0 0
        %6142 = vmatpush1.bf16.xpose.msra.mxu0 0
        %6143 = vmatprep.subr.bf16.mxu0 0
        %6144 = vmatpush1.bf16.xpose.msra.mxu0 0
        %6145 = vmatprep.mubr.bf16.mxu0 0
        %6146 = vmatmul.mubr.bf16.gmra.mrb[0].mxu0 %v6108
        %v6147 = vpop.f32.mrb[0].mxu0
        %v6148 = vadd.f32 0.0, %v6147
        %v6149 = vpop.f32.mrb[0].mxu0
        %v6150 = vpop.f32.mrb[0].mxu0
        %v6151 = vpop.f32.mrb[0].mxu0
        %6152 = vdwg.mxu0
        %v6153 = vsel %vm1335, %v6148, -inf
        %6154 = vmax.xlane.f32.xlu0 %v6153
        %v6155 = vpop.xlane.xlu0 %6154
        %v6156 = vsub.f32 %v6148, %v6155
        %v6157 = vmul.f32 %v6156, 1.442695
        %v6158 = vpow.pop %v6157
        %v6159 = vsel %vm1335, %v6158, 0.0
        %6160 = vadd.xlane.f32.xlu0 %v6159
        %v6161 = vpop.xlane.xlu0 %6160
        %v6162 = vrcp.pop %v6161
        %v6163 = vmul.f32 %v6158, %v6162
        %v6164 = vpack.c.bf16 %v6163, %v6163
        %6165 = vrot.lane.b32.xlu0 %v5790, 80
        %v6166 = vpop.permute.xlu0 %6165
        %v6168 = vsel %vm1335, %v6164, 0
        %v6171 = vsel %vm1399, %v6166, 0
        %6173 = vmatprep.subr.bf16.mxu0 0
        %6174 = vmatpush1.bf16.msra.mxu0 %v6171
        %6175 = vmatprep.subr.bf16.mxu0 0
        %6176 = vmatpush1.bf16.msra.mxu0 0
        %6177 = vmatprep.subr.bf16.mxu0 0
        %6178 = vmatpush1.bf16.msra.mxu0 0
        %6179 = vmatprep.subr.bf16.mxu0 0
        %6180 = vmatpush1.bf16.msra.mxu0 0
        %6181 = vmatprep.subr.bf16.mxu0 0
        %6182 = vmatpush1.bf16.msra.mxu0 0
        %6183 = vmatprep.subr.bf16.mxu0 0
        %6184 = vmatpush1.bf16.msra.mxu0 0
        %6185 = vmatprep.subr.bf16.mxu0 0
        %6186 = vmatpush1.bf16.msra.mxu0 0
        %6187 = vmatprep.subr.bf16.mxu0 0
        %6188 = vmatpush1.bf16.msra.mxu0 0
        %6189 = vmatprep.subr.bf16.mxu0 0
        %6190 = vmatpush1.bf16.msra.mxu0 0
        %6191 = vmatprep.subr.bf16.mxu0 0
        %6192 = vmatpush1.bf16.msra.mxu0 0
        %6193 = vmatprep.subr.bf16.mxu0 0
        %6194 = vmatpush1.bf16.msra.mxu0 0
        %6195 = vmatprep.subr.bf16.mxu0 0
        %6196 = vmatpush1.bf16.msra.mxu0 0
        %6197 = vmatprep.subr.bf16.mxu0 0
        %6198 = vmatpush1.bf16.msra.mxu0 0
        %6199 = vmatprep.subr.bf16.mxu0 0
        %6200 = vmatpush1.bf16.msra.mxu0 0
        %6201 = vmatprep.subr.bf16.mxu0 0
        %6202 = vmatpush1.bf16.msra.mxu0 0
        %6203 = vmatprep.subr.bf16.mxu0 0
        %6204 = vmatpush1.bf16.msra.mxu0 0
        %6205 = vmatprep.mubr.bf16.mxu0 0
        %6206 = vmatmul.mubr.bf16.gmra.mrb[0].mxu0 %v6168
        %v6207 = vpop.f32.mrb[0].mxu0
        %v6208 = vadd.f32 0.0, %v6207
        %v6209 = vpop.f32.mrb[0].mxu0
        %v6210 = vpop.f32.mrb[0].mxu0
        %v6211 = vpop.f32.mrb[0].mxu0
        %6212 = vdwg.mxu0
        %v6213 = vpack.c.bf16 %v6208, %v6208
        %v6215 = vsel %vm1335, %v6213, 0
        %v6218 = vsel %vm1399, %v5661, 0
        %6220 = vmatprep.subr.bf16.mxu0 0
        %6221 = vmatpush1.bf16.msra.mxu0 %v6218
        %6222 = vmatprep.subr.bf16.mxu0 0
        %6223 = vmatpush1.bf16.msra.mxu0 0
        %6224 = vmatprep.subr.bf16.mxu0 0
        %6225 = vmatpush1.bf16.msra.mxu0 0
        %6226 = vmatprep.subr.bf16.mxu0 0
        %6227 = vmatpush1.bf16.msra.mxu0 0
        %6228 = vmatprep.subr.bf16.mxu0 0
        %6229 = vmatpush1.bf16.msra.mxu0 0
        %6230 = vmatprep.subr.bf16.mxu0 0
        %6231 = vmatpush1.bf16.msra.mxu0 0
        %6232 = vmatprep.subr.bf16.mxu0 0
        %6233 = vmatpush1.bf16.msra.mxu0 0
        %6234 = vmatprep.subr.bf16.mxu0 0
        %6235 = vmatpush1.bf16.msra.mxu0 0
        %6236 = vmatprep.subr.bf16.mxu0 0
        %6237 = vmatpush1.bf16.msra.mxu0 0
        %6238 = vmatprep.subr.bf16.mxu0 0
        %6239 = vmatpush1.bf16.msra.mxu0 0
        %6240 = vmatprep.subr.bf16.mxu0 0
        %6241 = vmatpush1.bf16.msra.mxu0 0
        %6242 = vmatprep.subr.bf16.mxu0 0
        %6243 = vmatpush1.bf16.msra.mxu0 0
        %6244 = vmatprep.subr.bf16.mxu0 0
        %6245 = vmatpush1.bf16.msra.mxu0 0
        %6246 = vmatprep.subr.bf16.mxu0 0
        %6247 = vmatpush1.bf16.msra.mxu0 0
        %6248 = vmatprep.subr.bf16.mxu0 0
        %6249 = vmatpush1.bf16.msra.mxu0 0
        %6250 = vmatprep.subr.bf16.mxu0 0
        %6251 = vmatpush1.bf16.msra.mxu0 0
        %6252 = vmatprep.mubr.bf16.mxu0 0
        %6253 = vmatmul.mubr.bf16.gmra.mrb[0].mxu0 %v6215
        %v6254 = vpop.f32.mrb[0].mxu0
        %v6255 = vadd.f32 0.0, %v6254
        %v6256 = vpop.f32.mrb[0].mxu0
        %v6257 = vpop.f32.mrb[0].mxu0
        %v6258 = vpop.f32.mrb[0].mxu0
        %6259 = vdwg.mxu0
        %v6260 = vadd.f32 %v6098, %v6255
        %6261 = vrot.lane.b32.xlu0 %v5789, 104
        %v6262 = vpop.permute.xlu0 %6261
        %6263 = vrot.lane.b32.xlu0 %v5790, 104
        %v6264 = vpop.permute.xlu0 %6263
        %v6266 = vsel %vm1335, %v6262, 0
        %v6269 = vsel %vm1335, %v6264, 0
        %6271 = vmatprep.subr.bf16.mxu0 0
        %6272 = vmatpush1.bf16.xpose.msra.mxu0 %v6269
        %6273 = vmatprep.subr.bf16.mxu0 0
        %6274 = vmatpush1.bf16.xpose.msra.mxu0 0
        %6275 = vmatprep.subr.bf16.mxu0 0
        %6276 = vmatpush1.bf16.xpose.msra.mxu0 0
        %6277 = vmatprep.subr.bf16.mxu0 0
        %6278 = vmatpush1.bf16.xpose.msra.mxu0 0
        %6279 = vmatprep.subr.bf16.mxu0 0
        %6280 = vmatpush1.bf16.xpose.msra.mxu0 0
        %6281 = vmatprep.subr.bf16.mxu0 0
        %6282 = vmatpush1.bf16.xpose.msra.mxu0 0
        %6283 = vmatprep.subr.bf16.mxu0 0
        %6284 = vmatpush1.bf16.xpose.msra.mxu0 0
        %6285 = vmatprep.subr.bf16.mxu0 0
        %6286 = vmatpush1.bf16.xpose.msra.mxu0 0
        %6287 = vmatprep.subr.bf16.mxu0 0
        %6288 = vmatpush1.bf16.xpose.msra.mxu0 0
        %6289 = vmatprep.subr.bf16.mxu0 0
        %6290 = vmatpush1.bf16.xpose.msra.mxu0 0
        %6291 = vmatprep.subr.bf16.mxu0 0
        %6292 = vmatpush1.bf16.xpose.msra.mxu0 0
        %6293 = vmatprep.subr.bf16.mxu0 0
        %6294 = vmatpush1.bf16.xpose.msra.mxu0 0
        %6295 = vmatprep.subr.bf16.mxu0 0
        %6296 = vmatpush1.bf16.xpose.msra.mxu0 0
        %6297 = vmatprep.subr.bf16.mxu0 0
        %6298 = vmatpush1.bf16.xpose.msra.mxu0 0
        %6299 = vmatprep.subr.bf16.mxu0 0
        %6300 = vmatpush1.bf16.xpose.msra.mxu0 0
        %6301 = vmatprep.subr.bf16.mxu0 0
        %6302 = vmatpush1.bf16.xpose.msra.mxu0 0
        %6303 = vmatprep.mubr.bf16.mxu0 0
        %6304 = vmatmul.mubr.bf16.gmra.mrb[0].mxu0 %v6266
        %v6305 = vpop.f32.mrb[0].mxu0
        %v6306 = vadd.f32 0.0, %v6305
        %v6307 = vpop.f32.mrb[0].mxu0
        %v6308 = vpop.f32.mrb[0].mxu0
        %v6309 = vpop.f32.mrb[0].mxu0
        %6310 = vdwg.mxu0
        %v6311 = vsel %vm1335, %v6306, -inf
        %6312 = vmax.xlane.f32.xlu0 %v6311
        %v6313 = vpop.xlane.xlu0 %6312
        %v6314 = vsub.f32 %v6306, %v6313
        %v6315 = vmul.f32 %v6314, 1.442695
        %v6316 = vpow.pop %v6315
        %v6317 = vsel %vm1335, %v6316, 0.0
        %6318 = vadd.xlane.f32.xlu0 %v6317
        %v6319 = vpop.xlane.xlu0 %6318
        %v6320 = vrcp.pop %v6319
        %v6321 = vmul.f32 %v6316, %v6320
        %v6322 = vpack.c.bf16 %v6321, %v6321
        %6323 = vrot.lane.b32.xlu0 %v5790, 72
        %v6324 = vpop.permute.xlu0 %6323
        %v6326 = vsel %vm1335, %v6322, 0
        %v6329 = vsel %vm1399, %v6324, 0
        %6331 = vmatprep.subr.bf16.mxu0 0
        %6332 = vmatpush1.bf16.msra.mxu0 %v6329
        %6333 = vmatprep.subr.bf16.mxu0 0
        %6334 = vmatpush1.bf16.msra.mxu0 0
        %6335 = vmatprep.subr.bf16.mxu0 0
        %6336 = vmatpush1.bf16.msra.mxu0 0
        %6337 = vmatprep.subr.bf16.mxu0 0
        %6338 = vmatpush1.bf16.msra.mxu0 0
        %6339 = vmatprep.subr.bf16.mxu0 0
        %6340 = vmatpush1.bf16.msra.mxu0 0
        %6341 = vmatprep.subr.bf16.mxu0 0
        %6342 = vmatpush1.bf16.msra.mxu0 0
        %6343 = vmatprep.subr.bf16.mxu0 0
        %6344 = vmatpush1.bf16.msra.mxu0 0
        %6345 = vmatprep.subr.bf16.mxu0 0
        %6346 = vmatpush1.bf16.msra.mxu0 0
        %6347 = vmatprep.subr.bf16.mxu0 0
        %6348 = vmatpush1.bf16.msra.mxu0 0
        %6349 = vmatprep.subr.bf16.mxu0 0
        %6350 = vmatpush1.bf16.msra.mxu0 0
        %6351 = vmatprep.subr.bf16.mxu0 0
        %6352 = vmatpush1.bf16.msra.mxu0 0
        %6353 = vmatprep.subr.bf16.mxu0 0
        %6354 = vmatpush1.bf16.msra.mxu0 0
        %6355 = vmatprep.subr.bf16.mxu0 0
        %6356 = vmatpush1.bf16.msra.mxu0 0
        %6357 = vmatprep.subr.bf16.mxu0 0
        %6358 = vmatpush1.bf16.msra.mxu0 0
        %6359 = vmatprep.subr.bf16.mxu0 0
        %6360 = vmatpush1.bf16.msra.mxu0 0
        %6361 = vmatprep.subr.bf16.mxu0 0
        %6362 = vmatpush1.bf16.msra.mxu0 0
        %6363 = vmatprep.mubr.bf16.mxu0 0
        %6364 = vmatmul.mubr.bf16.gmra.mrb[0].mxu0 %v6326
        %v6365 = vpop.f32.mrb[0].mxu0
        %v6366 = vadd.f32 0.0, %v6365
        %v6367 = vpop.f32.mrb[0].mxu0
        %v6368 = vpop.f32.mrb[0].mxu0
        %v6369 = vpop.f32.mrb[0].mxu0
        %6370 = vdwg.mxu0
        %v6371 = vpack.c.bf16 %v6366, %v6366
        %v6373 = vsel %vm1335, %v6371, 0
        %v6376 = vsel %vm1399, %v5662, 0
        %6378 = vmatprep.subr.bf16.mxu0 0
        %6379 = vmatpush1.bf16.msra.mxu0 %v6376
        %6380 = vmatprep.subr.bf16.mxu0 0
        %6381 = vmatpush1.bf16.msra.mxu0 0
        %6382 = vmatprep.subr.bf16.mxu0 0
        %6383 = vmatpush1.bf16.msra.mxu0 0
        %6384 = vmatprep.subr.bf16.mxu0 0
        %6385 = vmatpush1.bf16.msra.mxu0 0
        %6386 = vmatprep.subr.bf16.mxu0 0
        %6387 = vmatpush1.bf16.msra.mxu0 0
        %6388 = vmatprep.subr.bf16.mxu0 0
        %6389 = vmatpush1.bf16.msra.mxu0 0
        %6390 = vmatprep.subr.bf16.mxu0 0
        %6391 = vmatpush1.bf16.msra.mxu0 0
        %6392 = vmatprep.subr.bf16.mxu0 0
        %6393 = vmatpush1.bf16.msra.mxu0 0
        %6394 = vmatprep.subr.bf16.mxu0 0
        %6395 = vmatpush1.bf16.msra.mxu0 0
        %6396 = vmatprep.subr.bf16.mxu0 0
        %6397 = vmatpush1.bf16.msra.mxu0 0
        %6398 = vmatprep.subr.bf16.mxu0 0
        %6399 = vmatpush1.bf16.msra.mxu0 0
        %6400 = vmatprep.subr.bf16.mxu0 0
        %6401 = vmatpush1.bf16.msra.mxu0 0
        %6402 = vmatprep.subr.bf16.mxu0 0
        %6403 = vmatpush1.bf16.msra.mxu0 0
        %6404 = vmatprep.subr.bf16.mxu0 0
        %6405 = vmatpush1.bf16.msra.mxu0 0
        %6406 = vmatprep.subr.bf16.mxu0 0
        %6407 = vmatpush1.bf16.msra.mxu0 0
        %6408 = vmatprep.subr.bf16.mxu0 0
        %6409 = vmatpush1.bf16.msra.mxu0 0
        %6410 = vmatprep.mubr.bf16.mxu0 0
        %6411 = vmatmul.mubr.bf16.gmra.mrb[0].mxu0 %v6373
        %v6412 = vpop.f32.mrb[0].mxu0
        %v6413 = vadd.f32 0.0, %v6412
        %v6414 = vpop.f32.mrb[0].mxu0
        %v6415 = vpop.f32.mrb[0].mxu0
        %v6416 = vpop.f32.mrb[0].mxu0
        %6417 = vdwg.mxu0
        %v6418 = vadd.f32 %v6260, %v6413
        %v6420 = vlaneseq
        %v6421 = vshrl.u32 %v6420, 7
        %v6422 = vsub.s32 0, %v6421
        %v6423 = vrot.slane %v5664, %v6422
        %v6425 = vadd.f32 %v6418, %v6423
        %v6426 = vadd.f32 %v6425, %v5643
        %v6427 = vsel %vm1228, %v6426, 0.0
        %6428 = vadd.xlane.f32.xlu0 %v6427
        %v6429 = vpop.xlane.xlu0 %6428
        %v6430 = vmul.f32 %v6429, %v1232
        %v6431 = vsub.f32 %v6426, %v6430
        %v6432 = vmul.f32 %v6431, %v6431
        %v6433 = vsel %vm1228, %v6432, 0.0
        %6434 = vadd.xlane.f32.xlu0 %v6433
        %v6435 = vpop.xlane.xlu0 %6434
        %v6436 = vmul.f32 %v6435, %v1232
        %v6437 = vadd.f32 %v6436, 1e-05
        %v6438 = vrsqrt.pop %v6437
        %v6439 = vmul.f32 %v6431, %v6438
        %v6441 = vlaneseq
        %v6442 = vshrl.u32 %v6441, 7
        %v6443 = vsub.s32 0, %v6442
        %v6444 = vrot.slane %v5666, %v6443
        %v6446 = vmul.f32 %v6439, %v6444
        %v6448 = vlaneseq
        %v6449 = vshrl.u32 %v6448, 7
        %v6450 = vsub.s32 0, %v6449
        %v6451 = vrot.slane %v5668, %v6450
        %v6453 = vadd.f32 %v6446, %v6451
        %s6454 = scalar_lea.vmem %s65, 16
        %v6455 = vld [vmem:[%s6454] sm:$0xf]
        %v6456 = vld [vmem:[%s6454 + $0x4] sm:$0xf]
        %v6457 = vld [vmem:[%s6454 + $0x8] sm:$0xf]
        %v6458 = vld [vmem:[%s6454 + $0xc] sm:$0xf]
        %s6459 = scalar_lea.vmem %s67, 1
        %v6460 = vld [vmem:[%s6459] sm:$0x1]
        %s6461 = scalar_lea.vmem %s69, 32
        %v6462 = vld [vmem:[%s6461] sm:$0xf]
        %v6463 = vld [vmem:[%s6461 + $0x4] sm:$0xf]
        %v6464 = vld [vmem:[%s6461 + $0x8] sm:$0xf]
        %v6465 = vld [vmem:[%s6461 + $0xc] sm:$0xf]
        %v6466 = vld [vmem:[%s6461 + $0x10] sm:$0xf]
        %v6467 = vld [vmem:[%s6461 + $0x14] sm:$0xf]
        %v6468 = vld [vmem:[%s6461 + $0x18] sm:$0xf]
        %v6469 = vld [vmem:[%s6461 + $0x1c] sm:$0xf]
        %s6470 = scalar_lea.vmem %s71, 1
        %v6471 = vld [vmem:[%s6470] sm:$0x1]
        %s6472 = scalar_lea.vmem %s73, 1
        %v6473 = vld [vmem:[%s6472] sm:$0x1]
        %s6474 = scalar_lea.vmem %s75, 1
        %v6475 = vld [vmem:[%s6474] sm:$0x1]
        %v6476 = vpack.c.bf16 %v6453, %v6453
        %v6478 = vlaneseq
        %v6479 = vshrl.u32 %v6478, 7
        %v6480 = vsub.s32 0, %v6479
        %v6481 = vrot.slane %v6460, %v6480
        %v6487 = vunpack.c.l.b16 %v6455
        %v6488 = vunpack.c.l.b16 %v6456
        %v6489 = vunpack.c.l.b16 %v6457
        %v6490 = vunpack.c.l.b16 %v6458
        %v6491 = vpack.c.b16 %v6488, %v6487
        %v6492 = vpack.c.b16 %v6490, %v6489
        %v6496 = vsel %vm1228, %v6476, 0
        %6498 = vmatprep.subr.bf16.mxu0 0
        %6499 = vmatpush1.bf16.msra.mxu0 %v6491
        %6500 = vmatprep.subr.bf16.mxu0 0
        %6501 = vmatpush1.bf16.msra.mxu0 %v6492
        %6502 = vmatprep.subr.bf16.mxu0 0
        %6503 = vmatpush1.bf16.msra.mxu0 0
        %6504 = vmatprep.subr.bf16.mxu0 0
        %6505 = vmatpush1.bf16.msra.mxu0 0
        %6506 = vmatprep.subr.bf16.mxu0 0
        %6507 = vmatpush1.bf16.msra.mxu0 0
        %6508 = vmatprep.subr.bf16.mxu0 0
        %6509 = vmatpush1.bf16.msra.mxu0 0
        %6510 = vmatprep.subr.bf16.mxu0 0
        %6511 = vmatpush1.bf16.msra.mxu0 0
        %6512 = vmatprep.subr.bf16.mxu0 0
        %6513 = vmatpush1.bf16.msra.mxu0 0
        %6514 = vmatprep.subr.bf16.mxu0 0
        %6515 = vmatpush1.bf16.msra.mxu0 0
        %6516 = vmatprep.subr.bf16.mxu0 0
        %6517 = vmatpush1.bf16.msra.mxu0 0
        %6518 = vmatprep.subr.bf16.mxu0 0
        %6519 = vmatpush1.bf16.msra.mxu0 0
        %6520 = vmatprep.subr.bf16.mxu0 0
        %6521 = vmatpush1.bf16.msra.mxu0 0
        %6522 = vmatprep.subr.bf16.mxu0 0
        %6523 = vmatpush1.bf16.msra.mxu0 0
        %6524 = vmatprep.subr.bf16.mxu0 0
        %6525 = vmatpush1.bf16.msra.mxu0 0
        %6526 = vmatprep.subr.bf16.mxu0 0
        %6527 = vmatpush1.bf16.msra.mxu0 0
        %6528 = vmatprep.subr.bf16.mxu0 0
        %6529 = vmatpush1.bf16.msra.mxu0 0
        %6530 = vmatprep.mubr.bf16.mxu0 0
        %6531 = vmatmul.mubr.bf16.gmra.mrb[0].mxu0 %v6496
        %v6532 = vpop.f32.mrb[0].mxu0
        %v6533 = vadd.f32 %v6481, %v6532
        %v6534 = vpop.f32.mrb[0].mxu0
        %v6535 = vpop.f32.mrb[0].mxu0
        %v6536 = vpop.f32.mrb[0].mxu0
        %6537 = vdwg.mxu0
        %v6538 = vmul.f32 %v6533, 0.5
        %v6539 = vmul.f32 %v6533, 0.044715
        %v6540 = vmul.f32 %v6539, %v6533
        %v6541 = vmul.f32 %v6540, %v6533
        %v6542 = vadd.f32 %v6533, %v6541
        %v6543 = vmul.f32 %v6542, 0.7978846
        %v6544 = vtanh.pop %v6543
        %v6545 = vadd.f32 %v6544, 1.0
        %v6546 = vmul.f32 %v6538, %v6545
        %v6547 = vpack.c.bf16 %v6546, %v6546
        %v6549 = vlaneseq
        %v6550 = vshrl.u32 %v6549, 7
        %v6551 = vsub.s32 0, %v6550
        %v6552 = vrot.slane %v6471, %v6551
        %v6562 = vunpack.c.l.b16 %v6462
        %v6563 = vunpack.c.l.b16 %v6463
        %v6564 = vunpack.c.l.b16 %v6464
        %v6565 = vunpack.c.l.b16 %v6465
        %v6566 = vunpack.c.l.b16 %v6466
        %v6567 = vunpack.c.l.b16 %v6467
        %v6568 = vunpack.c.l.b16 %v6468
        %v6569 = vunpack.c.l.b16 %v6469
        %v6570 = vpack.c.b16 %v6563, %v6562
        %v6571 = vpack.c.b16 %v6565, %v6564
        %v6572 = vpack.c.b16 %v6567, %v6566
        %v6573 = vpack.c.b16 %v6569, %v6568
        %v6579 = vsel %vm2116, %v6547, 0
        %6581 = vmatprep.subr.bf16.mxu0 0
        %6582 = vmatpush1.bf16.msra.mxu0 %v6570
        %6583 = vmatprep.subr.bf16.mxu0 0
        %6584 = vmatpush1.bf16.msra.mxu0 %v6571
        %6585 = vmatprep.subr.bf16.mxu0 0
        %6586 = vmatpush1.bf16.msra.mxu0 %v6572
        %6587 = vmatprep.subr.bf16.mxu0 0
        %6588 = vmatpush1.bf16.msra.mxu0 %v6573
        %6589 = vmatprep.subr.bf16.mxu0 0
        %6590 = vmatpush1.bf16.msra.mxu0 0
        %6591 = vmatprep.subr.bf16.mxu0 0
        %6592 = vmatpush1.bf16.msra.mxu0 0
        %6593 = vmatprep.subr.bf16.mxu0 0
        %6594 = vmatpush1.bf16.msra.mxu0 0
        %6595 = vmatprep.subr.bf16.mxu0 0
        %6596 = vmatpush1.bf16.msra.mxu0 0
        %6597 = vmatprep.subr.bf16.mxu0 0
        %6598 = vmatpush1.bf16.msra.mxu0 0
        %6599 = vmatprep.subr.bf16.mxu0 0
        %6600 = vmatpush1.bf16.msra.mxu0 0
        %6601 = vmatprep.subr.bf16.mxu0 0
        %6602 = vmatpush1.bf16.msra.mxu0 0
        %6603 = vmatprep.subr.bf16.mxu0 0
        %6604 = vmatpush1.bf16.msra.mxu0 0
        %6605 = vmatprep.subr.bf16.mxu0 0
        %6606 = vmatpush1.bf16.msra.mxu0 0
        %6607 = vmatprep.subr.bf16.mxu0 0
        %6608 = vmatpush1.bf16.msra.mxu0 0
        %6609 = vmatprep.subr.bf16.mxu0 0
        %6610 = vmatpush1.bf16.msra.mxu0 0
        %6611 = vmatprep.subr.bf16.mxu0 0
        %6612 = vmatpush1.bf16.msra.mxu0 0
        %6613 = vmatprep.mubr.bf16.mxu0 0
        %6614 = vmatmul.mubr.bf16.gmra.mrb[0].mxu0 %v6579
        %v6615 = vpop.f32.mrb[0].mxu0
        %v6616 = vadd.f32 %v6552, %v6615
        %v6617 = vpop.f32.mrb[0].mxu0
        %v6618 = vpop.f32.mrb[0].mxu0
        %v6619 = vpop.f32.mrb[0].mxu0
        %6620 = vdwg.mxu0
        %v6621 = vadd.f32 %v6616, %v6453
        %v6622 = vsel %vm1228, %v6621, 0.0
        %6623 = vadd.xlane.f32.xlu0 %v6622
        %v6624 = vpop.xlane.xlu0 %6623
        %v6625 = vmul.f32 %v6624, %v1232
        %v6626 = vsub.f32 %v6621, %v6625
        %v6627 = vmul.f32 %v6626, %v6626
        %v6628 = vsel %vm1228, %v6627, 0.0
        %6629 = vadd.xlane.f32.xlu0 %v6628
        %v6630 = vpop.xlane.xlu0 %6629
        %v6631 = vmul.f32 %v6630, %v1232
        %v6632 = vadd.f32 %v6631, 1e-05
        %v6633 = vrsqrt.pop %v6632
        %v6634 = vmul.f32 %v6626, %v6633
        %v6636 = vlaneseq
        %v6637 = vshrl.u32 %v6636, 7
        %v6638 = vsub.s32 0, %v6637
        %v6639 = vrot.slane %v6473, %v6638
        %v6641 = vmul.f32 %v6634, %v6639
        %v6643 = vlaneseq
        %v6644 = vshrl.u32 %v6643, 7
        %v6645 = vsub.s32 0, %v6644
        %v6646 = vrot.slane %v6475, %v6645
        %v6648 = vadd.f32 %v6641, %v6646
        %v6649 = vpack.c.bf16 %v6648, %v6648
        %v6650 = vld [vmem:[%s77] sm:$0xf]
        %v6651 = vld [vmem:[%s77 + $0x4] sm:$0xf]
        %v6652 = vld [vmem:[%s77 + $0x8] sm:$0xf]
        %v6653 = vld [vmem:[%s77 + $0xc] sm:$0xf]
        %v6654 = vld [vmem:[%s77 + $0x10] sm:$0xf]
        %v6655 = vld [vmem:[%s77 + $0x14] sm:$0xf]
        %v6656 = vld [vmem:[%s77 + $0x18] sm:$0xf]
        %v6657 = vld [vmem:[%s77 + $0x1c] sm:$0xf]
        %v6658 = vld [vmem:[%s77 + $0x20] sm:$0xf]
        %v6659 = vld [vmem:[%s77 + $0x24] sm:$0xf]
        %v6660 = vld [vmem:[%s77 + $0x28] sm:$0xf]
        %v6661 = vld [vmem:[%s77 + $0x2c] sm:$0xf]
        %v6662 = vld [vmem:[%s77 + $0x30] sm:$0xf]
        %v6663 = vld [vmem:[%s77 + $0x34] sm:$0xf]
        %v6664 = vld [vmem:[%s77 + $0x38] sm:$0xf]
        %v6665 = vld [vmem:[%s77 + $0x3c] sm:$0xf]
        %v6666 = vld [vmem:[%s79] sm:$0x1]
        %v6668 = vlaneseq
        %v6669 = vshrl.u32 %v6668, 7
        %v6670 = vsub.s32 0, %v6669
        %v6671 = vrot.slane %v6666, %v6670
        %v6689 = vunpack.c.l.b16 %v6650
        %v6690 = vunpack.c.l.b16 %v6651
        %v6691 = vunpack.c.l.b16 %v6652
        %v6692 = vunpack.c.l.b16 %v6653
        %v6693 = vunpack.c.l.b16 %v6654
        %v6694 = vunpack.c.l.b16 %v6655
        %v6695 = vunpack.c.l.b16 %v6656
        %v6696 = vunpack.c.l.b16 %v6657
        %v6697 = vunpack.c.l.b16 %v6658
        %v6698 = vunpack.c.l.b16 %v6659
        %v6699 = vunpack.c.l.b16 %v6660
        %v6700 = vunpack.c.l.b16 %v6661
        %v6701 = vunpack.c.l.b16 %v6662
        %v6702 = vunpack.c.l.b16 %v6663
        %v6703 = vunpack.c.l.b16 %v6664
        %v6704 = vunpack.c.l.b16 %v6665
        %v6705 = vpack.c.b16 %v6690, %v6689
        %v6706 = vpack.c.b16 %v6692, %v6691
        %v6707 = vpack.c.b16 %v6694, %v6693
        %v6708 = vpack.c.b16 %v6696, %v6695
        %v6709 = vpack.c.b16 %v6698, %v6697
        %v6710 = vpack.c.b16 %v6700, %v6699
        %v6711 = vpack.c.b16 %v6702, %v6701
        %v6712 = vpack.c.b16 %v6704, %v6703
        %v6714 = vsel %vm1228, %v6649, 0
        %v6717 = vsel %vm1228, %v6705, 0
        %v6720 = vsel %vm1228, %v6706, 0
        %v6723 = vsel %vm1228, %v6707, 0
        %v6726 = vsel %vm1228, %v6708, 0
        %v6729 = vsel %vm1228, %v6709, 0
        %v6732 = vsel %vm1228, %v6710, 0
        %v6735 = vsel %vm1228, %v6711, 0
        %v6738 = vsel %vm1228, %v6712, 0
        %6740 = vmatprep.subr.bf16.mxu0 0
        %6741 = vmatpush1.bf16.xpose.msra.mxu0 %v6717
        %6742 = vmatprep.subr.bf16.mxu0 0
        %6743 = vmatpush1.bf16.xpose.msra.mxu0 %v6720
        %6744 = vmatprep.subr.bf16.mxu0 0
        %6745 = vmatpush1.bf16.xpose.msra.mxu0 %v6723
        %6746 = vmatprep.subr.bf16.mxu0 0
        %6747 = vmatpush1.bf16.xpose.msra.mxu0 %v6726
        %6748 = vmatprep.subr.bf16.mxu0 0
        %6749 = vmatpush1.bf16.xpose.msra.mxu0 %v6729
        %6750 = vmatprep.subr.bf16.mxu0 0
        %6751 = vmatpush1.bf16.xpose.msra.mxu0 %v6732
        %6752 = vmatprep.subr.bf16.mxu0 0
        %6753 = vmatpush1.bf16.xpose.msra.mxu0 %v6735
        %6754 = vmatprep.subr.bf16.mxu0 0
        %6755 = vmatpush1.bf16.xpose.msra.mxu0 %v6738
        %6756 = vmatprep.subr.bf16.mxu0 0
        %6757 = vmatpush1.bf16.xpose.msra.mxu0 0
        %6758 = vmatprep.subr.bf16.mxu0 0
        %6759 = vmatpush1.bf16.xpose.msra.mxu0 0
        %6760 = vmatprep.subr.bf16.mxu0 0
        %6761 = vmatpush1.bf16.xpose.msra.mxu0 0
        %6762 = vmatprep.subr.bf16.mxu0 0
        %6763 = vmatpush1.bf16.xpose.msra.mxu0 0
        %6764 = vmatprep.subr.bf16.mxu0 0
        %6765 = vmatpush1.bf16.xpose.msra.mxu0 0
        %6766 = vmatprep.subr.bf16.mxu0 0
        %6767 = vmatpush1.bf16.xpose.msra.mxu0 0
        %6768 = vmatprep.subr.bf16.mxu0 0
        %6769 = vmatpush1.bf16.xpose.msra.mxu0 0
        %6770 = vmatprep.subr.bf16.mxu0 0
        %6771 = vmatpush1.bf16.xpose.msra.mxu0 0
        %6772 = vmatprep.mubr.bf16.mxu0 0
        %6773 = vmatmul.mubr.bf16.gmra.mrb[0].mxu0 %v6714
        %v6774 = vpop.f32.mrb[0].mxu0
        %v6775 = vadd.f32 %v6671, %v6774
        %v6776 = vpop.f32.mrb[0].mxu0
        %v6777 = vpop.f32.mrb[0].mxu0
        %v6778 = vpop.f32.mrb[0].mxu0
        %6779 = vdwg.mxu0
        %v6780 = vpack.c.bf16 %v6775, %v6775
        %6781 = vst [vmem:[%s1214] sm:$0xf] %v6780
        %s6782 = sand.u32 %s953, 1
        %s6783 = scalar_lea.sflag [#allocation3], %s6782
        %s6784 = sand.u32 %s953, 1
        %s6785 = smul.addr %s6784, 4
        %s6786 = scalar_lea.vmem [#allocation2], %s6785
        // Predicated region
        $region181: #{bart_forward.1} parent=179 // pred_check
          %p6787 = pneg %p963
        $region182: #{bart_forward.1} parent=179 // pred_check_branch
          %6789 = sbr.rel (%p6787) target = $region184
        $region183: #{bart_forward.1} parent=179 // pred_region
          %s6791 = ssub.s32 64, 64
          %6792 = vsyncadd %s6783, %s6791
          %s6793 = smul.addr %s95, 64
          %s6794 = scalar_lea.hbm %s81, %s6793
          %s6796 = sshll.u32 %s6786, 4
          %s6797 = int_to_ptr.vmem [resolvable:$true] %s6796
          %6799 = dma.vmem_to_hbm [thread:$0]  %s6797, 64, %s6794, %s6783
        $region184: #{bart_forward.1} parent=179 // pred_fallthru
          _
      $region180: #{bart_forward.1} parent=5 // pred_fallthru
        _
      %p6800 = scmp.le.s32.totalorder 2, %s90
      // Predicated region
      $region185: #{bart_forward.1} parent=5 // pred_check
        %p6801 = pneg %p6800
      $region186: #{bart_forward.1} parent=5 // pred_check_branch
        %6803 = sbr.rel (%p6801) target = $region188
      $region187: #{bart_forward.1} parent=5 // pred_region
        %s6804 = ssub.s32 %s90, 2
        // Predicated region
        $region189: #{bart_forward.1} parent=187 // pred_check
          %p6805 = pneg %p969
        $region190: #{bart_forward.1} parent=187 // pred_check_branch
          %6807 = sbr.rel (%p6805) target = $region192
        $region191: #{bart_forward.1} parent=187 // pred_region
          %s6808 = sand.u32 %s954, 1
          %s6809 = scalar_lea.sflag [#allocation3], %s6808
          %s6810 = sand.u32 %s954, 1
          %s6811 = smul.addr %s6810, 4
          %s6812 = scalar_lea.vmem [#allocation2], %s6811
          %6813 = dma.done %s6809, 64
        $region192: #{bart_forward.1} parent=187 // pred_fallthru
          _
      $region188: #{bart_forward.1} parent=5 // pred_fallthru
        _
    $region6: #{bart_forward.1} parent=1 // loop_footer
      %s94 = sadd.s32 1, %s90
    $region7: #{bart_forward.1} parent=1 // loop_footer_branch
      %89 = sbr.rel target = $region3
    $region8: #{bart_forward.1} parent=1 // loop_exit
      _
    %6814 = vsyncpa [#allocation3], 1
    %s6815 = scalar_lea.sflag [#allocation3], 1
    %6816 = vsyncpa %s6815, 1

</llo_original>
